<compile_context>
chip_gen: v6e
topology: v6e:2x2x1
jax: 0.10.0
libtpu: 0.0.40
codegen_flags: <defaults>
</compile_context>

<pallas_src>
import functools

import jax
import jax.numpy as jnp
from jax import lax
from jax.experimental import pallas as pl
from jax.experimental.pallas import tpu as pltpu

BOARD = 8            # Othello board size
HEAD_C = 32          # channels of the policy / value 1x1 convs (fixed by the module)
VALUE_HIDDEN = 256
EPS = 1e-5


# ---------------------------------------------------------------------------
# Kernel 1: the whole conv tower for one batch tile (input conv + BN + PReLU,
# all residual blocks, merged policy/value 1x1 convs + BN + ReLU).
# ---------------------------------------------------------------------------
def tower_kernel(patches_ref, mask_ref, w_in_ref, b_in_ref, a_in_ref,
                 w1_ref, b1_ref, w2_ref, b2_ref, alpha_ref, fc1_ref, fc2_ref,
                 w_head_ref, b_head_ref, feat_ref, *, board_w):
    f32 = jnp.float32
    Mt = patches_ref.shape[0]            # rows in this batch tile = TB * H * W
    C = w_in_ref.shape[1]
    HW = board_w * board_w
    TB = Mt // HW
    n_blocks = w1_ref.shape[0]

    def prelu(z, a):
        return jnp.where(z > 0, z, a * z)

    def conv3x3(h, w, bias):
        # Build the (Mt, 9*C) shifted stack with pltpu.roll along rows; positions whose
        # source pixel is off-board are zeroed by the precomputed mask.  The whole 3x3
        # conv is then ONE lane-dense (Mt,9C)x(9C,C) MXU matmul.
        taps = []
        for dy in (-1, 0, 1):
            for dx in (-1, 0, 1):
                d = dy * board_w + dx
                taps.append(h if d == 0 else pltpu.roll(h, (-d) % Mt, axis=0))
        stack = jnp.concatenate(taps, axis=1) * mask_ref[...]
        return jnp.dot(stack, w, preferred_element_type=f32) + bias

    # ---- input 5x5 conv (host-side im2col, K padded to 128) + folded BN + PReLU ----
    h = jnp.dot(patches_ref[...], w_in_ref[...], preferred_element_type=f32) + b_in_ref[...]
    h = prelu(h, a_in_ref[...])

    # ---- residual tower ----
    # TODO(synk): switch to lax.fori_loop + dynamic weight indexing for deep towers.
    for b in range(n_blocks):
        alpha = alpha_ref[b]                                    # (1, C)
        residual = h
        z = prelu(conv3x3(h, w1_ref[b], b1_ref[b]), alpha)      # conv1 + bn1 (folded)
        z = conv3x3(z, w2_ref[b], b2_ref[b])                    # conv2 + bn2 (folded)
        # squeeze-and-excite: per-sample mean over the board, two tiny FCs, gated scale
        z3 = z.reshape(TB, HW, C)
        pooled = jnp.sum(z3, axis=1) * (1.0 / HW)               # (TB, C)
        y = jnp.maximum(jnp.dot(pooled, fc1_ref[b], preferred_element_type=f32), 0.0)
        gate = jax.nn.sigmoid(jnp.dot(y, fc2_ref[b], preferred_element_type=f32))  # (TB, C)
        z = (z3 * gate[:, None, :]).reshape(Mt, C)
        h = prelu(z + residual, alpha)

    # ---- merged policy|value 1x1 convs + folded BN + ReLU (lane-dense 64-col store) ----
    feat_ref[...] = jnp.maximum(
        jnp.dot(h, w_head_ref[...], preferred_element_type=f32) + b_head_ref[...], 0.0)


# ---------------------------------------------------------------------------
# Kernel 2: FC heads (policy FC + softmax, value FC -> ReLU -> FC -> tanh).
# ---------------------------------------------------------------------------
def head_kernel(pflat_ref, wfp_ref, bfp_ref,
                vflat_ref, wv1_ref, bv1_ref, wv2_ref, bv2_ref,
                policy_ref, value_ref):
    f32 = jnp.float32
    logits = jnp.dot(pflat_ref[...], wfp_ref[...], preferred_element_type=f32) + bfp_ref[...]
    logits = logits - jnp.max(logits, axis=1, keepdims=True)
    e = jnp.exp(logits)
    policy_ref[...] = e / jnp.sum(e, axis=1, keepdims=True)

    v = jnp.maximum(
        jnp.dot(vflat_ref[...], wv1_ref[...], preferred_element_type=f32) + bv1_ref[...], 0.0)
    value_ref[...] = jnp.tanh(
        jnp.dot(v, wv2_ref[...], preferred_element_type=f32) + bv2_ref[...])


# ---------------------------------------------------------------------------
# Host wrapper
# ---------------------------------------------------------------------------
def _fold_bn(w, b_conv, gamma, beta, mean, var):
    """Fold conv bias + inference BatchNorm into per-output-channel weight scale / shift."""
    s = gamma / jnp.sqrt(var + EPS)
    return w * s, (b_conv - mean) * s + beta


def _pick_batch_tile(n):
    for t in (8, 4, 2, 1):
        if n % t == 0:
            return t
    return 1


@jax.jit
def net_forward(x_nchw, params):
    """Forward pass of `Net`.  x_nchw: (N, Cin, 8, 8) float32.  Returns (value, policy)."""
    N, Cin, H, W = x_nchw.shape
    C = params["w_in"].shape[-1]
    HW = H * W
    M = N * HW
    f32 = jnp.float32
    TB = _pick_batch_tile(N)
    Mt = TB * HW
    n_tiles = N // TB
    nb = len(params["blocks"])
    Cr = params["blocks"][0]["fc1"].shape[-1]

    # ---- host-side prep (tiny; fused by XLA) ----
    # 5x5 im2col of the input (the only activation read from HBM), K zero-padded to 128.
    x = jnp.transpose(x_nchw, (0, 2, 3, 1))                       # NHWC
    xp = jnp.pad(x, ((0, 0), (2, 2), (2, 2), (0, 0)))
    patches = jnp.stack(
        [xp[:, ky:ky + H, kx:kx + W, :] for ky in range(5) for kx in range(5)],
        axis=3).reshape(M, 25 * Cin)
    Kpad = pl.cdiv(25 * Cin, 128) * 128
    patches = jnp.pad(patches, ((0, 0), (0, Kpad - 25 * Cin)))

    # Per-tile 3x3 border mask (Mt, 9*C): identical for every batch tile, so its
    # BlockSpec index_map always returns block 0 (no batch-scaled mask memory).
    pos = jnp.arange(Mt)
    yy = (pos % HW) // W
    xx = pos % W
    cols = []
    for dy in (-1, 0, 1):
        for dx in (-1, 0, 1):
            valid = ((yy + dy >= 0) & (yy + dy < H) &
                     (xx + dx >= 0) & (xx + dx < W)).astype(f32)
            cols.append(jnp.tile(valid[:, None], (1, C)))
    tap_mask = jnp.concatenate(cols, axis=1)                       # (Mt, 9*C)

    # Fold conv bias + BN (inference mode) into the conv weights.
    w_in, b_in = _fold_bn(params["w_in"].reshape(25 * Cin, C), params["b_in"],
                          params["bn_in_gamma"], params["bn_in_beta"],
                          params["bn_in_mean"], params["bn_in_var"])
    w_in = jnp.pad(w_in, ((0, Kpad - 25 * Cin), (0, 0)))

    w1s, b1s, w2s, b2s, alphas, fc1s, fc2s = [], [], [], [], [], [], []
    for blk in params["blocks"]:
        w1, b1 = _fold_bn(blk["w1"], blk["b1"], blk["bn1_gamma"], blk["bn1_beta"],
                          blk["bn1_mean"], blk["bn1_var"])
        w2, b2 = _fold_bn(blk["w2"], blk["b2"], blk["bn2_gamma"], blk["bn2_beta"],
                          blk["bn2_mean"], blk["bn2_var"])
        w1s.append(w1.reshape(9 * C, C)); b1s.append(b1.reshape(1, C))
        w2s.append(w2.reshape(9 * C, C)); b2s.append(b2.reshape(1, C))
        alphas.append(blk["alpha"].reshape(1, C))
        fc1s.append(blk["fc1"]); fc2s.append(blk["fc2"])
    w1s, b1s = jnp.stack(w1s), jnp.stack(b1s)
    w2s, b2s = jnp.stack(w2s), jnp.stack(b2s)
    alphas, fc1s, fc2s = jnp.stack(alphas), jnp.stack(fc1s), jnp.stack(fc2s)

    wp, bp = _fold_bn(params["w_policy"], params["b_policy"], params["bnp_gamma"],
                      params["bnp_beta"], params["bnp_mean"], params["bnp_var"])
    wv, bv = _fold_bn(params["w_value"], params["b_value"], params["bnv_gamma"],
                      params["bnv_beta"], params["bnv_mean"], params["bnv_var"])
    w_head = jnp.concatenate([wp, wv], axis=1)                     # (C, 64)
    b_head = jnp.concatenate([bp, bv]).reshape(1, 2 * HEAD_C)

    def const_spec(shape):
        nd = len(shape)
        return pl.BlockSpec(shape, lambda *_: (0,) * nd)

    # ---- pallas call 1: the whole conv tower, batch-tiled grid ----
    in_specs = [
        pl.BlockSpec((Mt, Kpad), lambda i: (i, 0)),     # im2col patches (batch-tiled)
        const_spec((Mt, 9 * C)),                        # 3x3 border mask (shared)
        const_spec((Kpad, C)), const_spec((1, C)), const_spec((1, C)),
        const_spec((nb, 9 * C, C)), const_spec((nb, 1, C)),
        const_spec((nb, 9 * C, C)), const_spec((nb, 1, C)),
        const_spec((nb, 1, C)),
        const_spec((nb, C, Cr)), const_spec((nb, Cr, C)),
        const_spec((C, 2 * HEAD_C)), const_spec((1, 2 * HEAD_C)),
    ]
    feats = pl.pallas_call(
        functools.partial(tower_kernel, board_w=W),
        out_shape=jax.ShapeDtypeStruct((M, 2 * HEAD_C), f32),
        grid=(n_tiles,),
        in_specs=in_specs,
        out_specs=pl.BlockSpec((Mt, 2 * HEAD_C), lambda i: (i, 0)),
        compiler_params=pltpu.CompilerParams(dimension_semantics=("parallel",)),
    )(patches, tap_mask, w_in, b_in.reshape(1, C), params["alpha_in"].reshape(1, C),
      w1s, b1s, w2s, b2s, alphas, fc1s, fc2s, w_head, b_head)

    # ---- pallas call 2: FC heads ----
    # (M, 64) -> (N, HW*32) per head is a cheap metadata reshape/slice; FC weights are
    # permuted on the host from PyTorch's (c*HW + s) flatten order to (s*32 + c).
    def perm_fc(wmat):
        out_dim = wmat.shape[1]
        return wmat.reshape(HEAD_C, HW, out_dim).transpose(1, 0, 2).reshape(HEAD_C * HW, out_dim)

    feats3 = feats.reshape(N, HW, 2 * HEAD_C)
    pflat = feats3[:, :, :HEAD_C].reshape(N, HW * HEAD_C)
    vflat = feats3[:, :, HEAD_C:].reshape(N, HW * HEAD_C)

    vspec = pl.BlockSpec(memory_space=pltpu.MemorySpace.VMEM)
    head_inputs = (pflat, perm_fc(params["fc_policy_w"]), params["fc_policy_b"].reshape(1, HW),
                   vflat, perm_fc(params["fc_value1_w"]),
                   params["fc_value1_b"].reshape(1, VALUE_HIDDEN),
                   params["fc_value2_w"], params["fc_value2_b"].reshape(1, 1))
    policy, value = pl.pallas_call(
        head_kernel,
        out_shape=(jax.ShapeDtypeStruct((N, HW), f32),
                   jax.ShapeDtypeStruct((N, 1), f32)),
        in_specs=[vspec] * len(head_inputs),
        out_specs=(vspec, vspec),
    )(*head_inputs)
    return value, policy


# ---------------------------------------------------------------------------
# Pure-JAX reference with PyTorch `Net.forward` semantics (BatchNorm in eval mode)
# ---------------------------------------------------------------------------
def reference_net(x_nchw, params):
    x = jnp.transpose(x_nchw, (0, 2, 3, 1))
    N = x.shape[0]
    conv = functools.partial(lax.conv_general_dilated, window_strides=(1, 1),
                             dimension_numbers=("NHWC", "HWIO", "NHWC"),
                             precision=lax.Precision.HIGHEST)
    mm = lambda a, b: jnp.dot(a, b, precision=lax.Precision.HIGHEST)
    bn = lambda h, g, b, m, v: (h - m) / jnp.sqrt(v + EPS) * g + b
    prelu = lambda h, a: jnp.where(h > 0, h, a * h)

    h = conv(x, params["w_in"], padding=((2, 2), (2, 2))) + params["b_in"]
    h = prelu(bn(h, params["bn_in_gamma"], params["bn_in_beta"],
                 params["bn_in_mean"], params["bn_in_var"]), params["alpha_in"])

    for blk in params["blocks"]:
        res = h
        t = conv(h, blk["w1"], padding=((1, 1), (1, 1))) + blk["b1"]
        t = prelu(bn(t, blk["bn1_gamma"], blk["bn1_beta"], blk["bn1_mean"], blk["bn1_var"]),
                  blk["alpha"])
        t = conv(t, blk["w2"], padding=((1, 1), (1, 1))) + blk["b2"]
        t = bn(t, blk["bn2_gamma"], blk["bn2_beta"], blk["bn2_mean"], blk["bn2_var"])
        y = t.mean(axis=(1, 2))
        y = jnp.maximum(mm(y, blk["fc1"]), 0.0)
        y = jax.nn.sigmoid(mm(y, blk["fc2"]))
        t = t * y[:, None, None, :]
        h = prelu(t + res, blk["alpha"])

    p = jnp.maximum(bn(jnp.einsum("nhwc,cd->nhwd", h, params["w_policy"],
                                  precision=lax.Precision.HIGHEST) + params["b_policy"],
                       params["bnp_gamma"], params["bnp_beta"],
                       params["bnp_mean"], params["bnp_var"]), 0.0)
    p = jnp.transpose(p, (0, 3, 1, 2)).reshape(N, -1)           # PyTorch NCHW flatten
    logits = mm(p, params["fc_policy_w"]) + params["fc_policy_b"]
    policy = jax.nn.softmax(logits, axis=1)

    v = jnp.maximum(bn(jnp.einsum("nhwc,cd->nhwd", h, params["w_value"],
                                  precision=lax.Precision.HIGHEST) + params["b_value"],
                       params["bnv_gamma"], params["bnv_beta"],
                       params["bnv_mean"], params["bnv_var"]), 0.0)
    v = jnp.transpose(v, (0, 3, 1, 2)).reshape(N, -1)
    v = jnp.maximum(mm(v, params["fc_value1_w"]) + params["fc_value1_b"], 0.0)
    value = jnp.tanh(mm(v, params["fc_value2_w"]) + params["fc_value2_b"])
    return value, policy


if __name__ == "__main__":
    N, Cin = 2, 3
    H = W = BOARD
    C, NUM_BLOCKS, REDUCTION = 32, 2, 16
    Cr = C // REDUCTION

    keys = iter(jax.random.split(jax.random.PRNGKey(0), 256))
    nk = lambda: next(keys)

    def nrm(shape, scale):
        return scale * jax.random.normal(nk(), shape, jnp.float32)

    def bn_params(c):
        return {"gamma": 1.0 + nrm((c,), 0.1), "beta": nrm((c,), 0.1),
                "mean": nrm((c,), 0.1),
                "var": 1.0 + 0.5 * jax.random.uniform(nk(), (c,), jnp.float32)}

    bn_in, bnp, bnv = bn_params(C), bn_params(HEAD_C), bn_params(HEAD_C)
    params = {
        "w_in": nrm((5, 5, Cin, C), 0.12), "b_in": nrm((C,), 0.1),
        "bn_in_gamma": bn_in["gamma"], "bn_in_beta": bn_in["beta"],
        "bn_in_mean": bn_in["mean"], "bn_in_var": bn_in["var"],
        "alpha_in": 0.25 + nrm((C,), 0.05),
        "w_policy": nrm((C, HEAD_C), 0.18), "b_policy": nrm((HEAD_C,), 0.1),
        "bnp_gamma": bnp["gamma"], "bnp_beta": bnp["beta"],
        "bnp_mean": bnp["mean"], "bnp_var": bnp["var"],
        "w_value": nrm((C, HEAD_C), 0.18), "b_value": nrm((HEAD_C,), 0.1),
        "bnv_gamma": bnv["gamma"], "bnv_beta": bnv["beta"],
        "bnv_mean": bnv["mean"], "bnv_var": bnv["var"],
        "fc_policy_w": nrm((HEAD_C * H * W, H * W), 0.02), "fc_policy_b": nrm((H * W,), 0.1),
        "fc_value1_w": nrm((HEAD_C * H * W, VALUE_HIDDEN), 0.02),
        "fc_value1_b": nrm((VALUE_HIDDEN,), 0.1),
        "fc_value2_w": nrm((VALUE_HIDDEN, 1), 0.06), "fc_value2_b": nrm((1,), 0.1),
        "blocks": [],
    }
    for _ in range(NUM_BLOCKS):
        bn1, bn2 = bn_params(C), bn_params(C)
        params["blocks"].append({
            "w1": nrm((3, 3, C, C), 0.06), "b1": nrm((C,), 0.1),
            "bn1_gamma": bn1["gamma"], "bn1_beta": bn1["beta"],
            "bn1_mean": bn1["mean"], "bn1_var": bn1["var"],
            "w2": nrm((3, 3, C, C), 0.06), "b2": nrm((C,), 0.1),
            "bn2_gamma": bn2["gamma"], "bn2_beta": bn2["beta"],
            "bn2_mean": bn2["mean"], "bn2_var": bn2["var"],
            "alpha": 0.25 + nrm((C,), 0.05),
            "fc1": nrm((C, Cr), 0.3),
            "fc2": nrm((Cr, C), 0.3),
        })

    x = jax.random.normal(nk(), (N, Cin, H, W), jnp.float32)

    value, policy = net_forward(x, params)
    jax.block_until_ready((value, policy))
    ref_value, ref_policy = reference_net(x, params)

    assert value.shape == (N, 1), value.shape
    assert policy.shape == (N, H * W), policy.shape
    err_v = float(jnp.max(jnp.abs(value - ref_value)))
    err_p = float(jnp.max(jnp.abs(policy - ref_policy)))
    assert err_v < 1e-2 and err_p < 1e-2, (err_v, err_p)
    print("KERNEL_OK")
</pallas_src>

<mosaic_0001>
module attributes {stable_mosaic.version = 11 : i64} {
  func.func @tower_kernel(%arg0: i32, %arg1: memref<128x128xf32, #tpu.memory_space<vmem>>, %arg2: memref<128x288xf32, #tpu.memory_space<vmem>>, %arg3: memref<128x32xf32, #tpu.memory_space<vmem>>, %arg4: memref<1x32xf32, #tpu.memory_space<vmem>>, %arg5: memref<1x32xf32, #tpu.memory_space<vmem>>, %arg6: memref<2x288x32xf32, #tpu.memory_space<vmem>>, %arg7: memref<2x1x32xf32, #tpu.memory_space<vmem>>, %arg8: memref<2x288x32xf32, #tpu.memory_space<vmem>>, %arg9: memref<2x1x32xf32, #tpu.memory_space<vmem>>, %arg10: memref<2x1x32xf32, #tpu.memory_space<vmem>>, %arg11: memref<2x32x2xf32, #tpu.memory_space<vmem>>, %arg12: memref<2x2x32xf32, #tpu.memory_space<vmem>>, %arg13: memref<32x64xf32, #tpu.memory_space<vmem>>, %arg14: memref<1x64xf32, #tpu.memory_space<vmem>>, %arg15: memref<128x64xf32, #tpu.memory_space<vmem>>) attributes {dimension_semantics = [#tpu.dimension_semantics<parallel>], iteration_bounds = array<i64: 1>, scalar_prefetch = 0 : i64, scratch_operands = 0 : i64, tpu.core_type = #tpu.core_type<tc>, window_params = [{transform_indices = @transform_0, window_bounds = array<i64: 128, 128>}, {pipeline_mode = #tpu.pipeline_mode<synchronous>, transform_indices = @transform_1, window_bounds = array<i64: 128, 288>}, {pipeline_mode = #tpu.pipeline_mode<synchronous>, transform_indices = @transform_2, window_bounds = array<i64: 128, 32>}, {pipeline_mode = #tpu.pipeline_mode<synchronous>, transform_indices = @transform_3, window_bounds = array<i64: 1, 32>}, {pipeline_mode = #tpu.pipeline_mode<synchronous>, transform_indices = @transform_4, window_bounds = array<i64: 1, 32>}, {pipeline_mode = #tpu.pipeline_mode<synchronous>, transform_indices = @transform_5, window_bounds = array<i64: 2, 288, 32>}, {pipeline_mode = #tpu.pipeline_mode<synchronous>, transform_indices = @transform_6, window_bounds = array<i64: 2, 1, 32>}, {pipeline_mode = #tpu.pipeline_mode<synchronous>, transform_indices = @transform_7, window_bounds = array<i64: 2, 288, 32>}, {pipeline_mode = #tpu.pipeline_mode<synchronous>, transform_indices = @transform_8, window_bounds = array<i64: 2, 1, 32>}, {pipeline_mode = #tpu.pipeline_mode<synchronous>, transform_indices = @transform_9, window_bounds = array<i64: 2, 1, 32>}, {pipeline_mode = #tpu.pipeline_mode<synchronous>, transform_indices = @transform_10, window_bounds = array<i64: 2, 32, 2>}, {pipeline_mode = #tpu.pipeline_mode<synchronous>, transform_indices = @transform_11, window_bounds = array<i64: 2, 2, 32>}, {pipeline_mode = #tpu.pipeline_mode<synchronous>, transform_indices = @transform_12, window_bounds = array<i64: 32, 64>}, {pipeline_mode = #tpu.pipeline_mode<synchronous>, transform_indices = @transform_13, window_bounds = array<i64: 1, 64>}, {transform_indices = @transform_14, window_bounds = array<i64: 128, 64>}]} {
    %c0 = arith.constant 0 : index
    %c0_0 = arith.constant 0 : index
    %0 = vector.load %arg1[%c0, %c0_0] : memref<128x128xf32, #tpu.memory_space<vmem>>, vector<128x128xf32>
    %c0_1 = arith.constant 0 : index
    %c0_2 = arith.constant 0 : index
    %1 = vector.load %arg3[%c0_1, %c0_2] : memref<128x32xf32, #tpu.memory_space<vmem>>, vector<128x32xf32>
    %cst = arith.constant dense<0.000000e+00> : vector<128x32xf32>
    %2 = tpu.matmul %0, %1, %cst {dimension_numbers = #tpu.dot_dimension_numbers<[1], [0], [0], [1], [0, 0, 1, 1], [], []>} : vector<128x128xf32>, vector<128x32xf32>, vector<128x32xf32> -> vector<128x32xf32>
    %c0_3 = arith.constant 0 : index
    %c0_4 = arith.constant 0 : index
    %3 = vector.load %arg4[%c0_3, %c0_4] : memref<1x32xf32, #tpu.memory_space<vmem>>, vector<1x32xf32>
    %4 = vector.broadcast %3 : vector<1x32xf32> to vector<128x32xf32>
    %5 = arith.addf %2, %4 : vector<128x32xf32>
    %c0_5 = arith.constant 0 : index
    %c0_6 = arith.constant 0 : index
    %6 = vector.load %arg5[%c0_5, %c0_6] : memref<1x32xf32, #tpu.memory_space<vmem>>, vector<1x32xf32>
    %cst_7 = arith.constant 0.000000e+00 : f32
    %7 = vector.broadcast %cst_7 : f32 to vector<128x32xf32>
    %8 = arith.cmpf ogt, %5, %7 : vector<128x32xf32>
    %9 = vector.broadcast %6 : vector<1x32xf32> to vector<128x32xf32>
    %10 = arith.mulf %9, %5 : vector<128x32xf32>
    %11 = arith.select %8, %5, %10 : vector<128x32xi1>, vector<128x32xf32>
    %c0_8 = arith.constant 0 : index
    %c0_9 = arith.constant 0 : index
    %c0_10 = arith.constant 0 : index
    %12 = vector.load %arg10[%c0_8, %c0_9, %c0_10] : memref<2x1x32xf32, #tpu.memory_space<vmem>>, vector<1x1x32xf32>
    %13 = vector.shape_cast %12 : vector<1x1x32xf32> to vector<1x32xf32>
    %c0_11 = arith.constant 0 : index
    %c0_12 = arith.constant 0 : index
    %c0_13 = arith.constant 0 : index
    %14 = vector.load %arg6[%c0_11, %c0_12, %c0_13] : memref<2x288x32xf32, #tpu.memory_space<vmem>>, vector<1x288x32xf32>
    %15 = vector.shape_cast %14 : vector<1x288x32xf32> to vector<288x32xf32>
    %c0_14 = arith.constant 0 : index
    %c0_15 = arith.constant 0 : index
    %c0_16 = arith.constant 0 : index
    %16 = vector.load %arg7[%c0_14, %c0_15, %c0_16] : memref<2x1x32xf32, #tpu.memory_space<vmem>>, vector<1x1x32xf32>
    %17 = vector.shape_cast %16 : vector<1x1x32xf32> to vector<1x32xf32>
    %c9_i32 = arith.constant 9 : i32
    %18 = tpu.dynamic_rotate %11 by %c9_i32 dim 0 : vector<128x32xf32>, i32 -> vector<128x32xf32>
    %c8_i32 = arith.constant 8 : i32
    %19 = tpu.dynamic_rotate %11 by %c8_i32 dim 0 : vector<128x32xf32>, i32 -> vector<128x32xf32>
    %c7_i32 = arith.constant 7 : i32
    %20 = tpu.dynamic_rotate %11 by %c7_i32 dim 0 : vector<128x32xf32>, i32 -> vector<128x32xf32>
    %c1_i32 = arith.constant 1 : i32
    %21 = tpu.dynamic_rotate %11 by %c1_i32 dim 0 : vector<128x32xf32>, i32 -> vector<128x32xf32>
    %c127_i32 = arith.constant 127 : i32
    %22 = tpu.dynamic_rotate %11 by %c127_i32 dim 0 : vector<128x32xf32>, i32 -> vector<128x32xf32>
    %c121_i32 = arith.constant 121 : i32
    %23 = tpu.dynamic_rotate %11 by %c121_i32 dim 0 : vector<128x32xf32>, i32 -> vector<128x32xf32>
    %c120_i32 = arith.constant 120 : i32
    %24 = tpu.dynamic_rotate %11 by %c120_i32 dim 0 : vector<128x32xf32>, i32 -> vector<128x32xf32>
    %c119_i32 = arith.constant 119 : i32
    %25 = tpu.dynamic_rotate %11 by %c119_i32 dim 0 : vector<128x32xf32>, i32 -> vector<128x32xf32>
    %26 = tpu.concatenate %18, %19, %20, %21, %11, %22, %23, %24, %25 in 1 : vector<128x32xf32>, vector<128x32xf32>, vector<128x32xf32>, vector<128x32xf32>, vector<128x32xf32>, vector<128x32xf32>, vector<128x32xf32>, vector<128x32xf32>, vector<128x32xf32> -> vector<128x288xf32>
    %c0_17 = arith.constant 0 : index
    %c0_18 = arith.constant 0 : index
    %27 = vector.load %arg2[%c0_17, %c0_18] : memref<128x288xf32, #tpu.memory_space<vmem>>, vector<128x288xf32>
    %28 = arith.mulf %26, %27 : vector<128x288xf32>
    %cst_19 = arith.constant dense<0.000000e+00> : vector<128x32xf32>
    %29 = tpu.matmul %28, %15, %cst_19 {dimension_numbers = #tpu.dot_dimension_numbers<[1], [0], [0], [1], [0, 0, 1, 1], [], []>} : vector<128x288xf32>, vector<288x32xf32>, vector<128x32xf32> -> vector<128x32xf32>
    %30 = vector.broadcast %17 : vector<1x32xf32> to vector<128x32xf32>
    %31 = arith.addf %29, %30 : vector<128x32xf32>
    %cst_20 = arith.constant 0.000000e+00 : f32
    %32 = vector.broadcast %cst_20 : f32 to vector<128x32xf32>
    %33 = arith.cmpf ogt, %31, %32 : vector<128x32xf32>
    %34 = vector.broadcast %13 : vector<1x32xf32> to vector<128x32xf32>
    %35 = arith.mulf %34, %31 : vector<128x32xf32>
    %36 = arith.select %33, %31, %35 : vector<128x32xi1>, vector<128x32xf32>
    %c0_21 = arith.constant 0 : index
    %c0_22 = arith.constant 0 : index
    %c0_23 = arith.constant 0 : index
    %37 = vector.load %arg8[%c0_21, %c0_22, %c0_23] : memref<2x288x32xf32, #tpu.memory_space<vmem>>, vector<1x288x32xf32>
    %38 = vector.shape_cast %37 : vector<1x288x32xf32> to vector<288x32xf32>
    %c0_24 = arith.constant 0 : index
    %c0_25 = arith.constant 0 : index
    %c0_26 = arith.constant 0 : index
    %39 = vector.load %arg9[%c0_24, %c0_25, %c0_26] : memref<2x1x32xf32, #tpu.memory_space<vmem>>, vector<1x1x32xf32>
    %40 = vector.shape_cast %39 : vector<1x1x32xf32> to vector<1x32xf32>
    %c9_i32_27 = arith.constant 9 : i32
    %41 = tpu.dynamic_rotate %36 by %c9_i32_27 dim 0 : vector<128x32xf32>, i32 -> vector<128x32xf32>
    %c8_i32_28 = arith.constant 8 : i32
    %42 = tpu.dynamic_rotate %36 by %c8_i32_28 dim 0 : vector<128x32xf32>, i32 -> vector<128x32xf32>
    %c7_i32_29 = arith.constant 7 : i32
    %43 = tpu.dynamic_rotate %36 by %c7_i32_29 dim 0 : vector<128x32xf32>, i32 -> vector<128x32xf32>
    %c1_i32_30 = arith.constant 1 : i32
    %44 = tpu.dynamic_rotate %36 by %c1_i32_30 dim 0 : vector<128x32xf32>, i32 -> vector<128x32xf32>
    %c127_i32_31 = arith.constant 127 : i32
    %45 = tpu.dynamic_rotate %36 by %c127_i32_31 dim 0 : vector<128x32xf32>, i32 -> vector<128x32xf32>
    %c121_i32_32 = arith.constant 121 : i32
    %46 = tpu.dynamic_rotate %36 by %c121_i32_32 dim 0 : vector<128x32xf32>, i32 -> vector<128x32xf32>
    %c120_i32_33 = arith.constant 120 : i32
    %47 = tpu.dynamic_rotate %36 by %c120_i32_33 dim 0 : vector<128x32xf32>, i32 -> vector<128x32xf32>
    %c119_i32_34 = arith.constant 119 : i32
    %48 = tpu.dynamic_rotate %36 by %c119_i32_34 dim 0 : vector<128x32xf32>, i32 -> vector<128x32xf32>
    %49 = tpu.concatenate %41, %42, %43, %44, %36, %45, %46, %47, %48 in 1 : vector<128x32xf32>, vector<128x32xf32>, vector<128x32xf32>, vector<128x32xf32>, vector<128x32xf32>, vector<128x32xf32>, vector<128x32xf32>, vector<128x32xf32>, vector<128x32xf32> -> vector<128x288xf32>
    %c0_35 = arith.constant 0 : index
    %c0_36 = arith.constant 0 : index
    %50 = vector.load %arg2[%c0_35, %c0_36] : memref<128x288xf32, #tpu.memory_space<vmem>>, vector<128x288xf32>
    %51 = arith.mulf %49, %50 : vector<128x288xf32>
    %cst_37 = arith.constant dense<0.000000e+00> : vector<128x32xf32>
    %52 = tpu.matmul %51, %38, %cst_37 {dimension_numbers = #tpu.dot_dimension_numbers<[1], [0], [0], [1], [0, 0, 1, 1], [], []>} : vector<128x288xf32>, vector<288x32xf32>, vector<128x32xf32> -> vector<128x32xf32>
    %53 = vector.broadcast %40 : vector<1x32xf32> to vector<128x32xf32>
    %54 = arith.addf %52, %53 : vector<128x32xf32>
    %55 = vector.shape_cast %54 : vector<128x32xf32> to vector<2x64x32xf32>
    %cst_38 = arith.constant dense<0.000000e+00> : vector<2x32xf32>
    %56 = vector.multi_reduction <add>, %55, %cst_38 [1] : vector<2x64x32xf32> to vector<2x32xf32>
    %cst_39 = arith.constant 1.562500e-02 : f32
    %57 = vector.broadcast %cst_39 : f32 to vector<2x32xf32>
    %58 = arith.mulf %56, %57 : vector<2x32xf32>
    %c0_40 = arith.constant 0 : index
    %c0_41 = arith.constant 0 : index
    %c0_42 = arith.constant 0 : index
    %59 = vector.load %arg11[%c0_40, %c0_41, %c0_42] : memref<2x32x2xf32, #tpu.memory_space<vmem>>, vector<1x32x2xf32>
    %60 = vector.shape_cast %59 : vector<1x32x2xf32> to vector<32x2xf32>
    %cst_43 = arith.constant dense<0.000000e+00> : vector<2x2xf32>
    %61 = tpu.matmul %58, %60, %cst_43 {dimension_numbers = #tpu.dot_dimension_numbers<[1], [0], [0], [1], [0, 0, 1, 1], [], []>} : vector<2x32xf32>, vector<32x2xf32>, vector<2x2xf32> -> vector<2x2xf32>
    %cst_44 = arith.constant 0.000000e+00 : f32
    %62 = vector.broadcast %cst_44 : f32 to vector<2x2xf32>
    %63 = arith.maximumf %61, %62 : vector<2x2xf32>
    %c0_45 = arith.constant 0 : index
    %c0_46 = arith.constant 0 : index
    %c0_47 = arith.constant 0 : index
    %64 = vector.load %arg12[%c0_45, %c0_46, %c0_47] : memref<2x2x32xf32, #tpu.memory_space<vmem>>, vector<1x2x32xf32>
    %65 = vector.shape_cast %64 : vector<1x2x32xf32> to vector<2x32xf32>
    %cst_48 = arith.constant dense<0.000000e+00> : vector<2x32xf32>
    %66 = tpu.matmul %63, %65, %cst_48 {dimension_numbers = #tpu.dot_dimension_numbers<[1], [0], [0], [1], [0, 0, 1, 1], [], []>} : vector<2x2xf32>, vector<2x32xf32>, vector<2x32xf32> -> vector<2x32xf32>
    %67 = arith.negf %66 : vector<2x32xf32>
    %68 = math.exp %67 : vector<2x32xf32>
    %cst_49 = arith.constant 1.000000e+00 : f32
    %69 = vector.broadcast %cst_49 : f32 to vector<2x32xf32>
    %70 = arith.addf %69, %68 : vector<2x32xf32>
    %71 = arith.divf %69, %70 : vector<2x32xf32>
    %72 = vector.shape_cast %71 : vector<2x32xf32> to vector<2x1x32xf32>
    %73 = vector.broadcast %72 : vector<2x1x32xf32> to vector<2x64x32xf32>
    %74 = arith.mulf %55, %73 : vector<2x64x32xf32>
    %75 = vector.shape_cast %74 : vector<2x64x32xf32> to vector<128x32xf32>
    %76 = arith.addf %75, %11 : vector<128x32xf32>
    %cst_50 = arith.constant 0.000000e+00 : f32
    %77 = vector.broadcast %cst_50 : f32 to vector<128x32xf32>
    %78 = arith.cmpf ogt, %76, %77 : vector<128x32xf32>
    %79 = vector.broadcast %13 : vector<1x32xf32> to vector<128x32xf32>
    %80 = arith.mulf %79, %76 : vector<128x32xf32>
    %81 = arith.select %78, %76, %80 : vector<128x32xi1>, vector<128x32xf32>
    %c1 = arith.constant 1 : index
    %c0_51 = arith.constant 0 : index
    %c0_52 = arith.constant 0 : index
    %82 = vector.load %arg10[%c1, %c0_51, %c0_52] : memref<2x1x32xf32, #tpu.memory_space<vmem>>, vector<1x1x32xf32>
    %83 = vector.shape_cast %82 : vector<1x1x32xf32> to vector<1x32xf32>
    %c1_53 = arith.constant 1 : index
    %c0_54 = arith.constant 0 : index
    %c0_55 = arith.constant 0 : index
    %84 = vector.load %arg6[%c1_53, %c0_54, %c0_55] : memref<2x288x32xf32, #tpu.memory_space<vmem>>, vector<1x288x32xf32>
    %85 = vector.shape_cast %84 : vector<1x288x32xf32> to vector<288x32xf32>
    %c1_56 = arith.constant 1 : index
    %c0_57 = arith.constant 0 : index
    %c0_58 = arith.constant 0 : index
    %86 = vector.load %arg7[%c1_56, %c0_57, %c0_58] : memref<2x1x32xf32, #tpu.memory_space<vmem>>, vector<1x1x32xf32>
    %87 = vector.shape_cast %86 : vector<1x1x32xf32> to vector<1x32xf32>
    %c9_i32_59 = arith.constant 9 : i32
    %88 = tpu.dynamic_rotate %81 by %c9_i32_59 dim 0 : vector<128x32xf32>, i32 -> vector<128x32xf32>
    %c8_i32_60 = arith.constant 8 : i32
    %89 = tpu.dynamic_rotate %81 by %c8_i32_60 dim 0 : vector<128x32xf32>, i32 -> vector<128x32xf32>
    %c7_i32_61 = arith.constant 7 : i32
    %90 = tpu.dynamic_rotate %81 by %c7_i32_61 dim 0 : vector<128x32xf32>, i32 -> vector<128x32xf32>
    %c1_i32_62 = arith.constant 1 : i32
    %91 = tpu.dynamic_rotate %81 by %c1_i32_62 dim 0 : vector<128x32xf32>, i32 -> vector<128x32xf32>
    %c127_i32_63 = arith.constant 127 : i32
    %92 = tpu.dynamic_rotate %81 by %c127_i32_63 dim 0 : vector<128x32xf32>, i32 -> vector<128x32xf32>
    %c121_i32_64 = arith.constant 121 : i32
    %93 = tpu.dynamic_rotate %81 by %c121_i32_64 dim 0 : vector<128x32xf32>, i32 -> vector<128x32xf32>
    %c120_i32_65 = arith.constant 120 : i32
    %94 = tpu.dynamic_rotate %81 by %c120_i32_65 dim 0 : vector<128x32xf32>, i32 -> vector<128x32xf32>
    %c119_i32_66 = arith.constant 119 : i32
    %95 = tpu.dynamic_rotate %81 by %c119_i32_66 dim 0 : vector<128x32xf32>, i32 -> vector<128x32xf32>
    %96 = tpu.concatenate %88, %89, %90, %91, %81, %92, %93, %94, %95 in 1 : vector<128x32xf32>, vector<128x32xf32>, vector<128x32xf32>, vector<128x32xf32>, vector<128x32xf32>, vector<128x32xf32>, vector<128x32xf32>, vector<128x32xf32>, vector<128x32xf32> -> vector<128x288xf32>
    %c0_67 = arith.constant 0 : index
    %c0_68 = arith.constant 0 : index
    %97 = vector.load %arg2[%c0_67, %c0_68] : memref<128x288xf32, #tpu.memory_space<vmem>>, vector<128x288xf32>
    %98 = arith.mulf %96, %97 : vector<128x288xf32>
    %cst_69 = arith.constant dense<0.000000e+00> : vector<128x32xf32>
    %99 = tpu.matmul %98, %85, %cst_69 {dimension_numbers = #tpu.dot_dimension_numbers<[1], [0], [0], [1], [0, 0, 1, 1], [], []>} : vector<128x288xf32>, vector<288x32xf32>, vector<128x32xf32> -> vector<128x32xf32>
    %100 = vector.broadcast %87 : vector<1x32xf32> to vector<128x32xf32>
    %101 = arith.addf %99, %100 : vector<128x32xf32>
    %cst_70 = arith.constant 0.000000e+00 : f32
    %102 = vector.broadcast %cst_70 : f32 to vector<128x32xf32>
    %103 = arith.cmpf ogt, %101, %102 : vector<128x32xf32>
    %104 = vector.broadcast %83 : vector<1x32xf32> to vector<128x32xf32>
    %105 = arith.mulf %104, %101 : vector<128x32xf32>
    %106 = arith.select %103, %101, %105 : vector<128x32xi1>, vector<128x32xf32>
    %c1_71 = arith.constant 1 : index
    %c0_72 = arith.constant 0 : index
    %c0_73 = arith.constant 0 : index
    %107 = vector.load %arg8[%c1_71, %c0_72, %c0_73] : memref<2x288x32xf32, #tpu.memory_space<vmem>>, vector<1x288x32xf32>
    %108 = vector.shape_cast %107 : vector<1x288x32xf32> to vector<288x32xf32>
    %c1_74 = arith.constant 1 : index
    %c0_75 = arith.constant 0 : index
    %c0_76 = arith.constant 0 : index
    %109 = vector.load %arg9[%c1_74, %c0_75, %c0_76] : memref<2x1x32xf32, #tpu.memory_space<vmem>>, vector<1x1x32xf32>
    %110 = vector.shape_cast %109 : vector<1x1x32xf32> to vector<1x32xf32>
    %c9_i32_77 = arith.constant 9 : i32
    %111 = tpu.dynamic_rotate %106 by %c9_i32_77 dim 0 : vector<128x32xf32>, i32 -> vector<128x32xf32>
    %c8_i32_78 = arith.constant 8 : i32
    %112 = tpu.dynamic_rotate %106 by %c8_i32_78 dim 0 : vector<128x32xf32>, i32 -> vector<128x32xf32>
    %c7_i32_79 = arith.constant 7 : i32
    %113 = tpu.dynamic_rotate %106 by %c7_i32_79 dim 0 : vector<128x32xf32>, i32 -> vector<128x32xf32>
    %c1_i32_80 = arith.constant 1 : i32
    %114 = tpu.dynamic_rotate %106 by %c1_i32_80 dim 0 : vector<128x32xf32>, i32 -> vector<128x32xf32>
    %c127_i32_81 = arith.constant 127 : i32
    %115 = tpu.dynamic_rotate %106 by %c127_i32_81 dim 0 : vector<128x32xf32>, i32 -> vector<128x32xf32>
    %c121_i32_82 = arith.constant 121 : i32
    %116 = tpu.dynamic_rotate %106 by %c121_i32_82 dim 0 : vector<128x32xf32>, i32 -> vector<128x32xf32>
    %c120_i32_83 = arith.constant 120 : i32
    %117 = tpu.dynamic_rotate %106 by %c120_i32_83 dim 0 : vector<128x32xf32>, i32 -> vector<128x32xf32>
    %c119_i32_84 = arith.constant 119 : i32
    %118 = tpu.dynamic_rotate %106 by %c119_i32_84 dim 0 : vector<128x32xf32>, i32 -> vector<128x32xf32>
    %119 = tpu.concatenate %111, %112, %113, %114, %106, %115, %116, %117, %118 in 1 : vector<128x32xf32>, vector<128x32xf32>, vector<128x32xf32>, vector<128x32xf32>, vector<128x32xf32>, vector<128x32xf32>, vector<128x32xf32>, vector<128x32xf32>, vector<128x32xf32> -> vector<128x288xf32>
    %c0_85 = arith.constant 0 : index
    %c0_86 = arith.constant 0 : index
    %120 = vector.load %arg2[%c0_85, %c0_86] : memref<128x288xf32, #tpu.memory_space<vmem>>, vector<128x288xf32>
    %121 = arith.mulf %119, %120 : vector<128x288xf32>
    %cst_87 = arith.constant dense<0.000000e+00> : vector<128x32xf32>
    %122 = tpu.matmul %121, %108, %cst_87 {dimension_numbers = #tpu.dot_dimension_numbers<[1], [0], [0], [1], [0, 0, 1, 1], [], []>} : vector<128x288xf32>, vector<288x32xf32>, vector<128x32xf32> -> vector<128x32xf32>
    %123 = vector.broadcast %110 : vector<1x32xf32> to vector<128x32xf32>
    %124 = arith.addf %122, %123 : vector<128x32xf32>
    %125 = vector.shape_cast %124 : vector<128x32xf32> to vector<2x64x32xf32>
    %cst_88 = arith.constant dense<0.000000e+00> : vector<2x32xf32>
    %126 = vector.multi_reduction <add>, %125, %cst_88 [1] : vector<2x64x32xf32> to vector<2x32xf32>
    %cst_89 = arith.constant 1.562500e-02 : f32
    %127 = vector.broadcast %cst_89 : f32 to vector<2x32xf32>
    %128 = arith.mulf %126, %127 : vector<2x32xf32>
    %c1_90 = arith.constant 1 : index
    %c0_91 = arith.constant 0 : index
    %c0_92 = arith.constant 0 : index
    %129 = vector.load %arg11[%c1_90, %c0_91, %c0_92] : memref<2x32x2xf32, #tpu.memory_space<vmem>>, vector<1x32x2xf32>
    %130 = vector.shape_cast %129 : vector<1x32x2xf32> to vector<32x2xf32>
    %cst_93 = arith.constant dense<0.000000e+00> : vector<2x2xf32>
    %131 = tpu.matmul %128, %130, %cst_93 {dimension_numbers = #tpu.dot_dimension_numbers<[1], [0], [0], [1], [0, 0, 1, 1], [], []>} : vector<2x32xf32>, vector<32x2xf32>, vector<2x2xf32> -> vector<2x2xf32>
    %cst_94 = arith.constant 0.000000e+00 : f32
    %132 = vector.broadcast %cst_94 : f32 to vector<2x2xf32>
    %133 = arith.maximumf %131, %132 : vector<2x2xf32>
    %c1_95 = arith.constant 1 : index
    %c0_96 = arith.constant 0 : index
    %c0_97 = arith.constant 0 : index
    %134 = vector.load %arg12[%c1_95, %c0_96, %c0_97] : memref<2x2x32xf32, #tpu.memory_space<vmem>>, vector<1x2x32xf32>
    %135 = vector.shape_cast %134 : vector<1x2x32xf32> to vector<2x32xf32>
    %cst_98 = arith.constant dense<0.000000e+00> : vector<2x32xf32>
    %136 = tpu.matmul %133, %135, %cst_98 {dimension_numbers = #tpu.dot_dimension_numbers<[1], [0], [0], [1], [0, 0, 1, 1], [], []>} : vector<2x2xf32>, vector<2x32xf32>, vector<2x32xf32> -> vector<2x32xf32>
    %137 = arith.negf %136 : vector<2x32xf32>
    %138 = math.exp %137 : vector<2x32xf32>
    %cst_99 = arith.constant 1.000000e+00 : f32
    %139 = vector.broadcast %cst_99 : f32 to vector<2x32xf32>
    %140 = arith.addf %139, %138 : vector<2x32xf32>
    %141 = arith.divf %139, %140 : vector<2x32xf32>
    %142 = vector.shape_cast %141 : vector<2x32xf32> to vector<2x1x32xf32>
    %143 = vector.broadcast %142 : vector<2x1x32xf32> to vector<2x64x32xf32>
    %144 = arith.mulf %125, %143 : vector<2x64x32xf32>
    %145 = vector.shape_cast %144 : vector<2x64x32xf32> to vector<128x32xf32>
    %146 = arith.addf %145, %81 : vector<128x32xf32>
    %cst_100 = arith.constant 0.000000e+00 : f32
    %147 = vector.broadcast %cst_100 : f32 to vector<128x32xf32>
    %148 = arith.cmpf ogt, %146, %147 : vector<128x32xf32>
    %149 = vector.broadcast %83 : vector<1x32xf32> to vector<128x32xf32>
    %150 = arith.mulf %149, %146 : vector<128x32xf32>
    %151 = arith.select %148, %146, %150 : vector<128x32xi1>, vector<128x32xf32>
    %c0_101 = arith.constant 0 : index
    %c0_102 = arith.constant 0 : index
    %152 = vector.load %arg13[%c0_101, %c0_102] : memref<32x64xf32, #tpu.memory_space<vmem>>, vector<32x64xf32>
    %cst_103 = arith.constant dense<0.000000e+00> : vector<128x64xf32>
    %153 = tpu.matmul %151, %152, %cst_103 {dimension_numbers = #tpu.dot_dimension_numbers<[1], [0], [0], [1], [0, 0, 1, 1], [], []>} : vector<128x32xf32>, vector<32x64xf32>, vector<128x64xf32> -> vector<128x64xf32>
    %c0_104 = arith.constant 0 : index
    %c0_105 = arith.constant 0 : index
    %154 = vector.load %arg14[%c0_104, %c0_105] : memref<1x64xf32, #tpu.memory_space<vmem>>, vector<1x64xf32>
    %155 = vector.broadcast %154 : vector<1x64xf32> to vector<128x64xf32>
    %156 = arith.addf %153, %155 : vector<128x64xf32>
    %cst_106 = arith.constant 0.000000e+00 : f32
    %157 = vector.broadcast %cst_106 : f32 to vector<128x64xf32>
    %158 = arith.maximumf %156, %157 : vector<128x64xf32>
    %c0_107 = arith.constant 0 : index
    %c0_108 = arith.constant 0 : index
    %159 = vector.load %arg15[%c0_107, %c0_108] : memref<128x64xf32, #tpu.memory_space<vmem>>, vector<128x64xf32>
    tpu.vector_store %arg15[%c0_107, %c0_108], %158 {strides = array<i32>} : memref<128x64xf32, #tpu.memory_space<vmem>>, vector<128x64xf32>,
    return
  }
  func.func @transform_0(%arg0: i32) -> (i32, i32) {
    %c0_i32 = arith.constant 0 : i32
    %c0_i32_0 = arith.constant 0 : i32
    return %arg0, %c0_i32 : i32, i32
  }
  func.func @transform_1(%arg0: i32) -> (i32, i32) {
    %c0_i32 = arith.constant 0 : i32
    %c0_i32_0 = arith.constant 0 : i32
    %c0_i32_1 = arith.constant 0 : i32
    return %c0_i32, %c0_i32_0 : i32, i32
  }
  func.func @transform_2(%arg0: i32) -> (i32, i32) {
    %c0_i32 = arith.constant 0 : i32
    %c0_i32_0 = arith.constant 0 : i32
    %c0_i32_1 = arith.constant 0 : i32
    return %c0_i32, %c0_i32_0 : i32, i32
  }
  func.func @transform_3(%arg0: i32) -> (i32, i32) {
    %c0_i32 = arith.constant 0 : i32
    %c0_i32_0 = arith.constant 0 : i32
    %c0_i32_1 = arith.constant 0 : i32
    return %c0_i32, %c0_i32_0 : i32, i32
  }
  func.func @transform_4(%arg0: i32) -> (i32, i32) {
    %c0_i32 = arith.constant 0 : i32
    %c0_i32_0 = arith.constant 0 : i32
    %c0_i32_1 = arith.constant 0 : i32
    return %c0_i32, %c0_i32_0 : i32, i32
  }
  func.func @transform_5(%arg0: i32) -> (i32, i32, i32) {
    %c0_i32 = arith.constant 0 : i32
    %c0_i32_0 = arith.constant 0 : i32
    %c0_i32_1 = arith.constant 0 : i32
    %c0_i32_2 = arith.constant 0 : i32
    return %c0_i32, %c0_i32_0, %c0_i32_1 : i32, i32, i32
  }
  func.func @transform_6(%arg0: i32) -> (i32, i32, i32) {
    %c0_i32 = arith.constant 0 : i32
    %c0_i32_0 = arith.constant 0 : i32
    %c0_i32_1 = arith.constant 0 : i32
    %c0_i32_2 = arith.constant 0 : i32
    return %c0_i32, %c0_i32_0, %c0_i32_1 : i32, i32, i32
  }
  func.func @transform_7(%arg0: i32) -> (i32, i32, i32) {
    %c0_i32 = arith.constant 0 : i32
    %c0_i32_0 = arith.constant 0 : i32
    %c0_i32_1 = arith.constant 0 : i32
    %c0_i32_2 = arith.constant 0 : i32
    return %c0_i32, %c0_i32_0, %c0_i32_1 : i32, i32, i32
  }
  func.func @transform_8(%arg0: i32) -> (i32, i32, i32) {
    %c0_i32 = arith.constant 0 : i32
    %c0_i32_0 = arith.constant 0 : i32
    %c0_i32_1 = arith.constant 0 : i32
    %c0_i32_2 = arith.constant 0 : i32
    return %c0_i32, %c0_i32_0, %c0_i32_1 : i32, i32, i32
  }
  func.func @transform_9(%arg0: i32) -> (i32, i32, i32) {
    %c0_i32 = arith.constant 0 : i32
    %c0_i32_0 = arith.constant 0 : i32
    %c0_i32_1 = arith.constant 0 : i32
    %c0_i32_2 = arith.constant 0 : i32
    return %c0_i32, %c0_i32_0, %c0_i32_1 : i32, i32, i32
  }
  func.func @transform_10(%arg0: i32) -> (i32, i32, i32) {
    %c0_i32 = arith.constant 0 : i32
    %c0_i32_0 = arith.constant 0 : i32
    %c0_i32_1 = arith.constant 0 : i32
    %c0_i32_2 = arith.constant 0 : i32
    return %c0_i32, %c0_i32_0, %c0_i32_1 : i32, i32, i32
  }
  func.func @transform_11(%arg0: i32) -> (i32, i32, i32) {
    %c0_i32 = arith.constant 0 : i32
    %c0_i32_0 = arith.constant 0 : i32
    %c0_i32_1 = arith.constant 0 : i32
    %c0_i32_2 = arith.constant 0 : i32
    return %c0_i32, %c0_i32_0, %c0_i32_1 : i32, i32, i32
  }
  func.func @transform_12(%arg0: i32) -> (i32, i32) {
    %c0_i32 = arith.constant 0 : i32
    %c0_i32_0 = arith.constant 0 : i32
    %c0_i32_1 = arith.constant 0 : i32
    return %c0_i32, %c0_i32_0 : i32, i32
  }
  func.func @transform_13(%arg0: i32) -> (i32, i32) {
    %c0_i32 = arith.constant 0 : i32
    %c0_i32_0 = arith.constant 0 : i32
    %c0_i32_1 = arith.constant 0 : i32
    return %c0_i32, %c0_i32_0 : i32, i32
  }
  func.func @transform_14(%arg0: i32) -> (i32, i32) {
    %c0_i32 = arith.constant 0 : i32
    %c0_i32_0 = arith.constant 0 : i32
    return %arg0, %c0_i32 : i32, i32
  }
}

module attributes {stable_mosaic.version = 11 : i64} {
  func.func @head_kernel(%arg0: memref<2x2048xf32, #tpu.memory_space<vmem>>, %arg1: memref<2048x64xf32, #tpu.memory_space<vmem>>, %arg2: memref<1x64xf32, #tpu.memory_space<vmem>>, %arg3: memref<2x2048xf32, #tpu.memory_space<vmem>>, %arg4: memref<2048x256xf32, #tpu.memory_space<vmem>>, %arg5: memref<1x256xf32, #tpu.memory_space<vmem>>, %arg6: memref<256x1xf32, #tpu.memory_space<vmem>>, %arg7: memref<1x1xf32, #tpu.memory_space<vmem>>, %arg8: memref<2x64xf32, #tpu.memory_space<vmem>>, %arg9: memref<2x1xf32, #tpu.memory_space<vmem>>) attributes {dimension_semantics = [], scalar_prefetch = 0 : i64, scratch_operands = 0 : i64, tpu.core_type = #tpu.core_type<tc>} {
    %c0 = arith.constant 0 : index
    %c0_0 = arith.constant 0 : index
    %0 = vector.load %arg0[%c0, %c0_0] : memref<2x2048xf32, #tpu.memory_space<vmem>>, vector<2x2048xf32>
    %c0_1 = arith.constant 0 : index
    %c0_2 = arith.constant 0 : index
    %1 = vector.load %arg1[%c0_1, %c0_2] : memref<2048x64xf32, #tpu.memory_space<vmem>>, vector<2048x64xf32>
    %cst = arith.constant dense<0.000000e+00> : vector<2x64xf32>
    %2 = tpu.matmul %0, %1, %cst {dimension_numbers = #tpu.dot_dimension_numbers<[1], [0], [0], [1], [0, 0, 1, 1], [], []>} : vector<2x2048xf32>, vector<2048x64xf32>, vector<2x64xf32> -> vector<2x64xf32>
    %c0_3 = arith.constant 0 : index
    %c0_4 = arith.constant 0 : index
    %3 = vector.load %arg2[%c0_3, %c0_4] : memref<1x64xf32, #tpu.memory_space<vmem>>, vector<1x64xf32>
    %4 = vector.broadcast %3 : vector<1x64xf32> to vector<2x64xf32>
    %5 = arith.addf %2, %4 : vector<2x64xf32>
    %cst_5 = arith.constant dense<0xFF800000> : vector<2xf32>
    %6 = vector.multi_reduction <maximumf>, %5, %cst_5 [1] : vector<2x64xf32> to vector<2xf32>
    %7 = vector.shape_cast %6 : vector<2xf32> to vector<2x1xf32>
    %8 = vector.broadcast %7 : vector<2x1xf32> to vector<2x64xf32>
    %9 = arith.subf %5, %8 : vector<2x64xf32>
    %10 = math.exp %9 : vector<2x64xf32>
    %cst_6 = arith.constant dense<0.000000e+00> : vector<2xf32>
    %11 = vector.multi_reduction <add>, %10, %cst_6 [1] : vector<2x64xf32> to vector<2xf32>
    %12 = vector.shape_cast %11 : vector<2xf32> to vector<2x1xf32>
    %13 = vector.broadcast %12 : vector<2x1xf32> to vector<2x64xf32>
    %14 = arith.divf %10, %13 : vector<2x64xf32>
    %c0_7 = arith.constant 0 : index
    %c0_8 = arith.constant 0 : index
    %15 = vector.load %arg8[%c0_7, %c0_8] : memref<2x64xf32, #tpu.memory_space<vmem>>, vector<2x64xf32>
    tpu.vector_store %arg8[%c0_7, %c0_8], %14 {strides = array<i32>} : memref<2x64xf32, #tpu.memory_space<vmem>>, vector<2x64xf32>,
    %c0_9 = arith.constant 0 : index
    %c0_10 = arith.constant 0 : index
    %16 = vector.load %arg3[%c0_9, %c0_10] : memref<2x2048xf32, #tpu.memory_space<vmem>>, vector<2x2048xf32>
    %c0_11 = arith.constant 0 : index
    %c0_12 = arith.constant 0 : index
    %17 = vector.load %arg4[%c0_11, %c0_12] : memref<2048x256xf32, #tpu.memory_space<vmem>>, vector<2048x256xf32>
    %cst_13 = arith.constant dense<0.000000e+00> : vector<2x256xf32>
    %18 = tpu.matmul %16, %17, %cst_13 {dimension_numbers = #tpu.dot_dimension_numbers<[1], [0], [0], [1], [0, 0, 1, 1], [], []>} : vector<2x2048xf32>, vector<2048x256xf32>, vector<2x256xf32> -> vector<2x256xf32>
    %c0_14 = arith.constant 0 : index
    %c0_15 = arith.constant 0 : index
    %19 = vector.load %arg5[%c0_14, %c0_15] : memref<1x256xf32, #tpu.memory_space<vmem>>, vector<1x256xf32>
    %20 = vector.broadcast %19 : vector<1x256xf32> to vector<2x256xf32>
    %21 = arith.addf %18, %20 : vector<2x256xf32>
    %cst_16 = arith.constant 0.000000e+00 : f32
    %22 = vector.broadcast %cst_16 : f32 to vector<2x256xf32>
    %23 = arith.maximumf %21, %22 : vector<2x256xf32>
    %c0_17 = arith.constant 0 : index
    %c0_18 = arith.constant 0 : index
    %24 = vector.load %arg6[%c0_17, %c0_18] : memref<256x1xf32, #tpu.memory_space<vmem>>, vector<256x1xf32>
    %cst_19 = arith.constant dense<0.000000e+00> : vector<2x1xf32>
    %25 = tpu.matmul %23, %24, %cst_19 {dimension_numbers = #tpu.dot_dimension_numbers<[1], [0], [0], [1], [0, 0, 1, 1], [], []>} : vector<2x256xf32>, vector<256x1xf32>, vector<2x1xf32> -> vector<2x1xf32>
    %c0_20 = arith.constant 0 : index
    %c0_21 = arith.constant 0 : index
    %26 = vector.load %arg7[%c0_20, %c0_21] : memref<1x1xf32, #tpu.memory_space<vmem>>, vector<1x1xf32>
    %27 = vector.broadcast %26 : vector<1x1xf32> to vector<2x1xf32>
    %28 = arith.addf %25, %27 : vector<2x1xf32>
    %29 = math.tanh %28 : vector<2x1xf32>
    %c0_22 = arith.constant 0 : index
    %c0_23 = arith.constant 0 : index
    %30 = vector.load %arg9[%c0_22, %c0_23] : memref<2x1xf32, #tpu.memory_space<vmem>>, vector<2x1xf32>
    tpu.vector_store %arg9[%c0_22, %c0_23], %29 {strides = array<i32>} : memref<2x1xf32, #tpu.memory_space<vmem>>, vector<2x1xf32>,
    return
  }
}

</mosaic_0001>

<llo_original>
// kernel: net_forward.2
$region0: #{net_forward.2}
  #allocation0 [shape = 'u32[]', space=smem, size = 0x4, offset = 0x4, fixed_abs, tag = 'smem constant byte address 0x4 - core index']
  #allocation1 [shape = 'u32[144,128]{1,0:T(1,128)}', space=vmem, size = 0x12000, scoped, tag = 'internal scratch']
  %s0 = inlined_call_operand.vmem [shape: f32[128,128], index: 0, kind: input, shape index: {}]
  %s1 = inlined_call_operand.vmem [shape: f32[128,288], index: 1, kind: input, shape index: {}]
  %s2 = inlined_call_operand.vmem [shape: f32[128,32], index: 2, kind: input, shape index: {}]
  %s3 = inlined_call_operand.vmem [shape: f32[1,32], index: 3, kind: input, shape index: {}]
  %s4 = inlined_call_operand.vmem [shape: f32[1,32], index: 4, kind: input, shape index: {}]
  %s5 = inlined_call_operand.vmem [shape: f32[2,288,32], index: 5, kind: input, shape index: {}]
  %s6 = inlined_call_operand.vmem [shape: f32[2,1,32], index: 6, kind: input, shape index: {}]
  %s7 = inlined_call_operand.vmem [shape: f32[2,288,32], index: 7, kind: input, shape index: {}]
  %s8 = inlined_call_operand.vmem [shape: f32[2,1,32], index: 8, kind: input, shape index: {}]
  %s9 = inlined_call_operand.vmem [shape: f32[2,1,32], index: 9, kind: input, shape index: {}]
  %s10 = inlined_call_operand.vmem [shape: f32[2,32,2], index: 10, kind: input, shape index: {}]
  %s11 = inlined_call_operand.vmem [shape: f32[2,2,32], index: 11, kind: input, shape index: {}]
  %s12 = inlined_call_operand.vmem [shape: f32[32,64], index: 12, kind: input, shape index: {}]
  %s13 = inlined_call_operand.vmem [shape: f32[1,64], index: 13, kind: input, shape index: {}]
  %s14 = inlined_call_operand.vmem [shape: f32[128,64], index: 14, kind: output, shape index: {}]
  %s15 = sld [smem:[#allocation0]]
  $region66: #{net_forward.2} parent=0
    _
  %s17 = ssub.s32 1, %s15
  %s18 = scalar_select 0, %s17, %s15
  // Predicated region
  $region2: #{net_forward.2} parent=0 // pred_check
    _
  $region3: #{net_forward.2} parent=0 // pred_check_branch
    %20 = sbr.rel (0) target = $region5
  $region4: #{net_forward.2} parent=0 // pred_region
    _
  $region5: #{net_forward.2} parent=0 // pred_fallthru
    _
  // Predicated region
  $region6: #{net_forward.2} parent=0 // pred_check
    _
  $region7: #{net_forward.2} parent=0 // pred_check_branch
    %22 = sbr.rel (0) target = $region9
  $region8: #{net_forward.2} parent=0 // pred_region
    _
  $region9: #{net_forward.2} parent=0 // pred_fallthru
    _
  // Predicated region
  $region10: #{net_forward.2} parent=0 // pred_check
    _
  $region11: #{net_forward.2} parent=0 // pred_check_branch
    %24 = sbr.rel (0) target = $region13
  $region12: #{net_forward.2} parent=0 // pred_region
    _
  $region13: #{net_forward.2} parent=0 // pred_fallthru
    _
  // Predicated region
  $region14: #{net_forward.2} parent=0 // pred_check
    _
  $region15: #{net_forward.2} parent=0 // pred_check_branch
    %26 = sbr.rel (0) target = $region17
  $region16: #{net_forward.2} parent=0 // pred_region
    _
  $region17: #{net_forward.2} parent=0 // pred_fallthru
    _
  // Predicated region
  $region18: #{net_forward.2} parent=0 // pred_check
    _
  $region19: #{net_forward.2} parent=0 // pred_check_branch
    %28 = sbr.rel (0) target = $region21
  $region20: #{net_forward.2} parent=0 // pred_region
    _
  $region21: #{net_forward.2} parent=0 // pred_fallthru
    _
  // Predicated region
  $region22: #{net_forward.2} parent=0 // pred_check
    _
  $region23: #{net_forward.2} parent=0 // pred_check_branch
    %30 = sbr.rel (0) target = $region25
  $region24: #{net_forward.2} parent=0 // pred_region
    _
  $region25: #{net_forward.2} parent=0 // pred_fallthru
    _
  // Predicated region
  $region26: #{net_forward.2} parent=0 // pred_check
    _
  $region27: #{net_forward.2} parent=0 // pred_check_branch
    %32 = sbr.rel (0) target = $region29
  $region28: #{net_forward.2} parent=0 // pred_region
    _
  $region29: #{net_forward.2} parent=0 // pred_fallthru
    _
  // Predicated region
  $region30: #{net_forward.2} parent=0 // pred_check
    _
  $region31: #{net_forward.2} parent=0 // pred_check_branch
    %34 = sbr.rel (0) target = $region33
  $region32: #{net_forward.2} parent=0 // pred_region
    _
  $region33: #{net_forward.2} parent=0 // pred_fallthru
    _
  // Predicated region
  $region34: #{net_forward.2} parent=0 // pred_check
    _
  $region35: #{net_forward.2} parent=0 // pred_check_branch
    %36 = sbr.rel (0) target = $region37
  $region36: #{net_forward.2} parent=0 // pred_region
    _
  $region37: #{net_forward.2} parent=0 // pred_fallthru
    _
  // Predicated region
  $region38: #{net_forward.2} parent=0 // pred_check
    _
  $region39: #{net_forward.2} parent=0 // pred_check_branch
    %38 = sbr.rel (0) target = $region41
  $region40: #{net_forward.2} parent=0 // pred_region
    _
  $region41: #{net_forward.2} parent=0 // pred_fallthru
    _
  // Predicated region
  $region42: #{net_forward.2} parent=0 // pred_check
    _
  $region43: #{net_forward.2} parent=0 // pred_check_branch
    %40 = sbr.rel (0) target = $region45
  $region44: #{net_forward.2} parent=0 // pred_region
    _
  $region45: #{net_forward.2} parent=0 // pred_fallthru
    _
  // Predicated region
  $region46: #{net_forward.2} parent=0 // pred_check
    _
  $region47: #{net_forward.2} parent=0 // pred_check_branch
    %42 = sbr.rel (0) target = $region49
  $region48: #{net_forward.2} parent=0 // pred_region
    _
  $region49: #{net_forward.2} parent=0 // pred_fallthru
    _
  // Predicated region
  $region50: #{net_forward.2} parent=0 // pred_check
    _
  $region51: #{net_forward.2} parent=0 // pred_check_branch
    %44 = sbr.rel (0) target = $region53
  $region52: #{net_forward.2} parent=0 // pred_region
    _
  $region53: #{net_forward.2} parent=0 // pred_fallthru
    _
  // Predicated region
  $region54: #{net_forward.2} parent=0 // pred_check
    _
  $region55: #{net_forward.2} parent=0 // pred_check_branch
    %46 = sbr.rel (0) target = $region57
  $region56: #{net_forward.2} parent=0 // pred_region
    _
  $region57: #{net_forward.2} parent=0 // pred_fallthru
    _
  %v47 = vld [vmem:[%s0] sm:$0xff]
  %v48 = vld [vmem:[%s0 + $0x8] sm:$0xff]
  %v49 = vld [vmem:[%s0 + $0x10] sm:$0xff]
  %v50 = vld [vmem:[%s0 + $0x18] sm:$0xff]
  %v51 = vld [vmem:[%s0 + $0x20] sm:$0xff]
  %v52 = vld [vmem:[%s0 + $0x28] sm:$0xff]
  %v53 = vld [vmem:[%s0 + $0x30] sm:$0xff]
  %v54 = vld [vmem:[%s0 + $0x38] sm:$0xff]
  %v55 = vld [vmem:[%s0 + $0x40] sm:$0xff]
  %v56 = vld [vmem:[%s0 + $0x48] sm:$0xff]
  %v57 = vld [vmem:[%s0 + $0x50] sm:$0xff]
  %v58 = vld [vmem:[%s0 + $0x58] sm:$0xff]
  %v59 = vld [vmem:[%s0 + $0x60] sm:$0xff]
  %v60 = vld [vmem:[%s0 + $0x68] sm:$0xff]
  %v61 = vld [vmem:[%s0 + $0x70] sm:$0xff]
  %v62 = vld [vmem:[%s0 + $0x78] sm:$0xff]
  %v63 = vld [vmem:[%s2] sm:$0xff]
  %v64 = vld [vmem:[%s2 + $0x8] sm:$0xff]
  %v65 = vld [vmem:[%s2 + $0x10] sm:$0xff]
  %v66 = vld [vmem:[%s2 + $0x18] sm:$0xff]
  %v67 = vld [vmem:[%s2 + $0x20] sm:$0xff]
  %v68 = vld [vmem:[%s2 + $0x28] sm:$0xff]
  %v69 = vld [vmem:[%s2 + $0x30] sm:$0xff]
  %v70 = vld [vmem:[%s2 + $0x38] sm:$0xff]
  %v71 = vld [vmem:[%s2 + $0x40] sm:$0xff]
  %v72 = vld [vmem:[%s2 + $0x48] sm:$0xff]
  %v73 = vld [vmem:[%s2 + $0x50] sm:$0xff]
  %v74 = vld [vmem:[%s2 + $0x58] sm:$0xff]
  %v75 = vld [vmem:[%s2 + $0x60] sm:$0xff]
  %v76 = vld [vmem:[%s2 + $0x68] sm:$0xff]
  %v77 = vld [vmem:[%s2 + $0x70] sm:$0xff]
  %v78 = vld [vmem:[%s2 + $0x78] sm:$0xff]
  %v79 = vld [vmem:[%s3] sm:$0x1]
  %v81 = vlaneseq
  %v82 = vshrl.u32 %v81, 7
  %v83 = vsub.s32 0, %v82
  %v84 = vrot.slane %v79, %v83
  %86 = vmatprep.subr.mxu0 0.0
  %87 = vmatpush1.msra.mxu0 %v78
  %88 = vmatprep.subr.mxu0 0.0
  %89 = vmatpush1.msra.mxu0 %v77
  %90 = vmatprep.subr.mxu0 0.0
  %91 = vmatpush1.msra.mxu0 %v76
  %92 = vmatprep.subr.mxu0 0.0
  %93 = vmatpush1.msra.mxu0 %v75
  %94 = vmatprep.subr.mxu0 0.0
  %95 = vmatpush1.msra.mxu0 %v74
  %96 = vmatprep.subr.mxu0 0.0
  %97 = vmatpush1.msra.mxu0 %v73
  %98 = vmatprep.subr.mxu0 0.0
  %99 = vmatpush1.msra.mxu0 %v72
  %100 = vmatprep.subr.mxu0 0.0
  %101 = vmatpush1.msra.mxu0 %v71
  %102 = vmatprep.subr.mxu0 0.0
  %103 = vmatpush1.msra.mxu0 %v70
  %104 = vmatprep.subr.mxu0 0.0
  %105 = vmatpush1.msra.mxu0 %v69
  %106 = vmatprep.subr.mxu0 0.0
  %107 = vmatpush1.msra.mxu0 %v68
  %108 = vmatprep.subr.mxu0 0.0
  %109 = vmatpush1.msra.mxu0 %v67
  %110 = vmatprep.subr.mxu0 0.0
  %111 = vmatpush1.msra.mxu0 %v66
  %112 = vmatprep.subr.mxu0 0.0
  %113 = vmatpush1.msra.mxu0 %v65
  %114 = vmatprep.subr.mxu0 0.0
  %115 = vmatpush1.msra.mxu0 %v64
  %116 = vmatprep.subr.mxu0 0.0
  %117 = vmatpush1.msra.mxu0 %v63
  %118 = vmatprep.subr.mxu0 0.0
  %119 = vmatpush2.msra.mxu0 0.0
  %120 = vmatprep.subr.mxu0 0.0
  %121 = vmatpush2.msra.mxu0 0.0
  %122 = vmatprep.subr.mxu0 0.0
  %123 = vmatpush2.msra.mxu0 0.0
  %124 = vmatprep.subr.mxu0 0.0
  %125 = vmatpush2.msra.mxu0 0.0
  %126 = vmatprep.subr.mxu0 0.0
  %127 = vmatpush2.msra.mxu0 0.0
  %128 = vmatprep.subr.mxu0 0.0
  %129 = vmatpush2.msra.mxu0 0.0
  %130 = vmatprep.subr.mxu0 0.0
  %131 = vmatpush2.msra.mxu0 0.0
  %132 = vmatprep.subr.mxu0 0.0
  %133 = vmatpush2.msra.mxu0 0.0
  %134 = vmatprep.subr.mxu0 0.0
  %135 = vmatpush2.msra.mxu0 0.0
  %136 = vmatprep.subr.mxu0 0.0
  %137 = vmatpush2.msra.mxu0 0.0
  %138 = vmatprep.subr.mxu0 0.0
  %139 = vmatpush2.msra.mxu0 0.0
  %140 = vmatprep.subr.mxu0 0.0
  %141 = vmatpush2.msra.mxu0 0.0
  %142 = vmatprep.subr.mxu0 0.0
  %143 = vmatpush2.msra.mxu0 0.0
  %144 = vmatprep.subr.mxu0 0.0
  %145 = vmatpush2.msra.mxu0 0.0
  %146 = vmatprep.subr.mxu0 0.0
  %147 = vmatpush2.msra.mxu0 0.0
  %148 = vmatprep.subr.mxu0 0.0
  %149 = vmatpush2.msra.mxu0 0.0
  %150 = vmatprep.mubr.f32.mxu0 0.0
  %151 = vmatmul.mubr.f32.gmra.mxu0 %v47
  %v152 = vpop.f32.mrf.mxu0
  %v153 = vadd.f32 %v84, %v152
  %v154 = vpop.f32.mrf.mxu0
  %155 = vmatprep.mubr.f32.mxu0 0.0
  %156 = vmatmul.mubr.f32.gmra.mxu0 %v48
  %v157 = vpop.f32.mrf.mxu0
  %v158 = vadd.f32 %v84, %v157
  %v159 = vpop.f32.mrf.mxu0
  %160 = vmatprep.mubr.f32.mxu0 0.0
  %161 = vmatmul.mubr.f32.gmra.mxu0 %v49
  %v162 = vpop.f32.mrf.mxu0
  %v163 = vadd.f32 %v84, %v162
  %v164 = vpop.f32.mrf.mxu0
  %165 = vmatprep.mubr.f32.mxu0 0.0
  %166 = vmatmul.mubr.f32.gmra.mxu0 %v50
  %v167 = vpop.f32.mrf.mxu0
  %v168 = vadd.f32 %v84, %v167
  %v169 = vpop.f32.mrf.mxu0
  %170 = vmatprep.mubr.f32.mxu0 0.0
  %171 = vmatmul.mubr.f32.gmra.mxu0 %v51
  %v172 = vpop.f32.mrf.mxu0
  %v173 = vadd.f32 %v84, %v172
  %v174 = vpop.f32.mrf.mxu0
  %175 = vmatprep.mubr.f32.mxu0 0.0
  %176 = vmatmul.mubr.f32.gmra.mxu0 %v52
  %v177 = vpop.f32.mrf.mxu0
  %v178 = vadd.f32 %v84, %v177
  %v179 = vpop.f32.mrf.mxu0
  %180 = vmatprep.mubr.f32.mxu0 0.0
  %181 = vmatmul.mubr.f32.gmra.mxu0 %v53
  %v182 = vpop.f32.mrf.mxu0
  %v183 = vadd.f32 %v84, %v182
  %v184 = vpop.f32.mrf.mxu0
  %185 = vmatprep.mubr.f32.mxu0 0.0
  %186 = vmatmul.mubr.f32.gmra.mxu0 %v54
  %v187 = vpop.f32.mrf.mxu0
  %v188 = vadd.f32 %v84, %v187
  %v189 = vpop.f32.mrf.mxu0
  %190 = vmatprep.mubr.f32.mxu0 0.0
  %191 = vmatmul.mubr.f32.gmra.mxu0 %v55
  %v192 = vpop.f32.mrf.mxu0
  %v193 = vadd.f32 %v84, %v192
  %v194 = vpop.f32.mrf.mxu0
  %195 = vmatprep.mubr.f32.mxu0 0.0
  %196 = vmatmul.mubr.f32.gmra.mxu0 %v56
  %v197 = vpop.f32.mrf.mxu0
  %v198 = vadd.f32 %v84, %v197
  %v199 = vpop.f32.mrf.mxu0
  %200 = vmatprep.mubr.f32.mxu0 0.0
  %201 = vmatmul.mubr.f32.gmra.mxu0 %v57
  %v202 = vpop.f32.mrf.mxu0
  %v203 = vadd.f32 %v84, %v202
  %v204 = vpop.f32.mrf.mxu0
  %205 = vmatprep.mubr.f32.mxu0 0.0
  %206 = vmatmul.mubr.f32.gmra.mxu0 %v58
  %v207 = vpop.f32.mrf.mxu0
  %v208 = vadd.f32 %v84, %v207
  %v209 = vpop.f32.mrf.mxu0
  %210 = vmatprep.mubr.f32.mxu0 0.0
  %211 = vmatmul.mubr.f32.gmra.mxu0 %v59
  %v212 = vpop.f32.mrf.mxu0
  %v213 = vadd.f32 %v84, %v212
  %v214 = vpop.f32.mrf.mxu0
  %215 = vmatprep.mubr.f32.mxu0 0.0
  %216 = vmatmul.mubr.f32.gmra.mxu0 %v60
  %v217 = vpop.f32.mrf.mxu0
  %v218 = vadd.f32 %v84, %v217
  %v219 = vpop.f32.mrf.mxu0
  %220 = vmatprep.mubr.f32.mxu0 0.0
  %221 = vmatmul.mubr.f32.gmra.mxu0 %v61
  %v222 = vpop.f32.mrf.mxu0
  %v223 = vadd.f32 %v84, %v222
  %v224 = vpop.f32.mrf.mxu0
  %225 = vmatprep.mubr.f32.mxu0 0.0
  %226 = vmatmul.mubr.f32.gmra.mxu0 %v62
  %v227 = vpop.f32.mrf.mxu0
  %v228 = vadd.f32 %v84, %v227
  %v229 = vpop.f32.mrf.mxu0
  %230 = vdwg.mxu0
  %v231 = vld [vmem:[%s4] sm:$0x1]
  %vm232 = vcmp.gt.f32.partialorder %v153, 0.0
  %vm233 = vcmp.gt.f32.partialorder %v158, 0.0
  %vm234 = vcmp.gt.f32.partialorder %v163, 0.0
  %vm235 = vcmp.gt.f32.partialorder %v168, 0.0
  %vm236 = vcmp.gt.f32.partialorder %v173, 0.0
  %vm237 = vcmp.gt.f32.partialorder %v178, 0.0
  %vm238 = vcmp.gt.f32.partialorder %v183, 0.0
  %vm239 = vcmp.gt.f32.partialorder %v188, 0.0
  %vm240 = vcmp.gt.f32.partialorder %v193, 0.0
  %vm241 = vcmp.gt.f32.partialorder %v198, 0.0
  %vm242 = vcmp.gt.f32.partialorder %v203, 0.0
  %vm243 = vcmp.gt.f32.partialorder %v208, 0.0
  %vm244 = vcmp.gt.f32.partialorder %v213, 0.0
  %vm245 = vcmp.gt.f32.partialorder %v218, 0.0
  %vm246 = vcmp.gt.f32.partialorder %v223, 0.0
  %vm247 = vcmp.gt.f32.partialorder %v228, 0.0
  %v249 = vlaneseq
  %v250 = vshrl.u32 %v249, 7
  %v251 = vsub.s32 0, %v250
  %v252 = vrot.slane %v231, %v251
  %v254 = vmul.f32 %v252, %v153
  %v255 = vmul.f32 %v252, %v158
  %v256 = vmul.f32 %v252, %v163
  %v257 = vmul.f32 %v252, %v168
  %v258 = vmul.f32 %v252, %v173
  %v259 = vmul.f32 %v252, %v178
  %v260 = vmul.f32 %v252, %v183
  %v261 = vmul.f32 %v252, %v188
  %v262 = vmul.f32 %v252, %v193
  %v263 = vmul.f32 %v252, %v198
  %v264 = vmul.f32 %v252, %v203
  %v265 = vmul.f32 %v252, %v208
  %v266 = vmul.f32 %v252, %v213
  %v267 = vmul.f32 %v252, %v218
  %v268 = vmul.f32 %v252, %v223
  %v269 = vmul.f32 %v252, %v228
  %v270 = vsel %vm232, %v153, %v254
  %v271 = vsel %vm233, %v158, %v255
  %v272 = vsel %vm234, %v163, %v256
  %v273 = vsel %vm235, %v168, %v257
  %v274 = vsel %vm236, %v173, %v258
  %v275 = vsel %vm237, %v178, %v259
  %v276 = vsel %vm238, %v183, %v260
  %v277 = vsel %vm239, %v188, %v261
  %v278 = vsel %vm240, %v193, %v262
  %v279 = vsel %vm241, %v198, %v263
  %v280 = vsel %vm242, %v203, %v264
  %v281 = vsel %vm243, %v208, %v265
  %v282 = vsel %vm244, %v213, %v266
  %v283 = vsel %vm245, %v218, %v267
  %v284 = vsel %vm246, %v223, %v268
  %v285 = vsel %vm247, %v228, %v269
  %v286 = vld [vmem:[%s9] sm:$0x1]
  %v287 = vld [vmem:[%s5] sm:$0xff]
  %v288 = vld [vmem:[%s5 + $0x8] sm:$0xff]
  %v289 = vld [vmem:[%s5 + $0x10] sm:$0xff]
  %v290 = vld [vmem:[%s5 + $0x18] sm:$0xff]
  %v291 = vld [vmem:[%s5 + $0x20] sm:$0xff]
  %v292 = vld [vmem:[%s5 + $0x28] sm:$0xff]
  %v293 = vld [vmem:[%s5 + $0x30] sm:$0xff]
  %v294 = vld [vmem:[%s5 + $0x38] sm:$0xff]
  %v295 = vld [vmem:[%s5 + $0x40] sm:$0xff]
  %v296 = vld [vmem:[%s5 + $0x48] sm:$0xff]
  %v297 = vld [vmem:[%s5 + $0x50] sm:$0xff]
  %v298 = vld [vmem:[%s5 + $0x58] sm:$0xff]
  %v299 = vld [vmem:[%s5 + $0x60] sm:$0xff]
  %v300 = vld [vmem:[%s5 + $0x68] sm:$0xff]
  %v301 = vld [vmem:[%s5 + $0x70] sm:$0xff]
  %v302 = vld [vmem:[%s5 + $0x78] sm:$0xff]
  %v303 = vld [vmem:[%s5 + $0x80] sm:$0xff]
  %v304 = vld [vmem:[%s5 + $0x88] sm:$0xff]
  %v305 = vld [vmem:[%s5 + $0x90] sm:$0xff]
  %v306 = vld [vmem:[%s5 + $0x98] sm:$0xff]
  %v307 = vld [vmem:[%s5 + $0xa0] sm:$0xff]
  %v308 = vld [vmem:[%s5 + $0xa8] sm:$0xff]
  %v309 = vld [vmem:[%s5 + $0xb0] sm:$0xff]
  %v310 = vld [vmem:[%s5 + $0xb8] sm:$0xff]
  %v311 = vld [vmem:[%s5 + $0xc0] sm:$0xff]
  %v312 = vld [vmem:[%s5 + $0xc8] sm:$0xff]
  %v313 = vld [vmem:[%s5 + $0xd0] sm:$0xff]
  %v314 = vld [vmem:[%s5 + $0xd8] sm:$0xff]
  %v315 = vld [vmem:[%s5 + $0xe0] sm:$0xff]
  %v316 = vld [vmem:[%s5 + $0xe8] sm:$0xff]
  %v317 = vld [vmem:[%s5 + $0xf0] sm:$0xff]
  %v318 = vld [vmem:[%s5 + $0xf8] sm:$0xff]
  %v319 = vld [vmem:[%s5 + $0x100] sm:$0xff]
  %v320 = vld [vmem:[%s5 + $0x108] sm:$0xff]
  %v321 = vld [vmem:[%s5 + $0x110] sm:$0xff]
  %v322 = vld [vmem:[%s5 + $0x118] sm:$0xff]
  %v323 = vld [vmem:[%s6] sm:$0x1]
  %v324 = vrot.slane %v270, 7
  %v325 = vrot.slane %v271, 7
  %v326 = vrot.slane %v272, 7
  %v327 = vrot.slane %v273, 7
  %v328 = vrot.slane %v274, 7
  %v329 = vrot.slane %v275, 7
  %v330 = vrot.slane %v276, 7
  %v331 = vrot.slane %v277, 7
  %v332 = vrot.slane %v278, 7
  %v333 = vrot.slane %v279, 7
  %v334 = vrot.slane %v280, 7
  %v335 = vrot.slane %v281, 7
  %v336 = vrot.slane %v282, 7
  %v337 = vrot.slane %v283, 7
  %v338 = vrot.slane %v284, 7
  %v339 = vrot.slane %v285, 7
  %v340 = vlaneseq
  %v341 = vshrl.u32 %v340, 7
  %vm342 = vcmp.lt.s32.totalorder %v341, 1
  %v343 = vsel %vm342, %v338, %v339
  %v344 = vsel %vm342, %v337, %v338
  %v345 = vsel %vm342, %v336, %v337
  %v346 = vsel %vm342, %v335, %v336
  %v347 = vsel %vm342, %v334, %v335
  %v348 = vsel %vm342, %v333, %v334
  %v349 = vsel %vm342, %v332, %v333
  %v350 = vsel %vm342, %v331, %v332
  %v351 = vsel %vm342, %v330, %v331
  %v352 = vsel %vm342, %v329, %v330
  %v353 = vsel %vm342, %v328, %v329
  %v354 = vsel %vm342, %v327, %v328
  %v355 = vsel %vm342, %v326, %v327
  %v356 = vsel %vm342, %v325, %v326
  %v357 = vsel %vm342, %v324, %v325
  %v358 = vsel %vm342, %v339, %v324
  %v359 = vrot.slane %v270, 1
  %v360 = vrot.slane %v271, 1
  %v361 = vrot.slane %v272, 1
  %v362 = vrot.slane %v273, 1
  %v363 = vrot.slane %v274, 1
  %v364 = vrot.slane %v275, 1
  %v365 = vrot.slane %v276, 1
  %v366 = vrot.slane %v277, 1
  %v367 = vrot.slane %v278, 1
  %v368 = vrot.slane %v279, 1
  %v369 = vrot.slane %v280, 1
  %v370 = vrot.slane %v281, 1
  %v371 = vrot.slane %v282, 1
  %v372 = vrot.slane %v283, 1
  %v373 = vrot.slane %v284, 1
  %v374 = vrot.slane %v285, 1
  %vm375 = vcmp.lt.s32.totalorder %v341, 7
  %v376 = vsel %vm375, %v373, %v374
  %v377 = vsel %vm375, %v372, %v373
  %v378 = vsel %vm375, %v371, %v372
  %v379 = vsel %vm375, %v370, %v371
  %v380 = vsel %vm375, %v369, %v370
  %v381 = vsel %vm375, %v368, %v369
  %v382 = vsel %vm375, %v367, %v368
  %v383 = vsel %vm375, %v366, %v367
  %v384 = vsel %vm375, %v365, %v366
  %v385 = vsel %vm375, %v364, %v365
  %v386 = vsel %vm375, %v363, %v364
  %v387 = vsel %vm375, %v362, %v363
  %v388 = vsel %vm375, %v361, %v362
  %v389 = vsel %vm375, %v360, %v361
  %v390 = vsel %vm375, %v359, %v360
  %v391 = vsel %vm375, %v374, %v359
  %408 = vrot.lane.b32.xlu0 %v285, 32
  %v409 = vpop.permute.xlu0 %408
  %410 = vrot.lane.b32.xlu0 %v270, 32
  %v411 = vpop.permute.xlu0 %410
  %412 = vrot.lane.b32.xlu0 %v271, 32
  %v413 = vpop.permute.xlu0 %412
  %414 = vrot.lane.b32.xlu0 %v272, 32
  %v415 = vpop.permute.xlu0 %414
  %416 = vrot.lane.b32.xlu0 %v273, 32
  %v417 = vpop.permute.xlu0 %416
  %418 = vrot.lane.b32.xlu0 %v274, 32
  %v419 = vpop.permute.xlu0 %418
  %420 = vrot.lane.b32.xlu0 %v275, 32
  %v421 = vpop.permute.xlu0 %420
  %422 = vrot.lane.b32.xlu0 %v276, 32
  %v423 = vpop.permute.xlu0 %422
  %424 = vrot.lane.b32.xlu0 %v277, 32
  %v425 = vpop.permute.xlu0 %424
  %426 = vrot.lane.b32.xlu0 %v278, 32
  %v427 = vpop.permute.xlu0 %426
  %428 = vrot.lane.b32.xlu0 %v279, 32
  %v429 = vpop.permute.xlu0 %428
  %430 = vrot.lane.b32.xlu0 %v280, 32
  %v431 = vpop.permute.xlu0 %430
  %432 = vrot.lane.b32.xlu0 %v281, 32
  %v433 = vpop.permute.xlu0 %432
  %434 = vrot.lane.b32.xlu0 %v282, 32
  %v435 = vpop.permute.xlu0 %434
  %436 = vrot.lane.b32.xlu0 %v283, 32
  %v437 = vpop.permute.xlu0 %436
  %438 = vrot.lane.b32.xlu0 %v284, 32
  %v439 = vpop.permute.xlu0 %438
  %472 = vrot.lane.b32.xlu0 %v391, 64
  %v473 = vpop.permute.xlu0 %472
  %474 = vrot.lane.b32.xlu0 %v390, 64
  %v475 = vpop.permute.xlu0 %474
  %476 = vrot.lane.b32.xlu0 %v389, 64
  %v477 = vpop.permute.xlu0 %476
  %478 = vrot.lane.b32.xlu0 %v388, 64
  %v479 = vpop.permute.xlu0 %478
  %480 = vrot.lane.b32.xlu0 %v387, 64
  %v481 = vpop.permute.xlu0 %480
  %482 = vrot.lane.b32.xlu0 %v386, 64
  %v483 = vpop.permute.xlu0 %482
  %484 = vrot.lane.b32.xlu0 %v385, 64
  %v485 = vpop.permute.xlu0 %484
  %486 = vrot.lane.b32.xlu0 %v384, 64
  %v487 = vpop.permute.xlu0 %486
  %488 = vrot.lane.b32.xlu0 %v383, 64
  %v489 = vpop.permute.xlu0 %488
  %490 = vrot.lane.b32.xlu0 %v382, 64
  %v491 = vpop.permute.xlu0 %490
  %492 = vrot.lane.b32.xlu0 %v381, 64
  %v493 = vpop.permute.xlu0 %492
  %494 = vrot.lane.b32.xlu0 %v380, 64
  %v495 = vpop.permute.xlu0 %494
  %496 = vrot.lane.b32.xlu0 %v379, 64
  %v497 = vpop.permute.xlu0 %496
  %498 = vrot.lane.b32.xlu0 %v378, 64
  %v499 = vpop.permute.xlu0 %498
  %500 = vrot.lane.b32.xlu0 %v377, 64
  %v501 = vpop.permute.xlu0 %500
  %502 = vrot.lane.b32.xlu0 %v376, 64
  %v503 = vpop.permute.xlu0 %502
  %536 = vrot.lane.b32.xlu0 %v358, 96
  %v537 = vpop.permute.xlu0 %536
  %538 = vrot.lane.b32.xlu0 %v357, 96
  %v539 = vpop.permute.xlu0 %538
  %540 = vrot.lane.b32.xlu0 %v356, 96
  %v541 = vpop.permute.xlu0 %540
  %542 = vrot.lane.b32.xlu0 %v355, 96
  %v543 = vpop.permute.xlu0 %542
  %544 = vrot.lane.b32.xlu0 %v354, 96
  %v545 = vpop.permute.xlu0 %544
  %546 = vrot.lane.b32.xlu0 %v353, 96
  %v547 = vpop.permute.xlu0 %546
  %548 = vrot.lane.b32.xlu0 %v352, 96
  %v549 = vpop.permute.xlu0 %548
  %550 = vrot.lane.b32.xlu0 %v351, 96
  %v551 = vpop.permute.xlu0 %550
  %552 = vrot.lane.b32.xlu0 %v350, 96
  %v553 = vpop.permute.xlu0 %552
  %554 = vrot.lane.b32.xlu0 %v349, 96
  %v555 = vpop.permute.xlu0 %554
  %556 = vrot.lane.b32.xlu0 %v348, 96
  %v557 = vpop.permute.xlu0 %556
  %558 = vrot.lane.b32.xlu0 %v347, 96
  %v559 = vpop.permute.xlu0 %558
  %560 = vrot.lane.b32.xlu0 %v346, 96
  %v561 = vpop.permute.xlu0 %560
  %562 = vrot.lane.b32.xlu0 %v345, 96
  %v563 = vpop.permute.xlu0 %562
  %564 = vrot.lane.b32.xlu0 %v344, 96
  %v565 = vpop.permute.xlu0 %564
  %566 = vrot.lane.b32.xlu0 %v343, 96
  %v567 = vpop.permute.xlu0 %566
  %584 = vrot.lane.b32.xlu0 %v390, 32
  %v585 = vpop.permute.xlu0 %584
  %586 = vrot.lane.b32.xlu0 %v389, 32
  %v587 = vpop.permute.xlu0 %586
  %588 = vrot.lane.b32.xlu0 %v388, 32
  %v589 = vpop.permute.xlu0 %588
  %590 = vrot.lane.b32.xlu0 %v387, 32
  %v591 = vpop.permute.xlu0 %590
  %592 = vrot.lane.b32.xlu0 %v386, 32
  %v593 = vpop.permute.xlu0 %592
  %594 = vrot.lane.b32.xlu0 %v385, 32
  %v595 = vpop.permute.xlu0 %594
  %596 = vrot.lane.b32.xlu0 %v384, 32
  %v597 = vpop.permute.xlu0 %596
  %598 = vrot.lane.b32.xlu0 %v383, 32
  %v599 = vpop.permute.xlu0 %598
  %600 = vrot.lane.b32.xlu0 %v382, 32
  %v601 = vpop.permute.xlu0 %600
  %602 = vrot.lane.b32.xlu0 %v381, 32
  %v603 = vpop.permute.xlu0 %602
  %604 = vrot.lane.b32.xlu0 %v380, 32
  %v605 = vpop.permute.xlu0 %604
  %606 = vrot.lane.b32.xlu0 %v379, 32
  %v607 = vpop.permute.xlu0 %606
  %608 = vrot.lane.b32.xlu0 %v378, 32
  %v609 = vpop.permute.xlu0 %608
  %610 = vrot.lane.b32.xlu0 %v377, 32
  %v611 = vpop.permute.xlu0 %610
  %612 = vrot.lane.b32.xlu0 %v376, 32
  %v613 = vpop.permute.xlu0 %612
  %614 = vrot.lane.b32.xlu0 %v391, 32
  %v615 = vpop.permute.xlu0 %614
  %632 = vrot.lane.b32.xlu0 %v357, 64
  %v633 = vpop.permute.xlu0 %632
  %634 = vrot.lane.b32.xlu0 %v356, 64
  %v635 = vpop.permute.xlu0 %634
  %636 = vrot.lane.b32.xlu0 %v355, 64
  %v637 = vpop.permute.xlu0 %636
  %638 = vrot.lane.b32.xlu0 %v354, 64
  %v639 = vpop.permute.xlu0 %638
  %640 = vrot.lane.b32.xlu0 %v353, 64
  %v641 = vpop.permute.xlu0 %640
  %642 = vrot.lane.b32.xlu0 %v352, 64
  %v643 = vpop.permute.xlu0 %642
  %644 = vrot.lane.b32.xlu0 %v351, 64
  %v645 = vpop.permute.xlu0 %644
  %646 = vrot.lane.b32.xlu0 %v350, 64
  %v647 = vpop.permute.xlu0 %646
  %648 = vrot.lane.b32.xlu0 %v349, 64
  %v649 = vpop.permute.xlu0 %648
  %650 = vrot.lane.b32.xlu0 %v348, 64
  %v651 = vpop.permute.xlu0 %650
  %652 = vrot.lane.b32.xlu0 %v347, 64
  %v653 = vpop.permute.xlu0 %652
  %654 = vrot.lane.b32.xlu0 %v346, 64
  %v655 = vpop.permute.xlu0 %654
  %656 = vrot.lane.b32.xlu0 %v345, 64
  %v657 = vpop.permute.xlu0 %656
  %658 = vrot.lane.b32.xlu0 %v344, 64
  %v659 = vpop.permute.xlu0 %658
  %660 = vrot.lane.b32.xlu0 %v343, 64
  %v661 = vpop.permute.xlu0 %660
  %662 = vrot.lane.b32.xlu0 %v358, 64
  %v663 = vpop.permute.xlu0 %662
  %680 = vrot.lane.b32.xlu0 %v271, 96
  %v681 = vpop.permute.xlu0 %680
  %682 = vrot.lane.b32.xlu0 %v272, 96
  %v683 = vpop.permute.xlu0 %682
  %684 = vrot.lane.b32.xlu0 %v273, 96
  %v685 = vpop.permute.xlu0 %684
  %686 = vrot.lane.b32.xlu0 %v274, 96
  %v687 = vpop.permute.xlu0 %686
  %688 = vrot.lane.b32.xlu0 %v275, 96
  %v689 = vpop.permute.xlu0 %688
  %690 = vrot.lane.b32.xlu0 %v276, 96
  %v691 = vpop.permute.xlu0 %690
  %692 = vrot.lane.b32.xlu0 %v277, 96
  %v693 = vpop.permute.xlu0 %692
  %694 = vrot.lane.b32.xlu0 %v278, 96
  %v695 = vpop.permute.xlu0 %694
  %696 = vrot.lane.b32.xlu0 %v279, 96
  %v697 = vpop.permute.xlu0 %696
  %698 = vrot.lane.b32.xlu0 %v280, 96
  %v699 = vpop.permute.xlu0 %698
  %700 = vrot.lane.b32.xlu0 %v281, 96
  %v701 = vpop.permute.xlu0 %700
  %702 = vrot.lane.b32.xlu0 %v282, 96
  %v703 = vpop.permute.xlu0 %702
  %704 = vrot.lane.b32.xlu0 %v283, 96
  %v705 = vpop.permute.xlu0 %704
  %706 = vrot.lane.b32.xlu0 %v284, 96
  %v707 = vpop.permute.xlu0 %706
  %708 = vrot.lane.b32.xlu0 %v285, 96
  %v709 = vpop.permute.xlu0 %708
  %710 = vrot.lane.b32.xlu0 %v270, 96
  %v711 = vpop.permute.xlu0 %710
  %vm728 = vcmask 261120
  %v729 = vsel %vm728, %v343, %v409
  %v730 = vsel %vm728, %v358, %v411
  %v731 = vsel %vm728, %v357, %v413
  %v732 = vsel %vm728, %v356, %v415
  %v733 = vsel %vm728, %v355, %v417
  %v734 = vsel %vm728, %v354, %v419
  %v735 = vsel %vm728, %v353, %v421
  %v736 = vsel %vm728, %v352, %v423
  %v737 = vsel %vm728, %v351, %v425
  %v738 = vsel %vm728, %v350, %v427
  %v739 = vsel %vm728, %v349, %v429
  %v740 = vsel %vm728, %v348, %v431
  %v741 = vsel %vm728, %v347, %v433
  %v742 = vsel %vm728, %v346, %v435
  %v743 = vsel %vm728, %v345, %v437
  %v744 = vsel %vm728, %v344, %v439
  %vm745 = vcmask 523264
  %v746 = vsel %vm745, %v729, %v473
  %v747 = vsel %vm745, %v730, %v475
  %v748 = vsel %vm745, %v731, %v477
  %v749 = vsel %vm745, %v732, %v479
  %v750 = vsel %vm745, %v733, %v481
  %v751 = vsel %vm745, %v734, %v483
  %v752 = vsel %vm745, %v735, %v485
  %v753 = vsel %vm745, %v736, %v487
  %v754 = vsel %vm745, %v737, %v489
  %v755 = vsel %vm745, %v738, %v491
  %v756 = vsel %vm745, %v739, %v493
  %v757 = vsel %vm745, %v740, %v495
  %v758 = vsel %vm745, %v741, %v497
  %v759 = vsel %vm745, %v742, %v499
  %v760 = vsel %vm745, %v743, %v501
  %v761 = vsel %vm745, %v744, %v503
  %vm762 = vcmask 785408
  %v763 = vsel %vm762, %v746, %v537
  %v764 = vsel %vm762, %v747, %v539
  %v765 = vsel %vm762, %v748, %v541
  %v766 = vsel %vm762, %v749, %v543
  %v767 = vsel %vm762, %v750, %v545
  %v768 = vsel %vm762, %v751, %v547
  %v769 = vsel %vm762, %v752, %v549
  %v770 = vsel %vm762, %v753, %v551
  %v771 = vsel %vm762, %v754, %v553
  %v772 = vsel %vm762, %v755, %v555
  %v773 = vsel %vm762, %v756, %v557
  %v774 = vsel %vm762, %v757, %v559
  %v775 = vsel %vm762, %v758, %v561
  %v776 = vsel %vm762, %v759, %v563
  %v777 = vsel %vm762, %v760, %v565
  %v778 = vsel %vm762, %v761, %v567
  %v779 = vsel %vm728, %v270, %v585
  %v780 = vsel %vm728, %v271, %v587
  %v781 = vsel %vm728, %v272, %v589
  %v782 = vsel %vm728, %v273, %v591
  %v783 = vsel %vm728, %v274, %v593
  %v784 = vsel %vm728, %v275, %v595
  %v785 = vsel %vm728, %v276, %v597
  %v786 = vsel %vm728, %v277, %v599
  %v787 = vsel %vm728, %v278, %v601
  %v788 = vsel %vm728, %v279, %v603
  %v789 = vsel %vm728, %v280, %v605
  %v790 = vsel %vm728, %v281, %v607
  %v791 = vsel %vm728, %v282, %v609
  %v792 = vsel %vm728, %v283, %v611
  %v793 = vsel %vm728, %v284, %v613
  %v794 = vsel %vm728, %v285, %v615
  %v795 = vsel %vm745, %v779, %v633
  %v796 = vsel %vm745, %v780, %v635
  %v797 = vsel %vm745, %v781, %v637
  %v798 = vsel %vm745, %v782, %v639
  %v799 = vsel %vm745, %v783, %v641
  %v800 = vsel %vm745, %v784, %v643
  %v801 = vsel %vm745, %v785, %v645
  %v802 = vsel %vm745, %v786, %v647
  %v803 = vsel %vm745, %v787, %v649
  %v804 = vsel %vm745, %v788, %v651
  %v805 = vsel %vm745, %v789, %v653
  %v806 = vsel %vm745, %v790, %v655
  %v807 = vsel %vm745, %v791, %v657
  %v808 = vsel %vm745, %v792, %v659
  %v809 = vsel %vm745, %v793, %v661
  %v810 = vsel %vm745, %v794, %v663
  %v811 = vsel %vm762, %v795, %v681
  %v812 = vsel %vm762, %v796, %v683
  %v813 = vsel %vm762, %v797, %v685
  %v814 = vsel %vm762, %v798, %v687
  %v815 = vsel %vm762, %v799, %v689
  %v816 = vsel %vm762, %v800, %v691
  %v817 = vsel %vm762, %v801, %v693
  %v818 = vsel %vm762, %v802, %v695
  %v819 = vsel %vm762, %v803, %v697
  %v820 = vsel %vm762, %v804, %v699
  %v821 = vsel %vm762, %v805, %v701
  %v822 = vsel %vm762, %v806, %v703
  %v823 = vsel %vm762, %v807, %v705
  %v824 = vsel %vm762, %v808, %v707
  %v825 = vsel %vm762, %v809, %v709
  %v826 = vsel %vm762, %v810, %v711
  %v827 = vld [vmem:[%s1] sm:$0xff]
  %v828 = vld [vmem:[%s1 + $0x8] sm:$0xff]
  %v829 = vld [vmem:[%s1 + $0x10] sm:$0xff]
  %v830 = vld [vmem:[%s1 + $0x18] sm:$0xff]
  %v831 = vld [vmem:[%s1 + $0x20] sm:$0xff]
  %v832 = vld [vmem:[%s1 + $0x28] sm:$0xff]
  %v833 = vld [vmem:[%s1 + $0x30] sm:$0xff]
  %v834 = vld [vmem:[%s1 + $0x38] sm:$0xff]
  %v835 = vld [vmem:[%s1 + $0x40] sm:$0xff]
  %v836 = vld [vmem:[%s1 + $0x48] sm:$0xff]
  %v837 = vld [vmem:[%s1 + $0x50] sm:$0xff]
  %v838 = vld [vmem:[%s1 + $0x58] sm:$0xff]
  %v839 = vld [vmem:[%s1 + $0x60] sm:$0xff]
  %v840 = vld [vmem:[%s1 + $0x68] sm:$0xff]
  %v841 = vld [vmem:[%s1 + $0x70] sm:$0xff]
  %v842 = vld [vmem:[%s1 + $0x78] sm:$0xff]
  %v843 = vld [vmem:[%s1 + $0x80] sm:$0xff]
  %v844 = vld [vmem:[%s1 + $0x88] sm:$0xff]
  %v845 = vld [vmem:[%s1 + $0x90] sm:$0xff]
  %v846 = vld [vmem:[%s1 + $0x98] sm:$0xff]
  %v847 = vld [vmem:[%s1 + $0xa0] sm:$0xff]
  %v848 = vld [vmem:[%s1 + $0xa8] sm:$0xff]
  %v849 = vld [vmem:[%s1 + $0xb0] sm:$0xff]
  %v850 = vld [vmem:[%s1 + $0xb8] sm:$0xff]
  %v851 = vld [vmem:[%s1 + $0xc0] sm:$0xff]
  %v852 = vld [vmem:[%s1 + $0xc8] sm:$0xff]
  %v853 = vld [vmem:[%s1 + $0xd0] sm:$0xff]
  %v854 = vld [vmem:[%s1 + $0xd8] sm:$0xff]
  %v855 = vld [vmem:[%s1 + $0xe0] sm:$0xff]
  %v856 = vld [vmem:[%s1 + $0xe8] sm:$0xff]
  %v857 = vld [vmem:[%s1 + $0xf0] sm:$0xff]
  %v858 = vld [vmem:[%s1 + $0xf8] sm:$0xff]
  %v859 = vld [vmem:[%s1 + $0x100] sm:$0xff]
  %v860 = vld [vmem:[%s1 + $0x108] sm:$0xff]
  %v861 = vld [vmem:[%s1 + $0x110] sm:$0xff]
  %v862 = vld [vmem:[%s1 + $0x118] sm:$0xff]
  %v863 = vld [vmem:[%s1 + $0x120] sm:$0xff]
  %v864 = vld [vmem:[%s1 + $0x128] sm:$0xff]
  %v865 = vld [vmem:[%s1 + $0x130] sm:$0xff]
  %v866 = vld [vmem:[%s1 + $0x138] sm:$0xff]
  %v867 = vld [vmem:[%s1 + $0x140] sm:$0xff]
  %v868 = vld [vmem:[%s1 + $0x148] sm:$0xff]
  %v869 = vld [vmem:[%s1 + $0x150] sm:$0xff]
  %v870 = vld [vmem:[%s1 + $0x158] sm:$0xff]
  %v871 = vld [vmem:[%s1 + $0x160] sm:$0xff]
  %v872 = vld [vmem:[%s1 + $0x168] sm:$0xff]
  %v873 = vld [vmem:[%s1 + $0x170] sm:$0xff]
  %v874 = vld [vmem:[%s1 + $0x178] sm:$0xff]
  %v875 = vmul.f32 %v763, %v827
  %v876 = vmul.f32 %v811, %v828
  %v877 = vmul.f32 %v389, %v829
  %v878 = vmul.f32 %v764, %v830
  %v879 = vmul.f32 %v812, %v831
  %v880 = vmul.f32 %v388, %v832
  %v881 = vmul.f32 %v765, %v833
  %v882 = vmul.f32 %v813, %v834
  %v883 = vmul.f32 %v387, %v835
  %v884 = vmul.f32 %v766, %v836
  %v885 = vmul.f32 %v814, %v837
  %v886 = vmul.f32 %v386, %v838
  %v887 = vmul.f32 %v767, %v839
  %v888 = vmul.f32 %v815, %v840
  %v889 = vmul.f32 %v385, %v841
  %v890 = vmul.f32 %v768, %v842
  %v891 = vmul.f32 %v816, %v843
  %v892 = vmul.f32 %v384, %v844
  %v893 = vmul.f32 %v769, %v845
  %v894 = vmul.f32 %v817, %v846
  %v895 = vmul.f32 %v383, %v847
  %v896 = vmul.f32 %v770, %v848
  %v897 = vmul.f32 %v818, %v849
  %v898 = vmul.f32 %v382, %v850
  %v899 = vmul.f32 %v771, %v851
  %v900 = vmul.f32 %v819, %v852
  %v901 = vmul.f32 %v381, %v853
  %v902 = vmul.f32 %v772, %v854
  %v903 = vmul.f32 %v820, %v855
  %v904 = vmul.f32 %v380, %v856
  %v905 = vmul.f32 %v773, %v857
  %v906 = vmul.f32 %v821, %v858
  %v907 = vmul.f32 %v379, %v859
  %v908 = vmul.f32 %v774, %v860
  %v909 = vmul.f32 %v822, %v861
  %v910 = vmul.f32 %v378, %v862
  %v911 = vmul.f32 %v775, %v863
  %v912 = vmul.f32 %v823, %v864
  %v913 = vmul.f32 %v377, %v865
  %v914 = vmul.f32 %v776, %v866
  %v915 = vmul.f32 %v824, %v867
  %v916 = vmul.f32 %v376, %v868
  %v917 = vmul.f32 %v777, %v869
  %v918 = vmul.f32 %v825, %v870
  %v919 = vmul.f32 %v391, %v871
  %v920 = vmul.f32 %v778, %v872
  %v921 = vmul.f32 %v826, %v873
  %v922 = vmul.f32 %v390, %v874
  %v924 = vlaneseq
  %v925 = vshrl.u32 %v924, 7
  %v926 = vsub.s32 0, %v925
  %v927 = vrot.slane %v323, %v926
  %v930 = vsel %vm728, %v877, 0
  %v933 = vsel %vm728, %v880, 0
  %v936 = vsel %vm728, %v883, 0
  %v939 = vsel %vm728, %v886, 0
  %v942 = vsel %vm728, %v889, 0
  %v945 = vsel %vm728, %v892, 0
  %v948 = vsel %vm728, %v895, 0
  %v951 = vsel %vm728, %v898, 0
  %v954 = vsel %vm728, %v901, 0
  %v957 = vsel %vm728, %v904, 0
  %v960 = vsel %vm728, %v907, 0
  %v963 = vsel %vm728, %v910, 0
  %v966 = vsel %vm728, %v913, 0
  %v969 = vsel %vm728, %v916, 0
  %v972 = vsel %vm728, %v919, 0
  %v975 = vsel %vm728, %v922, 0
  %977 = vmatprep.subr.mxu0 0.0
  %978 = vmatpush1.msra.mxu0 %v302
  %979 = vmatprep.subr.mxu0 0.0
  %980 = vmatpush1.msra.mxu0 %v301
  %981 = vmatprep.subr.mxu0 0.0
  %982 = vmatpush1.msra.mxu0 %v300
  %983 = vmatprep.subr.mxu0 0.0
  %984 = vmatpush1.msra.mxu0 %v299
  %985 = vmatprep.subr.mxu0 0.0
  %986 = vmatpush1.msra.mxu0 %v298
  %987 = vmatprep.subr.mxu0 0.0
  %988 = vmatpush1.msra.mxu0 %v297
  %989 = vmatprep.subr.mxu0 0.0
  %990 = vmatpush1.msra.mxu0 %v296
  %991 = vmatprep.subr.mxu0 0.0
  %992 = vmatpush1.msra.mxu0 %v295
  %993 = vmatprep.subr.mxu0 0.0
  %994 = vmatpush1.msra.mxu0 %v294
  %995 = vmatprep.subr.mxu0 0.0
  %996 = vmatpush1.msra.mxu0 %v293
  %997 = vmatprep.subr.mxu0 0.0
  %998 = vmatpush1.msra.mxu0 %v292
  %999 = vmatprep.subr.mxu0 0.0
  %1000 = vmatpush1.msra.mxu0 %v291
  %1001 = vmatprep.subr.mxu0 0.0
  %1002 = vmatpush1.msra.mxu0 %v290
  %1003 = vmatprep.subr.mxu0 0.0
  %1004 = vmatpush1.msra.mxu0 %v289
  %1005 = vmatprep.subr.mxu0 0.0
  %1006 = vmatpush1.msra.mxu0 %v288
  %1007 = vmatprep.subr.mxu0 0.0
  %1008 = vmatpush1.msra.mxu0 %v287
  %1009 = vmatprep.subr.mxu0 0.0
  %1010 = vmatpush2.msra.mxu0 %v318
  %1011 = vmatprep.subr.mxu0 0.0
  %1012 = vmatpush2.msra.mxu0 %v317
  %1013 = vmatprep.subr.mxu0 0.0
  %1014 = vmatpush2.msra.mxu0 %v316
  %1015 = vmatprep.subr.mxu0 0.0
  %1016 = vmatpush2.msra.mxu0 %v315
  %1017 = vmatprep.subr.mxu0 0.0
  %1018 = vmatpush2.msra.mxu0 %v314
  %1019 = vmatprep.subr.mxu0 0.0
  %1020 = vmatpush2.msra.mxu0 %v313
  %1021 = vmatprep.subr.mxu0 0.0
  %1022 = vmatpush2.msra.mxu0 %v312
  %1023 = vmatprep.subr.mxu0 0.0
  %1024 = vmatpush2.msra.mxu0 %v311
  %1025 = vmatprep.subr.mxu0 0.0
  %1026 = vmatpush2.msra.mxu0 %v310
  %1027 = vmatprep.subr.mxu0 0.0
  %1028 = vmatpush2.msra.mxu0 %v309
  %1029 = vmatprep.subr.mxu0 0.0
  %1030 = vmatpush2.msra.mxu0 %v308
  %1031 = vmatprep.subr.mxu0 0.0
  %1032 = vmatpush2.msra.mxu0 %v307
  %1033 = vmatprep.subr.mxu0 0.0
  %1034 = vmatpush2.msra.mxu0 %v306
  %1035 = vmatprep.subr.mxu0 0.0
  %1036 = vmatpush2.msra.mxu0 %v305
  %1037 = vmatprep.subr.mxu0 0.0
  %1038 = vmatpush2.msra.mxu0 %v304
  %1039 = vmatprep.subr.mxu0 0.0
  %1040 = vmatpush2.msra.mxu0 %v303
  %1041 = vmatprep.mubr.f32.mxu0 %v876
  %1042 = vmatmul.mubr.f32.gmra.mxu0 %v875
  %v1043 = vpop.f32.mrf.mxu0
  %v1044 = vadd.f32 %v927, %v1043
  %v1045 = vpop.f32.mrf.mxu0
  %1046 = vmatprep.mubr.f32.mxu0 %v879
  %1047 = vmatmul.mubr.f32.gmra.mxu0 %v878
  %v1048 = vpop.f32.mrf.mxu0
  %v1049 = vadd.f32 %v927, %v1048
  %v1050 = vpop.f32.mrf.mxu0
  %1051 = vmatprep.mubr.f32.mxu0 %v882
  %1052 = vmatmul.mubr.f32.gmra.mxu0 %v881
  %v1053 = vpop.f32.mrf.mxu0
  %v1054 = vadd.f32 %v927, %v1053
  %v1055 = vpop.f32.mrf.mxu0
  %1056 = vmatprep.mubr.f32.mxu0 %v885
  %1057 = vmatmul.mubr.f32.gmra.mxu0 %v884
  %v1058 = vpop.f32.mrf.mxu0
  %v1059 = vadd.f32 %v927, %v1058
  %v1060 = vpop.f32.mrf.mxu0
  %1061 = vmatprep.mubr.f32.mxu0 %v888
  %1062 = vmatmul.mubr.f32.gmra.mxu0 %v887
  %v1063 = vpop.f32.mrf.mxu0
  %v1064 = vadd.f32 %v927, %v1063
  %v1065 = vpop.f32.mrf.mxu0
  %1066 = vmatprep.mubr.f32.mxu0 %v891
  %1067 = vmatmul.mubr.f32.gmra.mxu0 %v890
  %v1068 = vpop.f32.mrf.mxu0
  %v1069 = vadd.f32 %v927, %v1068
  %v1070 = vpop.f32.mrf.mxu0
  %1071 = vmatprep.mubr.f32.mxu0 %v894
  %1072 = vmatmul.mubr.f32.gmra.mxu0 %v893
  %v1073 = vpop.f32.mrf.mxu0
  %v1074 = vadd.f32 %v927, %v1073
  %v1075 = vpop.f32.mrf.mxu0
  %1076 = vmatprep.mubr.f32.mxu0 %v897
  %1077 = vmatmul.mubr.f32.gmra.mxu0 %v896
  %v1078 = vpop.f32.mrf.mxu0
  %v1079 = vadd.f32 %v927, %v1078
  %v1080 = vpop.f32.mrf.mxu0
  %1081 = vmatprep.mubr.f32.mxu0 %v900
  %1082 = vmatmul.mubr.f32.gmra.mxu0 %v899
  %v1083 = vpop.f32.mrf.mxu0
  %v1084 = vadd.f32 %v927, %v1083
  %v1085 = vpop.f32.mrf.mxu0
  %1086 = vmatprep.mubr.f32.mxu0 %v903
  %1087 = vmatmul.mubr.f32.gmra.mxu0 %v902
  %v1088 = vpop.f32.mrf.mxu0
  %v1089 = vadd.f32 %v927, %v1088
  %v1090 = vpop.f32.mrf.mxu0
  %1091 = vmatprep.mubr.f32.mxu0 %v906
  %1092 = vmatmul.mubr.f32.gmra.mxu0 %v905
  %v1093 = vpop.f32.mrf.mxu0
  %v1094 = vadd.f32 %v927, %v1093
  %v1095 = vpop.f32.mrf.mxu0
  %1096 = vmatprep.mubr.f32.mxu0 %v909
  %1097 = vmatmul.mubr.f32.gmra.mxu0 %v908
  %v1098 = vpop.f32.mrf.mxu0
  %v1099 = vadd.f32 %v927, %v1098
  %v1100 = vpop.f32.mrf.mxu0
  %1101 = vmatprep.mubr.f32.mxu0 %v912
  %1102 = vmatmul.mubr.f32.gmra.mxu0 %v911
  %v1103 = vpop.f32.mrf.mxu0
  %v1104 = vadd.f32 %v927, %v1103
  %v1105 = vpop.f32.mrf.mxu0
  %1106 = vmatprep.mubr.f32.mxu0 %v915
  %1107 = vmatmul.mubr.f32.gmra.mxu0 %v914
  %v1108 = vpop.f32.mrf.mxu0
  %v1109 = vadd.f32 %v927, %v1108
  %v1110 = vpop.f32.mrf.mxu0
  %1111 = vmatprep.mubr.f32.mxu0 %v918
  %1112 = vmatmul.mubr.f32.gmra.mxu0 %v917
  %v1113 = vpop.f32.mrf.mxu0
  %v1114 = vadd.f32 %v927, %v1113
  %v1115 = vpop.f32.mrf.mxu0
  %1116 = vmatprep.mubr.f32.mxu0 %v921
  %1117 = vmatmul.mubr.f32.gmra.mxu0 %v920
  %v1118 = vpop.f32.mrf.mxu0
  %v1119 = vadd.f32 %v927, %v1118
  %v1120 = vpop.f32.mrf.mxu0
  %1121 = vdwg.mxu0
  %1122 = vmatprep.subr.mxu0 0.0
  %1123 = vmatpush1.msra.mxu0 0.0
  %1124 = vmatprep.subr.mxu0 0.0
  %1125 = vmatpush1.msra.mxu0 0.0
  %1126 = vmatprep.subr.mxu0 0.0
  %1127 = vmatpush1.msra.mxu0 0.0
  %1128 = vmatprep.subr.mxu0 0.0
  %1129 = vmatpush1.msra.mxu0 0.0
  %1130 = vmatprep.subr.mxu0 0.0
  %1131 = vmatpush1.msra.mxu0 0.0
  %1132 = vmatprep.subr.mxu0 0.0
  %1133 = vmatpush1.msra.mxu0 0.0
  %1134 = vmatprep.subr.mxu0 0.0
  %1135 = vmatpush1.msra.mxu0 0.0
  %1136 = vmatprep.subr.mxu0 0.0
  %1137 = vmatpush1.msra.mxu0 0.0
  %1138 = vmatprep.subr.mxu0 0.0
  %1139 = vmatpush1.msra.mxu0 0.0
  %1140 = vmatprep.subr.mxu0 0.0
  %1141 = vmatpush1.msra.mxu0 0.0
  %1142 = vmatprep.subr.mxu0 0.0
  %1143 = vmatpush1.msra.mxu0 0.0
  %1144 = vmatprep.subr.mxu0 0.0
  %1145 = vmatpush1.msra.mxu0 0.0
  %1146 = vmatprep.subr.mxu0 0.0
  %1147 = vmatpush1.msra.mxu0 %v322
  %1148 = vmatprep.subr.mxu0 0.0
  %1149 = vmatpush1.msra.mxu0 %v321
  %1150 = vmatprep.subr.mxu0 0.0
  %1151 = vmatpush1.msra.mxu0 %v320
  %1152 = vmatprep.subr.mxu0 0.0
  %1153 = vmatpush1.msra.mxu0 %v319
  %1154 = vmatprep.subr.mxu0 0.0
  %1155 = vmatpush2.msra.mxu0 0.0
  %1156 = vmatprep.subr.mxu0 0.0
  %1157 = vmatpush2.msra.mxu0 0.0
  %1158 = vmatprep.subr.mxu0 0.0
  %1159 = vmatpush2.msra.mxu0 0.0
  %1160 = vmatprep.subr.mxu0 0.0
  %1161 = vmatpush2.msra.mxu0 0.0
  %1162 = vmatprep.subr.mxu0 0.0
  %1163 = vmatpush2.msra.mxu0 0.0
  %1164 = vmatprep.subr.mxu0 0.0
  %1165 = vmatpush2.msra.mxu0 0.0
  %1166 = vmatprep.subr.mxu0 0.0
  %1167 = vmatpush2.msra.mxu0 0.0
  %1168 = vmatprep.subr.mxu0 0.0
  %1169 = vmatpush2.msra.mxu0 0.0
  %1170 = vmatprep.subr.mxu0 0.0
  %1171 = vmatpush2.msra.mxu0 0.0
  %1172 = vmatprep.subr.mxu0 0.0
  %1173 = vmatpush2.msra.mxu0 0.0
  %1174 = vmatprep.subr.mxu0 0.0
  %1175 = vmatpush2.msra.mxu0 0.0
  %1176 = vmatprep.subr.mxu0 0.0
  %1177 = vmatpush2.msra.mxu0 0.0
  %1178 = vmatprep.subr.mxu0 0.0
  %1179 = vmatpush2.msra.mxu0 0.0
  %1180 = vmatprep.subr.mxu0 0.0
  %1181 = vmatpush2.msra.mxu0 0.0
  %1182 = vmatprep.subr.mxu0 0.0
  %1183 = vmatpush2.msra.mxu0 0.0
  %1184 = vmatprep.subr.mxu0 0.0
  %1185 = vmatpush2.msra.mxu0 0.0
  %1186 = vmatprep.mubr.f32.mxu0 0.0
  %1187 = vmatmul.mubr.f32.gmra.mxu0 %v930
  %v1188 = vpop.f32.mrf.mxu0
  %v1189 = vadd.f32 %v1044, %v1188
  %v1190 = vpop.f32.mrf.mxu0
  %1191 = vmatprep.mubr.f32.mxu0 0.0
  %1192 = vmatmul.mubr.f32.gmra.mxu0 %v933
  %v1193 = vpop.f32.mrf.mxu0
  %v1194 = vadd.f32 %v1049, %v1193
  %v1195 = vpop.f32.mrf.mxu0
  %1196 = vmatprep.mubr.f32.mxu0 0.0
  %1197 = vmatmul.mubr.f32.gmra.mxu0 %v936
  %v1198 = vpop.f32.mrf.mxu0
  %v1199 = vadd.f32 %v1054, %v1198
  %v1200 = vpop.f32.mrf.mxu0
  %1201 = vmatprep.mubr.f32.mxu0 0.0
  %1202 = vmatmul.mubr.f32.gmra.mxu0 %v939
  %v1203 = vpop.f32.mrf.mxu0
  %v1204 = vadd.f32 %v1059, %v1203
  %v1205 = vpop.f32.mrf.mxu0
  %1206 = vmatprep.mubr.f32.mxu0 0.0
  %1207 = vmatmul.mubr.f32.gmra.mxu0 %v942
  %v1208 = vpop.f32.mrf.mxu0
  %v1209 = vadd.f32 %v1064, %v1208
  %v1210 = vpop.f32.mrf.mxu0
  %1211 = vmatprep.mubr.f32.mxu0 0.0
  %1212 = vmatmul.mubr.f32.gmra.mxu0 %v945
  %v1213 = vpop.f32.mrf.mxu0
  %v1214 = vadd.f32 %v1069, %v1213
  %v1215 = vpop.f32.mrf.mxu0
  %1216 = vmatprep.mubr.f32.mxu0 0.0
  %1217 = vmatmul.mubr.f32.gmra.mxu0 %v948
  %v1218 = vpop.f32.mrf.mxu0
  %v1219 = vadd.f32 %v1074, %v1218
  %v1220 = vpop.f32.mrf.mxu0
  %1221 = vmatprep.mubr.f32.mxu0 0.0
  %1222 = vmatmul.mubr.f32.gmra.mxu0 %v951
  %v1223 = vpop.f32.mrf.mxu0
  %v1224 = vadd.f32 %v1079, %v1223
  %v1225 = vpop.f32.mrf.mxu0
  %1226 = vmatprep.mubr.f32.mxu0 0.0
  %1227 = vmatmul.mubr.f32.gmra.mxu0 %v954
  %v1228 = vpop.f32.mrf.mxu0
  %v1229 = vadd.f32 %v1084, %v1228
  %v1230 = vpop.f32.mrf.mxu0
  %1231 = vmatprep.mubr.f32.mxu0 0.0
  %1232 = vmatmul.mubr.f32.gmra.mxu0 %v957
  %v1233 = vpop.f32.mrf.mxu0
  %v1234 = vadd.f32 %v1089, %v1233
  %v1235 = vpop.f32.mrf.mxu0
  %1236 = vmatprep.mubr.f32.mxu0 0.0
  %1237 = vmatmul.mubr.f32.gmra.mxu0 %v960
  %v1238 = vpop.f32.mrf.mxu0
  %v1239 = vadd.f32 %v1094, %v1238
  %v1240 = vpop.f32.mrf.mxu0
  %1241 = vmatprep.mubr.f32.mxu0 0.0
  %1242 = vmatmul.mubr.f32.gmra.mxu0 %v963
  %v1243 = vpop.f32.mrf.mxu0
  %v1244 = vadd.f32 %v1099, %v1243
  %v1245 = vpop.f32.mrf.mxu0
  %1246 = vmatprep.mubr.f32.mxu0 0.0
  %1247 = vmatmul.mubr.f32.gmra.mxu0 %v966
  %v1248 = vpop.f32.mrf.mxu0
  %v1249 = vadd.f32 %v1104, %v1248
  %v1250 = vpop.f32.mrf.mxu0
  %1251 = vmatprep.mubr.f32.mxu0 0.0
  %1252 = vmatmul.mubr.f32.gmra.mxu0 %v969
  %v1253 = vpop.f32.mrf.mxu0
  %v1254 = vadd.f32 %v1109, %v1253
  %v1255 = vpop.f32.mrf.mxu0
  %1256 = vmatprep.mubr.f32.mxu0 0.0
  %1257 = vmatmul.mubr.f32.gmra.mxu0 %v972
  %v1258 = vpop.f32.mrf.mxu0
  %v1259 = vadd.f32 %v1114, %v1258
  %v1260 = vpop.f32.mrf.mxu0
  %1261 = vmatprep.mubr.f32.mxu0 0.0
  %1262 = vmatmul.mubr.f32.gmra.mxu0 %v975
  %v1263 = vpop.f32.mrf.mxu0
  %v1264 = vadd.f32 %v1119, %v1263
  %v1265 = vpop.f32.mrf.mxu0
  %1266 = vdwg.mxu0
  %vm1267 = vcmp.gt.f32.partialorder %v1189, 0.0
  %vm1268 = vcmp.gt.f32.partialorder %v1194, 0.0
  %vm1269 = vcmp.gt.f32.partialorder %v1199, 0.0
  %vm1270 = vcmp.gt.f32.partialorder %v1204, 0.0
  %vm1271 = vcmp.gt.f32.partialorder %v1209, 0.0
  %vm1272 = vcmp.gt.f32.partialorder %v1214, 0.0
  %vm1273 = vcmp.gt.f32.partialorder %v1219, 0.0
  %vm1274 = vcmp.gt.f32.partialorder %v1224, 0.0
  %vm1275 = vcmp.gt.f32.partialorder %v1229, 0.0
  %vm1276 = vcmp.gt.f32.partialorder %v1234, 0.0
  %vm1277 = vcmp.gt.f32.partialorder %v1239, 0.0
  %vm1278 = vcmp.gt.f32.partialorder %v1244, 0.0
  %vm1279 = vcmp.gt.f32.partialorder %v1249, 0.0
  %vm1280 = vcmp.gt.f32.partialorder %v1254, 0.0
  %vm1281 = vcmp.gt.f32.partialorder %v1259, 0.0
  %vm1282 = vcmp.gt.f32.partialorder %v1264, 0.0
  %v1284 = vlaneseq
  %v1285 = vshrl.u32 %v1284, 7
  %v1286 = vsub.s32 0, %v1285
  %v1287 = vrot.slane %v286, %v1286
  %v1289 = vmul.f32 %v1287, %v1189
  %v1290 = vmul.f32 %v1287, %v1194
  %v1291 = vmul.f32 %v1287, %v1199
  %v1292 = vmul.f32 %v1287, %v1204
  %v1293 = vmul.f32 %v1287, %v1209
  %v1294 = vmul.f32 %v1287, %v1214
  %v1295 = vmul.f32 %v1287, %v1219
  %v1296 = vmul.f32 %v1287, %v1224
  %v1297 = vmul.f32 %v1287, %v1229
  %v1298 = vmul.f32 %v1287, %v1234
  %v1299 = vmul.f32 %v1287, %v1239
  %v1300 = vmul.f32 %v1287, %v1244
  %v1301 = vmul.f32 %v1287, %v1249
  %v1302 = vmul.f32 %v1287, %v1254
  %v1303 = vmul.f32 %v1287, %v1259
  %v1304 = vmul.f32 %v1287, %v1264
  %v1305 = vsel %vm1267, %v1189, %v1289
  %v1306 = vsel %vm1268, %v1194, %v1290
  %v1307 = vsel %vm1269, %v1199, %v1291
  %v1308 = vsel %vm1270, %v1204, %v1292
  %v1309 = vsel %vm1271, %v1209, %v1293
  %v1310 = vsel %vm1272, %v1214, %v1294
  %v1311 = vsel %vm1273, %v1219, %v1295
  %v1312 = vsel %vm1274, %v1224, %v1296
  %v1313 = vsel %vm1275, %v1229, %v1297
  %v1314 = vsel %vm1276, %v1234, %v1298
  %v1315 = vsel %vm1277, %v1239, %v1299
  %v1316 = vsel %vm1278, %v1244, %v1300
  %v1317 = vsel %vm1279, %v1249, %v1301
  %v1318 = vsel %vm1280, %v1254, %v1302
  %v1319 = vsel %vm1281, %v1259, %v1303
  %v1320 = vsel %vm1282, %v1264, %v1304
  %v1321 = vld [vmem:[%s7] sm:$0xff]
  %v1322 = vld [vmem:[%s7 + $0x8] sm:$0xff]
  %v1323 = vld [vmem:[%s7 + $0x10] sm:$0xff]
  %v1324 = vld [vmem:[%s7 + $0x18] sm:$0xff]
  %v1325 = vld [vmem:[%s7 + $0x20] sm:$0xff]
  %v1326 = vld [vmem:[%s7 + $0x28] sm:$0xff]
  %v1327 = vld [vmem:[%s7 + $0x30] sm:$0xff]
  %v1328 = vld [vmem:[%s7 + $0x38] sm:$0xff]
  %v1329 = vld [vmem:[%s7 + $0x40] sm:$0xff]
  %v1330 = vld [vmem:[%s7 + $0x48] sm:$0xff]
  %v1331 = vld [vmem:[%s7 + $0x50] sm:$0xff]
  %v1332 = vld [vmem:[%s7 + $0x58] sm:$0xff]
  %v1333 = vld [vmem:[%s7 + $0x60] sm:$0xff]
  %v1334 = vld [vmem:[%s7 + $0x68] sm:$0xff]
  %v1335 = vld [vmem:[%s7 + $0x70] sm:$0xff]
  %v1336 = vld [vmem:[%s7 + $0x78] sm:$0xff]
  %v1337 = vld [vmem:[%s7 + $0x80] sm:$0xff]
  %v1338 = vld [vmem:[%s7 + $0x88] sm:$0xff]
  %v1339 = vld [vmem:[%s7 + $0x90] sm:$0xff]
  %v1340 = vld [vmem:[%s7 + $0x98] sm:$0xff]
  %v1341 = vld [vmem:[%s7 + $0xa0] sm:$0xff]
  %v1342 = vld [vmem:[%s7 + $0xa8] sm:$0xff]
  %v1343 = vld [vmem:[%s7 + $0xb0] sm:$0xff]
  %v1344 = vld [vmem:[%s7 + $0xb8] sm:$0xff]
  %v1345 = vld [vmem:[%s7 + $0xc0] sm:$0xff]
  %v1346 = vld [vmem:[%s7 + $0xc8] sm:$0xff]
  %v1347 = vld [vmem:[%s7 + $0xd0] sm:$0xff]
  %v1348 = vld [vmem:[%s7 + $0xd8] sm:$0xff]
  %v1349 = vld [vmem:[%s7 + $0xe0] sm:$0xff]
  %v1350 = vld [vmem:[%s7 + $0xe8] sm:$0xff]
  %v1351 = vld [vmem:[%s7 + $0xf0] sm:$0xff]
  %v1352 = vld [vmem:[%s7 + $0xf8] sm:$0xff]
  %v1353 = vld [vmem:[%s7 + $0x100] sm:$0xff]
  %v1354 = vld [vmem:[%s7 + $0x108] sm:$0xff]
  %v1355 = vld [vmem:[%s7 + $0x110] sm:$0xff]
  %v1356 = vld [vmem:[%s7 + $0x118] sm:$0xff]
  %v1357 = vld [vmem:[%s8] sm:$0x1]
  %v1358 = vrot.slane %v1305, 7
  %v1359 = vrot.slane %v1306, 7
  %v1360 = vrot.slane %v1307, 7
  %v1361 = vrot.slane %v1308, 7
  %v1362 = vrot.slane %v1309, 7
  %v1363 = vrot.slane %v1310, 7
  %v1364 = vrot.slane %v1311, 7
  %v1365 = vrot.slane %v1312, 7
  %v1366 = vrot.slane %v1313, 7
  %v1367 = vrot.slane %v1314, 7
  %v1368 = vrot.slane %v1315, 7
  %v1369 = vrot.slane %v1316, 7
  %v1370 = vrot.slane %v1317, 7
  %v1371 = vrot.slane %v1318, 7
  %v1372 = vrot.slane %v1319, 7
  %v1373 = vrot.slane %v1320, 7
  %v1374 = vsel %vm342, %v1372, %v1373
  %v1375 = vsel %vm342, %v1371, %v1372
  %v1376 = vsel %vm342, %v1370, %v1371
  %v1377 = vsel %vm342, %v1369, %v1370
  %v1378 = vsel %vm342, %v1368, %v1369
  %v1379 = vsel %vm342, %v1367, %v1368
  %v1380 = vsel %vm342, %v1366, %v1367
  %v1381 = vsel %vm342, %v1365, %v1366
  %v1382 = vsel %vm342, %v1364, %v1365
  %v1383 = vsel %vm342, %v1363, %v1364
  %v1384 = vsel %vm342, %v1362, %v1363
  %v1385 = vsel %vm342, %v1361, %v1362
  %v1386 = vsel %vm342, %v1360, %v1361
  %v1387 = vsel %vm342, %v1359, %v1360
  %v1388 = vsel %vm342, %v1358, %v1359
  %v1389 = vsel %vm342, %v1373, %v1358
  %v1390 = vrot.slane %v1305, 1
  %v1391 = vrot.slane %v1306, 1
  %v1392 = vrot.slane %v1307, 1
  %v1393 = vrot.slane %v1308, 1
  %v1394 = vrot.slane %v1309, 1
  %v1395 = vrot.slane %v1310, 1
  %v1396 = vrot.slane %v1311, 1
  %v1397 = vrot.slane %v1312, 1
  %v1398 = vrot.slane %v1313, 1
  %v1399 = vrot.slane %v1314, 1
  %v1400 = vrot.slane %v1315, 1
  %v1401 = vrot.slane %v1316, 1
  %v1402 = vrot.slane %v1317, 1
  %v1403 = vrot.slane %v1318, 1
  %v1404 = vrot.slane %v1319, 1
  %v1405 = vrot.slane %v1320, 1
  %v1406 = vsel %vm375, %v1404, %v1405
  %v1407 = vsel %vm375, %v1403, %v1404
  %v1408 = vsel %vm375, %v1402, %v1403
  %v1409 = vsel %vm375, %v1401, %v1402
  %v1410 = vsel %vm375, %v1400, %v1401
  %v1411 = vsel %vm375, %v1399, %v1400
  %v1412 = vsel %vm375, %v1398, %v1399
  %v1413 = vsel %vm375, %v1397, %v1398
  %v1414 = vsel %vm375, %v1396, %v1397
  %v1415 = vsel %vm375, %v1395, %v1396
  %v1416 = vsel %vm375, %v1394, %v1395
  %v1417 = vsel %vm375, %v1393, %v1394
  %v1418 = vsel %vm375, %v1392, %v1393
  %v1419 = vsel %vm375, %v1391, %v1392
  %v1420 = vsel %vm375, %v1390, %v1391
  %v1421 = vsel %vm375, %v1405, %v1390
  %1438 = vrot.lane.b32.xlu0 %v1320, 32
  %v1439 = vpop.permute.xlu0 %1438
  %1440 = vrot.lane.b32.xlu0 %v1305, 32
  %v1441 = vpop.permute.xlu0 %1440
  %1442 = vrot.lane.b32.xlu0 %v1306, 32
  %v1443 = vpop.permute.xlu0 %1442
  %1444 = vrot.lane.b32.xlu0 %v1307, 32
  %v1445 = vpop.permute.xlu0 %1444
  %1446 = vrot.lane.b32.xlu0 %v1308, 32
  %v1447 = vpop.permute.xlu0 %1446
  %1448 = vrot.lane.b32.xlu0 %v1309, 32
  %v1449 = vpop.permute.xlu0 %1448
  %1450 = vrot.lane.b32.xlu0 %v1310, 32
  %v1451 = vpop.permute.xlu0 %1450
  %1452 = vrot.lane.b32.xlu0 %v1311, 32
  %v1453 = vpop.permute.xlu0 %1452
  %1454 = vrot.lane.b32.xlu0 %v1312, 32
  %v1455 = vpop.permute.xlu0 %1454
  %1456 = vrot.lane.b32.xlu0 %v1313, 32
  %v1457 = vpop.permute.xlu0 %1456
  %1458 = vrot.lane.b32.xlu0 %v1314, 32
  %v1459 = vpop.permute.xlu0 %1458
  %1460 = vrot.lane.b32.xlu0 %v1315, 32
  %v1461 = vpop.permute.xlu0 %1460
  %1462 = vrot.lane.b32.xlu0 %v1316, 32
  %v1463 = vpop.permute.xlu0 %1462
  %1464 = vrot.lane.b32.xlu0 %v1317, 32
  %v1465 = vpop.permute.xlu0 %1464
  %1466 = vrot.lane.b32.xlu0 %v1318, 32
  %v1467 = vpop.permute.xlu0 %1466
  %1468 = vrot.lane.b32.xlu0 %v1319, 32
  %v1469 = vpop.permute.xlu0 %1468
  %1502 = vrot.lane.b32.xlu0 %v1421, 64
  %v1503 = vpop.permute.xlu0 %1502
  %1504 = vrot.lane.b32.xlu0 %v1420, 64
  %v1505 = vpop.permute.xlu0 %1504
  %1506 = vrot.lane.b32.xlu0 %v1419, 64
  %v1507 = vpop.permute.xlu0 %1506
  %1508 = vrot.lane.b32.xlu0 %v1418, 64
  %v1509 = vpop.permute.xlu0 %1508
  %1510 = vrot.lane.b32.xlu0 %v1417, 64
  %v1511 = vpop.permute.xlu0 %1510
  %1512 = vrot.lane.b32.xlu0 %v1416, 64
  %v1513 = vpop.permute.xlu0 %1512
  %1514 = vrot.lane.b32.xlu0 %v1415, 64
  %v1515 = vpop.permute.xlu0 %1514
  %1516 = vrot.lane.b32.xlu0 %v1414, 64
  %v1517 = vpop.permute.xlu0 %1516
  %1518 = vrot.lane.b32.xlu0 %v1413, 64
  %v1519 = vpop.permute.xlu0 %1518
  %1520 = vrot.lane.b32.xlu0 %v1412, 64
  %v1521 = vpop.permute.xlu0 %1520
  %1522 = vrot.lane.b32.xlu0 %v1411, 64
  %v1523 = vpop.permute.xlu0 %1522
  %1524 = vrot.lane.b32.xlu0 %v1410, 64
  %v1525 = vpop.permute.xlu0 %1524
  %1526 = vrot.lane.b32.xlu0 %v1409, 64
  %v1527 = vpop.permute.xlu0 %1526
  %1528 = vrot.lane.b32.xlu0 %v1408, 64
  %v1529 = vpop.permute.xlu0 %1528
  %1530 = vrot.lane.b32.xlu0 %v1407, 64
  %v1531 = vpop.permute.xlu0 %1530
  %1532 = vrot.lane.b32.xlu0 %v1406, 64
  %v1533 = vpop.permute.xlu0 %1532
  %1566 = vrot.lane.b32.xlu0 %v1389, 96
  %v1567 = vpop.permute.xlu0 %1566
  %1568 = vrot.lane.b32.xlu0 %v1388, 96
  %v1569 = vpop.permute.xlu0 %1568
  %1570 = vrot.lane.b32.xlu0 %v1387, 96
  %v1571 = vpop.permute.xlu0 %1570
  %1572 = vrot.lane.b32.xlu0 %v1386, 96
  %v1573 = vpop.permute.xlu0 %1572
  %1574 = vrot.lane.b32.xlu0 %v1385, 96
  %v1575 = vpop.permute.xlu0 %1574
  %1576 = vrot.lane.b32.xlu0 %v1384, 96
  %v1577 = vpop.permute.xlu0 %1576
  %1578 = vrot.lane.b32.xlu0 %v1383, 96
  %v1579 = vpop.permute.xlu0 %1578
  %1580 = vrot.lane.b32.xlu0 %v1382, 96
  %v1581 = vpop.permute.xlu0 %1580
  %1582 = vrot.lane.b32.xlu0 %v1381, 96
  %v1583 = vpop.permute.xlu0 %1582
  %1584 = vrot.lane.b32.xlu0 %v1380, 96
  %v1585 = vpop.permute.xlu0 %1584
  %1586 = vrot.lane.b32.xlu0 %v1379, 96
  %v1587 = vpop.permute.xlu0 %1586
  %1588 = vrot.lane.b32.xlu0 %v1378, 96
  %v1589 = vpop.permute.xlu0 %1588
  %1590 = vrot.lane.b32.xlu0 %v1377, 96
  %v1591 = vpop.permute.xlu0 %1590
  %1592 = vrot.lane.b32.xlu0 %v1376, 96
  %v1593 = vpop.permute.xlu0 %1592
  %1594 = vrot.lane.b32.xlu0 %v1375, 96
  %v1595 = vpop.permute.xlu0 %1594
  %1596 = vrot.lane.b32.xlu0 %v1374, 96
  %v1597 = vpop.permute.xlu0 %1596
  %1614 = vrot.lane.b32.xlu0 %v1420, 32
  %v1615 = vpop.permute.xlu0 %1614
  %1616 = vrot.lane.b32.xlu0 %v1419, 32
  %v1617 = vpop.permute.xlu0 %1616
  %1618 = vrot.lane.b32.xlu0 %v1418, 32
  %v1619 = vpop.permute.xlu0 %1618
  %1620 = vrot.lane.b32.xlu0 %v1417, 32
  %v1621 = vpop.permute.xlu0 %1620
  %1622 = vrot.lane.b32.xlu0 %v1416, 32
  %v1623 = vpop.permute.xlu0 %1622
  %1624 = vrot.lane.b32.xlu0 %v1415, 32
  %v1625 = vpop.permute.xlu0 %1624
  %1626 = vrot.lane.b32.xlu0 %v1414, 32
  %v1627 = vpop.permute.xlu0 %1626
  %1628 = vrot.lane.b32.xlu0 %v1413, 32
  %v1629 = vpop.permute.xlu0 %1628
  %1630 = vrot.lane.b32.xlu0 %v1412, 32
  %v1631 = vpop.permute.xlu0 %1630
  %1632 = vrot.lane.b32.xlu0 %v1411, 32
  %v1633 = vpop.permute.xlu0 %1632
  %1634 = vrot.lane.b32.xlu0 %v1410, 32
  %v1635 = vpop.permute.xlu0 %1634
  %1636 = vrot.lane.b32.xlu0 %v1409, 32
  %v1637 = vpop.permute.xlu0 %1636
  %1638 = vrot.lane.b32.xlu0 %v1408, 32
  %v1639 = vpop.permute.xlu0 %1638
  %1640 = vrot.lane.b32.xlu0 %v1407, 32
  %v1641 = vpop.permute.xlu0 %1640
  %1642 = vrot.lane.b32.xlu0 %v1406, 32
  %v1643 = vpop.permute.xlu0 %1642
  %1644 = vrot.lane.b32.xlu0 %v1421, 32
  %v1645 = vpop.permute.xlu0 %1644
  %1662 = vrot.lane.b32.xlu0 %v1388, 64
  %v1663 = vpop.permute.xlu0 %1662
  %1664 = vrot.lane.b32.xlu0 %v1387, 64
  %v1665 = vpop.permute.xlu0 %1664
  %1666 = vrot.lane.b32.xlu0 %v1386, 64
  %v1667 = vpop.permute.xlu0 %1666
  %1668 = vrot.lane.b32.xlu0 %v1385, 64
  %v1669 = vpop.permute.xlu0 %1668
  %1670 = vrot.lane.b32.xlu0 %v1384, 64
  %v1671 = vpop.permute.xlu0 %1670
  %1672 = vrot.lane.b32.xlu0 %v1383, 64
  %v1673 = vpop.permute.xlu0 %1672
  %1674 = vrot.lane.b32.xlu0 %v1382, 64
  %v1675 = vpop.permute.xlu0 %1674
  %1676 = vrot.lane.b32.xlu0 %v1381, 64
  %v1677 = vpop.permute.xlu0 %1676
  %1678 = vrot.lane.b32.xlu0 %v1380, 64
  %v1679 = vpop.permute.xlu0 %1678
  %1680 = vrot.lane.b32.xlu0 %v1379, 64
  %v1681 = vpop.permute.xlu0 %1680
  %1682 = vrot.lane.b32.xlu0 %v1378, 64
  %v1683 = vpop.permute.xlu0 %1682
  %1684 = vrot.lane.b32.xlu0 %v1377, 64
  %v1685 = vpop.permute.xlu0 %1684
  %1686 = vrot.lane.b32.xlu0 %v1376, 64
  %v1687 = vpop.permute.xlu0 %1686
  %1688 = vrot.lane.b32.xlu0 %v1375, 64
  %v1689 = vpop.permute.xlu0 %1688
  %1690 = vrot.lane.b32.xlu0 %v1374, 64
  %v1691 = vpop.permute.xlu0 %1690
  %1692 = vrot.lane.b32.xlu0 %v1389, 64
  %v1693 = vpop.permute.xlu0 %1692
  %1710 = vrot.lane.b32.xlu0 %v1306, 96
  %v1711 = vpop.permute.xlu0 %1710
  %1712 = vrot.lane.b32.xlu0 %v1307, 96
  %v1713 = vpop.permute.xlu0 %1712
  %1714 = vrot.lane.b32.xlu0 %v1308, 96
  %v1715 = vpop.permute.xlu0 %1714
  %1716 = vrot.lane.b32.xlu0 %v1309, 96
  %v1717 = vpop.permute.xlu0 %1716
  %1718 = vrot.lane.b32.xlu0 %v1310, 96
  %v1719 = vpop.permute.xlu0 %1718
  %1720 = vrot.lane.b32.xlu0 %v1311, 96
  %v1721 = vpop.permute.xlu0 %1720
  %1722 = vrot.lane.b32.xlu0 %v1312, 96
  %v1723 = vpop.permute.xlu0 %1722
  %1724 = vrot.lane.b32.xlu0 %v1313, 96
  %v1725 = vpop.permute.xlu0 %1724
  %1726 = vrot.lane.b32.xlu0 %v1314, 96
  %v1727 = vpop.permute.xlu0 %1726
  %1728 = vrot.lane.b32.xlu0 %v1315, 96
  %v1729 = vpop.permute.xlu0 %1728
  %1730 = vrot.lane.b32.xlu0 %v1316, 96
  %v1731 = vpop.permute.xlu0 %1730
  %1732 = vrot.lane.b32.xlu0 %v1317, 96
  %v1733 = vpop.permute.xlu0 %1732
  %1734 = vrot.lane.b32.xlu0 %v1318, 96
  %v1735 = vpop.permute.xlu0 %1734
  %1736 = vrot.lane.b32.xlu0 %v1319, 96
  %v1737 = vpop.permute.xlu0 %1736
  %1738 = vrot.lane.b32.xlu0 %v1320, 96
  %v1739 = vpop.permute.xlu0 %1738
  %1740 = vrot.lane.b32.xlu0 %v1305, 96
  %v1741 = vpop.permute.xlu0 %1740
  %v1758 = vsel %vm728, %v1374, %v1439
  %v1759 = vsel %vm728, %v1389, %v1441
  %v1760 = vsel %vm728, %v1388, %v1443
  %v1761 = vsel %vm728, %v1387, %v1445
  %v1762 = vsel %vm728, %v1386, %v1447
  %v1763 = vsel %vm728, %v1385, %v1449
  %v1764 = vsel %vm728, %v1384, %v1451
  %v1765 = vsel %vm728, %v1383, %v1453
  %v1766 = vsel %vm728, %v1382, %v1455
  %v1767 = vsel %vm728, %v1381, %v1457
  %v1768 = vsel %vm728, %v1380, %v1459
  %v1769 = vsel %vm728, %v1379, %v1461
  %v1770 = vsel %vm728, %v1378, %v1463
  %v1771 = vsel %vm728, %v1377, %v1465
  %v1772 = vsel %vm728, %v1376, %v1467
  %v1773 = vsel %vm728, %v1375, %v1469
  %v1774 = vsel %vm745, %v1758, %v1503
  %v1775 = vsel %vm745, %v1759, %v1505
  %v1776 = vsel %vm745, %v1760, %v1507
  %v1777 = vsel %vm745, %v1761, %v1509
  %v1778 = vsel %vm745, %v1762, %v1511
  %v1779 = vsel %vm745, %v1763, %v1513
  %v1780 = vsel %vm745, %v1764, %v1515
  %v1781 = vsel %vm745, %v1765, %v1517
  %v1782 = vsel %vm745, %v1766, %v1519
  %v1783 = vsel %vm745, %v1767, %v1521
  %v1784 = vsel %vm745, %v1768, %v1523
  %v1785 = vsel %vm745, %v1769, %v1525
  %v1786 = vsel %vm745, %v1770, %v1527
  %v1787 = vsel %vm745, %v1771, %v1529
  %v1788 = vsel %vm745, %v1772, %v1531
  %v1789 = vsel %vm745, %v1773, %v1533
  %v1790 = vsel %vm762, %v1774, %v1567
  %v1791 = vsel %vm762, %v1775, %v1569
  %v1792 = vsel %vm762, %v1776, %v1571
  %v1793 = vsel %vm762, %v1777, %v1573
  %v1794 = vsel %vm762, %v1778, %v1575
  %v1795 = vsel %vm762, %v1779, %v1577
  %v1796 = vsel %vm762, %v1780, %v1579
  %v1797 = vsel %vm762, %v1781, %v1581
  %v1798 = vsel %vm762, %v1782, %v1583
  %v1799 = vsel %vm762, %v1783, %v1585
  %v1800 = vsel %vm762, %v1784, %v1587
  %v1801 = vsel %vm762, %v1785, %v1589
  %v1802 = vsel %vm762, %v1786, %v1591
  %v1803 = vsel %vm762, %v1787, %v1593
  %v1804 = vsel %vm762, %v1788, %v1595
  %v1805 = vsel %vm762, %v1789, %v1597
  %v1806 = vsel %vm728, %v1305, %v1615
  %v1807 = vsel %vm728, %v1306, %v1617
  %v1808 = vsel %vm728, %v1307, %v1619
  %v1809 = vsel %vm728, %v1308, %v1621
  %v1810 = vsel %vm728, %v1309, %v1623
  %v1811 = vsel %vm728, %v1310, %v1625
  %v1812 = vsel %vm728, %v1311, %v1627
  %v1813 = vsel %vm728, %v1312, %v1629
  %v1814 = vsel %vm728, %v1313, %v1631
  %v1815 = vsel %vm728, %v1314, %v1633
  %v1816 = vsel %vm728, %v1315, %v1635
  %v1817 = vsel %vm728, %v1316, %v1637
  %v1818 = vsel %vm728, %v1317, %v1639
  %v1819 = vsel %vm728, %v1318, %v1641
  %v1820 = vsel %vm728, %v1319, %v1643
  %v1821 = vsel %vm728, %v1320, %v1645
  %v1822 = vsel %vm745, %v1806, %v1663
  %v1823 = vsel %vm745, %v1807, %v1665
  %v1824 = vsel %vm745, %v1808, %v1667
  %v1825 = vsel %vm745, %v1809, %v1669
  %v1826 = vsel %vm745, %v1810, %v1671
  %v1827 = vsel %vm745, %v1811, %v1673
  %v1828 = vsel %vm745, %v1812, %v1675
  %v1829 = vsel %vm745, %v1813, %v1677
  %v1830 = vsel %vm745, %v1814, %v1679
  %v1831 = vsel %vm745, %v1815, %v1681
  %v1832 = vsel %vm745, %v1816, %v1683
  %v1833 = vsel %vm745, %v1817, %v1685
  %v1834 = vsel %vm745, %v1818, %v1687
  %v1835 = vsel %vm745, %v1819, %v1689
  %v1836 = vsel %vm745, %v1820, %v1691
  %v1837 = vsel %vm745, %v1821, %v1693
  %v1838 = vsel %vm762, %v1822, %v1711
  %v1839 = vsel %vm762, %v1823, %v1713
  %v1840 = vsel %vm762, %v1824, %v1715
  %v1841 = vsel %vm762, %v1825, %v1717
  %v1842 = vsel %vm762, %v1826, %v1719
  %v1843 = vsel %vm762, %v1827, %v1721
  %v1844 = vsel %vm762, %v1828, %v1723
  %v1845 = vsel %vm762, %v1829, %v1725
  %v1846 = vsel %vm762, %v1830, %v1727
  %v1847 = vsel %vm762, %v1831, %v1729
  %v1848 = vsel %vm762, %v1832, %v1731
  %v1849 = vsel %vm762, %v1833, %v1733
  %v1850 = vsel %vm762, %v1834, %v1735
  %v1851 = vsel %vm762, %v1835, %v1737
  %v1852 = vsel %vm762, %v1836, %v1739
  %v1853 = vsel %vm762, %v1837, %v1741
  %v1854 = vmul.f32 %v1790, %v827
  %v1855 = vmul.f32 %v1838, %v828
  %v1856 = vmul.f32 %v1419, %v829
  %v1857 = vmul.f32 %v1791, %v830
  %v1858 = vmul.f32 %v1839, %v831
  %v1859 = vmul.f32 %v1418, %v832
  %v1860 = vmul.f32 %v1792, %v833
  %v1861 = vmul.f32 %v1840, %v834
  %v1862 = vmul.f32 %v1417, %v835
  %v1863 = vmul.f32 %v1793, %v836
  %v1864 = vmul.f32 %v1841, %v837
  %v1865 = vmul.f32 %v1416, %v838
  %v1866 = vmul.f32 %v1794, %v839
  %v1867 = vmul.f32 %v1842, %v840
  %v1868 = vmul.f32 %v1415, %v841
  %v1869 = vmul.f32 %v1795, %v842
  %v1870 = vmul.f32 %v1843, %v843
  %v1871 = vmul.f32 %v1414, %v844
  %v1872 = vmul.f32 %v1796, %v845
  %v1873 = vmul.f32 %v1844, %v846
  %v1874 = vmul.f32 %v1413, %v847
  %v1875 = vmul.f32 %v1797, %v848
  %v1876 = vmul.f32 %v1845, %v849
  %v1877 = vmul.f32 %v1412, %v850
  %v1878 = vmul.f32 %v1798, %v851
  %v1879 = vmul.f32 %v1846, %v852
  %v1880 = vmul.f32 %v1411, %v853
  %v1881 = vmul.f32 %v1799, %v854
  %v1882 = vmul.f32 %v1847, %v855
  %v1883 = vmul.f32 %v1410, %v856
  %v1884 = vmul.f32 %v1800, %v857
  %v1885 = vmul.f32 %v1848, %v858
  %v1886 = vmul.f32 %v1409, %v859
  %v1887 = vmul.f32 %v1801, %v860
  %v1888 = vmul.f32 %v1849, %v861
  %v1889 = vmul.f32 %v1408, %v862
  %v1890 = vmul.f32 %v1802, %v863
  %v1891 = vmul.f32 %v1850, %v864
  %v1892 = vmul.f32 %v1407, %v865
  %v1893 = vmul.f32 %v1803, %v866
  %v1894 = vmul.f32 %v1851, %v867
  %v1895 = vmul.f32 %v1406, %v868
  %v1896 = vmul.f32 %v1804, %v869
  %v1897 = vmul.f32 %v1852, %v870
  %v1898 = vmul.f32 %v1421, %v871
  %v1899 = vmul.f32 %v1805, %v872
  %v1900 = vmul.f32 %v1853, %v873
  %v1901 = vmul.f32 %v1420, %v874
  %v1903 = vlaneseq
  %v1904 = vshrl.u32 %v1903, 7
  %v1905 = vsub.s32 0, %v1904
  %v1906 = vrot.slane %v1357, %v1905
  %v1909 = vsel %vm728, %v1856, 0
  %v1912 = vsel %vm728, %v1859, 0
  %v1915 = vsel %vm728, %v1862, 0
  %v1918 = vsel %vm728, %v1865, 0
  %v1921 = vsel %vm728, %v1868, 0
  %v1924 = vsel %vm728, %v1871, 0
  %v1927 = vsel %vm728, %v1874, 0
  %v1930 = vsel %vm728, %v1877, 0
  %v1933 = vsel %vm728, %v1880, 0
  %v1936 = vsel %vm728, %v1883, 0
  %v1939 = vsel %vm728, %v1886, 0
  %v1942 = vsel %vm728, %v1889, 0
  %v1945 = vsel %vm728, %v1892, 0
  %v1948 = vsel %vm728, %v1895, 0
  %v1951 = vsel %vm728, %v1898, 0
  %v1954 = vsel %vm728, %v1901, 0
  %1956 = vmatprep.subr.mxu0 0.0
  %1957 = vmatpush1.msra.mxu0 %v1336
  %1958 = vmatprep.subr.mxu0 0.0
  %1959 = vmatpush1.msra.mxu0 %v1335
  %1960 = vmatprep.subr.mxu0 0.0
  %1961 = vmatpush1.msra.mxu0 %v1334
  %1962 = vmatprep.subr.mxu0 0.0
  %1963 = vmatpush1.msra.mxu0 %v1333
  %1964 = vmatprep.subr.mxu0 0.0
  %1965 = vmatpush1.msra.mxu0 %v1332
  %1966 = vmatprep.subr.mxu0 0.0
  %1967 = vmatpush1.msra.mxu0 %v1331
  %1968 = vmatprep.subr.mxu0 0.0
  %1969 = vmatpush1.msra.mxu0 %v1330
  %1970 = vmatprep.subr.mxu0 0.0
  %1971 = vmatpush1.msra.mxu0 %v1329
  %1972 = vmatprep.subr.mxu0 0.0
  %1973 = vmatpush1.msra.mxu0 %v1328
  %1974 = vmatprep.subr.mxu0 0.0
  %1975 = vmatpush1.msra.mxu0 %v1327
  %1976 = vmatprep.subr.mxu0 0.0
  %1977 = vmatpush1.msra.mxu0 %v1326
  %1978 = vmatprep.subr.mxu0 0.0
  %1979 = vmatpush1.msra.mxu0 %v1325
  %1980 = vmatprep.subr.mxu0 0.0
  %1981 = vmatpush1.msra.mxu0 %v1324
  %1982 = vmatprep.subr.mxu0 0.0
  %1983 = vmatpush1.msra.mxu0 %v1323
  %1984 = vmatprep.subr.mxu0 0.0
  %1985 = vmatpush1.msra.mxu0 %v1322
  %1986 = vmatprep.subr.mxu0 0.0
  %1987 = vmatpush1.msra.mxu0 %v1321
  %1988 = vmatprep.subr.mxu0 0.0
  %1989 = vmatpush2.msra.mxu0 %v1352
  %1990 = vmatprep.subr.mxu0 0.0
  %1991 = vmatpush2.msra.mxu0 %v1351
  %1992 = vmatprep.subr.mxu0 0.0
  %1993 = vmatpush2.msra.mxu0 %v1350
  %1994 = vmatprep.subr.mxu0 0.0
  %1995 = vmatpush2.msra.mxu0 %v1349
  %1996 = vmatprep.subr.mxu0 0.0
  %1997 = vmatpush2.msra.mxu0 %v1348
  %1998 = vmatprep.subr.mxu0 0.0
  %1999 = vmatpush2.msra.mxu0 %v1347
  %2000 = vmatprep.subr.mxu0 0.0
  %2001 = vmatpush2.msra.mxu0 %v1346
  %2002 = vmatprep.subr.mxu0 0.0
  %2003 = vmatpush2.msra.mxu0 %v1345
  %2004 = vmatprep.subr.mxu0 0.0
  %2005 = vmatpush2.msra.mxu0 %v1344
  %2006 = vmatprep.subr.mxu0 0.0
  %2007 = vmatpush2.msra.mxu0 %v1343
  %2008 = vmatprep.subr.mxu0 0.0
  %2009 = vmatpush2.msra.mxu0 %v1342
  %2010 = vmatprep.subr.mxu0 0.0
  %2011 = vmatpush2.msra.mxu0 %v1341
  %2012 = vmatprep.subr.mxu0 0.0
  %2013 = vmatpush2.msra.mxu0 %v1340
  %2014 = vmatprep.subr.mxu0 0.0
  %2015 = vmatpush2.msra.mxu0 %v1339
  %2016 = vmatprep.subr.mxu0 0.0
  %2017 = vmatpush2.msra.mxu0 %v1338
  %2018 = vmatprep.subr.mxu0 0.0
  %2019 = vmatpush2.msra.mxu0 %v1337
  %2020 = vmatprep.mubr.f32.mxu0 %v1855
  %2021 = vmatmul.mubr.f32.gmra.mxu0 %v1854
  %v2022 = vpop.f32.mrf.mxu0
  %v2023 = vadd.f32 %v1906, %v2022
  %v2024 = vpop.f32.mrf.mxu0
  %2025 = vmatprep.mubr.f32.mxu0 %v1858
  %2026 = vmatmul.mubr.f32.gmra.mxu0 %v1857
  %v2027 = vpop.f32.mrf.mxu0
  %v2028 = vadd.f32 %v1906, %v2027
  %v2029 = vpop.f32.mrf.mxu0
  %2030 = vmatprep.mubr.f32.mxu0 %v1861
  %2031 = vmatmul.mubr.f32.gmra.mxu0 %v1860
  %v2032 = vpop.f32.mrf.mxu0
  %v2033 = vadd.f32 %v1906, %v2032
  %v2034 = vpop.f32.mrf.mxu0
  %2035 = vmatprep.mubr.f32.mxu0 %v1864
  %2036 = vmatmul.mubr.f32.gmra.mxu0 %v1863
  %v2037 = vpop.f32.mrf.mxu0
  %v2038 = vadd.f32 %v1906, %v2037
  %v2039 = vpop.f32.mrf.mxu0
  %2040 = vmatprep.mubr.f32.mxu0 %v1867
  %2041 = vmatmul.mubr.f32.gmra.mxu0 %v1866
  %v2042 = vpop.f32.mrf.mxu0
  %v2043 = vadd.f32 %v1906, %v2042
  %v2044 = vpop.f32.mrf.mxu0
  %2045 = vmatprep.mubr.f32.mxu0 %v1870
  %2046 = vmatmul.mubr.f32.gmra.mxu0 %v1869
  %v2047 = vpop.f32.mrf.mxu0
  %v2048 = vadd.f32 %v1906, %v2047
  %v2049 = vpop.f32.mrf.mxu0
  %2050 = vmatprep.mubr.f32.mxu0 %v1873
  %2051 = vmatmul.mubr.f32.gmra.mxu0 %v1872
  %v2052 = vpop.f32.mrf.mxu0
  %v2053 = vadd.f32 %v1906, %v2052
  %v2054 = vpop.f32.mrf.mxu0
  %2055 = vmatprep.mubr.f32.mxu0 %v1876
  %2056 = vmatmul.mubr.f32.gmra.mxu0 %v1875
  %v2057 = vpop.f32.mrf.mxu0
  %v2058 = vadd.f32 %v1906, %v2057
  %v2059 = vpop.f32.mrf.mxu0
  %2060 = vmatprep.mubr.f32.mxu0 %v1879
  %2061 = vmatmul.mubr.f32.gmra.mxu0 %v1878
  %v2062 = vpop.f32.mrf.mxu0
  %v2063 = vadd.f32 %v1906, %v2062
  %v2064 = vpop.f32.mrf.mxu0
  %2065 = vmatprep.mubr.f32.mxu0 %v1882
  %2066 = vmatmul.mubr.f32.gmra.mxu0 %v1881
  %v2067 = vpop.f32.mrf.mxu0
  %v2068 = vadd.f32 %v1906, %v2067
  %v2069 = vpop.f32.mrf.mxu0
  %2070 = vmatprep.mubr.f32.mxu0 %v1885
  %2071 = vmatmul.mubr.f32.gmra.mxu0 %v1884
  %v2072 = vpop.f32.mrf.mxu0
  %v2073 = vadd.f32 %v1906, %v2072
  %v2074 = vpop.f32.mrf.mxu0
  %2075 = vmatprep.mubr.f32.mxu0 %v1888
  %2076 = vmatmul.mubr.f32.gmra.mxu0 %v1887
  %v2077 = vpop.f32.mrf.mxu0
  %v2078 = vadd.f32 %v1906, %v2077
  %v2079 = vpop.f32.mrf.mxu0
  %2080 = vmatprep.mubr.f32.mxu0 %v1891
  %2081 = vmatmul.mubr.f32.gmra.mxu0 %v1890
  %v2082 = vpop.f32.mrf.mxu0
  %v2083 = vadd.f32 %v1906, %v2082
  %v2084 = vpop.f32.mrf.mxu0
  %2085 = vmatprep.mubr.f32.mxu0 %v1894
  %2086 = vmatmul.mubr.f32.gmra.mxu0 %v1893
  %v2087 = vpop.f32.mrf.mxu0
  %v2088 = vadd.f32 %v1906, %v2087
  %v2089 = vpop.f32.mrf.mxu0
  %2090 = vmatprep.mubr.f32.mxu0 %v1897
  %2091 = vmatmul.mubr.f32.gmra.mxu0 %v1896
  %v2092 = vpop.f32.mrf.mxu0
  %v2093 = vadd.f32 %v1906, %v2092
  %v2094 = vpop.f32.mrf.mxu0
  %2095 = vmatprep.mubr.f32.mxu0 %v1900
  %2096 = vmatmul.mubr.f32.gmra.mxu0 %v1899
  %v2097 = vpop.f32.mrf.mxu0
  %v2098 = vadd.f32 %v1906, %v2097
  %v2099 = vpop.f32.mrf.mxu0
  %2100 = vdwg.mxu0
  %2101 = vmatprep.subr.mxu0 0.0
  %2102 = vmatpush1.msra.mxu0 0.0
  %2103 = vmatprep.subr.mxu0 0.0
  %2104 = vmatpush1.msra.mxu0 0.0
  %2105 = vmatprep.subr.mxu0 0.0
  %2106 = vmatpush1.msra.mxu0 0.0
  %2107 = vmatprep.subr.mxu0 0.0
  %2108 = vmatpush1.msra.mxu0 0.0
  %2109 = vmatprep.subr.mxu0 0.0
  %2110 = vmatpush1.msra.mxu0 0.0
  %2111 = vmatprep.subr.mxu0 0.0
  %2112 = vmatpush1.msra.mxu0 0.0
  %2113 = vmatprep.subr.mxu0 0.0
  %2114 = vmatpush1.msra.mxu0 0.0
  %2115 = vmatprep.subr.mxu0 0.0
  %2116 = vmatpush1.msra.mxu0 0.0
  %2117 = vmatprep.subr.mxu0 0.0
  %2118 = vmatpush1.msra.mxu0 0.0
  %2119 = vmatprep.subr.mxu0 0.0
  %2120 = vmatpush1.msra.mxu0 0.0
  %2121 = vmatprep.subr.mxu0 0.0
  %2122 = vmatpush1.msra.mxu0 0.0
  %2123 = vmatprep.subr.mxu0 0.0
  %2124 = vmatpush1.msra.mxu0 0.0
  %2125 = vmatprep.subr.mxu0 0.0
  %2126 = vmatpush1.msra.mxu0 %v1356
  %2127 = vmatprep.subr.mxu0 0.0
  %2128 = vmatpush1.msra.mxu0 %v1355
  %2129 = vmatprep.subr.mxu0 0.0
  %2130 = vmatpush1.msra.mxu0 %v1354
  %2131 = vmatprep.subr.mxu0 0.0
  %2132 = vmatpush1.msra.mxu0 %v1353
  %2133 = vmatprep.subr.mxu0 0.0
  %2134 = vmatpush2.msra.mxu0 0.0
  %2135 = vmatprep.subr.mxu0 0.0
  %2136 = vmatpush2.msra.mxu0 0.0
  %2137 = vmatprep.subr.mxu0 0.0
  %2138 = vmatpush2.msra.mxu0 0.0
  %2139 = vmatprep.subr.mxu0 0.0
  %2140 = vmatpush2.msra.mxu0 0.0
  %2141 = vmatprep.subr.mxu0 0.0
  %2142 = vmatpush2.msra.mxu0 0.0
  %2143 = vmatprep.subr.mxu0 0.0
  %2144 = vmatpush2.msra.mxu0 0.0
  %2145 = vmatprep.subr.mxu0 0.0
  %2146 = vmatpush2.msra.mxu0 0.0
  %2147 = vmatprep.subr.mxu0 0.0
  %2148 = vmatpush2.msra.mxu0 0.0
  %2149 = vmatprep.subr.mxu0 0.0
  %2150 = vmatpush2.msra.mxu0 0.0
  %2151 = vmatprep.subr.mxu0 0.0
  %2152 = vmatpush2.msra.mxu0 0.0
  %2153 = vmatprep.subr.mxu0 0.0
  %2154 = vmatpush2.msra.mxu0 0.0
  %2155 = vmatprep.subr.mxu0 0.0
  %2156 = vmatpush2.msra.mxu0 0.0
  %2157 = vmatprep.subr.mxu0 0.0
  %2158 = vmatpush2.msra.mxu0 0.0
  %2159 = vmatprep.subr.mxu0 0.0
  %2160 = vmatpush2.msra.mxu0 0.0
  %2161 = vmatprep.subr.mxu0 0.0
  %2162 = vmatpush2.msra.mxu0 0.0
  %2163 = vmatprep.subr.mxu0 0.0
  %2164 = vmatpush2.msra.mxu0 0.0
  %2165 = vmatprep.mubr.f32.mxu0 0.0
  %2166 = vmatmul.mubr.f32.gmra.mxu0 %v1909
  %v2167 = vpop.f32.mrf.mxu0
  %v2168 = vadd.f32 %v2023, %v2167
  %v2169 = vpop.f32.mrf.mxu0
  %2170 = vmatprep.mubr.f32.mxu0 0.0
  %2171 = vmatmul.mubr.f32.gmra.mxu0 %v1912
  %v2172 = vpop.f32.mrf.mxu0
  %v2173 = vadd.f32 %v2028, %v2172
  %v2174 = vpop.f32.mrf.mxu0
  %2175 = vmatprep.mubr.f32.mxu0 0.0
  %2176 = vmatmul.mubr.f32.gmra.mxu0 %v1915
  %v2177 = vpop.f32.mrf.mxu0
  %v2178 = vadd.f32 %v2033, %v2177
  %v2179 = vpop.f32.mrf.mxu0
  %2180 = vmatprep.mubr.f32.mxu0 0.0
  %2181 = vmatmul.mubr.f32.gmra.mxu0 %v1918
  %v2182 = vpop.f32.mrf.mxu0
  %v2183 = vadd.f32 %v2038, %v2182
  %v2184 = vpop.f32.mrf.mxu0
  %2185 = vmatprep.mubr.f32.mxu0 0.0
  %2186 = vmatmul.mubr.f32.gmra.mxu0 %v1921
  %v2187 = vpop.f32.mrf.mxu0
  %v2188 = vadd.f32 %v2043, %v2187
  %v2189 = vpop.f32.mrf.mxu0
  %2190 = vmatprep.mubr.f32.mxu0 0.0
  %2191 = vmatmul.mubr.f32.gmra.mxu0 %v1924
  %v2192 = vpop.f32.mrf.mxu0
  %v2193 = vadd.f32 %v2048, %v2192
  %v2194 = vpop.f32.mrf.mxu0
  %2195 = vmatprep.mubr.f32.mxu0 0.0
  %2196 = vmatmul.mubr.f32.gmra.mxu0 %v1927
  %v2197 = vpop.f32.mrf.mxu0
  %v2198 = vadd.f32 %v2053, %v2197
  %v2199 = vpop.f32.mrf.mxu0
  %2200 = vmatprep.mubr.f32.mxu0 0.0
  %2201 = vmatmul.mubr.f32.gmra.mxu0 %v1930
  %v2202 = vpop.f32.mrf.mxu0
  %v2203 = vadd.f32 %v2058, %v2202
  %v2204 = vpop.f32.mrf.mxu0
  %2205 = vmatprep.mubr.f32.mxu0 0.0
  %2206 = vmatmul.mubr.f32.gmra.mxu0 %v1933
  %v2207 = vpop.f32.mrf.mxu0
  %v2208 = vadd.f32 %v2063, %v2207
  %v2209 = vpop.f32.mrf.mxu0
  %2210 = vmatprep.mubr.f32.mxu0 0.0
  %2211 = vmatmul.mubr.f32.gmra.mxu0 %v1936
  %v2212 = vpop.f32.mrf.mxu0
  %v2213 = vadd.f32 %v2068, %v2212
  %v2214 = vpop.f32.mrf.mxu0
  %2215 = vmatprep.mubr.f32.mxu0 0.0
  %2216 = vmatmul.mubr.f32.gmra.mxu0 %v1939
  %v2217 = vpop.f32.mrf.mxu0
  %v2218 = vadd.f32 %v2073, %v2217
  %v2219 = vpop.f32.mrf.mxu0
  %2220 = vmatprep.mubr.f32.mxu0 0.0
  %2221 = vmatmul.mubr.f32.gmra.mxu0 %v1942
  %v2222 = vpop.f32.mrf.mxu0
  %v2223 = vadd.f32 %v2078, %v2222
  %v2224 = vpop.f32.mrf.mxu0
  %2225 = vmatprep.mubr.f32.mxu0 0.0
  %2226 = vmatmul.mubr.f32.gmra.mxu0 %v1945
  %v2227 = vpop.f32.mrf.mxu0
  %v2228 = vadd.f32 %v2083, %v2227
  %v2229 = vpop.f32.mrf.mxu0
  %2230 = vmatprep.mubr.f32.mxu0 0.0
  %2231 = vmatmul.mubr.f32.gmra.mxu0 %v1948
  %v2232 = vpop.f32.mrf.mxu0
  %v2233 = vadd.f32 %v2088, %v2232
  %v2234 = vpop.f32.mrf.mxu0
  %2235 = vmatprep.mubr.f32.mxu0 0.0
  %2236 = vmatmul.mubr.f32.gmra.mxu0 %v1951
  %v2237 = vpop.f32.mrf.mxu0
  %v2238 = vadd.f32 %v2093, %v2237
  %v2239 = vpop.f32.mrf.mxu0
  %2240 = vmatprep.mubr.f32.mxu0 0.0
  %2241 = vmatmul.mubr.f32.gmra.mxu0 %v1954
  %v2242 = vpop.f32.mrf.mxu0
  %v2243 = vadd.f32 %v2098, %v2242
  %v2244 = vpop.f32.mrf.mxu0
  %2245 = vdwg.mxu0
  %v2246 = vsel %vm728, %v2168, 0.0
  %v2247 = vsel %vm728, %v2173, 0.0
  %v2248 = vadd.f32 %v2246, %v2247
  %v2249 = vsel %vm728, %v2178, 0.0
  %v2250 = vadd.f32 %v2248, %v2249
  %v2251 = vsel %vm728, %v2183, 0.0
  %v2252 = vadd.f32 %v2250, %v2251
  %v2253 = vsel %vm728, %v2188, 0.0
  %v2254 = vadd.f32 %v2252, %v2253
  %v2255 = vsel %vm728, %v2193, 0.0
  %v2256 = vadd.f32 %v2254, %v2255
  %v2257 = vsel %vm728, %v2198, 0.0
  %v2258 = vadd.f32 %v2256, %v2257
  %v2259 = vsel %vm728, %v2203, 0.0
  %v2260 = vadd.f32 %v2258, %v2259
  %v2261 = vrot.slane %v2260, 4
  %v2262 = vadd.f32 %v2260, %v2261
  %v2263 = vrot.slane %v2262, 2
  %v2264 = vadd.f32 %v2262, %v2263
  %v2265 = vrot.slane %v2264, 1
  %v2266 = vadd.f32 %v2264, %v2265
  %v2267 = vsel %vm728, %v2208, 0.0
  %v2268 = vsel %vm728, %v2213, 0.0
  %v2269 = vadd.f32 %v2267, %v2268
  %v2270 = vsel %vm728, %v2218, 0.0
  %v2271 = vadd.f32 %v2269, %v2270
  %v2272 = vsel %vm728, %v2223, 0.0
  %v2273 = vadd.f32 %v2271, %v2272
  %v2274 = vsel %vm728, %v2228, 0.0
  %v2275 = vadd.f32 %v2273, %v2274
  %v2276 = vsel %vm728, %v2233, 0.0
  %v2277 = vadd.f32 %v2275, %v2276
  %v2278 = vsel %vm728, %v2238, 0.0
  %v2279 = vadd.f32 %v2277, %v2278
  %v2280 = vsel %vm728, %v2243, 0.0
  %v2281 = vadd.f32 %v2279, %v2280
  %v2282 = vrot.slane %v2281, 4
  %v2283 = vadd.f32 %v2281, %v2282
  %v2284 = vrot.slane %v2283, 2
  %v2285 = vadd.f32 %v2283, %v2284
  %v2286 = vrot.slane %v2285, 1
  %v2287 = vadd.f32 %v2285, %v2286
  %v2288 = vmul.f32 %v2266, 0.015625
  %v2289 = vmul.f32 %v2287, 0.015625
  %v2290 = vld [vmem:[%s10] sm:$0xff]
  %v2291 = vld [vmem:[%s10 + $0x8] sm:$0xff]
  %v2292 = vld [vmem:[%s10 + $0x10] sm:$0xff]
  %v2293 = vld [vmem:[%s10 + $0x18] sm:$0xff]
  %vm2296 = vcmask 1041409
  %v2297 = vsel %vm2296, %v2289, %v2288
  %v2298 = vsel %vm728, %v2297, 0
  %2300 = vmatprep.subr.mxu0 0.0
  %2301 = vmatpush1.msra.mxu0 0.0
  %2302 = vmatprep.subr.mxu0 0.0
  %2303 = vmatpush1.msra.mxu0 0.0
  %2304 = vmatprep.subr.mxu0 0.0
  %2305 = vmatpush1.msra.mxu0 0.0
  %2306 = vmatprep.subr.mxu0 0.0
  %2307 = vmatpush1.msra.mxu0 0.0
  %2308 = vmatprep.subr.mxu0 0.0
  %2309 = vmatpush1.msra.mxu0 0.0
  %2310 = vmatprep.subr.mxu0 0.0
  %2311 = vmatpush1.msra.mxu0 0.0
  %2312 = vmatprep.subr.mxu0 0.0
  %2313 = vmatpush1.msra.mxu0 0.0
  %2314 = vmatprep.subr.mxu0 0.0
  %2315 = vmatpush1.msra.mxu0 0.0
  %2316 = vmatprep.subr.mxu0 0.0
  %2317 = vmatpush1.msra.mxu0 0.0
  %2318 = vmatprep.subr.mxu0 0.0
  %2319 = vmatpush1.msra.mxu0 0.0
  %2320 = vmatprep.subr.mxu0 0.0
  %2321 = vmatpush1.msra.mxu0 0.0
  %2322 = vmatprep.subr.mxu0 0.0
  %2323 = vmatpush1.msra.mxu0 0.0
  %2324 = vmatprep.subr.mxu0 0.0
  %2325 = vmatpush1.msra.mxu0 %v2293
  %2326 = vmatprep.subr.mxu0 0.0
  %2327 = vmatpush1.msra.mxu0 %v2292
  %2328 = vmatprep.subr.mxu0 0.0
  %2329 = vmatpush1.msra.mxu0 %v2291
  %2330 = vmatprep.subr.mxu0 0.0
  %2331 = vmatpush1.msra.mxu0 %v2290
  %2332 = vmatprep.subr.mxu0 0.0
  %2333 = vmatpush2.msra.mxu0 0.0
  %2334 = vmatprep.subr.mxu0 0.0
  %2335 = vmatpush2.msra.mxu0 0.0
  %2336 = vmatprep.subr.mxu0 0.0
  %2337 = vmatpush2.msra.mxu0 0.0
  %2338 = vmatprep.subr.mxu0 0.0
  %2339 = vmatpush2.msra.mxu0 0.0
  %2340 = vmatprep.subr.mxu0 0.0
  %2341 = vmatpush2.msra.mxu0 0.0
  %2342 = vmatprep.subr.mxu0 0.0
  %2343 = vmatpush2.msra.mxu0 0.0
  %2344 = vmatprep.subr.mxu0 0.0
  %2345 = vmatpush2.msra.mxu0 0.0
  %2346 = vmatprep.subr.mxu0 0.0
  %2347 = vmatpush2.msra.mxu0 0.0
  %2348 = vmatprep.subr.mxu0 0.0
  %2349 = vmatpush2.msra.mxu0 0.0
  %2350 = vmatprep.subr.mxu0 0.0
  %2351 = vmatpush2.msra.mxu0 0.0
  %2352 = vmatprep.subr.mxu0 0.0
  %2353 = vmatpush2.msra.mxu0 0.0
  %2354 = vmatprep.subr.mxu0 0.0
  %2355 = vmatpush2.msra.mxu0 0.0
  %2356 = vmatprep.subr.mxu0 0.0
  %2357 = vmatpush2.msra.mxu0 0.0
  %2358 = vmatprep.subr.mxu0 0.0
  %2359 = vmatpush2.msra.mxu0 0.0
  %2360 = vmatprep.subr.mxu0 0.0
  %2361 = vmatpush2.msra.mxu0 0.0
  %2362 = vmatprep.subr.mxu0 0.0
  %2363 = vmatpush2.msra.mxu0 0.0
  %2364 = vmatprep.mubr.f32.mxu0 0.0
  %2365 = vmatmul.mubr.f32.gmra.mxu0 %v2298
  %v2366 = vpop.f32.mrf.mxu0
  %v2367 = vadd.f32 0.0, %v2366
  %v2368 = vpop.f32.mrf.mxu0
  %2369 = vdwg.mxu0
  %v2370 = vmax.f32 %v2367, 0.0
  %v2371 = vld [vmem:[%s11] sm:$0x3]
  %vm2372 = vcmask 15360
  %v2374 = vsel %vm2372, %v2370, 0
  %vm2376 = vcmask 1041408
  %v2378 = vsel %vm2376, %v2371, 0
  %2380 = vmatprep.subr.mxu0 0.0
  %2381 = vmatpush1.msra.mxu0 0.0
  %2382 = vmatprep.subr.mxu0 0.0
  %2383 = vmatpush1.msra.mxu0 0.0
  %2384 = vmatprep.subr.mxu0 0.0
  %2385 = vmatpush1.msra.mxu0 0.0
  %2386 = vmatprep.subr.mxu0 0.0
  %2387 = vmatpush1.msra.mxu0 0.0
  %2388 = vmatprep.subr.mxu0 0.0
  %2389 = vmatpush1.msra.mxu0 0.0
  %2390 = vmatprep.subr.mxu0 0.0
  %2391 = vmatpush1.msra.mxu0 0.0
  %2392 = vmatprep.subr.mxu0 0.0
  %2393 = vmatpush1.msra.mxu0 0.0
  %2394 = vmatprep.subr.mxu0 0.0
  %2395 = vmatpush1.msra.mxu0 0.0
  %2396 = vmatprep.subr.mxu0 0.0
  %2397 = vmatpush1.msra.mxu0 0.0
  %2398 = vmatprep.subr.mxu0 0.0
  %2399 = vmatpush1.msra.mxu0 0.0
  %2400 = vmatprep.subr.mxu0 0.0
  %2401 = vmatpush1.msra.mxu0 0.0
  %2402 = vmatprep.subr.mxu0 0.0
  %2403 = vmatpush1.msra.mxu0 0.0
  %2404 = vmatprep.subr.mxu0 0.0
  %2405 = vmatpush1.msra.mxu0 0.0
  %2406 = vmatprep.subr.mxu0 0.0
  %2407 = vmatpush1.msra.mxu0 0.0
  %2408 = vmatprep.subr.mxu0 0.0
  %2409 = vmatpush1.msra.mxu0 0.0
  %2410 = vmatprep.subr.mxu0 0.0
  %2411 = vmatpush1.msra.mxu0 %v2378
  %2412 = vmatprep.subr.mxu0 0.0
  %2413 = vmatpush2.msra.mxu0 0.0
  %2414 = vmatprep.subr.mxu0 0.0
  %2415 = vmatpush2.msra.mxu0 0.0
  %2416 = vmatprep.subr.mxu0 0.0
  %2417 = vmatpush2.msra.mxu0 0.0
  %2418 = vmatprep.subr.mxu0 0.0
  %2419 = vmatpush2.msra.mxu0 0.0
  %2420 = vmatprep.subr.mxu0 0.0
  %2421 = vmatpush2.msra.mxu0 0.0
  %2422 = vmatprep.subr.mxu0 0.0
  %2423 = vmatpush2.msra.mxu0 0.0
  %2424 = vmatprep.subr.mxu0 0.0
  %2425 = vmatpush2.msra.mxu0 0.0
  %2426 = vmatprep.subr.mxu0 0.0
  %2427 = vmatpush2.msra.mxu0 0.0
  %2428 = vmatprep.subr.mxu0 0.0
  %2429 = vmatpush2.msra.mxu0 0.0
  %2430 = vmatprep.subr.mxu0 0.0
  %2431 = vmatpush2.msra.mxu0 0.0
  %2432 = vmatprep.subr.mxu0 0.0
  %2433 = vmatpush2.msra.mxu0 0.0
  %2434 = vmatprep.subr.mxu0 0.0
  %2435 = vmatpush2.msra.mxu0 0.0
  %2436 = vmatprep.subr.mxu0 0.0
  %2437 = vmatpush2.msra.mxu0 0.0
  %2438 = vmatprep.subr.mxu0 0.0
  %2439 = vmatpush2.msra.mxu0 0.0
  %2440 = vmatprep.subr.mxu0 0.0
  %2441 = vmatpush2.msra.mxu0 0.0
  %2442 = vmatprep.subr.mxu0 0.0
  %2443 = vmatpush2.msra.mxu0 0.0
  %2444 = vmatprep.mubr.f32.mxu0 0.0
  %2445 = vmatmul.mubr.f32.gmra.mxu0 %v2374
  %v2446 = vpop.f32.mrf.mxu0
  %v2447 = vadd.f32 0.0, %v2446
  %v2448 = vpop.f32.mrf.mxu0
  %2449 = vdwg.mxu0
  %v2450 = vxor.u32 %v2447, 2147483648
  %v2451 = vmul.f32 %v2450, 1.442695
  %v2452 = vpow.pop %v2451
  %v2453 = vadd.f32 %v2452, 1.0
  %v2454 = vrcp.pop %v2453
  %v2455 = vmul.f32 1.0, %v2454
  %v2458 = vunpack.c.l.s4 1966171168
  %v2459 = vunpack.c.0.s8 %v2458
  %v2460 = vlaneseq
  %v2461 = vshrl.u32 %v2460, 7
  %v2462 = vsub.s32 %v2459, %v2461
  %v2463 = vrot.slane %v2455, %v2462
  %v2464 = vcombine.high %v2463, %v2463
  %v2466 = vunpack.c.l.s4 1966171168
  %v2467 = vunpack.c.0.s8 %v2466
  %v2468 = vlaneseq
  %v2469 = vshrl.u32 %v2468, 7
  %v2470 = vsub.s32 %v2467, %v2469
  %v2471 = vrot.slane %v2463, %v2470
  %v2473 = vunpack.c.l.s4 1966171168
  %v2474 = vunpack.c.0.s8 %v2473
  %v2475 = vlaneseq
  %v2476 = vshrl.u32 %v2475, 7
  %v2477 = vsub.s32 %v2474, %v2476
  %v2478 = vrot.slane %v2464, %v2477
  %v2479 = vlaneseq
  %v2480 = vshrl.u32 %v2479, 7
  %v2481 = vsub.s32 0, %v2480
  %v2482 = vrot.slane %v2471, %v2481
  %v2483 = vlaneseq
  %v2484 = vshrl.u32 %v2483, 7
  %v2485 = vsub.s32 0, %v2484
  %v2486 = vrot.slane %v2478, %v2485
  %v2489 = vmul.f32 %v2168, %v2482
  %v2490 = vmul.f32 %v2173, %v2482
  %v2491 = vmul.f32 %v2178, %v2482
  %v2492 = vmul.f32 %v2183, %v2482
  %v2493 = vmul.f32 %v2188, %v2482
  %v2494 = vmul.f32 %v2193, %v2482
  %v2495 = vmul.f32 %v2198, %v2482
  %v2496 = vmul.f32 %v2203, %v2482
  %v2497 = vmul.f32 %v2208, %v2486
  %v2498 = vmul.f32 %v2213, %v2486
  %v2499 = vmul.f32 %v2218, %v2486
  %v2500 = vmul.f32 %v2223, %v2486
  %v2501 = vmul.f32 %v2228, %v2486
  %v2502 = vmul.f32 %v2233, %v2486
  %v2503 = vmul.f32 %v2238, %v2486
  %v2504 = vmul.f32 %v2243, %v2486
  %v2505 = vadd.f32 %v2489, %v270
  %v2506 = vadd.f32 %v2490, %v271
  %v2507 = vadd.f32 %v2491, %v272
  %v2508 = vadd.f32 %v2492, %v273
  %v2509 = vadd.f32 %v2493, %v274
  %v2510 = vadd.f32 %v2494, %v275
  %v2511 = vadd.f32 %v2495, %v276
  %v2512 = vadd.f32 %v2496, %v277
  %v2513 = vadd.f32 %v2497, %v278
  %v2514 = vadd.f32 %v2498, %v279
  %v2515 = vadd.f32 %v2499, %v280
  %v2516 = vadd.f32 %v2500, %v281
  %v2517 = vadd.f32 %v2501, %v282
  %v2518 = vadd.f32 %v2502, %v283
  %v2519 = vadd.f32 %v2503, %v284
  %v2520 = vadd.f32 %v2504, %v285
  %vm2521 = vcmp.gt.f32.partialorder %v2505, 0.0
  %vm2522 = vcmp.gt.f32.partialorder %v2506, 0.0
  %vm2523 = vcmp.gt.f32.partialorder %v2507, 0.0
  %vm2524 = vcmp.gt.f32.partialorder %v2508, 0.0
  %vm2525 = vcmp.gt.f32.partialorder %v2509, 0.0
  %vm2526 = vcmp.gt.f32.partialorder %v2510, 0.0
  %vm2527 = vcmp.gt.f32.partialorder %v2511, 0.0
  %vm2528 = vcmp.gt.f32.partialorder %v2512, 0.0
  %vm2529 = vcmp.gt.f32.partialorder %v2513, 0.0
  %vm2530 = vcmp.gt.f32.partialorder %v2514, 0.0
  %vm2531 = vcmp.gt.f32.partialorder %v2515, 0.0
  %vm2532 = vcmp.gt.f32.partialorder %v2516, 0.0
  %vm2533 = vcmp.gt.f32.partialorder %v2517, 0.0
  %vm2534 = vcmp.gt.f32.partialorder %v2518, 0.0
  %vm2535 = vcmp.gt.f32.partialorder %v2519, 0.0
  %vm2536 = vcmp.gt.f32.partialorder %v2520, 0.0
  %v2537 = vmul.f32 %v1287, %v2505
  %v2538 = vmul.f32 %v1287, %v2506
  %v2539 = vmul.f32 %v1287, %v2507
  %v2540 = vmul.f32 %v1287, %v2508
  %v2541 = vmul.f32 %v1287, %v2509
  %v2542 = vmul.f32 %v1287, %v2510
  %v2543 = vmul.f32 %v1287, %v2511
  %v2544 = vmul.f32 %v1287, %v2512
  %v2545 = vmul.f32 %v1287, %v2513
  %v2546 = vmul.f32 %v1287, %v2514
  %v2547 = vmul.f32 %v1287, %v2515
  %v2548 = vmul.f32 %v1287, %v2516
  %v2549 = vmul.f32 %v1287, %v2517
  %v2550 = vmul.f32 %v1287, %v2518
  %v2551 = vmul.f32 %v1287, %v2519
  %v2552 = vmul.f32 %v1287, %v2520
  %v2553 = vsel %vm2521, %v2505, %v2537
  %v2554 = vsel %vm2522, %v2506, %v2538
  %v2555 = vsel %vm2523, %v2507, %v2539
  %v2556 = vsel %vm2524, %v2508, %v2540
  %v2557 = vsel %vm2525, %v2509, %v2541
  %v2558 = vsel %vm2526, %v2510, %v2542
  %v2559 = vsel %vm2527, %v2511, %v2543
  %v2560 = vsel %vm2528, %v2512, %v2544
  %v2561 = vsel %vm2529, %v2513, %v2545
  %v2562 = vsel %vm2530, %v2514, %v2546
  %v2563 = vsel %vm2531, %v2515, %v2547
  %v2564 = vsel %vm2532, %v2516, %v2548
  %v2565 = vsel %vm2533, %v2517, %v2549
  %v2566 = vsel %vm2534, %v2518, %v2550
  %v2567 = vsel %vm2535, %v2519, %v2551
  %v2568 = vsel %vm2536, %v2520, %v2552
  %s2569 = scalar_lea.vmem %s9, 1
  %v2570 = vld [vmem:[%s2569] sm:$0x1]
  %s2571 = scalar_lea.vmem %s5, 288
  %v2572 = vld [vmem:[%s2571] sm:$0xff]
  %v2573 = vld [vmem:[%s2571 + $0x8] sm:$0xff]
  %v2574 = vld [vmem:[%s2571 + $0x10] sm:$0xff]
  %v2575 = vld [vmem:[%s2571 + $0x18] sm:$0xff]
  %v2576 = vld [vmem:[%s2571 + $0x20] sm:$0xff]
  %v2577 = vld [vmem:[%s2571 + $0x28] sm:$0xff]
  %v2578 = vld [vmem:[%s2571 + $0x30] sm:$0xff]
  %v2579 = vld [vmem:[%s2571 + $0x38] sm:$0xff]
  %v2580 = vld [vmem:[%s2571 + $0x40] sm:$0xff]
  %v2581 = vld [vmem:[%s2571 + $0x48] sm:$0xff]
  %v2582 = vld [vmem:[%s2571 + $0x50] sm:$0xff]
  %v2583 = vld [vmem:[%s2571 + $0x58] sm:$0xff]
  %v2584 = vld [vmem:[%s2571 + $0x60] sm:$0xff]
  %v2585 = vld [vmem:[%s2571 + $0x68] sm:$0xff]
  %v2586 = vld [vmem:[%s2571 + $0x70] sm:$0xff]
  %v2587 = vld [vmem:[%s2571 + $0x78] sm:$0xff]
  %v2588 = vld [vmem:[%s2571 + $0x80] sm:$0xff]
  %v2589 = vld [vmem:[%s2571 + $0x88] sm:$0xff]
  %v2590 = vld [vmem:[%s2571 + $0x90] sm:$0xff]
  %v2591 = vld [vmem:[%s2571 + $0x98] sm:$0xff]
  %v2592 = vld [vmem:[%s2571 + $0xa0] sm:$0xff]
  %v2593 = vld [vmem:[%s2571 + $0xa8] sm:$0xff]
  %v2594 = vld [vmem:[%s2571 + $0xb0] sm:$0xff]
  %v2595 = vld [vmem:[%s2571 + $0xb8] sm:$0xff]
  %v2596 = vld [vmem:[%s2571 + $0xc0] sm:$0xff]
  %v2597 = vld [vmem:[%s2571 + $0xc8] sm:$0xff]
  %v2598 = vld [vmem:[%s2571 + $0xd0] sm:$0xff]
  %v2599 = vld [vmem:[%s2571 + $0xd8] sm:$0xff]
  %v2600 = vld [vmem:[%s2571 + $0xe0] sm:$0xff]
  %v2601 = vld [vmem:[%s2571 + $0xe8] sm:$0xff]
  %v2602 = vld [vmem:[%s2571 + $0xf0] sm:$0xff]
  %v2603 = vld [vmem:[%s2571 + $0xf8] sm:$0xff]
  %v2604 = vld [vmem:[%s2571 + $0x100] sm:$0xff]
  %v2605 = vld [vmem:[%s2571 + $0x108] sm:$0xff]
  %v2606 = vld [vmem:[%s2571 + $0x110] sm:$0xff]
  %v2607 = vld [vmem:[%s2571 + $0x118] sm:$0xff]
  %s2608 = scalar_lea.vmem %s6, 1
  %v2609 = vld [vmem:[%s2608] sm:$0x1]
  %v2610 = vrot.slane %v2553, 7
  %v2611 = vrot.slane %v2554, 7
  %v2612 = vrot.slane %v2555, 7
  %v2613 = vrot.slane %v2556, 7
  %v2614 = vrot.slane %v2557, 7
  %v2615 = vrot.slane %v2558, 7
  %v2616 = vrot.slane %v2559, 7
  %v2617 = vrot.slane %v2560, 7
  %v2618 = vrot.slane %v2561, 7
  %v2619 = vrot.slane %v2562, 7
  %v2620 = vrot.slane %v2563, 7
  %v2621 = vrot.slane %v2564, 7
  %v2622 = vrot.slane %v2565, 7
  %v2623 = vrot.slane %v2566, 7
  %v2624 = vrot.slane %v2567, 7
  %v2625 = vrot.slane %v2568, 7
  %v2626 = vsel %vm342, %v2624, %v2625
  %v2627 = vsel %vm342, %v2623, %v2624
  %v2628 = vsel %vm342, %v2622, %v2623
  %v2629 = vsel %vm342, %v2621, %v2622
  %v2630 = vsel %vm342, %v2620, %v2621
  %v2631 = vsel %vm342, %v2619, %v2620
  %v2632 = vsel %vm342, %v2618, %v2619
  %v2633 = vsel %vm342, %v2617, %v2618
  %v2634 = vsel %vm342, %v2616, %v2617
  %v2635 = vsel %vm342, %v2615, %v2616
  %v2636 = vsel %vm342, %v2614, %v2615
  %v2637 = vsel %vm342, %v2613, %v2614
  %v2638 = vsel %vm342, %v2612, %v2613
  %v2639 = vsel %vm342, %v2611, %v2612
  %v2640 = vsel %vm342, %v2610, %v2611
  %v2641 = vsel %vm342, %v2625, %v2610
  %v2642 = vrot.slane %v2553, 1
  %v2643 = vrot.slane %v2554, 1
  %v2644 = vrot.slane %v2555, 1
  %v2645 = vrot.slane %v2556, 1
  %v2646 = vrot.slane %v2557, 1
  %v2647 = vrot.slane %v2558, 1
  %v2648 = vrot.slane %v2559, 1
  %v2649 = vrot.slane %v2560, 1
  %v2650 = vrot.slane %v2561, 1
  %v2651 = vrot.slane %v2562, 1
  %v2652 = vrot.slane %v2563, 1
  %v2653 = vrot.slane %v2564, 1
  %v2654 = vrot.slane %v2565, 1
  %v2655 = vrot.slane %v2566, 1
  %v2656 = vrot.slane %v2567, 1
  %v2657 = vrot.slane %v2568, 1
  %v2658 = vsel %vm375, %v2656, %v2657
  %v2659 = vsel %vm375, %v2655, %v2656
  %v2660 = vsel %vm375, %v2654, %v2655
  %v2661 = vsel %vm375, %v2653, %v2654
  %v2662 = vsel %vm375, %v2652, %v2653
  %v2663 = vsel %vm375, %v2651, %v2652
  %v2664 = vsel %vm375, %v2650, %v2651
  %v2665 = vsel %vm375, %v2649, %v2650
  %v2666 = vsel %vm375, %v2648, %v2649
  %v2667 = vsel %vm375, %v2647, %v2648
  %v2668 = vsel %vm375, %v2646, %v2647
  %v2669 = vsel %vm375, %v2645, %v2646
  %v2670 = vsel %vm375, %v2644, %v2645
  %v2671 = vsel %vm375, %v2643, %v2644
  %v2672 = vsel %vm375, %v2642, %v2643
  %v2673 = vsel %vm375, %v2657, %v2642
  %2690 = vrot.lane.b32.xlu0 %v2568, 32
  %v2691 = vpop.permute.xlu0 %2690
  %2692 = vrot.lane.b32.xlu0 %v2553, 32
  %v2693 = vpop.permute.xlu0 %2692
  %2694 = vrot.lane.b32.xlu0 %v2554, 32
  %v2695 = vpop.permute.xlu0 %2694
  %2696 = vrot.lane.b32.xlu0 %v2555, 32
  %v2697 = vpop.permute.xlu0 %2696
  %2698 = vrot.lane.b32.xlu0 %v2556, 32
  %v2699 = vpop.permute.xlu0 %2698
  %2700 = vrot.lane.b32.xlu0 %v2557, 32
  %v2701 = vpop.permute.xlu0 %2700
  %2702 = vrot.lane.b32.xlu0 %v2558, 32
  %v2703 = vpop.permute.xlu0 %2702
  %2704 = vrot.lane.b32.xlu0 %v2559, 32
  %v2705 = vpop.permute.xlu0 %2704
  %2706 = vrot.lane.b32.xlu0 %v2560, 32
  %v2707 = vpop.permute.xlu0 %2706
  %2708 = vrot.lane.b32.xlu0 %v2561, 32
  %v2709 = vpop.permute.xlu0 %2708
  %2710 = vrot.lane.b32.xlu0 %v2562, 32
  %v2711 = vpop.permute.xlu0 %2710
  %2712 = vrot.lane.b32.xlu0 %v2563, 32
  %v2713 = vpop.permute.xlu0 %2712
  %2714 = vrot.lane.b32.xlu0 %v2564, 32
  %v2715 = vpop.permute.xlu0 %2714
  %2716 = vrot.lane.b32.xlu0 %v2565, 32
  %v2717 = vpop.permute.xlu0 %2716
  %2718 = vrot.lane.b32.xlu0 %v2566, 32
  %v2719 = vpop.permute.xlu0 %2718
  %2720 = vrot.lane.b32.xlu0 %v2567, 32
  %v2721 = vpop.permute.xlu0 %2720
  %2754 = vrot.lane.b32.xlu0 %v2673, 64
  %v2755 = vpop.permute.xlu0 %2754
  %2756 = vrot.lane.b32.xlu0 %v2672, 64
  %v2757 = vpop.permute.xlu0 %2756
  %2758 = vrot.lane.b32.xlu0 %v2671, 64
  %v2759 = vpop.permute.xlu0 %2758
  %2760 = vrot.lane.b32.xlu0 %v2670, 64
  %v2761 = vpop.permute.xlu0 %2760
  %2762 = vrot.lane.b32.xlu0 %v2669, 64
  %v2763 = vpop.permute.xlu0 %2762
  %2764 = vrot.lane.b32.xlu0 %v2668, 64
  %v2765 = vpop.permute.xlu0 %2764
  %2766 = vrot.lane.b32.xlu0 %v2667, 64
  %v2767 = vpop.permute.xlu0 %2766
  %2768 = vrot.lane.b32.xlu0 %v2666, 64
  %v2769 = vpop.permute.xlu0 %2768
  %2770 = vrot.lane.b32.xlu0 %v2665, 64
  %v2771 = vpop.permute.xlu0 %2770
  %2772 = vrot.lane.b32.xlu0 %v2664, 64
  %v2773 = vpop.permute.xlu0 %2772
  %2774 = vrot.lane.b32.xlu0 %v2663, 64
  %v2775 = vpop.permute.xlu0 %2774
  %2776 = vrot.lane.b32.xlu0 %v2662, 64
  %v2777 = vpop.permute.xlu0 %2776
  %2778 = vrot.lane.b32.xlu0 %v2661, 64
  %v2779 = vpop.permute.xlu0 %2778
  %2780 = vrot.lane.b32.xlu0 %v2660, 64
  %v2781 = vpop.permute.xlu0 %2780
  %2782 = vrot.lane.b32.xlu0 %v2659, 64
  %v2783 = vpop.permute.xlu0 %2782
  %2784 = vrot.lane.b32.xlu0 %v2658, 64
  %v2785 = vpop.permute.xlu0 %2784
  %2818 = vrot.lane.b32.xlu0 %v2641, 96
  %v2819 = vpop.permute.xlu0 %2818
  %2820 = vrot.lane.b32.xlu0 %v2640, 96
  %v2821 = vpop.permute.xlu0 %2820
  %2822 = vrot.lane.b32.xlu0 %v2639, 96
  %v2823 = vpop.permute.xlu0 %2822
  %2824 = vrot.lane.b32.xlu0 %v2638, 96
  %v2825 = vpop.permute.xlu0 %2824
  %2826 = vrot.lane.b32.xlu0 %v2637, 96
  %v2827 = vpop.permute.xlu0 %2826
  %2828 = vrot.lane.b32.xlu0 %v2636, 96
  %v2829 = vpop.permute.xlu0 %2828
  %2830 = vrot.lane.b32.xlu0 %v2635, 96
  %v2831 = vpop.permute.xlu0 %2830
  %2832 = vrot.lane.b32.xlu0 %v2634, 96
  %v2833 = vpop.permute.xlu0 %2832
  %2834 = vrot.lane.b32.xlu0 %v2633, 96
  %v2835 = vpop.permute.xlu0 %2834
  %2836 = vrot.lane.b32.xlu0 %v2632, 96
  %v2837 = vpop.permute.xlu0 %2836
  %2838 = vrot.lane.b32.xlu0 %v2631, 96
  %v2839 = vpop.permute.xlu0 %2838
  %2840 = vrot.lane.b32.xlu0 %v2630, 96
  %v2841 = vpop.permute.xlu0 %2840
  %2842 = vrot.lane.b32.xlu0 %v2629, 96
  %v2843 = vpop.permute.xlu0 %2842
  %2844 = vrot.lane.b32.xlu0 %v2628, 96
  %v2845 = vpop.permute.xlu0 %2844
  %2846 = vrot.lane.b32.xlu0 %v2627, 96
  %v2847 = vpop.permute.xlu0 %2846
  %2848 = vrot.lane.b32.xlu0 %v2626, 96
  %v2849 = vpop.permute.xlu0 %2848
  %2866 = vrot.lane.b32.xlu0 %v2672, 32
  %v2867 = vpop.permute.xlu0 %2866
  %2868 = vrot.lane.b32.xlu0 %v2671, 32
  %v2869 = vpop.permute.xlu0 %2868
  %2870 = vrot.lane.b32.xlu0 %v2670, 32
  %v2871 = vpop.permute.xlu0 %2870
  %2872 = vrot.lane.b32.xlu0 %v2669, 32
  %v2873 = vpop.permute.xlu0 %2872
  %2874 = vrot.lane.b32.xlu0 %v2668, 32
  %v2875 = vpop.permute.xlu0 %2874
  %2876 = vrot.lane.b32.xlu0 %v2667, 32
  %v2877 = vpop.permute.xlu0 %2876
  %2878 = vrot.lane.b32.xlu0 %v2666, 32
  %v2879 = vpop.permute.xlu0 %2878
  %2880 = vrot.lane.b32.xlu0 %v2665, 32
  %v2881 = vpop.permute.xlu0 %2880
  %2882 = vrot.lane.b32.xlu0 %v2664, 32
  %v2883 = vpop.permute.xlu0 %2882
  %2884 = vrot.lane.b32.xlu0 %v2663, 32
  %v2885 = vpop.permute.xlu0 %2884
  %2886 = vrot.lane.b32.xlu0 %v2662, 32
  %v2887 = vpop.permute.xlu0 %2886
  %2888 = vrot.lane.b32.xlu0 %v2661, 32
  %v2889 = vpop.permute.xlu0 %2888
  %2890 = vrot.lane.b32.xlu0 %v2660, 32
  %v2891 = vpop.permute.xlu0 %2890
  %2892 = vrot.lane.b32.xlu0 %v2659, 32
  %v2893 = vpop.permute.xlu0 %2892
  %2894 = vrot.lane.b32.xlu0 %v2658, 32
  %v2895 = vpop.permute.xlu0 %2894
  %2896 = vrot.lane.b32.xlu0 %v2673, 32
  %v2897 = vpop.permute.xlu0 %2896
  %2914 = vrot.lane.b32.xlu0 %v2640, 64
  %v2915 = vpop.permute.xlu0 %2914
  %2916 = vrot.lane.b32.xlu0 %v2639, 64
  %v2917 = vpop.permute.xlu0 %2916
  %2918 = vrot.lane.b32.xlu0 %v2638, 64
  %v2919 = vpop.permute.xlu0 %2918
  %2920 = vrot.lane.b32.xlu0 %v2637, 64
  %v2921 = vpop.permute.xlu0 %2920
  %2922 = vrot.lane.b32.xlu0 %v2636, 64
  %v2923 = vpop.permute.xlu0 %2922
  %2924 = vrot.lane.b32.xlu0 %v2635, 64
  %v2925 = vpop.permute.xlu0 %2924
  %2926 = vrot.lane.b32.xlu0 %v2634, 64
  %v2927 = vpop.permute.xlu0 %2926
  %2928 = vrot.lane.b32.xlu0 %v2633, 64
  %v2929 = vpop.permute.xlu0 %2928
  %2930 = vrot.lane.b32.xlu0 %v2632, 64
  %v2931 = vpop.permute.xlu0 %2930
  %2932 = vrot.lane.b32.xlu0 %v2631, 64
  %v2933 = vpop.permute.xlu0 %2932
  %2934 = vrot.lane.b32.xlu0 %v2630, 64
  %v2935 = vpop.permute.xlu0 %2934
  %2936 = vrot.lane.b32.xlu0 %v2629, 64
  %v2937 = vpop.permute.xlu0 %2936
  %2938 = vrot.lane.b32.xlu0 %v2628, 64
  %v2939 = vpop.permute.xlu0 %2938
  %2940 = vrot.lane.b32.xlu0 %v2627, 64
  %v2941 = vpop.permute.xlu0 %2940
  %2942 = vrot.lane.b32.xlu0 %v2626, 64
  %v2943 = vpop.permute.xlu0 %2942
  %2944 = vrot.lane.b32.xlu0 %v2641, 64
  %v2945 = vpop.permute.xlu0 %2944
  %2962 = vrot.lane.b32.xlu0 %v2554, 96
  %v2963 = vpop.permute.xlu0 %2962
  %2964 = vrot.lane.b32.xlu0 %v2555, 96
  %v2965 = vpop.permute.xlu0 %2964
  %2966 = vrot.lane.b32.xlu0 %v2556, 96
  %v2967 = vpop.permute.xlu0 %2966
  %2968 = vrot.lane.b32.xlu0 %v2557, 96
  %v2969 = vpop.permute.xlu0 %2968
  %2970 = vrot.lane.b32.xlu0 %v2558, 96
  %v2971 = vpop.permute.xlu0 %2970
  %2972 = vrot.lane.b32.xlu0 %v2559, 96
  %v2973 = vpop.permute.xlu0 %2972
  %2974 = vrot.lane.b32.xlu0 %v2560, 96
  %v2975 = vpop.permute.xlu0 %2974
  %2976 = vrot.lane.b32.xlu0 %v2561, 96
  %v2977 = vpop.permute.xlu0 %2976
  %2978 = vrot.lane.b32.xlu0 %v2562, 96
  %v2979 = vpop.permute.xlu0 %2978
  %2980 = vrot.lane.b32.xlu0 %v2563, 96
  %v2981 = vpop.permute.xlu0 %2980
  %2982 = vrot.lane.b32.xlu0 %v2564, 96
  %v2983 = vpop.permute.xlu0 %2982
  %2984 = vrot.lane.b32.xlu0 %v2565, 96
  %v2985 = vpop.permute.xlu0 %2984
  %2986 = vrot.lane.b32.xlu0 %v2566, 96
  %v2987 = vpop.permute.xlu0 %2986
  %2988 = vrot.lane.b32.xlu0 %v2567, 96
  %v2989 = vpop.permute.xlu0 %2988
  %2990 = vrot.lane.b32.xlu0 %v2568, 96
  %v2991 = vpop.permute.xlu0 %2990
  %2992 = vrot.lane.b32.xlu0 %v2553, 96
  %v2993 = vpop.permute.xlu0 %2992
  %v3010 = vsel %vm728, %v2626, %v2691
  %v3011 = vsel %vm728, %v2641, %v2693
  %v3012 = vsel %vm728, %v2640, %v2695
  %v3013 = vsel %vm728, %v2639, %v2697
  %v3014 = vsel %vm728, %v2638, %v2699
  %v3015 = vsel %vm728, %v2637, %v2701
  %v3016 = vsel %vm728, %v2636, %v2703
  %v3017 = vsel %vm728, %v2635, %v2705
  %v3018 = vsel %vm728, %v2634, %v2707
  %v3019 = vsel %vm728, %v2633, %v2709
  %v3020 = vsel %vm728, %v2632, %v2711
  %v3021 = vsel %vm728, %v2631, %v2713
  %v3022 = vsel %vm728, %v2630, %v2715
  %v3023 = vsel %vm728, %v2629, %v2717
  %v3024 = vsel %vm728, %v2628, %v2719
  %v3025 = vsel %vm728, %v2627, %v2721
  %v3026 = vsel %vm745, %v3010, %v2755
  %v3027 = vsel %vm745, %v3011, %v2757
  %v3028 = vsel %vm745, %v3012, %v2759
  %v3029 = vsel %vm745, %v3013, %v2761
  %v3030 = vsel %vm745, %v3014, %v2763
  %v3031 = vsel %vm745, %v3015, %v2765
  %v3032 = vsel %vm745, %v3016, %v2767
  %v3033 = vsel %vm745, %v3017, %v2769
  %v3034 = vsel %vm745, %v3018, %v2771
  %v3035 = vsel %vm745, %v3019, %v2773
  %v3036 = vsel %vm745, %v3020, %v2775
  %v3037 = vsel %vm745, %v3021, %v2777
  %v3038 = vsel %vm745, %v3022, %v2779
  %v3039 = vsel %vm745, %v3023, %v2781
  %v3040 = vsel %vm745, %v3024, %v2783
  %v3041 = vsel %vm745, %v3025, %v2785
  %v3042 = vsel %vm762, %v3026, %v2819
  %v3043 = vsel %vm762, %v3027, %v2821
  %v3044 = vsel %vm762, %v3028, %v2823
  %v3045 = vsel %vm762, %v3029, %v2825
  %v3046 = vsel %vm762, %v3030, %v2827
  %v3047 = vsel %vm762, %v3031, %v2829
  %v3048 = vsel %vm762, %v3032, %v2831
  %v3049 = vsel %vm762, %v3033, %v2833
  %v3050 = vsel %vm762, %v3034, %v2835
  %v3051 = vsel %vm762, %v3035, %v2837
  %v3052 = vsel %vm762, %v3036, %v2839
  %v3053 = vsel %vm762, %v3037, %v2841
  %v3054 = vsel %vm762, %v3038, %v2843
  %v3055 = vsel %vm762, %v3039, %v2845
  %v3056 = vsel %vm762, %v3040, %v2847
  %v3057 = vsel %vm762, %v3041, %v2849
  %v3058 = vsel %vm728, %v2553, %v2867
  %v3059 = vsel %vm728, %v2554, %v2869
  %v3060 = vsel %vm728, %v2555, %v2871
  %v3061 = vsel %vm728, %v2556, %v2873
  %v3062 = vsel %vm728, %v2557, %v2875
  %v3063 = vsel %vm728, %v2558, %v2877
  %v3064 = vsel %vm728, %v2559, %v2879
  %v3065 = vsel %vm728, %v2560, %v2881
  %v3066 = vsel %vm728, %v2561, %v2883
  %v3067 = vsel %vm728, %v2562, %v2885
  %v3068 = vsel %vm728, %v2563, %v2887
  %v3069 = vsel %vm728, %v2564, %v2889
  %v3070 = vsel %vm728, %v2565, %v2891
  %v3071 = vsel %vm728, %v2566, %v2893
  %v3072 = vsel %vm728, %v2567, %v2895
  %v3073 = vsel %vm728, %v2568, %v2897
  %v3074 = vsel %vm745, %v3058, %v2915
  %v3075 = vsel %vm745, %v3059, %v2917
  %v3076 = vsel %vm745, %v3060, %v2919
  %v3077 = vsel %vm745, %v3061, %v2921
  %v3078 = vsel %vm745, %v3062, %v2923
  %v3079 = vsel %vm745, %v3063, %v2925
  %v3080 = vsel %vm745, %v3064, %v2927
  %v3081 = vsel %vm745, %v3065, %v2929
  %v3082 = vsel %vm745, %v3066, %v2931
  %v3083 = vsel %vm745, %v3067, %v2933
  %v3084 = vsel %vm745, %v3068, %v2935
  %v3085 = vsel %vm745, %v3069, %v2937
  %v3086 = vsel %vm745, %v3070, %v2939
  %v3087 = vsel %vm745, %v3071, %v2941
  %v3088 = vsel %vm745, %v3072, %v2943
  %v3089 = vsel %vm745, %v3073, %v2945
  %v3090 = vsel %vm762, %v3074, %v2963
  %v3091 = vsel %vm762, %v3075, %v2965
  %v3092 = vsel %vm762, %v3076, %v2967
  %v3093 = vsel %vm762, %v3077, %v2969
  %v3094 = vsel %vm762, %v3078, %v2971
  %v3095 = vsel %vm762, %v3079, %v2973
  %v3096 = vsel %vm762, %v3080, %v2975
  %v3097 = vsel %vm762, %v3081, %v2977
  %v3098 = vsel %vm762, %v3082, %v2979
  %v3099 = vsel %vm762, %v3083, %v2981
  %v3100 = vsel %vm762, %v3084, %v2983
  %v3101 = vsel %vm762, %v3085, %v2985
  %v3102 = vsel %vm762, %v3086, %v2987
  %v3103 = vsel %vm762, %v3087, %v2989
  %v3104 = vsel %vm762, %v3088, %v2991
  %v3105 = vsel %vm762, %v3089, %v2993
  %v3106 = vmul.f32 %v3042, %v827
  %v3107 = vmul.f32 %v3090, %v828
  %v3108 = vmul.f32 %v2671, %v829
  %v3109 = vmul.f32 %v3043, %v830
  %v3110 = vmul.f32 %v3091, %v831
  %v3111 = vmul.f32 %v2670, %v832
  %v3112 = vmul.f32 %v3044, %v833
  %v3113 = vmul.f32 %v3092, %v834
  %v3114 = vmul.f32 %v2669, %v835
  %v3115 = vmul.f32 %v3045, %v836
  %v3116 = vmul.f32 %v3093, %v837
  %v3117 = vmul.f32 %v2668, %v838
  %v3118 = vmul.f32 %v3046, %v839
  %v3119 = vmul.f32 %v3094, %v840
  %v3120 = vmul.f32 %v2667, %v841
  %v3121 = vmul.f32 %v3047, %v842
  %v3122 = vmul.f32 %v3095, %v843
  %v3123 = vmul.f32 %v2666, %v844
  %v3124 = vmul.f32 %v3048, %v845
  %v3125 = vmul.f32 %v3096, %v846
  %v3126 = vmul.f32 %v2665, %v847
  %v3127 = vmul.f32 %v3049, %v848
  %v3128 = vmul.f32 %v3097, %v849
  %v3129 = vmul.f32 %v2664, %v850
  %v3130 = vmul.f32 %v3050, %v851
  %v3131 = vmul.f32 %v3098, %v852
  %v3132 = vmul.f32 %v2663, %v853
  %v3133 = vmul.f32 %v3051, %v854
  %v3134 = vmul.f32 %v3099, %v855
  %v3135 = vmul.f32 %v2662, %v856
  %v3136 = vmul.f32 %v3052, %v857
  %v3137 = vmul.f32 %v3100, %v858
  %v3138 = vmul.f32 %v2661, %v859
  %v3139 = vmul.f32 %v3053, %v860
  %v3140 = vmul.f32 %v3101, %v861
  %v3141 = vmul.f32 %v2660, %v862
  %v3142 = vmul.f32 %v3054, %v863
  %v3143 = vmul.f32 %v3102, %v864
  %v3144 = vmul.f32 %v2659, %v865
  %v3145 = vmul.f32 %v3055, %v866
  %v3146 = vmul.f32 %v3103, %v867
  %v3147 = vmul.f32 %v2658, %v868
  %v3148 = vmul.f32 %v3056, %v869
  %v3149 = vmul.f32 %v3104, %v870
  %v3150 = vmul.f32 %v2673, %v871
  %v3151 = vmul.f32 %v3057, %v872
  %v3152 = vmul.f32 %v3105, %v873
  %v3153 = vmul.f32 %v2672, %v874
  %v3155 = vlaneseq
  %v3156 = vshrl.u32 %v3155, 7
  %v3157 = vsub.s32 0, %v3156
  %v3158 = vrot.slane %v2609, %v3157
  %v3161 = vsel %vm728, %v3108, 0
  %v3164 = vsel %vm728, %v3111, 0
  %v3167 = vsel %vm728, %v3114, 0
  %v3170 = vsel %vm728, %v3117, 0
  %v3173 = vsel %vm728, %v3120, 0
  %v3176 = vsel %vm728, %v3123, 0
  %v3179 = vsel %vm728, %v3126, 0
  %v3182 = vsel %vm728, %v3129, 0
  %v3185 = vsel %vm728, %v3132, 0
  %v3188 = vsel %vm728, %v3135, 0
  %v3191 = vsel %vm728, %v3138, 0
  %v3194 = vsel %vm728, %v3141, 0
  %v3197 = vsel %vm728, %v3144, 0
  %v3200 = vsel %vm728, %v3147, 0
  %v3203 = vsel %vm728, %v3150, 0
  %v3206 = vsel %vm728, %v3153, 0
  %3208 = vmatprep.subr.mxu0 0.0
  %3209 = vmatpush1.msra.mxu0 %v2587
  %3210 = vmatprep.subr.mxu0 0.0
  %3211 = vmatpush1.msra.mxu0 %v2586
  %3212 = vmatprep.subr.mxu0 0.0
  %3213 = vmatpush1.msra.mxu0 %v2585
  %3214 = vmatprep.subr.mxu0 0.0
  %3215 = vmatpush1.msra.mxu0 %v2584
  %3216 = vmatprep.subr.mxu0 0.0
  %3217 = vmatpush1.msra.mxu0 %v2583
  %3218 = vmatprep.subr.mxu0 0.0
  %3219 = vmatpush1.msra.mxu0 %v2582
  %3220 = vmatprep.subr.mxu0 0.0
  %3221 = vmatpush1.msra.mxu0 %v2581
  %3222 = vmatprep.subr.mxu0 0.0
  %3223 = vmatpush1.msra.mxu0 %v2580
  %3224 = vmatprep.subr.mxu0 0.0
  %3225 = vmatpush1.msra.mxu0 %v2579
  %3226 = vmatprep.subr.mxu0 0.0
  %3227 = vmatpush1.msra.mxu0 %v2578
  %3228 = vmatprep.subr.mxu0 0.0
  %3229 = vmatpush1.msra.mxu0 %v2577
  %3230 = vmatprep.subr.mxu0 0.0
  %3231 = vmatpush1.msra.mxu0 %v2576
  %3232 = vmatprep.subr.mxu0 0.0
  %3233 = vmatpush1.msra.mxu0 %v2575
  %3234 = vmatprep.subr.mxu0 0.0
  %3235 = vmatpush1.msra.mxu0 %v2574
  %3236 = vmatprep.subr.mxu0 0.0
  %3237 = vmatpush1.msra.mxu0 %v2573
  %3238 = vmatprep.subr.mxu0 0.0
  %3239 = vmatpush1.msra.mxu0 %v2572
  %3240 = vmatprep.subr.mxu0 0.0
  %3241 = vmatpush2.msra.mxu0 %v2603
  %3242 = vmatprep.subr.mxu0 0.0
  %3243 = vmatpush2.msra.mxu0 %v2602
  %3244 = vmatprep.subr.mxu0 0.0
  %3245 = vmatpush2.msra.mxu0 %v2601
  %3246 = vmatprep.subr.mxu0 0.0
  %3247 = vmatpush2.msra.mxu0 %v2600
  %3248 = vmatprep.subr.mxu0 0.0
  %3249 = vmatpush2.msra.mxu0 %v2599
  %3250 = vmatprep.subr.mxu0 0.0
  %3251 = vmatpush2.msra.mxu0 %v2598
  %3252 = vmatprep.subr.mxu0 0.0
  %3253 = vmatpush2.msra.mxu0 %v2597
  %3254 = vmatprep.subr.mxu0 0.0
  %3255 = vmatpush2.msra.mxu0 %v2596
  %3256 = vmatprep.subr.mxu0 0.0
  %3257 = vmatpush2.msra.mxu0 %v2595
  %3258 = vmatprep.subr.mxu0 0.0
  %3259 = vmatpush2.msra.mxu0 %v2594
  %3260 = vmatprep.subr.mxu0 0.0
  %3261 = vmatpush2.msra.mxu0 %v2593
  %3262 = vmatprep.subr.mxu0 0.0
  %3263 = vmatpush2.msra.mxu0 %v2592
  %3264 = vmatprep.subr.mxu0 0.0
  %3265 = vmatpush2.msra.mxu0 %v2591
  %3266 = vmatprep.subr.mxu0 0.0
  %3267 = vmatpush2.msra.mxu0 %v2590
  %3268 = vmatprep.subr.mxu0 0.0
  %3269 = vmatpush2.msra.mxu0 %v2589
  %3270 = vmatprep.subr.mxu0 0.0
  %3271 = vmatpush2.msra.mxu0 %v2588
  %3272 = vmatprep.mubr.f32.mxu0 %v3107
  %3273 = vmatmul.mubr.f32.gmra.mxu0 %v3106
  %v3274 = vpop.f32.mrf.mxu0
  %v3275 = vadd.f32 %v3158, %v3274
  %v3276 = vpop.f32.mrf.mxu0
  %3277 = vmatprep.mubr.f32.mxu0 %v3110
  %3278 = vmatmul.mubr.f32.gmra.mxu0 %v3109
  %v3279 = vpop.f32.mrf.mxu0
  %v3280 = vadd.f32 %v3158, %v3279
  %v3281 = vpop.f32.mrf.mxu0
  %3282 = vmatprep.mubr.f32.mxu0 %v3113
  %3283 = vmatmul.mubr.f32.gmra.mxu0 %v3112
  %v3284 = vpop.f32.mrf.mxu0
  %v3285 = vadd.f32 %v3158, %v3284
  %v3286 = vpop.f32.mrf.mxu0
  %3287 = vmatprep.mubr.f32.mxu0 %v3116
  %3288 = vmatmul.mubr.f32.gmra.mxu0 %v3115
  %v3289 = vpop.f32.mrf.mxu0
  %v3290 = vadd.f32 %v3158, %v3289
  %v3291 = vpop.f32.mrf.mxu0
  %3292 = vmatprep.mubr.f32.mxu0 %v3119
  %3293 = vmatmul.mubr.f32.gmra.mxu0 %v3118
  %v3294 = vpop.f32.mrf.mxu0
  %v3295 = vadd.f32 %v3158, %v3294
  %v3296 = vpop.f32.mrf.mxu0
  %3297 = vmatprep.mubr.f32.mxu0 %v3122
  %3298 = vmatmul.mubr.f32.gmra.mxu0 %v3121
  %v3299 = vpop.f32.mrf.mxu0
  %v3300 = vadd.f32 %v3158, %v3299
  %v3301 = vpop.f32.mrf.mxu0
  %3302 = vmatprep.mubr.f32.mxu0 %v3125
  %3303 = vmatmul.mubr.f32.gmra.mxu0 %v3124
  %v3304 = vpop.f32.mrf.mxu0
  %v3305 = vadd.f32 %v3158, %v3304
  %v3306 = vpop.f32.mrf.mxu0
  %3307 = vmatprep.mubr.f32.mxu0 %v3128
  %3308 = vmatmul.mubr.f32.gmra.mxu0 %v3127
  %v3309 = vpop.f32.mrf.mxu0
  %v3310 = vadd.f32 %v3158, %v3309
  %v3311 = vpop.f32.mrf.mxu0
  %3312 = vmatprep.mubr.f32.mxu0 %v3131
  %3313 = vmatmul.mubr.f32.gmra.mxu0 %v3130
  %v3314 = vpop.f32.mrf.mxu0
  %v3315 = vadd.f32 %v3158, %v3314
  %v3316 = vpop.f32.mrf.mxu0
  %3317 = vmatprep.mubr.f32.mxu0 %v3134
  %3318 = vmatmul.mubr.f32.gmra.mxu0 %v3133
  %v3319 = vpop.f32.mrf.mxu0
  %v3320 = vadd.f32 %v3158, %v3319
  %v3321 = vpop.f32.mrf.mxu0
  %3322 = vmatprep.mubr.f32.mxu0 %v3137
  %3323 = vmatmul.mubr.f32.gmra.mxu0 %v3136
  %v3324 = vpop.f32.mrf.mxu0
  %v3325 = vadd.f32 %v3158, %v3324
  %v3326 = vpop.f32.mrf.mxu0
  %3327 = vmatprep.mubr.f32.mxu0 %v3140
  %3328 = vmatmul.mubr.f32.gmra.mxu0 %v3139
  %v3329 = vpop.f32.mrf.mxu0
  %v3330 = vadd.f32 %v3158, %v3329
  %v3331 = vpop.f32.mrf.mxu0
  %3332 = vmatprep.mubr.f32.mxu0 %v3143
  %3333 = vmatmul.mubr.f32.gmra.mxu0 %v3142
  %v3334 = vpop.f32.mrf.mxu0
  %v3335 = vadd.f32 %v3158, %v3334
  %v3336 = vpop.f32.mrf.mxu0
  %3337 = vmatprep.mubr.f32.mxu0 %v3146
  %3338 = vmatmul.mubr.f32.gmra.mxu0 %v3145
  %v3339 = vpop.f32.mrf.mxu0
  %v3340 = vadd.f32 %v3158, %v3339
  %v3341 = vpop.f32.mrf.mxu0
  %3342 = vmatprep.mubr.f32.mxu0 %v3149
  %3343 = vmatmul.mubr.f32.gmra.mxu0 %v3148
  %v3344 = vpop.f32.mrf.mxu0
  %v3345 = vadd.f32 %v3158, %v3344
  %v3346 = vpop.f32.mrf.mxu0
  %3347 = vmatprep.mubr.f32.mxu0 %v3152
  %3348 = vmatmul.mubr.f32.gmra.mxu0 %v3151
  %v3349 = vpop.f32.mrf.mxu0
  %v3350 = vadd.f32 %v3158, %v3349
  %v3351 = vpop.f32.mrf.mxu0
  %3352 = vdwg.mxu0
  %3353 = vmatprep.subr.mxu0 0.0
  %3354 = vmatpush1.msra.mxu0 0.0
  %3355 = vmatprep.subr.mxu0 0.0
  %3356 = vmatpush1.msra.mxu0 0.0
  %3357 = vmatprep.subr.mxu0 0.0
  %3358 = vmatpush1.msra.mxu0 0.0
  %3359 = vmatprep.subr.mxu0 0.0
  %3360 = vmatpush1.msra.mxu0 0.0
  %3361 = vmatprep.subr.mxu0 0.0
  %3362 = vmatpush1.msra.mxu0 0.0
  %3363 = vmatprep.subr.mxu0 0.0
  %3364 = vmatpush1.msra.mxu0 0.0
  %3365 = vmatprep.subr.mxu0 0.0
  %3366 = vmatpush1.msra.mxu0 0.0
  %3367 = vmatprep.subr.mxu0 0.0
  %3368 = vmatpush1.msra.mxu0 0.0
  %3369 = vmatprep.subr.mxu0 0.0
  %3370 = vmatpush1.msra.mxu0 0.0
  %3371 = vmatprep.subr.mxu0 0.0
  %3372 = vmatpush1.msra.mxu0 0.0
  %3373 = vmatprep.subr.mxu0 0.0
  %3374 = vmatpush1.msra.mxu0 0.0
  %3375 = vmatprep.subr.mxu0 0.0
  %3376 = vmatpush1.msra.mxu0 0.0
  %3377 = vmatprep.subr.mxu0 0.0
  %3378 = vmatpush1.msra.mxu0 %v2607
  %3379 = vmatprep.subr.mxu0 0.0
  %3380 = vmatpush1.msra.mxu0 %v2606
  %3381 = vmatprep.subr.mxu0 0.0
  %3382 = vmatpush1.msra.mxu0 %v2605
  %3383 = vmatprep.subr.mxu0 0.0
  %3384 = vmatpush1.msra.mxu0 %v2604
  %3385 = vmatprep.subr.mxu0 0.0
  %3386 = vmatpush2.msra.mxu0 0.0
  %3387 = vmatprep.subr.mxu0 0.0
  %3388 = vmatpush2.msra.mxu0 0.0
  %3389 = vmatprep.subr.mxu0 0.0
  %3390 = vmatpush2.msra.mxu0 0.0
  %3391 = vmatprep.subr.mxu0 0.0
  %3392 = vmatpush2.msra.mxu0 0.0
  %3393 = vmatprep.subr.mxu0 0.0
  %3394 = vmatpush2.msra.mxu0 0.0
  %3395 = vmatprep.subr.mxu0 0.0
  %3396 = vmatpush2.msra.mxu0 0.0
  %3397 = vmatprep.subr.mxu0 0.0
  %3398 = vmatpush2.msra.mxu0 0.0
  %3399 = vmatprep.subr.mxu0 0.0
  %3400 = vmatpush2.msra.mxu0 0.0
  %3401 = vmatprep.subr.mxu0 0.0
  %3402 = vmatpush2.msra.mxu0 0.0
  %3403 = vmatprep.subr.mxu0 0.0
  %3404 = vmatpush2.msra.mxu0 0.0
  %3405 = vmatprep.subr.mxu0 0.0
  %3406 = vmatpush2.msra.mxu0 0.0
  %3407 = vmatprep.subr.mxu0 0.0
  %3408 = vmatpush2.msra.mxu0 0.0
  %3409 = vmatprep.subr.mxu0 0.0
  %3410 = vmatpush2.msra.mxu0 0.0
  %3411 = vmatprep.subr.mxu0 0.0
  %3412 = vmatpush2.msra.mxu0 0.0
  %3413 = vmatprep.subr.mxu0 0.0
  %3414 = vmatpush2.msra.mxu0 0.0
  %3415 = vmatprep.subr.mxu0 0.0
  %3416 = vmatpush2.msra.mxu0 0.0
  %3417 = vmatprep.mubr.f32.mxu0 0.0
  %3418 = vmatmul.mubr.f32.gmra.mxu0 %v3161
  %v3419 = vpop.f32.mrf.mxu0
  %v3420 = vadd.f32 %v3275, %v3419
  %v3421 = vpop.f32.mrf.mxu0
  %3422 = vmatprep.mubr.f32.mxu0 0.0
  %3423 = vmatmul.mubr.f32.gmra.mxu0 %v3164
  %v3424 = vpop.f32.mrf.mxu0
  %v3425 = vadd.f32 %v3280, %v3424
  %v3426 = vpop.f32.mrf.mxu0
  %3427 = vmatprep.mubr.f32.mxu0 0.0
  %3428 = vmatmul.mubr.f32.gmra.mxu0 %v3167
  %v3429 = vpop.f32.mrf.mxu0
  %v3430 = vadd.f32 %v3285, %v3429
  %v3431 = vpop.f32.mrf.mxu0
  %3432 = vmatprep.mubr.f32.mxu0 0.0
  %3433 = vmatmul.mubr.f32.gmra.mxu0 %v3170
  %v3434 = vpop.f32.mrf.mxu0
  %v3435 = vadd.f32 %v3290, %v3434
  %v3436 = vpop.f32.mrf.mxu0
  %3437 = vmatprep.mubr.f32.mxu0 0.0
  %3438 = vmatmul.mubr.f32.gmra.mxu0 %v3173
  %v3439 = vpop.f32.mrf.mxu0
  %v3440 = vadd.f32 %v3295, %v3439
  %v3441 = vpop.f32.mrf.mxu0
  %3442 = vmatprep.mubr.f32.mxu0 0.0
  %3443 = vmatmul.mubr.f32.gmra.mxu0 %v3176
  %v3444 = vpop.f32.mrf.mxu0
  %v3445 = vadd.f32 %v3300, %v3444
  %v3446 = vpop.f32.mrf.mxu0
  %3447 = vmatprep.mubr.f32.mxu0 0.0
  %3448 = vmatmul.mubr.f32.gmra.mxu0 %v3179
  %v3449 = vpop.f32.mrf.mxu0
  %v3450 = vadd.f32 %v3305, %v3449
  %v3451 = vpop.f32.mrf.mxu0
  %3452 = vmatprep.mubr.f32.mxu0 0.0
  %3453 = vmatmul.mubr.f32.gmra.mxu0 %v3182
  %v3454 = vpop.f32.mrf.mxu0
  %v3455 = vadd.f32 %v3310, %v3454
  %v3456 = vpop.f32.mrf.mxu0
  %3457 = vmatprep.mubr.f32.mxu0 0.0
  %3458 = vmatmul.mubr.f32.gmra.mxu0 %v3185
  %v3459 = vpop.f32.mrf.mxu0
  %v3460 = vadd.f32 %v3315, %v3459
  %v3461 = vpop.f32.mrf.mxu0
  %3462 = vmatprep.mubr.f32.mxu0 0.0
  %3463 = vmatmul.mubr.f32.gmra.mxu0 %v3188
  %v3464 = vpop.f32.mrf.mxu0
  %v3465 = vadd.f32 %v3320, %v3464
  %v3466 = vpop.f32.mrf.mxu0
  %3467 = vmatprep.mubr.f32.mxu0 0.0
  %3468 = vmatmul.mubr.f32.gmra.mxu0 %v3191
  %v3469 = vpop.f32.mrf.mxu0
  %v3470 = vadd.f32 %v3325, %v3469
  %v3471 = vpop.f32.mrf.mxu0
  %3472 = vmatprep.mubr.f32.mxu0 0.0
  %3473 = vmatmul.mubr.f32.gmra.mxu0 %v3194
  %v3474 = vpop.f32.mrf.mxu0
  %v3475 = vadd.f32 %v3330, %v3474
  %v3476 = vpop.f32.mrf.mxu0
  %3477 = vmatprep.mubr.f32.mxu0 0.0
  %3478 = vmatmul.mubr.f32.gmra.mxu0 %v3197
  %v3479 = vpop.f32.mrf.mxu0
  %v3480 = vadd.f32 %v3335, %v3479
  %v3481 = vpop.f32.mrf.mxu0
  %3482 = vmatprep.mubr.f32.mxu0 0.0
  %3483 = vmatmul.mubr.f32.gmra.mxu0 %v3200
  %v3484 = vpop.f32.mrf.mxu0
  %v3485 = vadd.f32 %v3340, %v3484
  %v3486 = vpop.f32.mrf.mxu0
  %3487 = vmatprep.mubr.f32.mxu0 0.0
  %3488 = vmatmul.mubr.f32.gmra.mxu0 %v3203
  %v3489 = vpop.f32.mrf.mxu0
  %v3490 = vadd.f32 %v3345, %v3489
  %v3491 = vpop.f32.mrf.mxu0
  %3492 = vmatprep.mubr.f32.mxu0 0.0
  %3493 = vmatmul.mubr.f32.gmra.mxu0 %v3206
  %v3494 = vpop.f32.mrf.mxu0
  %v3495 = vadd.f32 %v3350, %v3494
  %v3496 = vpop.f32.mrf.mxu0
  %3497 = vdwg.mxu0
  %vm3498 = vcmp.gt.f32.partialorder %v3420, 0.0
  %vm3499 = vcmp.gt.f32.partialorder %v3425, 0.0
  %vm3500 = vcmp.gt.f32.partialorder %v3430, 0.0
  %vm3501 = vcmp.gt.f32.partialorder %v3435, 0.0
  %vm3502 = vcmp.gt.f32.partialorder %v3440, 0.0
  %vm3503 = vcmp.gt.f32.partialorder %v3445, 0.0
  %vm3504 = vcmp.gt.f32.partialorder %v3450, 0.0
  %vm3505 = vcmp.gt.f32.partialorder %v3455, 0.0
  %vm3506 = vcmp.gt.f32.partialorder %v3460, 0.0
  %vm3507 = vcmp.gt.f32.partialorder %v3465, 0.0
  %vm3508 = vcmp.gt.f32.partialorder %v3470, 0.0
  %vm3509 = vcmp.gt.f32.partialorder %v3475, 0.0
  %vm3510 = vcmp.gt.f32.partialorder %v3480, 0.0
  %vm3511 = vcmp.gt.f32.partialorder %v3485, 0.0
  %vm3512 = vcmp.gt.f32.partialorder %v3490, 0.0
  %vm3513 = vcmp.gt.f32.partialorder %v3495, 0.0
  %v3515 = vlaneseq
  %v3516 = vshrl.u32 %v3515, 7
  %v3517 = vsub.s32 0, %v3516
  %v3518 = vrot.slane %v2570, %v3517
  %v3520 = vmul.f32 %v3518, %v3420
  %v3521 = vmul.f32 %v3518, %v3425
  %v3522 = vmul.f32 %v3518, %v3430
  %v3523 = vmul.f32 %v3518, %v3435
  %v3524 = vmul.f32 %v3518, %v3440
  %v3525 = vmul.f32 %v3518, %v3445
  %v3526 = vmul.f32 %v3518, %v3450
  %v3527 = vmul.f32 %v3518, %v3455
  %v3528 = vmul.f32 %v3518, %v3460
  %v3529 = vmul.f32 %v3518, %v3465
  %v3530 = vmul.f32 %v3518, %v3470
  %v3531 = vmul.f32 %v3518, %v3475
  %v3532 = vmul.f32 %v3518, %v3480
  %v3533 = vmul.f32 %v3518, %v3485
  %v3534 = vmul.f32 %v3518, %v3490
  %v3535 = vmul.f32 %v3518, %v3495
  %v3536 = vsel %vm3498, %v3420, %v3520
  %v3537 = vsel %vm3499, %v3425, %v3521
  %v3538 = vsel %vm3500, %v3430, %v3522
  %v3539 = vsel %vm3501, %v3435, %v3523
  %v3540 = vsel %vm3502, %v3440, %v3524
  %v3541 = vsel %vm3503, %v3445, %v3525
  %v3542 = vsel %vm3504, %v3450, %v3526
  %v3543 = vsel %vm3505, %v3455, %v3527
  %v3544 = vsel %vm3506, %v3460, %v3528
  %v3545 = vsel %vm3507, %v3465, %v3529
  %v3546 = vsel %vm3508, %v3470, %v3530
  %v3547 = vsel %vm3509, %v3475, %v3531
  %v3548 = vsel %vm3510, %v3480, %v3532
  %v3549 = vsel %vm3511, %v3485, %v3533
  %v3550 = vsel %vm3512, %v3490, %v3534
  %v3551 = vsel %vm3513, %v3495, %v3535
  %s3552 = scalar_lea.vmem %s7, 288
  %v3553 = vld [vmem:[%s3552] sm:$0xff]
  %v3554 = vld [vmem:[%s3552 + $0x8] sm:$0xff]
  %v3555 = vld [vmem:[%s3552 + $0x10] sm:$0xff]
  %v3556 = vld [vmem:[%s3552 + $0x18] sm:$0xff]
  %v3557 = vld [vmem:[%s3552 + $0x20] sm:$0xff]
  %v3558 = vld [vmem:[%s3552 + $0x28] sm:$0xff]
  %v3559 = vld [vmem:[%s3552 + $0x30] sm:$0xff]
  %v3560 = vld [vmem:[%s3552 + $0x38] sm:$0xff]
  %v3561 = vld [vmem:[%s3552 + $0x40] sm:$0xff]
  %v3562 = vld [vmem:[%s3552 + $0x48] sm:$0xff]
  %v3563 = vld [vmem:[%s3552 + $0x50] sm:$0xff]
  %v3564 = vld [vmem:[%s3552 + $0x58] sm:$0xff]
  %v3565 = vld [vmem:[%s3552 + $0x60] sm:$0xff]
  %v3566 = vld [vmem:[%s3552 + $0x68] sm:$0xff]
  %v3567 = vld [vmem:[%s3552 + $0x70] sm:$0xff]
  %v3568 = vld [vmem:[%s3552 + $0x78] sm:$0xff]
  %v3569 = vld [vmem:[%s3552 + $0x80] sm:$0xff]
  %v3570 = vld [vmem:[%s3552 + $0x88] sm:$0xff]
  %v3571 = vld [vmem:[%s3552 + $0x90] sm:$0xff]
  %v3572 = vld [vmem:[%s3552 + $0x98] sm:$0xff]
  %v3573 = vld [vmem:[%s3552 + $0xa0] sm:$0xff]
  %v3574 = vld [vmem:[%s3552 + $0xa8] sm:$0xff]
  %v3575 = vld [vmem:[%s3552 + $0xb0] sm:$0xff]
  %v3576 = vld [vmem:[%s3552 + $0xb8] sm:$0xff]
  %v3577 = vld [vmem:[%s3552 + $0xc0] sm:$0xff]
  %v3578 = vld [vmem:[%s3552 + $0xc8] sm:$0xff]
  %v3579 = vld [vmem:[%s3552 + $0xd0] sm:$0xff]
  %v3580 = vld [vmem:[%s3552 + $0xd8] sm:$0xff]
  %v3581 = vld [vmem:[%s3552 + $0xe0] sm:$0xff]
  %v3582 = vld [vmem:[%s3552 + $0xe8] sm:$0xff]
  %v3583 = vld [vmem:[%s3552 + $0xf0] sm:$0xff]
  %v3584 = vld [vmem:[%s3552 + $0xf8] sm:$0xff]
  %v3585 = vld [vmem:[%s3552 + $0x100] sm:$0xff]
  %v3586 = vld [vmem:[%s3552 + $0x108] sm:$0xff]
  %v3587 = vld [vmem:[%s3552 + $0x110] sm:$0xff]
  %v3588 = vld [vmem:[%s3552 + $0x118] sm:$0xff]
  %s3589 = scalar_lea.vmem %s8, 1
  %v3590 = vld [vmem:[%s3589] sm:$0x1]
  %v3591 = vrot.slane %v3536, 7
  %v3592 = vrot.slane %v3537, 7
  %v3593 = vrot.slane %v3538, 7
  %v3594 = vrot.slane %v3539, 7
  %v3595 = vrot.slane %v3540, 7
  %v3596 = vrot.slane %v3541, 7
  %v3597 = vrot.slane %v3542, 7
  %v3598 = vrot.slane %v3543, 7
  %v3599 = vrot.slane %v3544, 7
  %v3600 = vrot.slane %v3545, 7
  %v3601 = vrot.slane %v3546, 7
  %v3602 = vrot.slane %v3547, 7
  %v3603 = vrot.slane %v3548, 7
  %v3604 = vrot.slane %v3549, 7
  %v3605 = vrot.slane %v3550, 7
  %v3606 = vrot.slane %v3551, 7
  %v3607 = vsel %vm342, %v3605, %v3606
  %v3608 = vsel %vm342, %v3604, %v3605
  %v3609 = vsel %vm342, %v3603, %v3604
  %v3610 = vsel %vm342, %v3602, %v3603
  %v3611 = vsel %vm342, %v3601, %v3602
  %v3612 = vsel %vm342, %v3600, %v3601
  %v3613 = vsel %vm342, %v3599, %v3600
  %v3614 = vsel %vm342, %v3598, %v3599
  %v3615 = vsel %vm342, %v3597, %v3598
  %v3616 = vsel %vm342, %v3596, %v3597
  %v3617 = vsel %vm342, %v3595, %v3596
  %v3618 = vsel %vm342, %v3594, %v3595
  %v3619 = vsel %vm342, %v3593, %v3594
  %v3620 = vsel %vm342, %v3592, %v3593
  %v3621 = vsel %vm342, %v3591, %v3592
  %v3622 = vsel %vm342, %v3606, %v3591
  %v3623 = vrot.slane %v3536, 1
  %v3624 = vrot.slane %v3537, 1
  %v3625 = vrot.slane %v3538, 1
  %v3626 = vrot.slane %v3539, 1
  %v3627 = vrot.slane %v3540, 1
  %v3628 = vrot.slane %v3541, 1
  %v3629 = vrot.slane %v3542, 1
  %v3630 = vrot.slane %v3543, 1
  %v3631 = vrot.slane %v3544, 1
  %v3632 = vrot.slane %v3545, 1
  %v3633 = vrot.slane %v3546, 1
  %v3634 = vrot.slane %v3547, 1
  %v3635 = vrot.slane %v3548, 1
  %v3636 = vrot.slane %v3549, 1
  %v3637 = vrot.slane %v3550, 1
  %v3638 = vrot.slane %v3551, 1
  %v3639 = vsel %vm375, %v3637, %v3638
  %v3640 = vsel %vm375, %v3636, %v3637
  %v3641 = vsel %vm375, %v3635, %v3636
  %v3642 = vsel %vm375, %v3634, %v3635
  %v3643 = vsel %vm375, %v3633, %v3634
  %v3644 = vsel %vm375, %v3632, %v3633
  %v3645 = vsel %vm375, %v3631, %v3632
  %v3646 = vsel %vm375, %v3630, %v3631
  %v3647 = vsel %vm375, %v3629, %v3630
  %v3648 = vsel %vm375, %v3628, %v3629
  %v3649 = vsel %vm375, %v3627, %v3628
  %v3650 = vsel %vm375, %v3626, %v3627
  %v3651 = vsel %vm375, %v3625, %v3626
  %v3652 = vsel %vm375, %v3624, %v3625
  %v3653 = vsel %vm375, %v3623, %v3624
  %v3654 = vsel %vm375, %v3638, %v3623
  %3671 = vrot.lane.b32.xlu0 %v3551, 32
  %v3672 = vpop.permute.xlu0 %3671
  %3673 = vrot.lane.b32.xlu0 %v3536, 32
  %v3674 = vpop.permute.xlu0 %3673
  %3675 = vrot.lane.b32.xlu0 %v3537, 32
  %v3676 = vpop.permute.xlu0 %3675
  %3677 = vrot.lane.b32.xlu0 %v3538, 32
  %v3678 = vpop.permute.xlu0 %3677
  %3679 = vrot.lane.b32.xlu0 %v3539, 32
  %v3680 = vpop.permute.xlu0 %3679
  %3681 = vrot.lane.b32.xlu0 %v3540, 32
  %v3682 = vpop.permute.xlu0 %3681
  %3683 = vrot.lane.b32.xlu0 %v3541, 32
  %v3684 = vpop.permute.xlu0 %3683
  %3685 = vrot.lane.b32.xlu0 %v3542, 32
  %v3686 = vpop.permute.xlu0 %3685
  %3687 = vrot.lane.b32.xlu0 %v3543, 32
  %v3688 = vpop.permute.xlu0 %3687
  %3689 = vrot.lane.b32.xlu0 %v3544, 32
  %v3690 = vpop.permute.xlu0 %3689
  %3691 = vrot.lane.b32.xlu0 %v3545, 32
  %v3692 = vpop.permute.xlu0 %3691
  %3693 = vrot.lane.b32.xlu0 %v3546, 32
  %v3694 = vpop.permute.xlu0 %3693
  %3695 = vrot.lane.b32.xlu0 %v3547, 32
  %v3696 = vpop.permute.xlu0 %3695
  %3697 = vrot.lane.b32.xlu0 %v3548, 32
  %v3698 = vpop.permute.xlu0 %3697
  %3699 = vrot.lane.b32.xlu0 %v3549, 32
  %v3700 = vpop.permute.xlu0 %3699
  %3701 = vrot.lane.b32.xlu0 %v3550, 32
  %v3702 = vpop.permute.xlu0 %3701
  %3735 = vrot.lane.b32.xlu0 %v3654, 64
  %v3736 = vpop.permute.xlu0 %3735
  %3737 = vrot.lane.b32.xlu0 %v3653, 64
  %v3738 = vpop.permute.xlu0 %3737
  %3739 = vrot.lane.b32.xlu0 %v3652, 64
  %v3740 = vpop.permute.xlu0 %3739
  %3741 = vrot.lane.b32.xlu0 %v3651, 64
  %v3742 = vpop.permute.xlu0 %3741
  %3743 = vrot.lane.b32.xlu0 %v3650, 64
  %v3744 = vpop.permute.xlu0 %3743
  %3745 = vrot.lane.b32.xlu0 %v3649, 64
  %v3746 = vpop.permute.xlu0 %3745
  %3747 = vrot.lane.b32.xlu0 %v3648, 64
  %v3748 = vpop.permute.xlu0 %3747
  %3749 = vrot.lane.b32.xlu0 %v3647, 64
  %v3750 = vpop.permute.xlu0 %3749
  %3751 = vrot.lane.b32.xlu0 %v3646, 64
  %v3752 = vpop.permute.xlu0 %3751
  %3753 = vrot.lane.b32.xlu0 %v3645, 64
  %v3754 = vpop.permute.xlu0 %3753
  %3755 = vrot.lane.b32.xlu0 %v3644, 64
  %v3756 = vpop.permute.xlu0 %3755
  %3757 = vrot.lane.b32.xlu0 %v3643, 64
  %v3758 = vpop.permute.xlu0 %3757
  %3759 = vrot.lane.b32.xlu0 %v3642, 64
  %v3760 = vpop.permute.xlu0 %3759
  %3761 = vrot.lane.b32.xlu0 %v3641, 64
  %v3762 = vpop.permute.xlu0 %3761
  %3763 = vrot.lane.b32.xlu0 %v3640, 64
  %v3764 = vpop.permute.xlu0 %3763
  %3765 = vrot.lane.b32.xlu0 %v3639, 64
  %v3766 = vpop.permute.xlu0 %3765
  %3799 = vrot.lane.b32.xlu0 %v3622, 96
  %v3800 = vpop.permute.xlu0 %3799
  %3801 = vrot.lane.b32.xlu0 %v3621, 96
  %v3802 = vpop.permute.xlu0 %3801
  %3803 = vrot.lane.b32.xlu0 %v3620, 96
  %v3804 = vpop.permute.xlu0 %3803
  %3805 = vrot.lane.b32.xlu0 %v3619, 96
  %v3806 = vpop.permute.xlu0 %3805
  %3807 = vrot.lane.b32.xlu0 %v3618, 96
  %v3808 = vpop.permute.xlu0 %3807
  %3809 = vrot.lane.b32.xlu0 %v3617, 96
  %v3810 = vpop.permute.xlu0 %3809
  %3811 = vrot.lane.b32.xlu0 %v3616, 96
  %v3812 = vpop.permute.xlu0 %3811
  %3813 = vrot.lane.b32.xlu0 %v3615, 96
  %v3814 = vpop.permute.xlu0 %3813
  %3815 = vrot.lane.b32.xlu0 %v3614, 96
  %v3816 = vpop.permute.xlu0 %3815
  %3817 = vrot.lane.b32.xlu0 %v3613, 96
  %v3818 = vpop.permute.xlu0 %3817
  %3819 = vrot.lane.b32.xlu0 %v3612, 96
  %v3820 = vpop.permute.xlu0 %3819
  %3821 = vrot.lane.b32.xlu0 %v3611, 96
  %v3822 = vpop.permute.xlu0 %3821
  %3823 = vrot.lane.b32.xlu0 %v3610, 96
  %v3824 = vpop.permute.xlu0 %3823
  %3825 = vrot.lane.b32.xlu0 %v3609, 96
  %v3826 = vpop.permute.xlu0 %3825
  %3827 = vrot.lane.b32.xlu0 %v3608, 96
  %v3828 = vpop.permute.xlu0 %3827
  %3829 = vrot.lane.b32.xlu0 %v3607, 96
  %v3830 = vpop.permute.xlu0 %3829
  %3847 = vrot.lane.b32.xlu0 %v3653, 32
  %v3848 = vpop.permute.xlu0 %3847
  %3849 = vrot.lane.b32.xlu0 %v3652, 32
  %v3850 = vpop.permute.xlu0 %3849
  %3851 = vrot.lane.b32.xlu0 %v3651, 32
  %v3852 = vpop.permute.xlu0 %3851
  %3853 = vrot.lane.b32.xlu0 %v3650, 32
  %v3854 = vpop.permute.xlu0 %3853
  %3855 = vrot.lane.b32.xlu0 %v3649, 32
  %v3856 = vpop.permute.xlu0 %3855
  %3857 = vrot.lane.b32.xlu0 %v3648, 32
  %v3858 = vpop.permute.xlu0 %3857
  %3859 = vrot.lane.b32.xlu0 %v3647, 32
  %v3860 = vpop.permute.xlu0 %3859
  %3861 = vrot.lane.b32.xlu0 %v3646, 32
  %v3862 = vpop.permute.xlu0 %3861
  %3863 = vrot.lane.b32.xlu0 %v3645, 32
  %v3864 = vpop.permute.xlu0 %3863
  %3865 = vrot.lane.b32.xlu0 %v3644, 32
  %v3866 = vpop.permute.xlu0 %3865
  %3867 = vrot.lane.b32.xlu0 %v3643, 32
  %v3868 = vpop.permute.xlu0 %3867
  %3869 = vrot.lane.b32.xlu0 %v3642, 32
  %v3870 = vpop.permute.xlu0 %3869
  %3871 = vrot.lane.b32.xlu0 %v3641, 32
  %v3872 = vpop.permute.xlu0 %3871
  %3873 = vrot.lane.b32.xlu0 %v3640, 32
  %v3874 = vpop.permute.xlu0 %3873
  %3875 = vrot.lane.b32.xlu0 %v3639, 32
  %v3876 = vpop.permute.xlu0 %3875
  %3877 = vrot.lane.b32.xlu0 %v3654, 32
  %v3878 = vpop.permute.xlu0 %3877
  %3895 = vrot.lane.b32.xlu0 %v3621, 64
  %v3896 = vpop.permute.xlu0 %3895
  %3897 = vrot.lane.b32.xlu0 %v3620, 64
  %v3898 = vpop.permute.xlu0 %3897
  %3899 = vrot.lane.b32.xlu0 %v3619, 64
  %v3900 = vpop.permute.xlu0 %3899
  %3901 = vrot.lane.b32.xlu0 %v3618, 64
  %v3902 = vpop.permute.xlu0 %3901
  %3903 = vrot.lane.b32.xlu0 %v3617, 64
  %v3904 = vpop.permute.xlu0 %3903
  %3905 = vrot.lane.b32.xlu0 %v3616, 64
  %v3906 = vpop.permute.xlu0 %3905
  %3907 = vrot.lane.b32.xlu0 %v3615, 64
  %v3908 = vpop.permute.xlu0 %3907
  %3909 = vrot.lane.b32.xlu0 %v3614, 64
  %v3910 = vpop.permute.xlu0 %3909
  %3911 = vrot.lane.b32.xlu0 %v3613, 64
  %v3912 = vpop.permute.xlu0 %3911
  %3913 = vrot.lane.b32.xlu0 %v3612, 64
  %v3914 = vpop.permute.xlu0 %3913
  %3915 = vrot.lane.b32.xlu0 %v3611, 64
  %v3916 = vpop.permute.xlu0 %3915
  %3917 = vrot.lane.b32.xlu0 %v3610, 64
  %v3918 = vpop.permute.xlu0 %3917
  %3919 = vrot.lane.b32.xlu0 %v3609, 64
  %v3920 = vpop.permute.xlu0 %3919
  %3921 = vrot.lane.b32.xlu0 %v3608, 64
  %v3922 = vpop.permute.xlu0 %3921
  %3923 = vrot.lane.b32.xlu0 %v3607, 64
  %v3924 = vpop.permute.xlu0 %3923
  %3925 = vrot.lane.b32.xlu0 %v3622, 64
  %v3926 = vpop.permute.xlu0 %3925
  %3943 = vrot.lane.b32.xlu0 %v3537, 96
  %v3944 = vpop.permute.xlu0 %3943
  %3945 = vrot.lane.b32.xlu0 %v3538, 96
  %v3946 = vpop.permute.xlu0 %3945
  %3947 = vrot.lane.b32.xlu0 %v3539, 96
  %v3948 = vpop.permute.xlu0 %3947
  %3949 = vrot.lane.b32.xlu0 %v3540, 96
  %v3950 = vpop.permute.xlu0 %3949
  %3951 = vrot.lane.b32.xlu0 %v3541, 96
  %v3952 = vpop.permute.xlu0 %3951
  %3953 = vrot.lane.b32.xlu0 %v3542, 96
  %v3954 = vpop.permute.xlu0 %3953
  %3955 = vrot.lane.b32.xlu0 %v3543, 96
  %v3956 = vpop.permute.xlu0 %3955
  %3957 = vrot.lane.b32.xlu0 %v3544, 96
  %v3958 = vpop.permute.xlu0 %3957
  %3959 = vrot.lane.b32.xlu0 %v3545, 96
  %v3960 = vpop.permute.xlu0 %3959
  %3961 = vrot.lane.b32.xlu0 %v3546, 96
  %v3962 = vpop.permute.xlu0 %3961
  %3963 = vrot.lane.b32.xlu0 %v3547, 96
  %v3964 = vpop.permute.xlu0 %3963
  %3965 = vrot.lane.b32.xlu0 %v3548, 96
  %v3966 = vpop.permute.xlu0 %3965
  %3967 = vrot.lane.b32.xlu0 %v3549, 96
  %v3968 = vpop.permute.xlu0 %3967
  %3969 = vrot.lane.b32.xlu0 %v3550, 96
  %v3970 = vpop.permute.xlu0 %3969
  %3971 = vrot.lane.b32.xlu0 %v3551, 96
  %v3972 = vpop.permute.xlu0 %3971
  %3973 = vrot.lane.b32.xlu0 %v3536, 96
  %v3974 = vpop.permute.xlu0 %3973
  %v3991 = vsel %vm728, %v3607, %v3672
  %v3992 = vsel %vm728, %v3622, %v3674
  %v3993 = vsel %vm728, %v3621, %v3676
  %v3994 = vsel %vm728, %v3620, %v3678
  %v3995 = vsel %vm728, %v3619, %v3680
  %v3996 = vsel %vm728, %v3618, %v3682
  %v3997 = vsel %vm728, %v3617, %v3684
  %v3998 = vsel %vm728, %v3616, %v3686
  %v3999 = vsel %vm728, %v3615, %v3688
  %v4000 = vsel %vm728, %v3614, %v3690
  %v4001 = vsel %vm728, %v3613, %v3692
  %v4002 = vsel %vm728, %v3612, %v3694
  %v4003 = vsel %vm728, %v3611, %v3696
  %v4004 = vsel %vm728, %v3610, %v3698
  %v4005 = vsel %vm728, %v3609, %v3700
  %v4006 = vsel %vm728, %v3608, %v3702
  %v4007 = vsel %vm745, %v3991, %v3736
  %v4008 = vsel %vm745, %v3992, %v3738
  %v4009 = vsel %vm745, %v3993, %v3740
  %v4010 = vsel %vm745, %v3994, %v3742
  %v4011 = vsel %vm745, %v3995, %v3744
  %v4012 = vsel %vm745, %v3996, %v3746
  %v4013 = vsel %vm745, %v3997, %v3748
  %v4014 = vsel %vm745, %v3998, %v3750
  %v4015 = vsel %vm745, %v3999, %v3752
  %v4016 = vsel %vm745, %v4000, %v3754
  %v4017 = vsel %vm745, %v4001, %v3756
  %v4018 = vsel %vm745, %v4002, %v3758
  %v4019 = vsel %vm745, %v4003, %v3760
  %v4020 = vsel %vm745, %v4004, %v3762
  %v4021 = vsel %vm745, %v4005, %v3764
  %v4022 = vsel %vm745, %v4006, %v3766
  %v4023 = vsel %vm762, %v4007, %v3800
  %v4024 = vsel %vm762, %v4008, %v3802
  %v4025 = vsel %vm762, %v4009, %v3804
  %v4026 = vsel %vm762, %v4010, %v3806
  %v4027 = vsel %vm762, %v4011, %v3808
  %v4028 = vsel %vm762, %v4012, %v3810
  %v4029 = vsel %vm762, %v4013, %v3812
  %v4030 = vsel %vm762, %v4014, %v3814
  %v4031 = vsel %vm762, %v4015, %v3816
  %v4032 = vsel %vm762, %v4016, %v3818
  %v4033 = vsel %vm762, %v4017, %v3820
  %v4034 = vsel %vm762, %v4018, %v3822
  %v4035 = vsel %vm762, %v4019, %v3824
  %v4036 = vsel %vm762, %v4020, %v3826
  %v4037 = vsel %vm762, %v4021, %v3828
  %v4038 = vsel %vm762, %v4022, %v3830
  %v4039 = vsel %vm728, %v3536, %v3848
  %v4040 = vsel %vm728, %v3537, %v3850
  %v4041 = vsel %vm728, %v3538, %v3852
  %v4042 = vsel %vm728, %v3539, %v3854
  %v4043 = vsel %vm728, %v3540, %v3856
  %v4044 = vsel %vm728, %v3541, %v3858
  %v4045 = vsel %vm728, %v3542, %v3860
  %v4046 = vsel %vm728, %v3543, %v3862
  %v4047 = vsel %vm728, %v3544, %v3864
  %v4048 = vsel %vm728, %v3545, %v3866
  %v4049 = vsel %vm728, %v3546, %v3868
  %v4050 = vsel %vm728, %v3547, %v3870
  %v4051 = vsel %vm728, %v3548, %v3872
  %v4052 = vsel %vm728, %v3549, %v3874
  %v4053 = vsel %vm728, %v3550, %v3876
  %v4054 = vsel %vm728, %v3551, %v3878
  %v4055 = vsel %vm745, %v4039, %v3896
  %v4056 = vsel %vm745, %v4040, %v3898
  %v4057 = vsel %vm745, %v4041, %v3900
  %v4058 = vsel %vm745, %v4042, %v3902
  %v4059 = vsel %vm745, %v4043, %v3904
  %v4060 = vsel %vm745, %v4044, %v3906
  %v4061 = vsel %vm745, %v4045, %v3908
  %v4062 = vsel %vm745, %v4046, %v3910
  %v4063 = vsel %vm745, %v4047, %v3912
  %v4064 = vsel %vm745, %v4048, %v3914
  %v4065 = vsel %vm745, %v4049, %v3916
  %v4066 = vsel %vm745, %v4050, %v3918
  %v4067 = vsel %vm745, %v4051, %v3920
  %v4068 = vsel %vm745, %v4052, %v3922
  %v4069 = vsel %vm745, %v4053, %v3924
  %v4070 = vsel %vm745, %v4054, %v3926
  %v4071 = vsel %vm762, %v4055, %v3944
  %v4072 = vsel %vm762, %v4056, %v3946
  %v4073 = vsel %vm762, %v4057, %v3948
  %v4074 = vsel %vm762, %v4058, %v3950
  %v4075 = vsel %vm762, %v4059, %v3952
  %v4076 = vsel %vm762, %v4060, %v3954
  %v4077 = vsel %vm762, %v4061, %v3956
  %v4078 = vsel %vm762, %v4062, %v3958
  %v4079 = vsel %vm762, %v4063, %v3960
  %v4080 = vsel %vm762, %v4064, %v3962
  %v4081 = vsel %vm762, %v4065, %v3964
  %v4082 = vsel %vm762, %v4066, %v3966
  %v4083 = vsel %vm762, %v4067, %v3968
  %v4084 = vsel %vm762, %v4068, %v3970
  %v4085 = vsel %vm762, %v4069, %v3972
  %v4086 = vsel %vm762, %v4070, %v3974
  %v4087 = vmul.f32 %v4023, %v827
  %v4088 = vmul.f32 %v4071, %v828
  %v4089 = vmul.f32 %v3652, %v829
  %v4090 = vmul.f32 %v4024, %v830
  %v4091 = vmul.f32 %v4072, %v831
  %v4092 = vmul.f32 %v3651, %v832
  %v4093 = vmul.f32 %v4025, %v833
  %v4094 = vmul.f32 %v4073, %v834
  %v4095 = vmul.f32 %v3650, %v835
  %v4096 = vmul.f32 %v4026, %v836
  %v4097 = vmul.f32 %v4074, %v837
  %v4098 = vmul.f32 %v3649, %v838
  %v4099 = vmul.f32 %v4027, %v839
  %v4100 = vmul.f32 %v4075, %v840
  %v4101 = vmul.f32 %v3648, %v841
  %v4102 = vmul.f32 %v4028, %v842
  %v4103 = vmul.f32 %v4076, %v843
  %v4104 = vmul.f32 %v3647, %v844
  %v4105 = vmul.f32 %v4029, %v845
  %v4106 = vmul.f32 %v4077, %v846
  %v4107 = vmul.f32 %v3646, %v847
  %v4108 = vmul.f32 %v4030, %v848
  %v4109 = vmul.f32 %v4078, %v849
  %v4110 = vmul.f32 %v3645, %v850
  %v4111 = vmul.f32 %v4031, %v851
  %v4112 = vmul.f32 %v4079, %v852
  %v4113 = vmul.f32 %v3644, %v853
  %v4114 = vmul.f32 %v4032, %v854
  %v4115 = vmul.f32 %v4080, %v855
  %v4116 = vmul.f32 %v3643, %v856
  %v4117 = vmul.f32 %v4033, %v857
  %v4118 = vmul.f32 %v4081, %v858
  %v4119 = vmul.f32 %v3642, %v859
  %v4120 = vmul.f32 %v4034, %v860
  %v4121 = vmul.f32 %v4082, %v861
  %v4122 = vmul.f32 %v3641, %v862
  %v4123 = vmul.f32 %v4035, %v863
  %v4124 = vmul.f32 %v4083, %v864
  %v4125 = vmul.f32 %v3640, %v865
  %v4126 = vmul.f32 %v4036, %v866
  %v4127 = vmul.f32 %v4084, %v867
  %v4128 = vmul.f32 %v3639, %v868
  %v4129 = vmul.f32 %v4037, %v869
  %v4130 = vmul.f32 %v4085, %v870
  %v4131 = vmul.f32 %v3654, %v871
  %v4132 = vmul.f32 %v4038, %v872
  %v4133 = vmul.f32 %v4086, %v873
  %v4134 = vmul.f32 %v3653, %v874
  %v4136 = vlaneseq
  %v4137 = vshrl.u32 %v4136, 7
  %v4138 = vsub.s32 0, %v4137
  %v4139 = vrot.slane %v3590, %v4138
  %v4142 = vsel %vm728, %v4089, 0
  %v4145 = vsel %vm728, %v4092, 0
  %v4148 = vsel %vm728, %v4095, 0
  %v4151 = vsel %vm728, %v4098, 0
  %v4154 = vsel %vm728, %v4101, 0
  %v4157 = vsel %vm728, %v4104, 0
  %v4160 = vsel %vm728, %v4107, 0
  %v4163 = vsel %vm728, %v4110, 0
  %v4166 = vsel %vm728, %v4113, 0
  %v4169 = vsel %vm728, %v4116, 0
  %v4172 = vsel %vm728, %v4119, 0
  %v4175 = vsel %vm728, %v4122, 0
  %v4178 = vsel %vm728, %v4125, 0
  %v4181 = vsel %vm728, %v4128, 0
  %v4184 = vsel %vm728, %v4131, 0
  %v4187 = vsel %vm728, %v4134, 0
  %4189 = vmatprep.subr.mxu0 0.0
  %4190 = vmatpush1.msra.mxu0 %v3568
  %4191 = vmatprep.subr.mxu0 0.0
  %4192 = vmatpush1.msra.mxu0 %v3567
  %4193 = vmatprep.subr.mxu0 0.0
  %4194 = vmatpush1.msra.mxu0 %v3566
  %4195 = vmatprep.subr.mxu0 0.0
  %4196 = vmatpush1.msra.mxu0 %v3565
  %4197 = vmatprep.subr.mxu0 0.0
  %4198 = vmatpush1.msra.mxu0 %v3564
  %4199 = vmatprep.subr.mxu0 0.0
  %4200 = vmatpush1.msra.mxu0 %v3563
  %4201 = vmatprep.subr.mxu0 0.0
  %4202 = vmatpush1.msra.mxu0 %v3562
  %4203 = vmatprep.subr.mxu0 0.0
  %4204 = vmatpush1.msra.mxu0 %v3561
  %4205 = vmatprep.subr.mxu0 0.0
  %4206 = vmatpush1.msra.mxu0 %v3560
  %4207 = vmatprep.subr.mxu0 0.0
  %4208 = vmatpush1.msra.mxu0 %v3559
  %4209 = vmatprep.subr.mxu0 0.0
  %4210 = vmatpush1.msra.mxu0 %v3558
  %4211 = vmatprep.subr.mxu0 0.0
  %4212 = vmatpush1.msra.mxu0 %v3557
  %4213 = vmatprep.subr.mxu0 0.0
  %4214 = vmatpush1.msra.mxu0 %v3556
  %4215 = vmatprep.subr.mxu0 0.0
  %4216 = vmatpush1.msra.mxu0 %v3555
  %4217 = vmatprep.subr.mxu0 0.0
  %4218 = vmatpush1.msra.mxu0 %v3554
  %4219 = vmatprep.subr.mxu0 0.0
  %4220 = vmatpush1.msra.mxu0 %v3553
  %4221 = vmatprep.subr.mxu0 0.0
  %4222 = vmatpush2.msra.mxu0 %v3584
  %4223 = vmatprep.subr.mxu0 0.0
  %4224 = vmatpush2.msra.mxu0 %v3583
  %4225 = vmatprep.subr.mxu0 0.0
  %4226 = vmatpush2.msra.mxu0 %v3582
  %4227 = vmatprep.subr.mxu0 0.0
  %4228 = vmatpush2.msra.mxu0 %v3581
  %4229 = vmatprep.subr.mxu0 0.0
  %4230 = vmatpush2.msra.mxu0 %v3580
  %4231 = vmatprep.subr.mxu0 0.0
  %4232 = vmatpush2.msra.mxu0 %v3579
  %4233 = vmatprep.subr.mxu0 0.0
  %4234 = vmatpush2.msra.mxu0 %v3578
  %4235 = vmatprep.subr.mxu0 0.0
  %4236 = vmatpush2.msra.mxu0 %v3577
  %4237 = vmatprep.subr.mxu0 0.0
  %4238 = vmatpush2.msra.mxu0 %v3576
  %4239 = vmatprep.subr.mxu0 0.0
  %4240 = vmatpush2.msra.mxu0 %v3575
  %4241 = vmatprep.subr.mxu0 0.0
  %4242 = vmatpush2.msra.mxu0 %v3574
  %4243 = vmatprep.subr.mxu0 0.0
  %4244 = vmatpush2.msra.mxu0 %v3573
  %4245 = vmatprep.subr.mxu0 0.0
  %4246 = vmatpush2.msra.mxu0 %v3572
  %4247 = vmatprep.subr.mxu0 0.0
  %4248 = vmatpush2.msra.mxu0 %v3571
  %4249 = vmatprep.subr.mxu0 0.0
  %4250 = vmatpush2.msra.mxu0 %v3570
  %4251 = vmatprep.subr.mxu0 0.0
  %4252 = vmatpush2.msra.mxu0 %v3569
  %4253 = vmatprep.mubr.f32.mxu0 %v4088
  %4254 = vmatmul.mubr.f32.gmra.mxu0 %v4087
  %v4255 = vpop.f32.mrf.mxu0
  %v4256 = vadd.f32 %v4139, %v4255
  %v4257 = vpop.f32.mrf.mxu0
  %4258 = vmatprep.mubr.f32.mxu0 %v4091
  %4259 = vmatmul.mubr.f32.gmra.mxu0 %v4090
  %v4260 = vpop.f32.mrf.mxu0
  %v4261 = vadd.f32 %v4139, %v4260
  %v4262 = vpop.f32.mrf.mxu0
  %4263 = vmatprep.mubr.f32.mxu0 %v4094
  %4264 = vmatmul.mubr.f32.gmra.mxu0 %v4093
  %v4265 = vpop.f32.mrf.mxu0
  %v4266 = vadd.f32 %v4139, %v4265
  %v4267 = vpop.f32.mrf.mxu0
  %4268 = vmatprep.mubr.f32.mxu0 %v4097
  %4269 = vmatmul.mubr.f32.gmra.mxu0 %v4096
  %v4270 = vpop.f32.mrf.mxu0
  %v4271 = vadd.f32 %v4139, %v4270
  %v4272 = vpop.f32.mrf.mxu0
  %4273 = vmatprep.mubr.f32.mxu0 %v4100
  %4274 = vmatmul.mubr.f32.gmra.mxu0 %v4099
  %v4275 = vpop.f32.mrf.mxu0
  %v4276 = vadd.f32 %v4139, %v4275
  %v4277 = vpop.f32.mrf.mxu0
  %4278 = vmatprep.mubr.f32.mxu0 %v4103
  %4279 = vmatmul.mubr.f32.gmra.mxu0 %v4102
  %v4280 = vpop.f32.mrf.mxu0
  %v4281 = vadd.f32 %v4139, %v4280
  %v4282 = vpop.f32.mrf.mxu0
  %4283 = vmatprep.mubr.f32.mxu0 %v4106
  %4284 = vmatmul.mubr.f32.gmra.mxu0 %v4105
  %v4285 = vpop.f32.mrf.mxu0
  %v4286 = vadd.f32 %v4139, %v4285
  %v4287 = vpop.f32.mrf.mxu0
  %4288 = vmatprep.mubr.f32.mxu0 %v4109
  %4289 = vmatmul.mubr.f32.gmra.mxu0 %v4108
  %v4290 = vpop.f32.mrf.mxu0
  %v4291 = vadd.f32 %v4139, %v4290
  %v4292 = vpop.f32.mrf.mxu0
  %4293 = vmatprep.mubr.f32.mxu0 %v4112
  %4294 = vmatmul.mubr.f32.gmra.mxu0 %v4111
  %v4295 = vpop.f32.mrf.mxu0
  %v4296 = vadd.f32 %v4139, %v4295
  %v4297 = vpop.f32.mrf.mxu0
  %4298 = vmatprep.mubr.f32.mxu0 %v4115
  %4299 = vmatmul.mubr.f32.gmra.mxu0 %v4114
  %v4300 = vpop.f32.mrf.mxu0
  %v4301 = vadd.f32 %v4139, %v4300
  %v4302 = vpop.f32.mrf.mxu0
  %4303 = vmatprep.mubr.f32.mxu0 %v4118
  %4304 = vmatmul.mubr.f32.gmra.mxu0 %v4117
  %v4305 = vpop.f32.mrf.mxu0
  %v4306 = vadd.f32 %v4139, %v4305
  %v4307 = vpop.f32.mrf.mxu0
  %4308 = vmatprep.mubr.f32.mxu0 %v4121
  %4309 = vmatmul.mubr.f32.gmra.mxu0 %v4120
  %v4310 = vpop.f32.mrf.mxu0
  %v4311 = vadd.f32 %v4139, %v4310
  %v4312 = vpop.f32.mrf.mxu0
  %4313 = vmatprep.mubr.f32.mxu0 %v4124
  %4314 = vmatmul.mubr.f32.gmra.mxu0 %v4123
  %v4315 = vpop.f32.mrf.mxu0
  %v4316 = vadd.f32 %v4139, %v4315
  %v4317 = vpop.f32.mrf.mxu0
  %4318 = vmatprep.mubr.f32.mxu0 %v4127
  %4319 = vmatmul.mubr.f32.gmra.mxu0 %v4126
  %v4320 = vpop.f32.mrf.mxu0
  %v4321 = vadd.f32 %v4139, %v4320
  %v4322 = vpop.f32.mrf.mxu0
  %4323 = vmatprep.mubr.f32.mxu0 %v4130
  %4324 = vmatmul.mubr.f32.gmra.mxu0 %v4129
  %v4325 = vpop.f32.mrf.mxu0
  %v4326 = vadd.f32 %v4139, %v4325
  %v4327 = vpop.f32.mrf.mxu0
  %4328 = vmatprep.mubr.f32.mxu0 %v4133
  %4329 = vmatmul.mubr.f32.gmra.mxu0 %v4132
  %v4330 = vpop.f32.mrf.mxu0
  %v4331 = vadd.f32 %v4139, %v4330
  %v4332 = vpop.f32.mrf.mxu0
  %4333 = vdwg.mxu0
  %4334 = vmatprep.subr.mxu0 0.0
  %4335 = vmatpush1.msra.mxu0 0.0
  %4336 = vmatprep.subr.mxu0 0.0
  %4337 = vmatpush1.msra.mxu0 0.0
  %4338 = vmatprep.subr.mxu0 0.0
  %4339 = vmatpush1.msra.mxu0 0.0
  %4340 = vmatprep.subr.mxu0 0.0
  %4341 = vmatpush1.msra.mxu0 0.0
  %4342 = vmatprep.subr.mxu0 0.0
  %4343 = vmatpush1.msra.mxu0 0.0
  %4344 = vmatprep.subr.mxu0 0.0
  %4345 = vmatpush1.msra.mxu0 0.0
  %4346 = vmatprep.subr.mxu0 0.0
  %4347 = vmatpush1.msra.mxu0 0.0
  %4348 = vmatprep.subr.mxu0 0.0
  %4349 = vmatpush1.msra.mxu0 0.0
  %4350 = vmatprep.subr.mxu0 0.0
  %4351 = vmatpush1.msra.mxu0 0.0
  %4352 = vmatprep.subr.mxu0 0.0
  %4353 = vmatpush1.msra.mxu0 0.0
  %4354 = vmatprep.subr.mxu0 0.0
  %4355 = vmatpush1.msra.mxu0 0.0
  %4356 = vmatprep.subr.mxu0 0.0
  %4357 = vmatpush1.msra.mxu0 0.0
  %4358 = vmatprep.subr.mxu0 0.0
  %4359 = vmatpush1.msra.mxu0 %v3588
  %4360 = vmatprep.subr.mxu0 0.0
  %4361 = vmatpush1.msra.mxu0 %v3587
  %4362 = vmatprep.subr.mxu0 0.0
  %4363 = vmatpush1.msra.mxu0 %v3586
  %4364 = vmatprep.subr.mxu0 0.0
  %4365 = vmatpush1.msra.mxu0 %v3585
  %4366 = vmatprep.subr.mxu0 0.0
  %4367 = vmatpush2.msra.mxu0 0.0
  %4368 = vmatprep.subr.mxu0 0.0
  %4369 = vmatpush2.msra.mxu0 0.0
  %4370 = vmatprep.subr.mxu0 0.0
  %4371 = vmatpush2.msra.mxu0 0.0
  %4372 = vmatprep.subr.mxu0 0.0
  %4373 = vmatpush2.msra.mxu0 0.0
  %4374 = vmatprep.subr.mxu0 0.0
  %4375 = vmatpush2.msra.mxu0 0.0
  %4376 = vmatprep.subr.mxu0 0.0
  %4377 = vmatpush2.msra.mxu0 0.0
  %4378 = vmatprep.subr.mxu0 0.0
  %4379 = vmatpush2.msra.mxu0 0.0
  %4380 = vmatprep.subr.mxu0 0.0
  %4381 = vmatpush2.msra.mxu0 0.0
  %4382 = vmatprep.subr.mxu0 0.0
  %4383 = vmatpush2.msra.mxu0 0.0
  %4384 = vmatprep.subr.mxu0 0.0
  %4385 = vmatpush2.msra.mxu0 0.0
  %4386 = vmatprep.subr.mxu0 0.0
  %4387 = vmatpush2.msra.mxu0 0.0
  %4388 = vmatprep.subr.mxu0 0.0
  %4389 = vmatpush2.msra.mxu0 0.0
  %4390 = vmatprep.subr.mxu0 0.0
  %4391 = vmatpush2.msra.mxu0 0.0
  %4392 = vmatprep.subr.mxu0 0.0
  %4393 = vmatpush2.msra.mxu0 0.0
  %4394 = vmatprep.subr.mxu0 0.0
  %4395 = vmatpush2.msra.mxu0 0.0
  %4396 = vmatprep.subr.mxu0 0.0
  %4397 = vmatpush2.msra.mxu0 0.0
  %4398 = vmatprep.mubr.f32.mxu0 0.0
  %4399 = vmatmul.mubr.f32.gmra.mxu0 %v4142
  %v4400 = vpop.f32.mrf.mxu0
  %v4401 = vadd.f32 %v4256, %v4400
  %v4402 = vpop.f32.mrf.mxu0
  %4403 = vmatprep.mubr.f32.mxu0 0.0
  %4404 = vmatmul.mubr.f32.gmra.mxu0 %v4145
  %v4405 = vpop.f32.mrf.mxu0
  %v4406 = vadd.f32 %v4261, %v4405
  %v4407 = vpop.f32.mrf.mxu0
  %4408 = vmatprep.mubr.f32.mxu0 0.0
  %4409 = vmatmul.mubr.f32.gmra.mxu0 %v4148
  %v4410 = vpop.f32.mrf.mxu0
  %v4411 = vadd.f32 %v4266, %v4410
  %v4412 = vpop.f32.mrf.mxu0
  %4413 = vmatprep.mubr.f32.mxu0 0.0
  %4414 = vmatmul.mubr.f32.gmra.mxu0 %v4151
  %v4415 = vpop.f32.mrf.mxu0
  %v4416 = vadd.f32 %v4271, %v4415
  %v4417 = vpop.f32.mrf.mxu0
  %4418 = vmatprep.mubr.f32.mxu0 0.0
  %4419 = vmatmul.mubr.f32.gmra.mxu0 %v4154
  %v4420 = vpop.f32.mrf.mxu0
  %v4421 = vadd.f32 %v4276, %v4420
  %v4422 = vpop.f32.mrf.mxu0
  %4423 = vmatprep.mubr.f32.mxu0 0.0
  %4424 = vmatmul.mubr.f32.gmra.mxu0 %v4157
  %v4425 = vpop.f32.mrf.mxu0
  %v4426 = vadd.f32 %v4281, %v4425
  %v4427 = vpop.f32.mrf.mxu0
  %4428 = vmatprep.mubr.f32.mxu0 0.0
  %4429 = vmatmul.mubr.f32.gmra.mxu0 %v4160
  %v4430 = vpop.f32.mrf.mxu0
  %v4431 = vadd.f32 %v4286, %v4430
  %v4432 = vpop.f32.mrf.mxu0
  %4433 = vmatprep.mubr.f32.mxu0 0.0
  %4434 = vmatmul.mubr.f32.gmra.mxu0 %v4163
  %v4435 = vpop.f32.mrf.mxu0
  %v4436 = vadd.f32 %v4291, %v4435
  %v4437 = vpop.f32.mrf.mxu0
  %4438 = vmatprep.mubr.f32.mxu0 0.0
  %4439 = vmatmul.mubr.f32.gmra.mxu0 %v4166
  %v4440 = vpop.f32.mrf.mxu0
  %v4441 = vadd.f32 %v4296, %v4440
  %v4442 = vpop.f32.mrf.mxu0
  %4443 = vmatprep.mubr.f32.mxu0 0.0
  %4444 = vmatmul.mubr.f32.gmra.mxu0 %v4169
  %v4445 = vpop.f32.mrf.mxu0
  %v4446 = vadd.f32 %v4301, %v4445
  %v4447 = vpop.f32.mrf.mxu0
  %4448 = vmatprep.mubr.f32.mxu0 0.0
  %4449 = vmatmul.mubr.f32.gmra.mxu0 %v4172
  %v4450 = vpop.f32.mrf.mxu0
  %v4451 = vadd.f32 %v4306, %v4450
  %v4452 = vpop.f32.mrf.mxu0
  %4453 = vmatprep.mubr.f32.mxu0 0.0
  %4454 = vmatmul.mubr.f32.gmra.mxu0 %v4175
  %v4455 = vpop.f32.mrf.mxu0
  %v4456 = vadd.f32 %v4311, %v4455
  %v4457 = vpop.f32.mrf.mxu0
  %4458 = vmatprep.mubr.f32.mxu0 0.0
  %4459 = vmatmul.mubr.f32.gmra.mxu0 %v4178
  %v4460 = vpop.f32.mrf.mxu0
  %v4461 = vadd.f32 %v4316, %v4460
  %v4462 = vpop.f32.mrf.mxu0
  %4463 = vmatprep.mubr.f32.mxu0 0.0
  %4464 = vmatmul.mubr.f32.gmra.mxu0 %v4181
  %v4465 = vpop.f32.mrf.mxu0
  %v4466 = vadd.f32 %v4321, %v4465
  %v4467 = vpop.f32.mrf.mxu0
  %4468 = vmatprep.mubr.f32.mxu0 0.0
  %4469 = vmatmul.mubr.f32.gmra.mxu0 %v4184
  %v4470 = vpop.f32.mrf.mxu0
  %v4471 = vadd.f32 %v4326, %v4470
  %v4472 = vpop.f32.mrf.mxu0
  %4473 = vmatprep.mubr.f32.mxu0 0.0
  %4474 = vmatmul.mubr.f32.gmra.mxu0 %v4187
  %v4475 = vpop.f32.mrf.mxu0
  %v4476 = vadd.f32 %v4331, %v4475
  %v4477 = vpop.f32.mrf.mxu0
  %4478 = vdwg.mxu0
  %v4479 = vsel %vm728, %v4401, 0.0
  %v4480 = vsel %vm728, %v4406, 0.0
  %v4481 = vadd.f32 %v4479, %v4480
  %v4482 = vsel %vm728, %v4411, 0.0
  %v4483 = vadd.f32 %v4481, %v4482
  %v4484 = vsel %vm728, %v4416, 0.0
  %v4485 = vadd.f32 %v4483, %v4484
  %v4486 = vsel %vm728, %v4421, 0.0
  %v4487 = vadd.f32 %v4485, %v4486
  %v4488 = vsel %vm728, %v4426, 0.0
  %v4489 = vadd.f32 %v4487, %v4488
  %v4490 = vsel %vm728, %v4431, 0.0
  %v4491 = vadd.f32 %v4489, %v4490
  %v4492 = vsel %vm728, %v4436, 0.0
  %v4493 = vadd.f32 %v4491, %v4492
  %v4494 = vrot.slane %v4493, 4
  %v4495 = vadd.f32 %v4493, %v4494
  %v4496 = vrot.slane %v4495, 2
  %v4497 = vadd.f32 %v4495, %v4496
  %v4498 = vrot.slane %v4497, 1
  %v4499 = vadd.f32 %v4497, %v4498
  %v4500 = vsel %vm728, %v4441, 0.0
  %v4501 = vsel %vm728, %v4446, 0.0
  %v4502 = vadd.f32 %v4500, %v4501
  %v4503 = vsel %vm728, %v4451, 0.0
  %v4504 = vadd.f32 %v4502, %v4503
  %v4505 = vsel %vm728, %v4456, 0.0
  %v4506 = vadd.f32 %v4504, %v4505
  %v4507 = vsel %vm728, %v4461, 0.0
  %v4508 = vadd.f32 %v4506, %v4507
  %v4509 = vsel %vm728, %v4466, 0.0
  %v4510 = vadd.f32 %v4508, %v4509
  %v4511 = vsel %vm728, %v4471, 0.0
  %v4512 = vadd.f32 %v4510, %v4511
  %v4513 = vsel %vm728, %v4476, 0.0
  %v4514 = vadd.f32 %v4512, %v4513
  %v4515 = vrot.slane %v4514, 4
  %v4516 = vadd.f32 %v4514, %v4515
  %v4517 = vrot.slane %v4516, 2
  %v4518 = vadd.f32 %v4516, %v4517
  %v4519 = vrot.slane %v4518, 1
  %v4520 = vadd.f32 %v4518, %v4519
  %v4521 = vmul.f32 %v4499, 0.015625
  %v4522 = vmul.f32 %v4520, 0.015625
  %s4523 = scalar_lea.vmem %s10, 32
  %v4524 = vld [vmem:[%s4523] sm:$0xff]
  %v4525 = vld [vmem:[%s4523 + $0x8] sm:$0xff]
  %v4526 = vld [vmem:[%s4523 + $0x10] sm:$0xff]
  %v4527 = vld [vmem:[%s4523 + $0x18] sm:$0xff]
  %v4530 = vsel %vm2296, %v4522, %v4521
  %v4531 = vsel %vm728, %v4530, 0
  %4533 = vmatprep.subr.mxu0 0.0
  %4534 = vmatpush1.msra.mxu0 0.0
  %4535 = vmatprep.subr.mxu0 0.0
  %4536 = vmatpush1.msra.mxu0 0.0
  %4537 = vmatprep.subr.mxu0 0.0
  %4538 = vmatpush1.msra.mxu0 0.0
  %4539 = vmatprep.subr.mxu0 0.0
  %4540 = vmatpush1.msra.mxu0 0.0
  %4541 = vmatprep.subr.mxu0 0.0
  %4542 = vmatpush1.msra.mxu0 0.0
  %4543 = vmatprep.subr.mxu0 0.0
  %4544 = vmatpush1.msra.mxu0 0.0
  %4545 = vmatprep.subr.mxu0 0.0
  %4546 = vmatpush1.msra.mxu0 0.0
  %4547 = vmatprep.subr.mxu0 0.0
  %4548 = vmatpush1.msra.mxu0 0.0
  %4549 = vmatprep.subr.mxu0 0.0
  %4550 = vmatpush1.msra.mxu0 0.0
  %4551 = vmatprep.subr.mxu0 0.0
  %4552 = vmatpush1.msra.mxu0 0.0
  %4553 = vmatprep.subr.mxu0 0.0
  %4554 = vmatpush1.msra.mxu0 0.0
  %4555 = vmatprep.subr.mxu0 0.0
  %4556 = vmatpush1.msra.mxu0 0.0
  %4557 = vmatprep.subr.mxu0 0.0
  %4558 = vmatpush1.msra.mxu0 %v4527
  %4559 = vmatprep.subr.mxu0 0.0
  %4560 = vmatpush1.msra.mxu0 %v4526
  %4561 = vmatprep.subr.mxu0 0.0
  %4562 = vmatpush1.msra.mxu0 %v4525
  %4563 = vmatprep.subr.mxu0 0.0
  %4564 = vmatpush1.msra.mxu0 %v4524
  %4565 = vmatprep.subr.mxu0 0.0
  %4566 = vmatpush2.msra.mxu0 0.0
  %4567 = vmatprep.subr.mxu0 0.0
  %4568 = vmatpush2.msra.mxu0 0.0
  %4569 = vmatprep.subr.mxu0 0.0
  %4570 = vmatpush2.msra.mxu0 0.0
  %4571 = vmatprep.subr.mxu0 0.0
  %4572 = vmatpush2.msra.mxu0 0.0
  %4573 = vmatprep.subr.mxu0 0.0
  %4574 = vmatpush2.msra.mxu0 0.0
  %4575 = vmatprep.subr.mxu0 0.0
  %4576 = vmatpush2.msra.mxu0 0.0
  %4577 = vmatprep.subr.mxu0 0.0
  %4578 = vmatpush2.msra.mxu0 0.0
  %4579 = vmatprep.subr.mxu0 0.0
  %4580 = vmatpush2.msra.mxu0 0.0
  %4581 = vmatprep.subr.mxu0 0.0
  %4582 = vmatpush2.msra.mxu0 0.0
  %4583 = vmatprep.subr.mxu0 0.0
  %4584 = vmatpush2.msra.mxu0 0.0
  %4585 = vmatprep.subr.mxu0 0.0
  %4586 = vmatpush2.msra.mxu0 0.0
  %4587 = vmatprep.subr.mxu0 0.0
  %4588 = vmatpush2.msra.mxu0 0.0
  %4589 = vmatprep.subr.mxu0 0.0
  %4590 = vmatpush2.msra.mxu0 0.0
  %4591 = vmatprep.subr.mxu0 0.0
  %4592 = vmatpush2.msra.mxu0 0.0
  %4593 = vmatprep.subr.mxu0 0.0
  %4594 = vmatpush2.msra.mxu0 0.0
  %4595 = vmatprep.subr.mxu0 0.0
  %4596 = vmatpush2.msra.mxu0 0.0
  %4597 = vmatprep.mubr.f32.mxu0 0.0
  %4598 = vmatmul.mubr.f32.gmra.mxu0 %v4531
  %v4599 = vpop.f32.mrf.mxu0
  %v4600 = vadd.f32 0.0, %v4599
  %v4601 = vpop.f32.mrf.mxu0
  %4602 = vdwg.mxu0
  %v4603 = vmax.f32 %v4600, 0.0
  %s4604 = scalar_lea.vmem %s11, 2
  %v4605 = vld [vmem:[%s4604] sm:$0x3]
  %v4607 = vsel %vm2372, %v4603, 0
  %v4610 = vsel %vm2376, %v4605, 0
  %4612 = vmatprep.subr.mxu0 0.0
  %4613 = vmatpush1.msra.mxu0 0.0
  %4614 = vmatprep.subr.mxu0 0.0
  %4615 = vmatpush1.msra.mxu0 0.0
  %4616 = vmatprep.subr.mxu0 0.0
  %4617 = vmatpush1.msra.mxu0 0.0
  %4618 = vmatprep.subr.mxu0 0.0
  %4619 = vmatpush1.msra.mxu0 0.0
  %4620 = vmatprep.subr.mxu0 0.0
  %4621 = vmatpush1.msra.mxu0 0.0
  %4622 = vmatprep.subr.mxu0 0.0
  %4623 = vmatpush1.msra.mxu0 0.0
  %4624 = vmatprep.subr.mxu0 0.0
  %4625 = vmatpush1.msra.mxu0 0.0
  %4626 = vmatprep.subr.mxu0 0.0
  %4627 = vmatpush1.msra.mxu0 0.0
  %4628 = vmatprep.subr.mxu0 0.0
  %4629 = vmatpush1.msra.mxu0 0.0
  %4630 = vmatprep.subr.mxu0 0.0
  %4631 = vmatpush1.msra.mxu0 0.0
  %4632 = vmatprep.subr.mxu0 0.0
  %4633 = vmatpush1.msra.mxu0 0.0
  %4634 = vmatprep.subr.mxu0 0.0
  %4635 = vmatpush1.msra.mxu0 0.0
  %4636 = vmatprep.subr.mxu0 0.0
  %4637 = vmatpush1.msra.mxu0 0.0
  %4638 = vmatprep.subr.mxu0 0.0
  %4639 = vmatpush1.msra.mxu0 0.0
  %4640 = vmatprep.subr.mxu0 0.0
  %4641 = vmatpush1.msra.mxu0 0.0
  %4642 = vmatprep.subr.mxu0 0.0
  %4643 = vmatpush1.msra.mxu0 %v4610
  %4644 = vmatprep.subr.mxu0 0.0
  %4645 = vmatpush2.msra.mxu0 0.0
  %4646 = vmatprep.subr.mxu0 0.0
  %4647 = vmatpush2.msra.mxu0 0.0
  %4648 = vmatprep.subr.mxu0 0.0
  %4649 = vmatpush2.msra.mxu0 0.0
  %4650 = vmatprep.subr.mxu0 0.0
  %4651 = vmatpush2.msra.mxu0 0.0
  %4652 = vmatprep.subr.mxu0 0.0
  %4653 = vmatpush2.msra.mxu0 0.0
  %4654 = vmatprep.subr.mxu0 0.0
  %4655 = vmatpush2.msra.mxu0 0.0
  %4656 = vmatprep.subr.mxu0 0.0
  %4657 = vmatpush2.msra.mxu0 0.0
  %4658 = vmatprep.subr.mxu0 0.0
  %4659 = vmatpush2.msra.mxu0 0.0
  %4660 = vmatprep.subr.mxu0 0.0
  %4661 = vmatpush2.msra.mxu0 0.0
  %4662 = vmatprep.subr.mxu0 0.0
  %4663 = vmatpush2.msra.mxu0 0.0
  %4664 = vmatprep.subr.mxu0 0.0
  %4665 = vmatpush2.msra.mxu0 0.0
  %4666 = vmatprep.subr.mxu0 0.0
  %4667 = vmatpush2.msra.mxu0 0.0
  %4668 = vmatprep.subr.mxu0 0.0
  %4669 = vmatpush2.msra.mxu0 0.0
  %4670 = vmatprep.subr.mxu0 0.0
  %4671 = vmatpush2.msra.mxu0 0.0
  %4672 = vmatprep.subr.mxu0 0.0
  %4673 = vmatpush2.msra.mxu0 0.0
  %4674 = vmatprep.subr.mxu0 0.0
  %4675 = vmatpush2.msra.mxu0 0.0
  %4676 = vmatprep.mubr.f32.mxu0 0.0
  %4677 = vmatmul.mubr.f32.gmra.mxu0 %v4607
  %v4678 = vpop.f32.mrf.mxu0
  %v4679 = vadd.f32 0.0, %v4678
  %v4680 = vpop.f32.mrf.mxu0
  %4681 = vdwg.mxu0
  %v4682 = vxor.u32 %v4679, 2147483648
  %v4683 = vmul.f32 %v4682, 1.442695
  %v4684 = vpow.pop %v4683
  %v4685 = vadd.f32 %v4684, 1.0
  %v4686 = vrcp.pop %v4685
  %v4687 = vmul.f32 1.0, %v4686
  %v4690 = vunpack.c.l.s4 1966171168
  %v4691 = vunpack.c.0.s8 %v4690
  %v4692 = vlaneseq
  %v4693 = vshrl.u32 %v4692, 7
  %v4694 = vsub.s32 %v4691, %v4693
  %v4695 = vrot.slane %v4687, %v4694
  %v4696 = vcombine.high %v4695, %v4695
  %v4698 = vunpack.c.l.s4 1966171168
  %v4699 = vunpack.c.0.s8 %v4698
  %v4700 = vlaneseq
  %v4701 = vshrl.u32 %v4700, 7
  %v4702 = vsub.s32 %v4699, %v4701
  %v4703 = vrot.slane %v4695, %v4702
  %v4705 = vunpack.c.l.s4 1966171168
  %v4706 = vunpack.c.0.s8 %v4705
  %v4707 = vlaneseq
  %v4708 = vshrl.u32 %v4707, 7
  %v4709 = vsub.s32 %v4706, %v4708
  %v4710 = vrot.slane %v4696, %v4709
  %v4711 = vlaneseq
  %v4712 = vshrl.u32 %v4711, 7
  %v4713 = vsub.s32 0, %v4712
  %v4714 = vrot.slane %v4703, %v4713
  %v4715 = vlaneseq
  %v4716 = vshrl.u32 %v4715, 7
  %v4717 = vsub.s32 0, %v4716
  %v4718 = vrot.slane %v4710, %v4717
  %v4721 = vmul.f32 %v4401, %v4714
  %v4722 = vmul.f32 %v4406, %v4714
  %v4723 = vmul.f32 %v4411, %v4714
  %v4724 = vmul.f32 %v4416, %v4714
  %v4725 = vmul.f32 %v4421, %v4714
  %v4726 = vmul.f32 %v4426, %v4714
  %v4727 = vmul.f32 %v4431, %v4714
  %v4728 = vmul.f32 %v4436, %v4714
  %v4729 = vmul.f32 %v4441, %v4718
  %v4730 = vmul.f32 %v4446, %v4718
  %v4731 = vmul.f32 %v4451, %v4718
  %v4732 = vmul.f32 %v4456, %v4718
  %v4733 = vmul.f32 %v4461, %v4718
  %v4734 = vmul.f32 %v4466, %v4718
  %v4735 = vmul.f32 %v4471, %v4718
  %v4736 = vmul.f32 %v4476, %v4718
  %v4737 = vadd.f32 %v4721, %v2553
  %v4738 = vadd.f32 %v4722, %v2554
  %v4739 = vadd.f32 %v4723, %v2555
  %v4740 = vadd.f32 %v4724, %v2556
  %v4741 = vadd.f32 %v4725, %v2557
  %v4742 = vadd.f32 %v4726, %v2558
  %v4743 = vadd.f32 %v4727, %v2559
  %v4744 = vadd.f32 %v4728, %v2560
  %v4745 = vadd.f32 %v4729, %v2561
  %v4746 = vadd.f32 %v4730, %v2562
  %v4747 = vadd.f32 %v4731, %v2563
  %v4748 = vadd.f32 %v4732, %v2564
  %v4749 = vadd.f32 %v4733, %v2565
  %v4750 = vadd.f32 %v4734, %v2566
  %v4751 = vadd.f32 %v4735, %v2567
  %v4752 = vadd.f32 %v4736, %v2568
  %vm4753 = vcmp.gt.f32.partialorder %v4737, 0.0
  %vm4754 = vcmp.gt.f32.partialorder %v4738, 0.0
  %vm4755 = vcmp.gt.f32.partialorder %v4739, 0.0
  %vm4756 = vcmp.gt.f32.partialorder %v4740, 0.0
  %vm4757 = vcmp.gt.f32.partialorder %v4741, 0.0
  %vm4758 = vcmp.gt.f32.partialorder %v4742, 0.0
  %vm4759 = vcmp.gt.f32.partialorder %v4743, 0.0
  %vm4760 = vcmp.gt.f32.partialorder %v4744, 0.0
  %vm4761 = vcmp.gt.f32.partialorder %v4745, 0.0
  %vm4762 = vcmp.gt.f32.partialorder %v4746, 0.0
  %vm4763 = vcmp.gt.f32.partialorder %v4747, 0.0
  %vm4764 = vcmp.gt.f32.partialorder %v4748, 0.0
  %vm4765 = vcmp.gt.f32.partialorder %v4749, 0.0
  %vm4766 = vcmp.gt.f32.partialorder %v4750, 0.0
  %vm4767 = vcmp.gt.f32.partialorder %v4751, 0.0
  %vm4768 = vcmp.gt.f32.partialorder %v4752, 0.0
  %v4769 = vmul.f32 %v3518, %v4737
  %v4770 = vmul.f32 %v3518, %v4738
  %v4771 = vmul.f32 %v3518, %v4739
  %v4772 = vmul.f32 %v3518, %v4740
  %v4773 = vmul.f32 %v3518, %v4741
  %v4774 = vmul.f32 %v3518, %v4742
  %v4775 = vmul.f32 %v3518, %v4743
  %v4776 = vmul.f32 %v3518, %v4744
  %v4777 = vmul.f32 %v3518, %v4745
  %v4778 = vmul.f32 %v3518, %v4746
  %v4779 = vmul.f32 %v3518, %v4747
  %v4780 = vmul.f32 %v3518, %v4748
  %v4781 = vmul.f32 %v3518, %v4749
  %v4782 = vmul.f32 %v3518, %v4750
  %v4783 = vmul.f32 %v3518, %v4751
  %v4784 = vmul.f32 %v3518, %v4752
  %v4785 = vsel %vm4753, %v4737, %v4769
  %v4786 = vsel %vm4754, %v4738, %v4770
  %v4787 = vsel %vm4755, %v4739, %v4771
  %v4788 = vsel %vm4756, %v4740, %v4772
  %v4789 = vsel %vm4757, %v4741, %v4773
  %v4790 = vsel %vm4758, %v4742, %v4774
  %v4791 = vsel %vm4759, %v4743, %v4775
  %v4792 = vsel %vm4760, %v4744, %v4776
  %v4793 = vsel %vm4761, %v4745, %v4777
  %v4794 = vsel %vm4762, %v4746, %v4778
  %v4795 = vsel %vm4763, %v4747, %v4779
  %v4796 = vsel %vm4764, %v4748, %v4780
  %v4797 = vsel %vm4765, %v4749, %v4781
  %v4798 = vsel %vm4766, %v4750, %v4782
  %v4799 = vsel %vm4767, %v4751, %v4783
  %v4800 = vsel %vm4768, %v4752, %v4784
  %v4801 = vld [vmem:[%s12] sm:$0xff]
  %v4802 = vld [vmem:[%s12 + $0x8] sm:$0xff]
  %v4803 = vld [vmem:[%s12 + $0x10] sm:$0xff]
  %v4804 = vld [vmem:[%s12 + $0x18] sm:$0xff]
  %v4805 = vld [vmem:[%s13] sm:$0x1]
  %v4807 = vlaneseq
  %v4808 = vshrl.u32 %v4807, 7
  %v4809 = vsub.s32 0, %v4808
  %v4810 = vrot.slane %v4805, %v4809
  %v4813 = vsel %vm728, %v4785, 0
  %v4816 = vsel %vm728, %v4786, 0
  %v4819 = vsel %vm728, %v4787, 0
  %v4822 = vsel %vm728, %v4788, 0
  %v4825 = vsel %vm728, %v4789, 0
  %v4828 = vsel %vm728, %v4790, 0
  %v4831 = vsel %vm728, %v4791, 0
  %v4834 = vsel %vm728, %v4792, 0
  %v4837 = vsel %vm728, %v4793, 0
  %v4840 = vsel %vm728, %v4794, 0
  %v4843 = vsel %vm728, %v4795, 0
  %v4846 = vsel %vm728, %v4796, 0
  %v4849 = vsel %vm728, %v4797, 0
  %v4852 = vsel %vm728, %v4798, 0
  %v4855 = vsel %vm728, %v4799, 0
  %v4858 = vsel %vm728, %v4800, 0
  %4860 = vmatprep.subr.mxu0 0.0
  %4861 = vmatpush1.msra.mxu0 0.0
  %4862 = vmatprep.subr.mxu0 0.0
  %4863 = vmatpush1.msra.mxu0 0.0
  %4864 = vmatprep.subr.mxu0 0.0
  %4865 = vmatpush1.msra.mxu0 0.0
  %4866 = vmatprep.subr.mxu0 0.0
  %4867 = vmatpush1.msra.mxu0 0.0
  %4868 = vmatprep.subr.mxu0 0.0
  %4869 = vmatpush1.msra.mxu0 0.0
  %4870 = vmatprep.subr.mxu0 0.0
  %4871 = vmatpush1.msra.mxu0 0.0
  %4872 = vmatprep.subr.mxu0 0.0
  %4873 = vmatpush1.msra.mxu0 0.0
  %4874 = vmatprep.subr.mxu0 0.0
  %4875 = vmatpush1.msra.mxu0 0.0
  %4876 = vmatprep.subr.mxu0 0.0
  %4877 = vmatpush1.msra.mxu0 0.0
  %4878 = vmatprep.subr.mxu0 0.0
  %4879 = vmatpush1.msra.mxu0 0.0
  %4880 = vmatprep.subr.mxu0 0.0
  %4881 = vmatpush1.msra.mxu0 0.0
  %4882 = vmatprep.subr.mxu0 0.0
  %4883 = vmatpush1.msra.mxu0 0.0
  %4884 = vmatprep.subr.mxu0 0.0
  %4885 = vmatpush1.msra.mxu0 %v4804
  %4886 = vmatprep.subr.mxu0 0.0
  %4887 = vmatpush1.msra.mxu0 %v4803
  %4888 = vmatprep.subr.mxu0 0.0
  %4889 = vmatpush1.msra.mxu0 %v4802
  %4890 = vmatprep.subr.mxu0 0.0
  %4891 = vmatpush1.msra.mxu0 %v4801
  %4892 = vmatprep.subr.mxu0 0.0
  %4893 = vmatpush2.msra.mxu0 0.0
  %4894 = vmatprep.subr.mxu0 0.0
  %4895 = vmatpush2.msra.mxu0 0.0
  %4896 = vmatprep.subr.mxu0 0.0
  %4897 = vmatpush2.msra.mxu0 0.0
  %4898 = vmatprep.subr.mxu0 0.0
  %4899 = vmatpush2.msra.mxu0 0.0
  %4900 = vmatprep.subr.mxu0 0.0
  %4901 = vmatpush2.msra.mxu0 0.0
  %4902 = vmatprep.subr.mxu0 0.0
  %4903 = vmatpush2.msra.mxu0 0.0
  %4904 = vmatprep.subr.mxu0 0.0
  %4905 = vmatpush2.msra.mxu0 0.0
  %4906 = vmatprep.subr.mxu0 0.0
  %4907 = vmatpush2.msra.mxu0 0.0
  %4908 = vmatprep.subr.mxu0 0.0
  %4909 = vmatpush2.msra.mxu0 0.0
  %4910 = vmatprep.subr.mxu0 0.0
  %4911 = vmatpush2.msra.mxu0 0.0
  %4912 = vmatprep.subr.mxu0 0.0
  %4913 = vmatpush2.msra.mxu0 0.0
  %4914 = vmatprep.subr.mxu0 0.0
  %4915 = vmatpush2.msra.mxu0 0.0
  %4916 = vmatprep.subr.mxu0 0.0
  %4917 = vmatpush2.msra.mxu0 0.0
  %4918 = vmatprep.subr.mxu0 0.0
  %4919 = vmatpush2.msra.mxu0 0.0
  %4920 = vmatprep.subr.mxu0 0.0
  %4921 = vmatpush2.msra.mxu0 0.0
  %4922 = vmatprep.subr.mxu0 0.0
  %4923 = vmatpush2.msra.mxu0 0.0
  %4924 = vmatprep.mubr.f32.mxu0 0.0
  %4925 = vmatmul.mubr.f32.gmra.mxu0 %v4813
  %v4926 = vpop.f32.mrf.mxu0
  %v4927 = vadd.f32 %v4810, %v4926
  %v4928 = vpop.f32.mrf.mxu0
  %4929 = vmatprep.mubr.f32.mxu0 0.0
  %4930 = vmatmul.mubr.f32.gmra.mxu0 %v4816
  %v4931 = vpop.f32.mrf.mxu0
  %v4932 = vadd.f32 %v4810, %v4931
  %v4933 = vpop.f32.mrf.mxu0
  %4934 = vmatprep.mubr.f32.mxu0 0.0
  %4935 = vmatmul.mubr.f32.gmra.mxu0 %v4819
  %v4936 = vpop.f32.mrf.mxu0
  %v4937 = vadd.f32 %v4810, %v4936
  %v4938 = vpop.f32.mrf.mxu0
  %4939 = vmatprep.mubr.f32.mxu0 0.0
  %4940 = vmatmul.mubr.f32.gmra.mxu0 %v4822
  %v4941 = vpop.f32.mrf.mxu0
  %v4942 = vadd.f32 %v4810, %v4941
  %v4943 = vpop.f32.mrf.mxu0
  %4944 = vmatprep.mubr.f32.mxu0 0.0
  %4945 = vmatmul.mubr.f32.gmra.mxu0 %v4825
  %v4946 = vpop.f32.mrf.mxu0
  %v4947 = vadd.f32 %v4810, %v4946
  %v4948 = vpop.f32.mrf.mxu0
  %4949 = vmatprep.mubr.f32.mxu0 0.0
  %4950 = vmatmul.mubr.f32.gmra.mxu0 %v4828
  %v4951 = vpop.f32.mrf.mxu0
  %v4952 = vadd.f32 %v4810, %v4951
  %v4953 = vpop.f32.mrf.mxu0
  %4954 = vmatprep.mubr.f32.mxu0 0.0
  %4955 = vmatmul.mubr.f32.gmra.mxu0 %v4831
  %v4956 = vpop.f32.mrf.mxu0
  %v4957 = vadd.f32 %v4810, %v4956
  %v4958 = vpop.f32.mrf.mxu0
  %4959 = vmatprep.mubr.f32.mxu0 0.0
  %4960 = vmatmul.mubr.f32.gmra.mxu0 %v4834
  %v4961 = vpop.f32.mrf.mxu0
  %v4962 = vadd.f32 %v4810, %v4961
  %v4963 = vpop.f32.mrf.mxu0
  %4964 = vmatprep.mubr.f32.mxu0 0.0
  %4965 = vmatmul.mubr.f32.gmra.mxu0 %v4837
  %v4966 = vpop.f32.mrf.mxu0
  %v4967 = vadd.f32 %v4810, %v4966
  %v4968 = vpop.f32.mrf.mxu0
  %4969 = vmatprep.mubr.f32.mxu0 0.0
  %4970 = vmatmul.mubr.f32.gmra.mxu0 %v4840
  %v4971 = vpop.f32.mrf.mxu0
  %v4972 = vadd.f32 %v4810, %v4971
  %v4973 = vpop.f32.mrf.mxu0
  %4974 = vmatprep.mubr.f32.mxu0 0.0
  %4975 = vmatmul.mubr.f32.gmra.mxu0 %v4843
  %v4976 = vpop.f32.mrf.mxu0
  %v4977 = vadd.f32 %v4810, %v4976
  %v4978 = vpop.f32.mrf.mxu0
  %4979 = vmatprep.mubr.f32.mxu0 0.0
  %4980 = vmatmul.mubr.f32.gmra.mxu0 %v4846
  %v4981 = vpop.f32.mrf.mxu0
  %v4982 = vadd.f32 %v4810, %v4981
  %v4983 = vpop.f32.mrf.mxu0
  %4984 = vmatprep.mubr.f32.mxu0 0.0
  %4985 = vmatmul.mubr.f32.gmra.mxu0 %v4849
  %v4986 = vpop.f32.mrf.mxu0
  %v4987 = vadd.f32 %v4810, %v4986
  %v4988 = vpop.f32.mrf.mxu0
  %4989 = vmatprep.mubr.f32.mxu0 0.0
  %4990 = vmatmul.mubr.f32.gmra.mxu0 %v4852
  %v4991 = vpop.f32.mrf.mxu0
  %v4992 = vadd.f32 %v4810, %v4991
  %v4993 = vpop.f32.mrf.mxu0
  %4994 = vmatprep.mubr.f32.mxu0 0.0
  %4995 = vmatmul.mubr.f32.gmra.mxu0 %v4855
  %v4996 = vpop.f32.mrf.mxu0
  %v4997 = vadd.f32 %v4810, %v4996
  %v4998 = vpop.f32.mrf.mxu0
  %4999 = vmatprep.mubr.f32.mxu0 0.0
  %5000 = vmatmul.mubr.f32.gmra.mxu0 %v4858
  %v5001 = vpop.f32.mrf.mxu0
  %v5002 = vadd.f32 %v4810, %v5001
  %v5003 = vpop.f32.mrf.mxu0
  %5004 = vdwg.mxu0
  %v5005 = vmax.f32 %v4927, 0.0
  %v5006 = vmax.f32 %v4932, 0.0
  %v5007 = vmax.f32 %v4937, 0.0
  %v5008 = vmax.f32 %v4942, 0.0
  %v5009 = vmax.f32 %v4947, 0.0
  %v5010 = vmax.f32 %v4952, 0.0
  %v5011 = vmax.f32 %v4957, 0.0
  %v5012 = vmax.f32 %v4962, 0.0
  %v5013 = vmax.f32 %v4967, 0.0
  %v5014 = vmax.f32 %v4972, 0.0
  %v5015 = vmax.f32 %v4977, 0.0
  %v5016 = vmax.f32 %v4982, 0.0
  %v5017 = vmax.f32 %v4987, 0.0
  %v5018 = vmax.f32 %v4992, 0.0
  %v5019 = vmax.f32 %v4997, 0.0
  %v5020 = vmax.f32 %v5002, 0.0
  %5021 = vst.msk [vmem:[%s14] sm:$0xff] %vm745, %v5005
  %5022 = vst.msk [vmem:[%s14 + $0x8] sm:$0xff] %vm745, %v5006
  %5023 = vst.msk [vmem:[%s14 + $0x10] sm:$0xff] %vm745, %v5007
  %5024 = vst.msk [vmem:[%s14 + $0x18] sm:$0xff] %vm745, %v5008
  %5025 = vst.msk [vmem:[%s14 + $0x20] sm:$0xff] %vm745, %v5009
  %5026 = vst.msk [vmem:[%s14 + $0x28] sm:$0xff] %vm745, %v5010
  %5027 = vst.msk [vmem:[%s14 + $0x30] sm:$0xff] %vm745, %v5011
  %5028 = vst.msk [vmem:[%s14 + $0x38] sm:$0xff] %vm745, %v5012
  %5029 = vst.msk [vmem:[%s14 + $0x40] sm:$0xff] %vm745, %v5013
  %5030 = vst.msk [vmem:[%s14 + $0x48] sm:$0xff] %vm745, %v5014
  %5031 = vst.msk [vmem:[%s14 + $0x50] sm:$0xff] %vm745, %v5015
  %5032 = vst.msk [vmem:[%s14 + $0x58] sm:$0xff] %vm745, %v5016
  %5033 = vst.msk [vmem:[%s14 + $0x60] sm:$0xff] %vm745, %v5017
  %5034 = vst.msk [vmem:[%s14 + $0x68] sm:$0xff] %vm745, %v5018
  %5035 = vst.msk [vmem:[%s14 + $0x70] sm:$0xff] %vm745, %v5019
  %5036 = vst.msk [vmem:[%s14 + $0x78] sm:$0xff] %vm745, %v5020
  // Predicated region
  $region58: #{net_forward.2} parent=0 // pred_check
    _
  $region59: #{net_forward.2} parent=0 // pred_check_branch
    %5038 = sbr.rel (0) target = $region61
  $region60: #{net_forward.2} parent=0 // pred_region
    _
  $region61: #{net_forward.2} parent=0 // pred_fallthru
    _
  // Predicated region
  $region62: #{net_forward.2} parent=0 // pred_check
    _
  $region63: #{net_forward.2} parent=0 // pred_check_branch
    %5040 = sbr.rel (0) target = $region65
  $region64: #{net_forward.2} parent=0 // pred_region
    _
  $region65: #{net_forward.2} parent=0 // pred_fallthru
    _

// kernel: net_forward.3
$region0: #{net_forward.3}
  #allocation0 [shape = 'u32[]', space=smem, size = 0x4, offset = 0x4, fixed_abs, tag = 'smem constant byte address 0x4 - core index']
  #allocation1 [shape = 'u32[144,128]{1,0:T(1,128)}', space=vmem, size = 0x12000, scoped, tag = 'internal scratch']
  #allocation2 [shape = 'f32[1,1]{1,0:T(1,128)S(1)}', space=vmem, size = 0x200, scoped, tag = 'scoped memory for net_forward.3']
  %s0 = inlined_call_operand.vmem [shape: f32[2,2048], index: 0, kind: input, shape index: {}]
  %s1 = inlined_call_operand.vmem [shape: f32[2048,64], index: 1, kind: input, shape index: {}]
  %s2 = inlined_call_operand.vmem [shape: f32[1,64], index: 2, kind: input, shape index: {}]
  %s3 = inlined_call_operand.vmem [shape: f32[2,2048], index: 3, kind: input, shape index: {}]
  %s4 = inlined_call_operand.vmem [shape: f32[2048,256], index: 4, kind: input, shape index: {}]
  %s5 = inlined_call_operand.vmem [shape: f32[1,256], index: 5, kind: input, shape index: {}]
  %s6 = inlined_call_operand.vmem [shape: f32[256,1], index: 6, kind: input, shape index: {}]
  %s7 = inlined_call_operand.<no memory space> [shape: f32[1,1], index: 7, kind: input, shape index: {}]
  %s8 = inlined_call_operand.hbm [shape: f32[2,64], index: 8, kind: output, shape index: {0}]
  %s9 = inlined_call_operand.vmem [shape: f32[2,1], index: 9, kind: output, shape index: {1}]
  %10 = xla_tuple %s8, %s9
  %s11 = sld [smem:[#allocation0]]
  $region50: #{net_forward.3} parent=0
    _
  %s13 = ssub.s32 1, %s11
  %s14 = scalar_select 0, %s13, %s11
  %v15 = vstv %s7
  %16 = vst [vmem:[#allocation2] sm:$0x1] %v15
  $region1: #{net_forward.3} parent=0
    #allocation3 [shape = 'u8[1024]{0}', space=vmem, size = 0x400, scoped, tag = 'output window, operand 0, single buffered']
    #allocation4 [shape = 's32[1]{0}', space=sflag, size = 0x4, scoped, tag = 'scoped memory for net_forward.3']
    %17 = vsyncpa [#allocation4], 0
    // Predicated region
    $region2: #{net_forward.3} parent=1 // pred_check
      _
    $region3: #{net_forward.3} parent=1 // pred_check_branch
      %19 = sbr.rel (0) target = $region5
    $region4: #{net_forward.3} parent=1 // pred_region
      _
    $region5: #{net_forward.3} parent=1 // pred_fallthru
      _
    // Predicated region
    $region6: #{net_forward.3} parent=1 // pred_check
      _
    $region7: #{net_forward.3} parent=1 // pred_check_branch
      %21 = sbr.rel (0) target = $region9
    $region8: #{net_forward.3} parent=1 // pred_region
      _
    $region9: #{net_forward.3} parent=1 // pred_fallthru
      _
    // Predicated region
    $region10: #{net_forward.3} parent=1 // pred_check
      _
    $region11: #{net_forward.3} parent=1 // pred_check_branch
      %23 = sbr.rel (0) target = $region13
    $region12: #{net_forward.3} parent=1 // pred_region
      _
    $region13: #{net_forward.3} parent=1 // pred_fallthru
      _
    // Predicated region
    $region14: #{net_forward.3} parent=1 // pred_check
      _
    $region15: #{net_forward.3} parent=1 // pred_check_branch
      %25 = sbr.rel (0) target = $region17
    $region16: #{net_forward.3} parent=1 // pred_region
      _
    $region17: #{net_forward.3} parent=1 // pred_fallthru
      _
    // Predicated region
    $region18: #{net_forward.3} parent=1 // pred_check
      _
    $region19: #{net_forward.3} parent=1 // pred_check_branch
      %27 = sbr.rel (0) target = $region21
    $region20: #{net_forward.3} parent=1 // pred_region
      _
    $region21: #{net_forward.3} parent=1 // pred_fallthru
      _
    // Predicated region
    $region22: #{net_forward.3} parent=1 // pred_check
      _
    $region23: #{net_forward.3} parent=1 // pred_check_branch
      %29 = sbr.rel (0) target = $region25
    $region24: #{net_forward.3} parent=1 // pred_region
      _
    $region25: #{net_forward.3} parent=1 // pred_fallthru
      _
    // Predicated region
    $region26: #{net_forward.3} parent=1 // pred_check
      _
    $region27: #{net_forward.3} parent=1 // pred_check_branch
      %31 = sbr.rel (0) target = $region29
    $region28: #{net_forward.3} parent=1 // pred_region
      _
    $region29: #{net_forward.3} parent=1 // pred_fallthru
      _
    // Predicated region
    $region30: #{net_forward.3} parent=1 // pred_check
      _
    $region31: #{net_forward.3} parent=1 // pred_check_branch
      %33 = sbr.rel (0) target = $region33
    $region32: #{net_forward.3} parent=1 // pred_region
      _
    $region33: #{net_forward.3} parent=1 // pred_fallthru
      _
    %v34 = vld [vmem:[%s0] sm:$0xff]
    %v35 = vld [vmem:[%s0 + $0x8] sm:$0xff]
    %v36 = vld [vmem:[%s0 + $0x10] sm:$0xff]
    %v37 = vld [vmem:[%s0 + $0x18] sm:$0xff]
    %v38 = vld [vmem:[%s1] sm:$0xff]
    %v39 = vld [vmem:[%s1 + $0x8] sm:$0xff]
    %v40 = vld [vmem:[%s1 + $0x10] sm:$0xff]
    %v41 = vld [vmem:[%s1 + $0x18] sm:$0xff]
    %v42 = vld [vmem:[%s1 + $0x20] sm:$0xff]
    %v43 = vld [vmem:[%s1 + $0x28] sm:$0xff]
    %v44 = vld [vmem:[%s1 + $0x30] sm:$0xff]
    %v45 = vld [vmem:[%s1 + $0x38] sm:$0xff]
    %v46 = vld [vmem:[%s1 + $0x40] sm:$0xff]
    %v47 = vld [vmem:[%s1 + $0x48] sm:$0xff]
    %v48 = vld [vmem:[%s1 + $0x50] sm:$0xff]
    %v49 = vld [vmem:[%s1 + $0x58] sm:$0xff]
    %v50 = vld [vmem:[%s1 + $0x60] sm:$0xff]
    %v51 = vld [vmem:[%s1 + $0x68] sm:$0xff]
    %v52 = vld [vmem:[%s1 + $0x70] sm:$0xff]
    %v53 = vld [vmem:[%s1 + $0x78] sm:$0xff]
    %v54 = vld [vmem:[%s1 + $0x80] sm:$0xff]
    %v55 = vld [vmem:[%s1 + $0x88] sm:$0xff]
    %v56 = vld [vmem:[%s1 + $0x90] sm:$0xff]
    %v57 = vld [vmem:[%s1 + $0x98] sm:$0xff]
    %v58 = vld [vmem:[%s1 + $0xa0] sm:$0xff]
    %v59 = vld [vmem:[%s1 + $0xa8] sm:$0xff]
    %v60 = vld [vmem:[%s1 + $0xb0] sm:$0xff]
    %v61 = vld [vmem:[%s1 + $0xb8] sm:$0xff]
    %v62 = vld [vmem:[%s1 + $0xc0] sm:$0xff]
    %v63 = vld [vmem:[%s1 + $0xc8] sm:$0xff]
    %v64 = vld [vmem:[%s1 + $0xd0] sm:$0xff]
    %v65 = vld [vmem:[%s1 + $0xd8] sm:$0xff]
    %v66 = vld [vmem:[%s1 + $0xe0] sm:$0xff]
    %v67 = vld [vmem:[%s1 + $0xe8] sm:$0xff]
    %v68 = vld [vmem:[%s1 + $0xf0] sm:$0xff]
    %v69 = vld [vmem:[%s1 + $0xf8] sm:$0xff]
    %v70 = vld [vmem:[%s1 + $0x100] sm:$0xff]
    %v71 = vld [vmem:[%s1 + $0x108] sm:$0xff]
    %v72 = vld [vmem:[%s1 + $0x110] sm:$0xff]
    %v73 = vld [vmem:[%s1 + $0x118] sm:$0xff]
    %v74 = vld [vmem:[%s1 + $0x120] sm:$0xff]
    %v75 = vld [vmem:[%s1 + $0x128] sm:$0xff]
    %v76 = vld [vmem:[%s1 + $0x130] sm:$0xff]
    %v77 = vld [vmem:[%s1 + $0x138] sm:$0xff]
    %v78 = vld [vmem:[%s1 + $0x140] sm:$0xff]
    %v79 = vld [vmem:[%s1 + $0x148] sm:$0xff]
    %v80 = vld [vmem:[%s1 + $0x150] sm:$0xff]
    %v81 = vld [vmem:[%s1 + $0x158] sm:$0xff]
    %v82 = vld [vmem:[%s1 + $0x160] sm:$0xff]
    %v83 = vld [vmem:[%s1 + $0x168] sm:$0xff]
    %v84 = vld [vmem:[%s1 + $0x170] sm:$0xff]
    %v85 = vld [vmem:[%s1 + $0x178] sm:$0xff]
    %v86 = vld [vmem:[%s1 + $0x180] sm:$0xff]
    %v87 = vld [vmem:[%s1 + $0x188] sm:$0xff]
    %v88 = vld [vmem:[%s1 + $0x190] sm:$0xff]
    %v89 = vld [vmem:[%s1 + $0x198] sm:$0xff]
    %v90 = vld [vmem:[%s1 + $0x1a0] sm:$0xff]
    %v91 = vld [vmem:[%s1 + $0x1a8] sm:$0xff]
    %v92 = vld [vmem:[%s1 + $0x1b0] sm:$0xff]
    %v93 = vld [vmem:[%s1 + $0x1b8] sm:$0xff]
    %v94 = vld [vmem:[%s1 + $0x1c0] sm:$0xff]
    %v95 = vld [vmem:[%s1 + $0x1c8] sm:$0xff]
    %v96 = vld [vmem:[%s1 + $0x1d0] sm:$0xff]
    %v97 = vld [vmem:[%s1 + $0x1d8] sm:$0xff]
    %v98 = vld [vmem:[%s1 + $0x1e0] sm:$0xff]
    %v99 = vld [vmem:[%s1 + $0x1e8] sm:$0xff]
    %v100 = vld [vmem:[%s1 + $0x1f0] sm:$0xff]
    %v101 = vld [vmem:[%s1 + $0x1f8] sm:$0xff]
    %v102 = vld [vmem:[%s1 + $0x200] sm:$0xff]
    %v103 = vld [vmem:[%s1 + $0x208] sm:$0xff]
    %v104 = vld [vmem:[%s1 + $0x210] sm:$0xff]
    %v105 = vld [vmem:[%s1 + $0x218] sm:$0xff]
    %v106 = vld [vmem:[%s1 + $0x220] sm:$0xff]
    %v107 = vld [vmem:[%s1 + $0x228] sm:$0xff]
    %v108 = vld [vmem:[%s1 + $0x230] sm:$0xff]
    %v109 = vld [vmem:[%s1 + $0x238] sm:$0xff]
    %v110 = vld [vmem:[%s1 + $0x240] sm:$0xff]
    %v111 = vld [vmem:[%s1 + $0x248] sm:$0xff]
    %v112 = vld [vmem:[%s1 + $0x250] sm:$0xff]
    %v113 = vld [vmem:[%s1 + $0x258] sm:$0xff]
    %v114 = vld [vmem:[%s1 + $0x260] sm:$0xff]
    %v115 = vld [vmem:[%s1 + $0x268] sm:$0xff]
    %v116 = vld [vmem:[%s1 + $0x270] sm:$0xff]
    %v117 = vld [vmem:[%s1 + $0x278] sm:$0xff]
    %v118 = vld [vmem:[%s1 + $0x280] sm:$0xff]
    %v119 = vld [vmem:[%s1 + $0x288] sm:$0xff]
    %v120 = vld [vmem:[%s1 + $0x290] sm:$0xff]
    %v121 = vld [vmem:[%s1 + $0x298] sm:$0xff]
    %v122 = vld [vmem:[%s1 + $0x2a0] sm:$0xff]
    %v123 = vld [vmem:[%s1 + $0x2a8] sm:$0xff]
    %v124 = vld [vmem:[%s1 + $0x2b0] sm:$0xff]
    %v125 = vld [vmem:[%s1 + $0x2b8] sm:$0xff]
    %v126 = vld [vmem:[%s1 + $0x2c0] sm:$0xff]
    %v127 = vld [vmem:[%s1 + $0x2c8] sm:$0xff]
    %v128 = vld [vmem:[%s1 + $0x2d0] sm:$0xff]
    %v129 = vld [vmem:[%s1 + $0x2d8] sm:$0xff]
    %v130 = vld [vmem:[%s1 + $0x2e0] sm:$0xff]
    %v131 = vld [vmem:[%s1 + $0x2e8] sm:$0xff]
    %v132 = vld [vmem:[%s1 + $0x2f0] sm:$0xff]
    %v133 = vld [vmem:[%s1 + $0x2f8] sm:$0xff]
    %v134 = vld [vmem:[%s1 + $0x300] sm:$0xff]
    %v135 = vld [vmem:[%s1 + $0x308] sm:$0xff]
    %v136 = vld [vmem:[%s1 + $0x310] sm:$0xff]
    %v137 = vld [vmem:[%s1 + $0x318] sm:$0xff]
    %v138 = vld [vmem:[%s1 + $0x320] sm:$0xff]
    %v139 = vld [vmem:[%s1 + $0x328] sm:$0xff]
    %v140 = vld [vmem:[%s1 + $0x330] sm:$0xff]
    %v141 = vld [vmem:[%s1 + $0x338] sm:$0xff]
    %v142 = vld [vmem:[%s1 + $0x340] sm:$0xff]
    %v143 = vld [vmem:[%s1 + $0x348] sm:$0xff]
    %v144 = vld [vmem:[%s1 + $0x350] sm:$0xff]
    %v145 = vld [vmem:[%s1 + $0x358] sm:$0xff]
    %v146 = vld [vmem:[%s1 + $0x360] sm:$0xff]
    %v147 = vld [vmem:[%s1 + $0x368] sm:$0xff]
    %v148 = vld [vmem:[%s1 + $0x370] sm:$0xff]
    %v149 = vld [vmem:[%s1 + $0x378] sm:$0xff]
    %v150 = vld [vmem:[%s1 + $0x380] sm:$0xff]
    %v151 = vld [vmem:[%s1 + $0x388] sm:$0xff]
    %v152 = vld [vmem:[%s1 + $0x390] sm:$0xff]
    %v153 = vld [vmem:[%s1 + $0x398] sm:$0xff]
    %v154 = vld [vmem:[%s1 + $0x3a0] sm:$0xff]
    %v155 = vld [vmem:[%s1 + $0x3a8] sm:$0xff]
    %v156 = vld [vmem:[%s1 + $0x3b0] sm:$0xff]
    %v157 = vld [vmem:[%s1 + $0x3b8] sm:$0xff]
    %v158 = vld [vmem:[%s1 + $0x3c0] sm:$0xff]
    %v159 = vld [vmem:[%s1 + $0x3c8] sm:$0xff]
    %v160 = vld [vmem:[%s1 + $0x3d0] sm:$0xff]
    %v161 = vld [vmem:[%s1 + $0x3d8] sm:$0xff]
    %v162 = vld [vmem:[%s1 + $0x3e0] sm:$0xff]
    %v163 = vld [vmem:[%s1 + $0x3e8] sm:$0xff]
    %v164 = vld [vmem:[%s1 + $0x3f0] sm:$0xff]
    %v165 = vld [vmem:[%s1 + $0x3f8] sm:$0xff]
    %v166 = vld [vmem:[%s1 + $0x400] sm:$0xff]
    %v167 = vld [vmem:[%s1 + $0x408] sm:$0xff]
    %v168 = vld [vmem:[%s1 + $0x410] sm:$0xff]
    %v169 = vld [vmem:[%s1 + $0x418] sm:$0xff]
    %v170 = vld [vmem:[%s1 + $0x420] sm:$0xff]
    %v171 = vld [vmem:[%s1 + $0x428] sm:$0xff]
    %v172 = vld [vmem:[%s1 + $0x430] sm:$0xff]
    %v173 = vld [vmem:[%s1 + $0x438] sm:$0xff]
    %v174 = vld [vmem:[%s1 + $0x440] sm:$0xff]
    %v175 = vld [vmem:[%s1 + $0x448] sm:$0xff]
    %v176 = vld [vmem:[%s1 + $0x450] sm:$0xff]
    %v177 = vld [vmem:[%s1 + $0x458] sm:$0xff]
    %v178 = vld [vmem:[%s1 + $0x460] sm:$0xff]
    %v179 = vld [vmem:[%s1 + $0x468] sm:$0xff]
    %v180 = vld [vmem:[%s1 + $0x470] sm:$0xff]
    %v181 = vld [vmem:[%s1 + $0x478] sm:$0xff]
    %v182 = vld [vmem:[%s1 + $0x480] sm:$0xff]
    %v183 = vld [vmem:[%s1 + $0x488] sm:$0xff]
    %v184 = vld [vmem:[%s1 + $0x490] sm:$0xff]
    %v185 = vld [vmem:[%s1 + $0x498] sm:$0xff]
    %v186 = vld [vmem:[%s1 + $0x4a0] sm:$0xff]
    %v187 = vld [vmem:[%s1 + $0x4a8] sm:$0xff]
    %v188 = vld [vmem:[%s1 + $0x4b0] sm:$0xff]
    %v189 = vld [vmem:[%s1 + $0x4b8] sm:$0xff]
    %v190 = vld [vmem:[%s1 + $0x4c0] sm:$0xff]
    %v191 = vld [vmem:[%s1 + $0x4c8] sm:$0xff]
    %v192 = vld [vmem:[%s1 + $0x4d0] sm:$0xff]
    %v193 = vld [vmem:[%s1 + $0x4d8] sm:$0xff]
    %v194 = vld [vmem:[%s1 + $0x4e0] sm:$0xff]
    %v195 = vld [vmem:[%s1 + $0x4e8] sm:$0xff]
    %v196 = vld [vmem:[%s1 + $0x4f0] sm:$0xff]
    %v197 = vld [vmem:[%s1 + $0x4f8] sm:$0xff]
    %v198 = vld [vmem:[%s1 + $0x500] sm:$0xff]
    %v199 = vld [vmem:[%s1 + $0x508] sm:$0xff]
    %v200 = vld [vmem:[%s1 + $0x510] sm:$0xff]
    %v201 = vld [vmem:[%s1 + $0x518] sm:$0xff]
    %v202 = vld [vmem:[%s1 + $0x520] sm:$0xff]
    %v203 = vld [vmem:[%s1 + $0x528] sm:$0xff]
    %v204 = vld [vmem:[%s1 + $0x530] sm:$0xff]
    %v205 = vld [vmem:[%s1 + $0x538] sm:$0xff]
    %v206 = vld [vmem:[%s1 + $0x540] sm:$0xff]
    %v207 = vld [vmem:[%s1 + $0x548] sm:$0xff]
    %v208 = vld [vmem:[%s1 + $0x550] sm:$0xff]
    %v209 = vld [vmem:[%s1 + $0x558] sm:$0xff]
    %v210 = vld [vmem:[%s1 + $0x560] sm:$0xff]
    %v211 = vld [vmem:[%s1 + $0x568] sm:$0xff]
    %v212 = vld [vmem:[%s1 + $0x570] sm:$0xff]
    %v213 = vld [vmem:[%s1 + $0x578] sm:$0xff]
    %v214 = vld [vmem:[%s1 + $0x580] sm:$0xff]
    %v215 = vld [vmem:[%s1 + $0x588] sm:$0xff]
    %v216 = vld [vmem:[%s1 + $0x590] sm:$0xff]
    %v217 = vld [vmem:[%s1 + $0x598] sm:$0xff]
    %v218 = vld [vmem:[%s1 + $0x5a0] sm:$0xff]
    %v219 = vld [vmem:[%s1 + $0x5a8] sm:$0xff]
    %v220 = vld [vmem:[%s1 + $0x5b0] sm:$0xff]
    %v221 = vld [vmem:[%s1 + $0x5b8] sm:$0xff]
    %v222 = vld [vmem:[%s1 + $0x5c0] sm:$0xff]
    %v223 = vld [vmem:[%s1 + $0x5c8] sm:$0xff]
    %v224 = vld [vmem:[%s1 + $0x5d0] sm:$0xff]
    %v225 = vld [vmem:[%s1 + $0x5d8] sm:$0xff]
    %v226 = vld [vmem:[%s1 + $0x5e0] sm:$0xff]
    %v227 = vld [vmem:[%s1 + $0x5e8] sm:$0xff]
    %v228 = vld [vmem:[%s1 + $0x5f0] sm:$0xff]
    %v229 = vld [vmem:[%s1 + $0x5f8] sm:$0xff]
    %v230 = vld [vmem:[%s1 + $0x600] sm:$0xff]
    %v231 = vld [vmem:[%s1 + $0x608] sm:$0xff]
    %v232 = vld [vmem:[%s1 + $0x610] sm:$0xff]
    %v233 = vld [vmem:[%s1 + $0x618] sm:$0xff]
    %v234 = vld [vmem:[%s1 + $0x620] sm:$0xff]
    %v235 = vld [vmem:[%s1 + $0x628] sm:$0xff]
    %v236 = vld [vmem:[%s1 + $0x630] sm:$0xff]
    %v237 = vld [vmem:[%s1 + $0x638] sm:$0xff]
    %v238 = vld [vmem:[%s1 + $0x640] sm:$0xff]
    %v239 = vld [vmem:[%s1 + $0x648] sm:$0xff]
    %v240 = vld [vmem:[%s1 + $0x650] sm:$0xff]
    %v241 = vld [vmem:[%s1 + $0x658] sm:$0xff]
    %v242 = vld [vmem:[%s1 + $0x660] sm:$0xff]
    %v243 = vld [vmem:[%s1 + $0x668] sm:$0xff]
    %v244 = vld [vmem:[%s1 + $0x670] sm:$0xff]
    %v245 = vld [vmem:[%s1 + $0x678] sm:$0xff]
    %v246 = vld [vmem:[%s1 + $0x680] sm:$0xff]
    %v247 = vld [vmem:[%s1 + $0x688] sm:$0xff]
    %v248 = vld [vmem:[%s1 + $0x690] sm:$0xff]
    %v249 = vld [vmem:[%s1 + $0x698] sm:$0xff]
    %v250 = vld [vmem:[%s1 + $0x6a0] sm:$0xff]
    %v251 = vld [vmem:[%s1 + $0x6a8] sm:$0xff]
    %v252 = vld [vmem:[%s1 + $0x6b0] sm:$0xff]
    %v253 = vld [vmem:[%s1 + $0x6b8] sm:$0xff]
    %v254 = vld [vmem:[%s1 + $0x6c0] sm:$0xff]
    %v255 = vld [vmem:[%s1 + $0x6c8] sm:$0xff]
    %v256 = vld [vmem:[%s1 + $0x6d0] sm:$0xff]
    %v257 = vld [vmem:[%s1 + $0x6d8] sm:$0xff]
    %v258 = vld [vmem:[%s1 + $0x6e0] sm:$0xff]
    %v259 = vld [vmem:[%s1 + $0x6e8] sm:$0xff]
    %v260 = vld [vmem:[%s1 + $0x6f0] sm:$0xff]
    %v261 = vld [vmem:[%s1 + $0x6f8] sm:$0xff]
    %v262 = vld [vmem:[%s1 + $0x700] sm:$0xff]
    %v263 = vld [vmem:[%s1 + $0x708] sm:$0xff]
    %v264 = vld [vmem:[%s1 + $0x710] sm:$0xff]
    %v265 = vld [vmem:[%s1 + $0x718] sm:$0xff]
    %v266 = vld [vmem:[%s1 + $0x720] sm:$0xff]
    %v267 = vld [vmem:[%s1 + $0x728] sm:$0xff]
    %v268 = vld [vmem:[%s1 + $0x730] sm:$0xff]
    %v269 = vld [vmem:[%s1 + $0x738] sm:$0xff]
    %v270 = vld [vmem:[%s1 + $0x740] sm:$0xff]
    %v271 = vld [vmem:[%s1 + $0x748] sm:$0xff]
    %v272 = vld [vmem:[%s1 + $0x750] sm:$0xff]
    %v273 = vld [vmem:[%s1 + $0x758] sm:$0xff]
    %v274 = vld [vmem:[%s1 + $0x760] sm:$0xff]
    %v275 = vld [vmem:[%s1 + $0x768] sm:$0xff]
    %v276 = vld [vmem:[%s1 + $0x770] sm:$0xff]
    %v277 = vld [vmem:[%s1 + $0x778] sm:$0xff]
    %v278 = vld [vmem:[%s1 + $0x780] sm:$0xff]
    %v279 = vld [vmem:[%s1 + $0x788] sm:$0xff]
    %v280 = vld [vmem:[%s1 + $0x790] sm:$0xff]
    %v281 = vld [vmem:[%s1 + $0x798] sm:$0xff]
    %v282 = vld [vmem:[%s1 + $0x7a0] sm:$0xff]
    %v283 = vld [vmem:[%s1 + $0x7a8] sm:$0xff]
    %v284 = vld [vmem:[%s1 + $0x7b0] sm:$0xff]
    %v285 = vld [vmem:[%s1 + $0x7b8] sm:$0xff]
    %v286 = vld [vmem:[%s1 + $0x7c0] sm:$0xff]
    %v287 = vld [vmem:[%s1 + $0x7c8] sm:$0xff]
    %v288 = vld [vmem:[%s1 + $0x7d0] sm:$0xff]
    %v289 = vld [vmem:[%s1 + $0x7d8] sm:$0xff]
    %v290 = vld [vmem:[%s1 + $0x7e0] sm:$0xff]
    %v291 = vld [vmem:[%s1 + $0x7e8] sm:$0xff]
    %v292 = vld [vmem:[%s1 + $0x7f0] sm:$0xff]
    %v293 = vld [vmem:[%s1 + $0x7f8] sm:$0xff]
    %v294 = vld [vmem:[%s2] sm:$0x1]
    %v296 = vlaneseq
    %v297 = vshrl.u32 %v296, 7
    %v298 = vsub.s32 0, %v297
    %v299 = vrot.slane %v294, %v298
    %v305 = vcombine.high %v34, %v34
    %v307 = vunpack.c.l.s4 1983009808
    %v308 = vunpack.c.0.s8 %v307
    %v309 = vlaneseq
    %v310 = vshrl.u32 %v309, 7
    %v311 = vsub.s32 %v308, %v310
    %v312 = vrot.slane %v34, %v311
    %v314 = vunpack.c.l.s4 1983009808
    %v315 = vunpack.c.0.s8 %v314
    %v316 = vlaneseq
    %v317 = vshrl.u32 %v316, 7
    %v318 = vsub.s32 %v315, %v317
    %v319 = vrot.slane %v305, %v318
    %v320 = vcombine.high %v312, %v312
    %v321 = vcombine.high %v319, %v319
    %v322 = vcombine.high %v35, %v35
    %v324 = vunpack.c.l.s4 1983009808
    %v325 = vunpack.c.0.s8 %v324
    %v326 = vlaneseq
    %v327 = vshrl.u32 %v326, 7
    %v328 = vsub.s32 %v325, %v327
    %v329 = vrot.slane %v35, %v328
    %v331 = vunpack.c.l.s4 1983009808
    %v332 = vunpack.c.0.s8 %v331
    %v333 = vlaneseq
    %v334 = vshrl.u32 %v333, 7
    %v335 = vsub.s32 %v332, %v334
    %v336 = vrot.slane %v322, %v335
    %v337 = vcombine.high %v329, %v329
    %v338 = vcombine.high %v336, %v336
    %v339 = vcombine.high %v36, %v36
    %v341 = vunpack.c.l.s4 1983009808
    %v342 = vunpack.c.0.s8 %v341
    %v343 = vlaneseq
    %v344 = vshrl.u32 %v343, 7
    %v345 = vsub.s32 %v342, %v344
    %v346 = vrot.slane %v36, %v345
    %v348 = vunpack.c.l.s4 1983009808
    %v349 = vunpack.c.0.s8 %v348
    %v350 = vlaneseq
    %v351 = vshrl.u32 %v350, 7
    %v352 = vsub.s32 %v349, %v351
    %v353 = vrot.slane %v339, %v352
    %v354 = vcombine.high %v346, %v346
    %v355 = vcombine.high %v353, %v353
    %v356 = vcombine.high %v37, %v37
    %v358 = vunpack.c.l.s4 1983009808
    %v359 = vunpack.c.0.s8 %v358
    %v360 = vlaneseq
    %v361 = vshrl.u32 %v360, 7
    %v362 = vsub.s32 %v359, %v361
    %v363 = vrot.slane %v37, %v362
    %v365 = vunpack.c.l.s4 1983009808
    %v366 = vunpack.c.0.s8 %v365
    %v367 = vlaneseq
    %v368 = vshrl.u32 %v367, 7
    %v369 = vsub.s32 %v366, %v368
    %v370 = vrot.slane %v356, %v369
    %v371 = vcombine.high %v363, %v363
    %v372 = vcombine.high %v370, %v370
    %389 = vmatprep.subr.mxu0 0.0
    %390 = vmatpush1.msra.mxu0 %v53
    %391 = vmatprep.subr.mxu0 0.0
    %392 = vmatpush1.msra.mxu0 %v52
    %393 = vmatprep.subr.mxu0 0.0
    %394 = vmatpush1.msra.mxu0 %v51
    %395 = vmatprep.subr.mxu0 0.0
    %396 = vmatpush1.msra.mxu0 %v50
    %397 = vmatprep.subr.mxu0 0.0
    %398 = vmatpush1.msra.mxu0 %v49
    %399 = vmatprep.subr.mxu0 0.0
    %400 = vmatpush1.msra.mxu0 %v48
    %401 = vmatprep.subr.mxu0 0.0
    %402 = vmatpush1.msra.mxu0 %v47
    %403 = vmatprep.subr.mxu0 0.0
    %404 = vmatpush1.msra.mxu0 %v46
    %405 = vmatprep.subr.mxu0 0.0
    %406 = vmatpush1.msra.mxu0 %v45
    %407 = vmatprep.subr.mxu0 0.0
    %408 = vmatpush1.msra.mxu0 %v44
    %409 = vmatprep.subr.mxu0 0.0
    %410 = vmatpush1.msra.mxu0 %v43
    %411 = vmatprep.subr.mxu0 0.0
    %412 = vmatpush1.msra.mxu0 %v42
    %413 = vmatprep.subr.mxu0 0.0
    %414 = vmatpush1.msra.mxu0 %v41
    %415 = vmatprep.subr.mxu0 0.0
    %416 = vmatpush1.msra.mxu0 %v40
    %417 = vmatprep.subr.mxu0 0.0
    %418 = vmatpush1.msra.mxu0 %v39
    %419 = vmatprep.subr.mxu0 0.0
    %420 = vmatpush1.msra.mxu0 %v38
    %421 = vmatprep.subr.mxu0 0.0
    %422 = vmatpush2.msra.mxu0 %v69
    %423 = vmatprep.subr.mxu0 0.0
    %424 = vmatpush2.msra.mxu0 %v68
    %425 = vmatprep.subr.mxu0 0.0
    %426 = vmatpush2.msra.mxu0 %v67
    %427 = vmatprep.subr.mxu0 0.0
    %428 = vmatpush2.msra.mxu0 %v66
    %429 = vmatprep.subr.mxu0 0.0
    %430 = vmatpush2.msra.mxu0 %v65
    %431 = vmatprep.subr.mxu0 0.0
    %432 = vmatpush2.msra.mxu0 %v64
    %433 = vmatprep.subr.mxu0 0.0
    %434 = vmatpush2.msra.mxu0 %v63
    %435 = vmatprep.subr.mxu0 0.0
    %436 = vmatpush2.msra.mxu0 %v62
    %437 = vmatprep.subr.mxu0 0.0
    %438 = vmatpush2.msra.mxu0 %v61
    %439 = vmatprep.subr.mxu0 0.0
    %440 = vmatpush2.msra.mxu0 %v60
    %441 = vmatprep.subr.mxu0 0.0
    %442 = vmatpush2.msra.mxu0 %v59
    %443 = vmatprep.subr.mxu0 0.0
    %444 = vmatpush2.msra.mxu0 %v58
    %445 = vmatprep.subr.mxu0 0.0
    %446 = vmatpush2.msra.mxu0 %v57
    %447 = vmatprep.subr.mxu0 0.0
    %448 = vmatpush2.msra.mxu0 %v56
    %449 = vmatprep.subr.mxu0 0.0
    %450 = vmatpush2.msra.mxu0 %v55
    %451 = vmatprep.subr.mxu0 0.0
    %452 = vmatpush2.msra.mxu0 %v54
    %453 = vmatprep.mubr.f32.mxu0 %v320
    %454 = vmatmul.mubr.f32.gmra.mxu0 %v312
    %v455 = vpop.f32.mrf.mxu0
    %v456 = vadd.f32 %v299, %v455
    %v457 = vpop.f32.mrf.mxu0
    %458 = vdwg.mxu0
    %459 = vmatprep.subr.mxu0 0.0
    %460 = vmatpush1.msra.mxu0 %v85
    %461 = vmatprep.subr.mxu0 0.0
    %462 = vmatpush1.msra.mxu0 %v84
    %463 = vmatprep.subr.mxu0 0.0
    %464 = vmatpush1.msra.mxu0 %v83
    %465 = vmatprep.subr.mxu0 0.0
    %466 = vmatpush1.msra.mxu0 %v82
    %467 = vmatprep.subr.mxu0 0.0
    %468 = vmatpush1.msra.mxu0 %v81
    %469 = vmatprep.subr.mxu0 0.0
    %470 = vmatpush1.msra.mxu0 %v80
    %471 = vmatprep.subr.mxu0 0.0
    %472 = vmatpush1.msra.mxu0 %v79
    %473 = vmatprep.subr.mxu0 0.0
    %474 = vmatpush1.msra.mxu0 %v78
    %475 = vmatprep.subr.mxu0 0.0
    %476 = vmatpush1.msra.mxu0 %v77
    %477 = vmatprep.subr.mxu0 0.0
    %478 = vmatpush1.msra.mxu0 %v76
    %479 = vmatprep.subr.mxu0 0.0
    %480 = vmatpush1.msra.mxu0 %v75
    %481 = vmatprep.subr.mxu0 0.0
    %482 = vmatpush1.msra.mxu0 %v74
    %483 = vmatprep.subr.mxu0 0.0
    %484 = vmatpush1.msra.mxu0 %v73
    %485 = vmatprep.subr.mxu0 0.0
    %486 = vmatpush1.msra.mxu0 %v72
    %487 = vmatprep.subr.mxu0 0.0
    %488 = vmatpush1.msra.mxu0 %v71
    %489 = vmatprep.subr.mxu0 0.0
    %490 = vmatpush1.msra.mxu0 %v70
    %491 = vmatprep.subr.mxu0 0.0
    %492 = vmatpush2.msra.mxu0 %v101
    %493 = vmatprep.subr.mxu0 0.0
    %494 = vmatpush2.msra.mxu0 %v100
    %495 = vmatprep.subr.mxu0 0.0
    %496 = vmatpush2.msra.mxu0 %v99
    %497 = vmatprep.subr.mxu0 0.0
    %498 = vmatpush2.msra.mxu0 %v98
    %499 = vmatprep.subr.mxu0 0.0
    %500 = vmatpush2.msra.mxu0 %v97
    %501 = vmatprep.subr.mxu0 0.0
    %502 = vmatpush2.msra.mxu0 %v96
    %503 = vmatprep.subr.mxu0 0.0
    %504 = vmatpush2.msra.mxu0 %v95
    %505 = vmatprep.subr.mxu0 0.0
    %506 = vmatpush2.msra.mxu0 %v94
    %507 = vmatprep.subr.mxu0 0.0
    %508 = vmatpush2.msra.mxu0 %v93
    %509 = vmatprep.subr.mxu0 0.0
    %510 = vmatpush2.msra.mxu0 %v92
    %511 = vmatprep.subr.mxu0 0.0
    %512 = vmatpush2.msra.mxu0 %v91
    %513 = vmatprep.subr.mxu0 0.0
    %514 = vmatpush2.msra.mxu0 %v90
    %515 = vmatprep.subr.mxu0 0.0
    %516 = vmatpush2.msra.mxu0 %v89
    %517 = vmatprep.subr.mxu0 0.0
    %518 = vmatpush2.msra.mxu0 %v88
    %519 = vmatprep.subr.mxu0 0.0
    %520 = vmatpush2.msra.mxu0 %v87
    %521 = vmatprep.subr.mxu0 0.0
    %522 = vmatpush2.msra.mxu0 %v86
    %523 = vmatprep.mubr.f32.mxu0 %v321
    %524 = vmatmul.mubr.f32.gmra.mxu0 %v319
    %v525 = vpop.f32.mrf.mxu0
    %v526 = vadd.f32 %v456, %v525
    %v527 = vpop.f32.mrf.mxu0
    %528 = vdwg.mxu0
    %529 = vmatprep.subr.mxu0 0.0
    %530 = vmatpush1.msra.mxu0 %v117
    %531 = vmatprep.subr.mxu0 0.0
    %532 = vmatpush1.msra.mxu0 %v116
    %533 = vmatprep.subr.mxu0 0.0
    %534 = vmatpush1.msra.mxu0 %v115
    %535 = vmatprep.subr.mxu0 0.0
    %536 = vmatpush1.msra.mxu0 %v114
    %537 = vmatprep.subr.mxu0 0.0
    %538 = vmatpush1.msra.mxu0 %v113
    %539 = vmatprep.subr.mxu0 0.0
    %540 = vmatpush1.msra.mxu0 %v112
    %541 = vmatprep.subr.mxu0 0.0
    %542 = vmatpush1.msra.mxu0 %v111
    %543 = vmatprep.subr.mxu0 0.0
    %544 = vmatpush1.msra.mxu0 %v110
    %545 = vmatprep.subr.mxu0 0.0
    %546 = vmatpush1.msra.mxu0 %v109
    %547 = vmatprep.subr.mxu0 0.0
    %548 = vmatpush1.msra.mxu0 %v108
    %549 = vmatprep.subr.mxu0 0.0
    %550 = vmatpush1.msra.mxu0 %v107
    %551 = vmatprep.subr.mxu0 0.0
    %552 = vmatpush1.msra.mxu0 %v106
    %553 = vmatprep.subr.mxu0 0.0
    %554 = vmatpush1.msra.mxu0 %v105
    %555 = vmatprep.subr.mxu0 0.0
    %556 = vmatpush1.msra.mxu0 %v104
    %557 = vmatprep.subr.mxu0 0.0
    %558 = vmatpush1.msra.mxu0 %v103
    %559 = vmatprep.subr.mxu0 0.0
    %560 = vmatpush1.msra.mxu0 %v102
    %561 = vmatprep.subr.mxu0 0.0
    %562 = vmatpush2.msra.mxu0 %v133
    %563 = vmatprep.subr.mxu0 0.0
    %564 = vmatpush2.msra.mxu0 %v132
    %565 = vmatprep.subr.mxu0 0.0
    %566 = vmatpush2.msra.mxu0 %v131
    %567 = vmatprep.subr.mxu0 0.0
    %568 = vmatpush2.msra.mxu0 %v130
    %569 = vmatprep.subr.mxu0 0.0
    %570 = vmatpush2.msra.mxu0 %v129
    %571 = vmatprep.subr.mxu0 0.0
    %572 = vmatpush2.msra.mxu0 %v128
    %573 = vmatprep.subr.mxu0 0.0
    %574 = vmatpush2.msra.mxu0 %v127
    %575 = vmatprep.subr.mxu0 0.0
    %576 = vmatpush2.msra.mxu0 %v126
    %577 = vmatprep.subr.mxu0 0.0
    %578 = vmatpush2.msra.mxu0 %v125
    %579 = vmatprep.subr.mxu0 0.0
    %580 = vmatpush2.msra.mxu0 %v124
    %581 = vmatprep.subr.mxu0 0.0
    %582 = vmatpush2.msra.mxu0 %v123
    %583 = vmatprep.subr.mxu0 0.0
    %584 = vmatpush2.msra.mxu0 %v122
    %585 = vmatprep.subr.mxu0 0.0
    %586 = vmatpush2.msra.mxu0 %v121
    %587 = vmatprep.subr.mxu0 0.0
    %588 = vmatpush2.msra.mxu0 %v120
    %589 = vmatprep.subr.mxu0 0.0
    %590 = vmatpush2.msra.mxu0 %v119
    %591 = vmatprep.subr.mxu0 0.0
    %592 = vmatpush2.msra.mxu0 %v118
    %593 = vmatprep.mubr.f32.mxu0 %v337
    %594 = vmatmul.mubr.f32.gmra.mxu0 %v329
    %v595 = vpop.f32.mrf.mxu0
    %v596 = vadd.f32 %v526, %v595
    %v597 = vpop.f32.mrf.mxu0
    %598 = vdwg.mxu0
    %599 = vmatprep.subr.mxu0 0.0
    %600 = vmatpush1.msra.mxu0 %v149
    %601 = vmatprep.subr.mxu0 0.0
    %602 = vmatpush1.msra.mxu0 %v148
    %603 = vmatprep.subr.mxu0 0.0
    %604 = vmatpush1.msra.mxu0 %v147
    %605 = vmatprep.subr.mxu0 0.0
    %606 = vmatpush1.msra.mxu0 %v146
    %607 = vmatprep.subr.mxu0 0.0
    %608 = vmatpush1.msra.mxu0 %v145
    %609 = vmatprep.subr.mxu0 0.0
    %610 = vmatpush1.msra.mxu0 %v144
    %611 = vmatprep.subr.mxu0 0.0
    %612 = vmatpush1.msra.mxu0 %v143
    %613 = vmatprep.subr.mxu0 0.0
    %614 = vmatpush1.msra.mxu0 %v142
    %615 = vmatprep.subr.mxu0 0.0
    %616 = vmatpush1.msra.mxu0 %v141
    %617 = vmatprep.subr.mxu0 0.0
    %618 = vmatpush1.msra.mxu0 %v140
    %619 = vmatprep.subr.mxu0 0.0
    %620 = vmatpush1.msra.mxu0 %v139
    %621 = vmatprep.subr.mxu0 0.0
    %622 = vmatpush1.msra.mxu0 %v138
    %623 = vmatprep.subr.mxu0 0.0
    %624 = vmatpush1.msra.mxu0 %v137
    %625 = vmatprep.subr.mxu0 0.0
    %626 = vmatpush1.msra.mxu0 %v136
    %627 = vmatprep.subr.mxu0 0.0
    %628 = vmatpush1.msra.mxu0 %v135
    %629 = vmatprep.subr.mxu0 0.0
    %630 = vmatpush1.msra.mxu0 %v134
    %631 = vmatprep.subr.mxu0 0.0
    %632 = vmatpush2.msra.mxu0 %v165
    %633 = vmatprep.subr.mxu0 0.0
    %634 = vmatpush2.msra.mxu0 %v164
    %635 = vmatprep.subr.mxu0 0.0
    %636 = vmatpush2.msra.mxu0 %v163
    %637 = vmatprep.subr.mxu0 0.0
    %638 = vmatpush2.msra.mxu0 %v162
    %639 = vmatprep.subr.mxu0 0.0
    %640 = vmatpush2.msra.mxu0 %v161
    %641 = vmatprep.subr.mxu0 0.0
    %642 = vmatpush2.msra.mxu0 %v160
    %643 = vmatprep.subr.mxu0 0.0
    %644 = vmatpush2.msra.mxu0 %v159
    %645 = vmatprep.subr.mxu0 0.0
    %646 = vmatpush2.msra.mxu0 %v158
    %647 = vmatprep.subr.mxu0 0.0
    %648 = vmatpush2.msra.mxu0 %v157
    %649 = vmatprep.subr.mxu0 0.0
    %650 = vmatpush2.msra.mxu0 %v156
    %651 = vmatprep.subr.mxu0 0.0
    %652 = vmatpush2.msra.mxu0 %v155
    %653 = vmatprep.subr.mxu0 0.0
    %654 = vmatpush2.msra.mxu0 %v154
    %655 = vmatprep.subr.mxu0 0.0
    %656 = vmatpush2.msra.mxu0 %v153
    %657 = vmatprep.subr.mxu0 0.0
    %658 = vmatpush2.msra.mxu0 %v152
    %659 = vmatprep.subr.mxu0 0.0
    %660 = vmatpush2.msra.mxu0 %v151
    %661 = vmatprep.subr.mxu0 0.0
    %662 = vmatpush2.msra.mxu0 %v150
    %663 = vmatprep.mubr.f32.mxu0 %v338
    %664 = vmatmul.mubr.f32.gmra.mxu0 %v336
    %v665 = vpop.f32.mrf.mxu0
    %v666 = vadd.f32 %v596, %v665
    %v667 = vpop.f32.mrf.mxu0
    %668 = vdwg.mxu0
    %669 = vmatprep.subr.mxu0 0.0
    %670 = vmatpush1.msra.mxu0 %v181
    %671 = vmatprep.subr.mxu0 0.0
    %672 = vmatpush1.msra.mxu0 %v180
    %673 = vmatprep.subr.mxu0 0.0
    %674 = vmatpush1.msra.mxu0 %v179
    %675 = vmatprep.subr.mxu0 0.0
    %676 = vmatpush1.msra.mxu0 %v178
    %677 = vmatprep.subr.mxu0 0.0
    %678 = vmatpush1.msra.mxu0 %v177
    %679 = vmatprep.subr.mxu0 0.0
    %680 = vmatpush1.msra.mxu0 %v176
    %681 = vmatprep.subr.mxu0 0.0
    %682 = vmatpush1.msra.mxu0 %v175
    %683 = vmatprep.subr.mxu0 0.0
    %684 = vmatpush1.msra.mxu0 %v174
    %685 = vmatprep.subr.mxu0 0.0
    %686 = vmatpush1.msra.mxu0 %v173
    %687 = vmatprep.subr.mxu0 0.0
    %688 = vmatpush1.msra.mxu0 %v172
    %689 = vmatprep.subr.mxu0 0.0
    %690 = vmatpush1.msra.mxu0 %v171
    %691 = vmatprep.subr.mxu0 0.0
    %692 = vmatpush1.msra.mxu0 %v170
    %693 = vmatprep.subr.mxu0 0.0
    %694 = vmatpush1.msra.mxu0 %v169
    %695 = vmatprep.subr.mxu0 0.0
    %696 = vmatpush1.msra.mxu0 %v168
    %697 = vmatprep.subr.mxu0 0.0
    %698 = vmatpush1.msra.mxu0 %v167
    %699 = vmatprep.subr.mxu0 0.0
    %700 = vmatpush1.msra.mxu0 %v166
    %701 = vmatprep.subr.mxu0 0.0
    %702 = vmatpush2.msra.mxu0 %v197
    %703 = vmatprep.subr.mxu0 0.0
    %704 = vmatpush2.msra.mxu0 %v196
    %705 = vmatprep.subr.mxu0 0.0
    %706 = vmatpush2.msra.mxu0 %v195
    %707 = vmatprep.subr.mxu0 0.0
    %708 = vmatpush2.msra.mxu0 %v194
    %709 = vmatprep.subr.mxu0 0.0
    %710 = vmatpush2.msra.mxu0 %v193
    %711 = vmatprep.subr.mxu0 0.0
    %712 = vmatpush2.msra.mxu0 %v192
    %713 = vmatprep.subr.mxu0 0.0
    %714 = vmatpush2.msra.mxu0 %v191
    %715 = vmatprep.subr.mxu0 0.0
    %716 = vmatpush2.msra.mxu0 %v190
    %717 = vmatprep.subr.mxu0 0.0
    %718 = vmatpush2.msra.mxu0 %v189
    %719 = vmatprep.subr.mxu0 0.0
    %720 = vmatpush2.msra.mxu0 %v188
    %721 = vmatprep.subr.mxu0 0.0
    %722 = vmatpush2.msra.mxu0 %v187
    %723 = vmatprep.subr.mxu0 0.0
    %724 = vmatpush2.msra.mxu0 %v186
    %725 = vmatprep.subr.mxu0 0.0
    %726 = vmatpush2.msra.mxu0 %v185
    %727 = vmatprep.subr.mxu0 0.0
    %728 = vmatpush2.msra.mxu0 %v184
    %729 = vmatprep.subr.mxu0 0.0
    %730 = vmatpush2.msra.mxu0 %v183
    %731 = vmatprep.subr.mxu0 0.0
    %732 = vmatpush2.msra.mxu0 %v182
    %733 = vmatprep.mubr.f32.mxu0 %v354
    %734 = vmatmul.mubr.f32.gmra.mxu0 %v346
    %v735 = vpop.f32.mrf.mxu0
    %v736 = vadd.f32 %v666, %v735
    %v737 = vpop.f32.mrf.mxu0
    %738 = vdwg.mxu0
    %739 = vmatprep.subr.mxu0 0.0
    %740 = vmatpush1.msra.mxu0 %v213
    %741 = vmatprep.subr.mxu0 0.0
    %742 = vmatpush1.msra.mxu0 %v212
    %743 = vmatprep.subr.mxu0 0.0
    %744 = vmatpush1.msra.mxu0 %v211
    %745 = vmatprep.subr.mxu0 0.0
    %746 = vmatpush1.msra.mxu0 %v210
    %747 = vmatprep.subr.mxu0 0.0
    %748 = vmatpush1.msra.mxu0 %v209
    %749 = vmatprep.subr.mxu0 0.0
    %750 = vmatpush1.msra.mxu0 %v208
    %751 = vmatprep.subr.mxu0 0.0
    %752 = vmatpush1.msra.mxu0 %v207
    %753 = vmatprep.subr.mxu0 0.0
    %754 = vmatpush1.msra.mxu0 %v206
    %755 = vmatprep.subr.mxu0 0.0
    %756 = vmatpush1.msra.mxu0 %v205
    %757 = vmatprep.subr.mxu0 0.0
    %758 = vmatpush1.msra.mxu0 %v204
    %759 = vmatprep.subr.mxu0 0.0
    %760 = vmatpush1.msra.mxu0 %v203
    %761 = vmatprep.subr.mxu0 0.0
    %762 = vmatpush1.msra.mxu0 %v202
    %763 = vmatprep.subr.mxu0 0.0
    %764 = vmatpush1.msra.mxu0 %v201
    %765 = vmatprep.subr.mxu0 0.0
    %766 = vmatpush1.msra.mxu0 %v200
    %767 = vmatprep.subr.mxu0 0.0
    %768 = vmatpush1.msra.mxu0 %v199
    %769 = vmatprep.subr.mxu0 0.0
    %770 = vmatpush1.msra.mxu0 %v198
    %771 = vmatprep.subr.mxu0 0.0
    %772 = vmatpush2.msra.mxu0 %v229
    %773 = vmatprep.subr.mxu0 0.0
    %774 = vmatpush2.msra.mxu0 %v228
    %775 = vmatprep.subr.mxu0 0.0
    %776 = vmatpush2.msra.mxu0 %v227
    %777 = vmatprep.subr.mxu0 0.0
    %778 = vmatpush2.msra.mxu0 %v226
    %779 = vmatprep.subr.mxu0 0.0
    %780 = vmatpush2.msra.mxu0 %v225
    %781 = vmatprep.subr.mxu0 0.0
    %782 = vmatpush2.msra.mxu0 %v224
    %783 = vmatprep.subr.mxu0 0.0
    %784 = vmatpush2.msra.mxu0 %v223
    %785 = vmatprep.subr.mxu0 0.0
    %786 = vmatpush2.msra.mxu0 %v222
    %787 = vmatprep.subr.mxu0 0.0
    %788 = vmatpush2.msra.mxu0 %v221
    %789 = vmatprep.subr.mxu0 0.0
    %790 = vmatpush2.msra.mxu0 %v220
    %791 = vmatprep.subr.mxu0 0.0
    %792 = vmatpush2.msra.mxu0 %v219
    %793 = vmatprep.subr.mxu0 0.0
    %794 = vmatpush2.msra.mxu0 %v218
    %795 = vmatprep.subr.mxu0 0.0
    %796 = vmatpush2.msra.mxu0 %v217
    %797 = vmatprep.subr.mxu0 0.0
    %798 = vmatpush2.msra.mxu0 %v216
    %799 = vmatprep.subr.mxu0 0.0
    %800 = vmatpush2.msra.mxu0 %v215
    %801 = vmatprep.subr.mxu0 0.0
    %802 = vmatpush2.msra.mxu0 %v214
    %803 = vmatprep.mubr.f32.mxu0 %v355
    %804 = vmatmul.mubr.f32.gmra.mxu0 %v353
    %v805 = vpop.f32.mrf.mxu0
    %v806 = vadd.f32 %v736, %v805
    %v807 = vpop.f32.mrf.mxu0
    %808 = vdwg.mxu0
    %809 = vmatprep.subr.mxu0 0.0
    %810 = vmatpush1.msra.mxu0 %v245
    %811 = vmatprep.subr.mxu0 0.0
    %812 = vmatpush1.msra.mxu0 %v244
    %813 = vmatprep.subr.mxu0 0.0
    %814 = vmatpush1.msra.mxu0 %v243
    %815 = vmatprep.subr.mxu0 0.0
    %816 = vmatpush1.msra.mxu0 %v242
    %817 = vmatprep.subr.mxu0 0.0
    %818 = vmatpush1.msra.mxu0 %v241
    %819 = vmatprep.subr.mxu0 0.0
    %820 = vmatpush1.msra.mxu0 %v240
    %821 = vmatprep.subr.mxu0 0.0
    %822 = vmatpush1.msra.mxu0 %v239
    %823 = vmatprep.subr.mxu0 0.0
    %824 = vmatpush1.msra.mxu0 %v238
    %825 = vmatprep.subr.mxu0 0.0
    %826 = vmatpush1.msra.mxu0 %v237
    %827 = vmatprep.subr.mxu0 0.0
    %828 = vmatpush1.msra.mxu0 %v236
    %829 = vmatprep.subr.mxu0 0.0
    %830 = vmatpush1.msra.mxu0 %v235
    %831 = vmatprep.subr.mxu0 0.0
    %832 = vmatpush1.msra.mxu0 %v234
    %833 = vmatprep.subr.mxu0 0.0
    %834 = vmatpush1.msra.mxu0 %v233
    %835 = vmatprep.subr.mxu0 0.0
    %836 = vmatpush1.msra.mxu0 %v232
    %837 = vmatprep.subr.mxu0 0.0
    %838 = vmatpush1.msra.mxu0 %v231
    %839 = vmatprep.subr.mxu0 0.0
    %840 = vmatpush1.msra.mxu0 %v230
    %841 = vmatprep.subr.mxu0 0.0
    %842 = vmatpush2.msra.mxu0 %v261
    %843 = vmatprep.subr.mxu0 0.0
    %844 = vmatpush2.msra.mxu0 %v260
    %845 = vmatprep.subr.mxu0 0.0
    %846 = vmatpush2.msra.mxu0 %v259
    %847 = vmatprep.subr.mxu0 0.0
    %848 = vmatpush2.msra.mxu0 %v258
    %849 = vmatprep.subr.mxu0 0.0
    %850 = vmatpush2.msra.mxu0 %v257
    %851 = vmatprep.subr.mxu0 0.0
    %852 = vmatpush2.msra.mxu0 %v256
    %853 = vmatprep.subr.mxu0 0.0
    %854 = vmatpush2.msra.mxu0 %v255
    %855 = vmatprep.subr.mxu0 0.0
    %856 = vmatpush2.msra.mxu0 %v254
    %857 = vmatprep.subr.mxu0 0.0
    %858 = vmatpush2.msra.mxu0 %v253
    %859 = vmatprep.subr.mxu0 0.0
    %860 = vmatpush2.msra.mxu0 %v252
    %861 = vmatprep.subr.mxu0 0.0
    %862 = vmatpush2.msra.mxu0 %v251
    %863 = vmatprep.subr.mxu0 0.0
    %864 = vmatpush2.msra.mxu0 %v250
    %865 = vmatprep.subr.mxu0 0.0
    %866 = vmatpush2.msra.mxu0 %v249
    %867 = vmatprep.subr.mxu0 0.0
    %868 = vmatpush2.msra.mxu0 %v248
    %869 = vmatprep.subr.mxu0 0.0
    %870 = vmatpush2.msra.mxu0 %v247
    %871 = vmatprep.subr.mxu0 0.0
    %872 = vmatpush2.msra.mxu0 %v246
    %873 = vmatprep.mubr.f32.mxu0 %v371
    %874 = vmatmul.mubr.f32.gmra.mxu0 %v363
    %v875 = vpop.f32.mrf.mxu0
    %v876 = vadd.f32 %v806, %v875
    %v877 = vpop.f32.mrf.mxu0
    %878 = vdwg.mxu0
    %879 = vmatprep.subr.mxu0 0.0
    %880 = vmatpush1.msra.mxu0 %v277
    %881 = vmatprep.subr.mxu0 0.0
    %882 = vmatpush1.msra.mxu0 %v276
    %883 = vmatprep.subr.mxu0 0.0
    %884 = vmatpush1.msra.mxu0 %v275
    %885 = vmatprep.subr.mxu0 0.0
    %886 = vmatpush1.msra.mxu0 %v274
    %887 = vmatprep.subr.mxu0 0.0
    %888 = vmatpush1.msra.mxu0 %v273
    %889 = vmatprep.subr.mxu0 0.0
    %890 = vmatpush1.msra.mxu0 %v272
    %891 = vmatprep.subr.mxu0 0.0
    %892 = vmatpush1.msra.mxu0 %v271
    %893 = vmatprep.subr.mxu0 0.0
    %894 = vmatpush1.msra.mxu0 %v270
    %895 = vmatprep.subr.mxu0 0.0
    %896 = vmatpush1.msra.mxu0 %v269
    %897 = vmatprep.subr.mxu0 0.0
    %898 = vmatpush1.msra.mxu0 %v268
    %899 = vmatprep.subr.mxu0 0.0
    %900 = vmatpush1.msra.mxu0 %v267
    %901 = vmatprep.subr.mxu0 0.0
    %902 = vmatpush1.msra.mxu0 %v266
    %903 = vmatprep.subr.mxu0 0.0
    %904 = vmatpush1.msra.mxu0 %v265
    %905 = vmatprep.subr.mxu0 0.0
    %906 = vmatpush1.msra.mxu0 %v264
    %907 = vmatprep.subr.mxu0 0.0
    %908 = vmatpush1.msra.mxu0 %v263
    %909 = vmatprep.subr.mxu0 0.0
    %910 = vmatpush1.msra.mxu0 %v262
    %911 = vmatprep.subr.mxu0 0.0
    %912 = vmatpush2.msra.mxu0 %v293
    %913 = vmatprep.subr.mxu0 0.0
    %914 = vmatpush2.msra.mxu0 %v292
    %915 = vmatprep.subr.mxu0 0.0
    %916 = vmatpush2.msra.mxu0 %v291
    %917 = vmatprep.subr.mxu0 0.0
    %918 = vmatpush2.msra.mxu0 %v290
    %919 = vmatprep.subr.mxu0 0.0
    %920 = vmatpush2.msra.mxu0 %v289
    %921 = vmatprep.subr.mxu0 0.0
    %922 = vmatpush2.msra.mxu0 %v288
    %923 = vmatprep.subr.mxu0 0.0
    %924 = vmatpush2.msra.mxu0 %v287
    %925 = vmatprep.subr.mxu0 0.0
    %926 = vmatpush2.msra.mxu0 %v286
    %927 = vmatprep.subr.mxu0 0.0
    %928 = vmatpush2.msra.mxu0 %v285
    %929 = vmatprep.subr.mxu0 0.0
    %930 = vmatpush2.msra.mxu0 %v284
    %931 = vmatprep.subr.mxu0 0.0
    %932 = vmatpush2.msra.mxu0 %v283
    %933 = vmatprep.subr.mxu0 0.0
    %934 = vmatpush2.msra.mxu0 %v282
    %935 = vmatprep.subr.mxu0 0.0
    %936 = vmatpush2.msra.mxu0 %v281
    %937 = vmatprep.subr.mxu0 0.0
    %938 = vmatpush2.msra.mxu0 %v280
    %939 = vmatprep.subr.mxu0 0.0
    %940 = vmatpush2.msra.mxu0 %v279
    %941 = vmatprep.subr.mxu0 0.0
    %942 = vmatpush2.msra.mxu0 %v278
    %943 = vmatprep.mubr.f32.mxu0 %v372
    %944 = vmatmul.mubr.f32.gmra.mxu0 %v370
    %v945 = vpop.f32.mrf.mxu0
    %v946 = vadd.f32 %v876, %v945
    %v947 = vpop.f32.mrf.mxu0
    %948 = vdwg.mxu0
    %vm949 = vcmask 517120
    %v950 = vsel %vm949, %v946, -inf
    %951 = vmax.xlane.f32.xlu0 %v950
    %v952 = vpop.xlane.xlu0 %951
    %v953 = vsub.f32 %v946, %v952
    %v954 = vmul.f32 %v953, 1.442695
    %v955 = vpow.pop %v954
    %v956 = vsel %vm949, %v955, 0.0
    %957 = vadd.xlane.f32.xlu0 %v956
    %v958 = vpop.xlane.xlu0 %957
    %v959 = vrcp.pop %v958
    %v960 = vmul.f32 %v955, %v959
    %961 = vst.msk [vmem:[#allocation3] sm:$0x3] %vm949, %v960
    %v962 = vld [vmem:[%s3] sm:$0xff]
    %v963 = vld [vmem:[%s3 + $0x8] sm:$0xff]
    %v964 = vld [vmem:[%s3 + $0x10] sm:$0xff]
    %v965 = vld [vmem:[%s3 + $0x18] sm:$0xff]
    %v966 = vld [vmem:[%s4] sm:$0xff]
    %v967 = vld [vmem:[%s4 + $0x8] sm:$0xff]
    %v968 = vld [vmem:[%s4 + $0x10] sm:$0xff]
    %v969 = vld [vmem:[%s4 + $0x18] sm:$0xff]
    %v970 = vld [vmem:[%s4 + $0x20] sm:$0xff]
    %v971 = vld [vmem:[%s4 + $0x28] sm:$0xff]
    %v972 = vld [vmem:[%s4 + $0x30] sm:$0xff]
    %v973 = vld [vmem:[%s4 + $0x38] sm:$0xff]
    %v974 = vld [vmem:[%s4 + $0x40] sm:$0xff]
    %v975 = vld [vmem:[%s4 + $0x48] sm:$0xff]
    %v976 = vld [vmem:[%s4 + $0x50] sm:$0xff]
    %v977 = vld [vmem:[%s4 + $0x58] sm:$0xff]
    %v978 = vld [vmem:[%s4 + $0x60] sm:$0xff]
    %v979 = vld [vmem:[%s4 + $0x68] sm:$0xff]
    %v980 = vld [vmem:[%s4 + $0x70] sm:$0xff]
    %v981 = vld [vmem:[%s4 + $0x78] sm:$0xff]
    %v982 = vld [vmem:[%s4 + $0x80] sm:$0xff]
    %v983 = vld [vmem:[%s4 + $0x88] sm:$0xff]
    %v984 = vld [vmem:[%s4 + $0x90] sm:$0xff]
    %v985 = vld [vmem:[%s4 + $0x98] sm:$0xff]
    %v986 = vld [vmem:[%s4 + $0xa0] sm:$0xff]
    %v987 = vld [vmem:[%s4 + $0xa8] sm:$0xff]
    %v988 = vld [vmem:[%s4 + $0xb0] sm:$0xff]
    %v989 = vld [vmem:[%s4 + $0xb8] sm:$0xff]
    %v990 = vld [vmem:[%s4 + $0xc0] sm:$0xff]
    %v991 = vld [vmem:[%s4 + $0xc8] sm:$0xff]
    %v992 = vld [vmem:[%s4 + $0xd0] sm:$0xff]
    %v993 = vld [vmem:[%s4 + $0xd8] sm:$0xff]
    %v994 = vld [vmem:[%s4 + $0xe0] sm:$0xff]
    %v995 = vld [vmem:[%s4 + $0xe8] sm:$0xff]
    %v996 = vld [vmem:[%s4 + $0xf0] sm:$0xff]
    %v997 = vld [vmem:[%s4 + $0xf8] sm:$0xff]
    %v998 = vld [vmem:[%s4 + $0x100] sm:$0xff]
    %v999 = vld [vmem:[%s4 + $0x108] sm:$0xff]
    %v1000 = vld [vmem:[%s4 + $0x110] sm:$0xff]
    %v1001 = vld [vmem:[%s4 + $0x118] sm:$0xff]
    %v1002 = vld [vmem:[%s4 + $0x120] sm:$0xff]
    %v1003 = vld [vmem:[%s4 + $0x128] sm:$0xff]
    %v1004 = vld [vmem:[%s4 + $0x130] sm:$0xff]
    %v1005 = vld [vmem:[%s4 + $0x138] sm:$0xff]
    %v1006 = vld [vmem:[%s4 + $0x140] sm:$0xff]
    %v1007 = vld [vmem:[%s4 + $0x148] sm:$0xff]
    %v1008 = vld [vmem:[%s4 + $0x150] sm:$0xff]
    %v1009 = vld [vmem:[%s4 + $0x158] sm:$0xff]
    %v1010 = vld [vmem:[%s4 + $0x160] sm:$0xff]
    %v1011 = vld [vmem:[%s4 + $0x168] sm:$0xff]
    %v1012 = vld [vmem:[%s4 + $0x170] sm:$0xff]
    %v1013 = vld [vmem:[%s4 + $0x178] sm:$0xff]
    %v1014 = vld [vmem:[%s4 + $0x180] sm:$0xff]
    %v1015 = vld [vmem:[%s4 + $0x188] sm:$0xff]
    %v1016 = vld [vmem:[%s4 + $0x190] sm:$0xff]
    %v1017 = vld [vmem:[%s4 + $0x198] sm:$0xff]
    %v1018 = vld [vmem:[%s4 + $0x1a0] sm:$0xff]
    %v1019 = vld [vmem:[%s4 + $0x1a8] sm:$0xff]
    %v1020 = vld [vmem:[%s4 + $0x1b0] sm:$0xff]
    %v1021 = vld [vmem:[%s4 + $0x1b8] sm:$0xff]
    %v1022 = vld [vmem:[%s4 + $0x1c0] sm:$0xff]
    %v1023 = vld [vmem:[%s4 + $0x1c8] sm:$0xff]
    %v1024 = vld [vmem:[%s4 + $0x1d0] sm:$0xff]
    %v1025 = vld [vmem:[%s4 + $0x1d8] sm:$0xff]
    %v1026 = vld [vmem:[%s4 + $0x1e0] sm:$0xff]
    %v1027 = vld [vmem:[%s4 + $0x1e8] sm:$0xff]
    %v1028 = vld [vmem:[%s4 + $0x1f0] sm:$0xff]
    %v1029 = vld [vmem:[%s4 + $0x1f8] sm:$0xff]
    %v1030 = vld [vmem:[%s4 + $0x200] sm:$0xff]
    %v1031 = vld [vmem:[%s4 + $0x208] sm:$0xff]
    %v1032 = vld [vmem:[%s4 + $0x210] sm:$0xff]
    %v1033 = vld [vmem:[%s4 + $0x218] sm:$0xff]
    %v1034 = vld [vmem:[%s4 + $0x220] sm:$0xff]
    %v1035 = vld [vmem:[%s4 + $0x228] sm:$0xff]
    %v1036 = vld [vmem:[%s4 + $0x230] sm:$0xff]
    %v1037 = vld [vmem:[%s4 + $0x238] sm:$0xff]
    %v1038 = vld [vmem:[%s4 + $0x240] sm:$0xff]
    %v1039 = vld [vmem:[%s4 + $0x248] sm:$0xff]
    %v1040 = vld [vmem:[%s4 + $0x250] sm:$0xff]
    %v1041 = vld [vmem:[%s4 + $0x258] sm:$0xff]
    %v1042 = vld [vmem:[%s4 + $0x260] sm:$0xff]
    %v1043 = vld [vmem:[%s4 + $0x268] sm:$0xff]
    %v1044 = vld [vmem:[%s4 + $0x270] sm:$0xff]
    %v1045 = vld [vmem:[%s4 + $0x278] sm:$0xff]
    %v1046 = vld [vmem:[%s4 + $0x280] sm:$0xff]
    %v1047 = vld [vmem:[%s4 + $0x288] sm:$0xff]
    %v1048 = vld [vmem:[%s4 + $0x290] sm:$0xff]
    %v1049 = vld [vmem:[%s4 + $0x298] sm:$0xff]
    %v1050 = vld [vmem:[%s4 + $0x2a0] sm:$0xff]
    %v1051 = vld [vmem:[%s4 + $0x2a8] sm:$0xff]
    %v1052 = vld [vmem:[%s4 + $0x2b0] sm:$0xff]
    %v1053 = vld [vmem:[%s4 + $0x2b8] sm:$0xff]
    %v1054 = vld [vmem:[%s4 + $0x2c0] sm:$0xff]
    %v1055 = vld [vmem:[%s4 + $0x2c8] sm:$0xff]
    %v1056 = vld [vmem:[%s4 + $0x2d0] sm:$0xff]
    %v1057 = vld [vmem:[%s4 + $0x2d8] sm:$0xff]
    %v1058 = vld [vmem:[%s4 + $0x2e0] sm:$0xff]
    %v1059 = vld [vmem:[%s4 + $0x2e8] sm:$0xff]
    %v1060 = vld [vmem:[%s4 + $0x2f0] sm:$0xff]
    %v1061 = vld [vmem:[%s4 + $0x2f8] sm:$0xff]
    %v1062 = vld [vmem:[%s4 + $0x300] sm:$0xff]
    %v1063 = vld [vmem:[%s4 + $0x308] sm:$0xff]
    %v1064 = vld [vmem:[%s4 + $0x310] sm:$0xff]
    %v1065 = vld [vmem:[%s4 + $0x318] sm:$0xff]
    %v1066 = vld [vmem:[%s4 + $0x320] sm:$0xff]
    %v1067 = vld [vmem:[%s4 + $0x328] sm:$0xff]
    %v1068 = vld [vmem:[%s4 + $0x330] sm:$0xff]
    %v1069 = vld [vmem:[%s4 + $0x338] sm:$0xff]
    %v1070 = vld [vmem:[%s4 + $0x340] sm:$0xff]
    %v1071 = vld [vmem:[%s4 + $0x348] sm:$0xff]
    %v1072 = vld [vmem:[%s4 + $0x350] sm:$0xff]
    %v1073 = vld [vmem:[%s4 + $0x358] sm:$0xff]
    %v1074 = vld [vmem:[%s4 + $0x360] sm:$0xff]
    %v1075 = vld [vmem:[%s4 + $0x368] sm:$0xff]
    %v1076 = vld [vmem:[%s4 + $0x370] sm:$0xff]
    %v1077 = vld [vmem:[%s4 + $0x378] sm:$0xff]
    %v1078 = vld [vmem:[%s4 + $0x380] sm:$0xff]
    %v1079 = vld [vmem:[%s4 + $0x388] sm:$0xff]
    %v1080 = vld [vmem:[%s4 + $0x390] sm:$0xff]
    %v1081 = vld [vmem:[%s4 + $0x398] sm:$0xff]
    %v1082 = vld [vmem:[%s4 + $0x3a0] sm:$0xff]
    %v1083 = vld [vmem:[%s4 + $0x3a8] sm:$0xff]
    %v1084 = vld [vmem:[%s4 + $0x3b0] sm:$0xff]
    %v1085 = vld [vmem:[%s4 + $0x3b8] sm:$0xff]
    %v1086 = vld [vmem:[%s4 + $0x3c0] sm:$0xff]
    %v1087 = vld [vmem:[%s4 + $0x3c8] sm:$0xff]
    %v1088 = vld [vmem:[%s4 + $0x3d0] sm:$0xff]
    %v1089 = vld [vmem:[%s4 + $0x3d8] sm:$0xff]
    %v1090 = vld [vmem:[%s4 + $0x3e0] sm:$0xff]
    %v1091 = vld [vmem:[%s4 + $0x3e8] sm:$0xff]
    %v1092 = vld [vmem:[%s4 + $0x3f0] sm:$0xff]
    %v1093 = vld [vmem:[%s4 + $0x3f8] sm:$0xff]
    %v1094 = vld [vmem:[%s4 + $0x400] sm:$0xff]
    %v1095 = vld [vmem:[%s4 + $0x408] sm:$0xff]
    %v1096 = vld [vmem:[%s4 + $0x410] sm:$0xff]
    %v1097 = vld [vmem:[%s4 + $0x418] sm:$0xff]
    %v1098 = vld [vmem:[%s4 + $0x420] sm:$0xff]
    %v1099 = vld [vmem:[%s4 + $0x428] sm:$0xff]
    %v1100 = vld [vmem:[%s4 + $0x430] sm:$0xff]
    %v1101 = vld [vmem:[%s4 + $0x438] sm:$0xff]
    %v1102 = vld [vmem:[%s4 + $0x440] sm:$0xff]
    %v1103 = vld [vmem:[%s4 + $0x448] sm:$0xff]
    %v1104 = vld [vmem:[%s4 + $0x450] sm:$0xff]
    %v1105 = vld [vmem:[%s4 + $0x458] sm:$0xff]
    %v1106 = vld [vmem:[%s4 + $0x460] sm:$0xff]
    %v1107 = vld [vmem:[%s4 + $0x468] sm:$0xff]
    %v1108 = vld [vmem:[%s4 + $0x470] sm:$0xff]
    %v1109 = vld [vmem:[%s4 + $0x478] sm:$0xff]
    %v1110 = vld [vmem:[%s4 + $0x480] sm:$0xff]
    %v1111 = vld [vmem:[%s4 + $0x488] sm:$0xff]
    %v1112 = vld [vmem:[%s4 + $0x490] sm:$0xff]
    %v1113 = vld [vmem:[%s4 + $0x498] sm:$0xff]
    %v1114 = vld [vmem:[%s4 + $0x4a0] sm:$0xff]
    %v1115 = vld [vmem:[%s4 + $0x4a8] sm:$0xff]
    %v1116 = vld [vmem:[%s4 + $0x4b0] sm:$0xff]
    %v1117 = vld [vmem:[%s4 + $0x4b8] sm:$0xff]
    %v1118 = vld [vmem:[%s4 + $0x4c0] sm:$0xff]
    %v1119 = vld [vmem:[%s4 + $0x4c8] sm:$0xff]
    %v1120 = vld [vmem:[%s4 + $0x4d0] sm:$0xff]
    %v1121 = vld [vmem:[%s4 + $0x4d8] sm:$0xff]
    %v1122 = vld [vmem:[%s4 + $0x4e0] sm:$0xff]
    %v1123 = vld [vmem:[%s4 + $0x4e8] sm:$0xff]
    %v1124 = vld [vmem:[%s4 + $0x4f0] sm:$0xff]
    %v1125 = vld [vmem:[%s4 + $0x4f8] sm:$0xff]
    %v1126 = vld [vmem:[%s4 + $0x500] sm:$0xff]
    %v1127 = vld [vmem:[%s4 + $0x508] sm:$0xff]
    %v1128 = vld [vmem:[%s4 + $0x510] sm:$0xff]
    %v1129 = vld [vmem:[%s4 + $0x518] sm:$0xff]
    %v1130 = vld [vmem:[%s4 + $0x520] sm:$0xff]
    %v1131 = vld [vmem:[%s4 + $0x528] sm:$0xff]
    %v1132 = vld [vmem:[%s4 + $0x530] sm:$0xff]
    %v1133 = vld [vmem:[%s4 + $0x538] sm:$0xff]
    %v1134 = vld [vmem:[%s4 + $0x540] sm:$0xff]
    %v1135 = vld [vmem:[%s4 + $0x548] sm:$0xff]
    %v1136 = vld [vmem:[%s4 + $0x550] sm:$0xff]
    %v1137 = vld [vmem:[%s4 + $0x558] sm:$0xff]
    %v1138 = vld [vmem:[%s4 + $0x560] sm:$0xff]
    %v1139 = vld [vmem:[%s4 + $0x568] sm:$0xff]
    %v1140 = vld [vmem:[%s4 + $0x570] sm:$0xff]
    %v1141 = vld [vmem:[%s4 + $0x578] sm:$0xff]
    %v1142 = vld [vmem:[%s4 + $0x580] sm:$0xff]
    %v1143 = vld [vmem:[%s4 + $0x588] sm:$0xff]
    %v1144 = vld [vmem:[%s4 + $0x590] sm:$0xff]
    %v1145 = vld [vmem:[%s4 + $0x598] sm:$0xff]
    %v1146 = vld [vmem:[%s4 + $0x5a0] sm:$0xff]
    %v1147 = vld [vmem:[%s4 + $0x5a8] sm:$0xff]
    %v1148 = vld [vmem:[%s4 + $0x5b0] sm:$0xff]
    %v1149 = vld [vmem:[%s4 + $0x5b8] sm:$0xff]
    %v1150 = vld [vmem:[%s4 + $0x5c0] sm:$0xff]
    %v1151 = vld [vmem:[%s4 + $0x5c8] sm:$0xff]
    %v1152 = vld [vmem:[%s4 + $0x5d0] sm:$0xff]
    %v1153 = vld [vmem:[%s4 + $0x5d8] sm:$0xff]
    %v1154 = vld [vmem:[%s4 + $0x5e0] sm:$0xff]
    %v1155 = vld [vmem:[%s4 + $0x5e8] sm:$0xff]
    %v1156 = vld [vmem:[%s4 + $0x5f0] sm:$0xff]
    %v1157 = vld [vmem:[%s4 + $0x5f8] sm:$0xff]
    %v1158 = vld [vmem:[%s4 + $0x600] sm:$0xff]
    %v1159 = vld [vmem:[%s4 + $0x608] sm:$0xff]
    %v1160 = vld [vmem:[%s4 + $0x610] sm:$0xff]
    %v1161 = vld [vmem:[%s4 + $0x618] sm:$0xff]
    %v1162 = vld [vmem:[%s4 + $0x620] sm:$0xff]
    %v1163 = vld [vmem:[%s4 + $0x628] sm:$0xff]
    %v1164 = vld [vmem:[%s4 + $0x630] sm:$0xff]
    %v1165 = vld [vmem:[%s4 + $0x638] sm:$0xff]
    %v1166 = vld [vmem:[%s4 + $0x640] sm:$0xff]
    %v1167 = vld [vmem:[%s4 + $0x648] sm:$0xff]
    %v1168 = vld [vmem:[%s4 + $0x650] sm:$0xff]
    %v1169 = vld [vmem:[%s4 + $0x658] sm:$0xff]
    %v1170 = vld [vmem:[%s4 + $0x660] sm:$0xff]
    %v1171 = vld [vmem:[%s4 + $0x668] sm:$0xff]
    %v1172 = vld [vmem:[%s4 + $0x670] sm:$0xff]
    %v1173 = vld [vmem:[%s4 + $0x678] sm:$0xff]
    %v1174 = vld [vmem:[%s4 + $0x680] sm:$0xff]
    %v1175 = vld [vmem:[%s4 + $0x688] sm:$0xff]
    %v1176 = vld [vmem:[%s4 + $0x690] sm:$0xff]
    %v1177 = vld [vmem:[%s4 + $0x698] sm:$0xff]
    %v1178 = vld [vmem:[%s4 + $0x6a0] sm:$0xff]
    %v1179 = vld [vmem:[%s4 + $0x6a8] sm:$0xff]
    %v1180 = vld [vmem:[%s4 + $0x6b0] sm:$0xff]
    %v1181 = vld [vmem:[%s4 + $0x6b8] sm:$0xff]
    %v1182 = vld [vmem:[%s4 + $0x6c0] sm:$0xff]
    %v1183 = vld [vmem:[%s4 + $0x6c8] sm:$0xff]
    %v1184 = vld [vmem:[%s4 + $0x6d0] sm:$0xff]
    %v1185 = vld [vmem:[%s4 + $0x6d8] sm:$0xff]
    %v1186 = vld [vmem:[%s4 + $0x6e0] sm:$0xff]
    %v1187 = vld [vmem:[%s4 + $0x6e8] sm:$0xff]
    %v1188 = vld [vmem:[%s4 + $0x6f0] sm:$0xff]
    %v1189 = vld [vmem:[%s4 + $0x6f8] sm:$0xff]
    %v1190 = vld [vmem:[%s4 + $0x700] sm:$0xff]
    %v1191 = vld [vmem:[%s4 + $0x708] sm:$0xff]
    %v1192 = vld [vmem:[%s4 + $0x710] sm:$0xff]
    %v1193 = vld [vmem:[%s4 + $0x718] sm:$0xff]
    %v1194 = vld [vmem:[%s4 + $0x720] sm:$0xff]
    %v1195 = vld [vmem:[%s4 + $0x728] sm:$0xff]
    %v1196 = vld [vmem:[%s4 + $0x730] sm:$0xff]
    %v1197 = vld [vmem:[%s4 + $0x738] sm:$0xff]
    %v1198 = vld [vmem:[%s4 + $0x740] sm:$0xff]
    %v1199 = vld [vmem:[%s4 + $0x748] sm:$0xff]
    %v1200 = vld [vmem:[%s4 + $0x750] sm:$0xff]
    %v1201 = vld [vmem:[%s4 + $0x758] sm:$0xff]
    %v1202 = vld [vmem:[%s4 + $0x760] sm:$0xff]
    %v1203 = vld [vmem:[%s4 + $0x768] sm:$0xff]
    %v1204 = vld [vmem:[%s4 + $0x770] sm:$0xff]
    %v1205 = vld [vmem:[%s4 + $0x778] sm:$0xff]
    %v1206 = vld [vmem:[%s4 + $0x780] sm:$0xff]
    %v1207 = vld [vmem:[%s4 + $0x788] sm:$0xff]
    %v1208 = vld [vmem:[%s4 + $0x790] sm:$0xff]
    %v1209 = vld [vmem:[%s4 + $0x798] sm:$0xff]
    %v1210 = vld [vmem:[%s4 + $0x7a0] sm:$0xff]
    %v1211 = vld [vmem:[%s4 + $0x7a8] sm:$0xff]
    %v1212 = vld [vmem:[%s4 + $0x7b0] sm:$0xff]
    %v1213 = vld [vmem:[%s4 + $0x7b8] sm:$0xff]
    %v1214 = vld [vmem:[%s4 + $0x7c0] sm:$0xff]
    %v1215 = vld [vmem:[%s4 + $0x7c8] sm:$0xff]
    %v1216 = vld [vmem:[%s4 + $0x7d0] sm:$0xff]
    %v1217 = vld [vmem:[%s4 + $0x7d8] sm:$0xff]
    %v1218 = vld [vmem:[%s4 + $0x7e0] sm:$0xff]
    %v1219 = vld [vmem:[%s4 + $0x7e8] sm:$0xff]
    %v1220 = vld [vmem:[%s4 + $0x7f0] sm:$0xff]
    %v1221 = vld [vmem:[%s4 + $0x7f8] sm:$0xff]
    %v1222 = vld [vmem:[%s4 + $0x800] sm:$0xff]
    %v1223 = vld [vmem:[%s4 + $0x808] sm:$0xff]
    %v1224 = vld [vmem:[%s4 + $0x810] sm:$0xff]
    %v1225 = vld [vmem:[%s4 + $0x818] sm:$0xff]
    %v1226 = vld [vmem:[%s4 + $0x820] sm:$0xff]
    %v1227 = vld [vmem:[%s4 + $0x828] sm:$0xff]
    %v1228 = vld [vmem:[%s4 + $0x830] sm:$0xff]
    %v1229 = vld [vmem:[%s4 + $0x838] sm:$0xff]
    %v1230 = vld [vmem:[%s4 + $0x840] sm:$0xff]
    %v1231 = vld [vmem:[%s4 + $0x848] sm:$0xff]
    %v1232 = vld [vmem:[%s4 + $0x850] sm:$0xff]
    %v1233 = vld [vmem:[%s4 + $0x858] sm:$0xff]
    %v1234 = vld [vmem:[%s4 + $0x860] sm:$0xff]
    %v1235 = vld [vmem:[%s4 + $0x868] sm:$0xff]
    %v1236 = vld [vmem:[%s4 + $0x870] sm:$0xff]
    %v1237 = vld [vmem:[%s4 + $0x878] sm:$0xff]
    %v1238 = vld [vmem:[%s4 + $0x880] sm:$0xff]
    %v1239 = vld [vmem:[%s4 + $0x888] sm:$0xff]
    %v1240 = vld [vmem:[%s4 + $0x890] sm:$0xff]
    %v1241 = vld [vmem:[%s4 + $0x898] sm:$0xff]
    %v1242 = vld [vmem:[%s4 + $0x8a0] sm:$0xff]
    %v1243 = vld [vmem:[%s4 + $0x8a8] sm:$0xff]
    %v1244 = vld [vmem:[%s4 + $0x8b0] sm:$0xff]
    %v1245 = vld [vmem:[%s4 + $0x8b8] sm:$0xff]
    %v1246 = vld [vmem:[%s4 + $0x8c0] sm:$0xff]
    %v1247 = vld [vmem:[%s4 + $0x8c8] sm:$0xff]
    %v1248 = vld [vmem:[%s4 + $0x8d0] sm:$0xff]
    %v1249 = vld [vmem:[%s4 + $0x8d8] sm:$0xff]
    %v1250 = vld [vmem:[%s4 + $0x8e0] sm:$0xff]
    %v1251 = vld [vmem:[%s4 + $0x8e8] sm:$0xff]
    %v1252 = vld [vmem:[%s4 + $0x8f0] sm:$0xff]
    %v1253 = vld [vmem:[%s4 + $0x8f8] sm:$0xff]
    %v1254 = vld [vmem:[%s4 + $0x900] sm:$0xff]
    %v1255 = vld [vmem:[%s4 + $0x908] sm:$0xff]
    %v1256 = vld [vmem:[%s4 + $0x910] sm:$0xff]
    %v1257 = vld [vmem:[%s4 + $0x918] sm:$0xff]
    %v1258 = vld [vmem:[%s4 + $0x920] sm:$0xff]
    %v1259 = vld [vmem:[%s4 + $0x928] sm:$0xff]
    %v1260 = vld [vmem:[%s4 + $0x930] sm:$0xff]
    %v1261 = vld [vmem:[%s4 + $0x938] sm:$0xff]
    %v1262 = vld [vmem:[%s4 + $0x940] sm:$0xff]
    %v1263 = vld [vmem:[%s4 + $0x948] sm:$0xff]
    %v1264 = vld [vmem:[%s4 + $0x950] sm:$0xff]
    %v1265 = vld [vmem:[%s4 + $0x958] sm:$0xff]
    %v1266 = vld [vmem:[%s4 + $0x960] sm:$0xff]
    %v1267 = vld [vmem:[%s4 + $0x968] sm:$0xff]
    %v1268 = vld [vmem:[%s4 + $0x970] sm:$0xff]
    %v1269 = vld [vmem:[%s4 + $0x978] sm:$0xff]
    %v1270 = vld [vmem:[%s4 + $0x980] sm:$0xff]
    %v1271 = vld [vmem:[%s4 + $0x988] sm:$0xff]
    %v1272 = vld [vmem:[%s4 + $0x990] sm:$0xff]
    %v1273 = vld [vmem:[%s4 + $0x998] sm:$0xff]
    %v1274 = vld [vmem:[%s4 + $0x9a0] sm:$0xff]
    %v1275 = vld [vmem:[%s4 + $0x9a8] sm:$0xff]
    %v1276 = vld [vmem:[%s4 + $0x9b0] sm:$0xff]
    %v1277 = vld [vmem:[%s4 + $0x9b8] sm:$0xff]
    %v1278 = vld [vmem:[%s4 + $0x9c0] sm:$0xff]
    %v1279 = vld [vmem:[%s4 + $0x9c8] sm:$0xff]
    %v1280 = vld [vmem:[%s4 + $0x9d0] sm:$0xff]
    %v1281 = vld [vmem:[%s4 + $0x9d8] sm:$0xff]
    %v1282 = vld [vmem:[%s4 + $0x9e0] sm:$0xff]
    %v1283 = vld [vmem:[%s4 + $0x9e8] sm:$0xff]
    %v1284 = vld [vmem:[%s4 + $0x9f0] sm:$0xff]
    %v1285 = vld [vmem:[%s4 + $0x9f8] sm:$0xff]
    %v1286 = vld [vmem:[%s4 + $0xa00] sm:$0xff]
    %v1287 = vld [vmem:[%s4 + $0xa08] sm:$0xff]
    %v1288 = vld [vmem:[%s4 + $0xa10] sm:$0xff]
    %v1289 = vld [vmem:[%s4 + $0xa18] sm:$0xff]
    %v1290 = vld [vmem:[%s4 + $0xa20] sm:$0xff]
    %v1291 = vld [vmem:[%s4 + $0xa28] sm:$0xff]
    %v1292 = vld [vmem:[%s4 + $0xa30] sm:$0xff]
    %v1293 = vld [vmem:[%s4 + $0xa38] sm:$0xff]
    %v1294 = vld [vmem:[%s4 + $0xa40] sm:$0xff]
    %v1295 = vld [vmem:[%s4 + $0xa48] sm:$0xff]
    %v1296 = vld [vmem:[%s4 + $0xa50] sm:$0xff]
    %v1297 = vld [vmem:[%s4 + $0xa58] sm:$0xff]
    %v1298 = vld [vmem:[%s4 + $0xa60] sm:$0xff]
    %v1299 = vld [vmem:[%s4 + $0xa68] sm:$0xff]
    %v1300 = vld [vmem:[%s4 + $0xa70] sm:$0xff]
    %v1301 = vld [vmem:[%s4 + $0xa78] sm:$0xff]
    %v1302 = vld [vmem:[%s4 + $0xa80] sm:$0xff]
    %v1303 = vld [vmem:[%s4 + $0xa88] sm:$0xff]
    %v1304 = vld [vmem:[%s4 + $0xa90] sm:$0xff]
    %v1305 = vld [vmem:[%s4 + $0xa98] sm:$0xff]
    %v1306 = vld [vmem:[%s4 + $0xaa0] sm:$0xff]
    %v1307 = vld [vmem:[%s4 + $0xaa8] sm:$0xff]
    %v1308 = vld [vmem:[%s4 + $0xab0] sm:$0xff]
    %v1309 = vld [vmem:[%s4 + $0xab8] sm:$0xff]
    %v1310 = vld [vmem:[%s4 + $0xac0] sm:$0xff]
    %v1311 = vld [vmem:[%s4 + $0xac8] sm:$0xff]
    %v1312 = vld [vmem:[%s4 + $0xad0] sm:$0xff]
    %v1313 = vld [vmem:[%s4 + $0xad8] sm:$0xff]
    %v1314 = vld [vmem:[%s4 + $0xae0] sm:$0xff]
    %v1315 = vld [vmem:[%s4 + $0xae8] sm:$0xff]
    %v1316 = vld [vmem:[%s4 + $0xaf0] sm:$0xff]
    %v1317 = vld [vmem:[%s4 + $0xaf8] sm:$0xff]
    %v1318 = vld [vmem:[%s4 + $0xb00] sm:$0xff]
    %v1319 = vld [vmem:[%s4 + $0xb08] sm:$0xff]
    %v1320 = vld [vmem:[%s4 + $0xb10] sm:$0xff]
    %v1321 = vld [vmem:[%s4 + $0xb18] sm:$0xff]
    %v1322 = vld [vmem:[%s4 + $0xb20] sm:$0xff]
    %v1323 = vld [vmem:[%s4 + $0xb28] sm:$0xff]
    %v1324 = vld [vmem:[%s4 + $0xb30] sm:$0xff]
    %v1325 = vld [vmem:[%s4 + $0xb38] sm:$0xff]
    %v1326 = vld [vmem:[%s4 + $0xb40] sm:$0xff]
    %v1327 = vld [vmem:[%s4 + $0xb48] sm:$0xff]
    %v1328 = vld [vmem:[%s4 + $0xb50] sm:$0xff]
    %v1329 = vld [vmem:[%s4 + $0xb58] sm:$0xff]
    %v1330 = vld [vmem:[%s4 + $0xb60] sm:$0xff]
    %v1331 = vld [vmem:[%s4 + $0xb68] sm:$0xff]
    %v1332 = vld [vmem:[%s4 + $0xb70] sm:$0xff]
    %v1333 = vld [vmem:[%s4 + $0xb78] sm:$0xff]
    %v1334 = vld [vmem:[%s4 + $0xb80] sm:$0xff]
    %v1335 = vld [vmem:[%s4 + $0xb88] sm:$0xff]
    %v1336 = vld [vmem:[%s4 + $0xb90] sm:$0xff]
    %v1337 = vld [vmem:[%s4 + $0xb98] sm:$0xff]
    %v1338 = vld [vmem:[%s4 + $0xba0] sm:$0xff]
    %v1339 = vld [vmem:[%s4 + $0xba8] sm:$0xff]
    %v1340 = vld [vmem:[%s4 + $0xbb0] sm:$0xff]
    %v1341 = vld [vmem:[%s4 + $0xbb8] sm:$0xff]
    %v1342 = vld [vmem:[%s4 + $0xbc0] sm:$0xff]
    %v1343 = vld [vmem:[%s4 + $0xbc8] sm:$0xff]
    %v1344 = vld [vmem:[%s4 + $0xbd0] sm:$0xff]
    %v1345 = vld [vmem:[%s4 + $0xbd8] sm:$0xff]
    %v1346 = vld [vmem:[%s4 + $0xbe0] sm:$0xff]
    %v1347 = vld [vmem:[%s4 + $0xbe8] sm:$0xff]
    %v1348 = vld [vmem:[%s4 + $0xbf0] sm:$0xff]
    %v1349 = vld [vmem:[%s4 + $0xbf8] sm:$0xff]
    %v1350 = vld [vmem:[%s4 + $0xc00] sm:$0xff]
    %v1351 = vld [vmem:[%s4 + $0xc08] sm:$0xff]
    %v1352 = vld [vmem:[%s4 + $0xc10] sm:$0xff]
    %v1353 = vld [vmem:[%s4 + $0xc18] sm:$0xff]
    %v1354 = vld [vmem:[%s4 + $0xc20] sm:$0xff]
    %v1355 = vld [vmem:[%s4 + $0xc28] sm:$0xff]
    %v1356 = vld [vmem:[%s4 + $0xc30] sm:$0xff]
    %v1357 = vld [vmem:[%s4 + $0xc38] sm:$0xff]
    %v1358 = vld [vmem:[%s4 + $0xc40] sm:$0xff]
    %v1359 = vld [vmem:[%s4 + $0xc48] sm:$0xff]
    %v1360 = vld [vmem:[%s4 + $0xc50] sm:$0xff]
    %v1361 = vld [vmem:[%s4 + $0xc58] sm:$0xff]
    %v1362 = vld [vmem:[%s4 + $0xc60] sm:$0xff]
    %v1363 = vld [vmem:[%s4 + $0xc68] sm:$0xff]
    %v1364 = vld [vmem:[%s4 + $0xc70] sm:$0xff]
    %v1365 = vld [vmem:[%s4 + $0xc78] sm:$0xff]
    %v1366 = vld [vmem:[%s4 + $0xc80] sm:$0xff]
    %v1367 = vld [vmem:[%s4 + $0xc88] sm:$0xff]
    %v1368 = vld [vmem:[%s4 + $0xc90] sm:$0xff]
    %v1369 = vld [vmem:[%s4 + $0xc98] sm:$0xff]
    %v1370 = vld [vmem:[%s4 + $0xca0] sm:$0xff]
    %v1371 = vld [vmem:[%s4 + $0xca8] sm:$0xff]
    %v1372 = vld [vmem:[%s4 + $0xcb0] sm:$0xff]
    %v1373 = vld [vmem:[%s4 + $0xcb8] sm:$0xff]
    %v1374 = vld [vmem:[%s4 + $0xcc0] sm:$0xff]
    %v1375 = vld [vmem:[%s4 + $0xcc8] sm:$0xff]
    %v1376 = vld [vmem:[%s4 + $0xcd0] sm:$0xff]
    %v1377 = vld [vmem:[%s4 + $0xcd8] sm:$0xff]
    %v1378 = vld [vmem:[%s4 + $0xce0] sm:$0xff]
    %v1379 = vld [vmem:[%s4 + $0xce8] sm:$0xff]
    %v1380 = vld [vmem:[%s4 + $0xcf0] sm:$0xff]
    %v1381 = vld [vmem:[%s4 + $0xcf8] sm:$0xff]
    %v1382 = vld [vmem:[%s4 + $0xd00] sm:$0xff]
    %v1383 = vld [vmem:[%s4 + $0xd08] sm:$0xff]
    %v1384 = vld [vmem:[%s4 + $0xd10] sm:$0xff]
    %v1385 = vld [vmem:[%s4 + $0xd18] sm:$0xff]
    %v1386 = vld [vmem:[%s4 + $0xd20] sm:$0xff]
    %v1387 = vld [vmem:[%s4 + $0xd28] sm:$0xff]
    %v1388 = vld [vmem:[%s4 + $0xd30] sm:$0xff]
    %v1389 = vld [vmem:[%s4 + $0xd38] sm:$0xff]
    %v1390 = vld [vmem:[%s4 + $0xd40] sm:$0xff]
    %v1391 = vld [vmem:[%s4 + $0xd48] sm:$0xff]
    %v1392 = vld [vmem:[%s4 + $0xd50] sm:$0xff]
    %v1393 = vld [vmem:[%s4 + $0xd58] sm:$0xff]
    %v1394 = vld [vmem:[%s4 + $0xd60] sm:$0xff]
    %v1395 = vld [vmem:[%s4 + $0xd68] sm:$0xff]
    %v1396 = vld [vmem:[%s4 + $0xd70] sm:$0xff]
    %v1397 = vld [vmem:[%s4 + $0xd78] sm:$0xff]
    %v1398 = vld [vmem:[%s4 + $0xd80] sm:$0xff]
    %v1399 = vld [vmem:[%s4 + $0xd88] sm:$0xff]
    %v1400 = vld [vmem:[%s4 + $0xd90] sm:$0xff]
    %v1401 = vld [vmem:[%s4 + $0xd98] sm:$0xff]
    %v1402 = vld [vmem:[%s4 + $0xda0] sm:$0xff]
    %v1403 = vld [vmem:[%s4 + $0xda8] sm:$0xff]
    %v1404 = vld [vmem:[%s4 + $0xdb0] sm:$0xff]
    %v1405 = vld [vmem:[%s4 + $0xdb8] sm:$0xff]
    %v1406 = vld [vmem:[%s4 + $0xdc0] sm:$0xff]
    %v1407 = vld [vmem:[%s4 + $0xdc8] sm:$0xff]
    %v1408 = vld [vmem:[%s4 + $0xdd0] sm:$0xff]
    %v1409 = vld [vmem:[%s4 + $0xdd8] sm:$0xff]
    %v1410 = vld [vmem:[%s4 + $0xde0] sm:$0xff]
    %v1411 = vld [vmem:[%s4 + $0xde8] sm:$0xff]
    %v1412 = vld [vmem:[%s4 + $0xdf0] sm:$0xff]
    %v1413 = vld [vmem:[%s4 + $0xdf8] sm:$0xff]
    %v1414 = vld [vmem:[%s4 + $0xe00] sm:$0xff]
    %v1415 = vld [vmem:[%s4 + $0xe08] sm:$0xff]
    %v1416 = vld [vmem:[%s4 + $0xe10] sm:$0xff]
    %v1417 = vld [vmem:[%s4 + $0xe18] sm:$0xff]
    %v1418 = vld [vmem:[%s4 + $0xe20] sm:$0xff]
    %v1419 = vld [vmem:[%s4 + $0xe28] sm:$0xff]
    %v1420 = vld [vmem:[%s4 + $0xe30] sm:$0xff]
    %v1421 = vld [vmem:[%s4 + $0xe38] sm:$0xff]
    %v1422 = vld [vmem:[%s4 + $0xe40] sm:$0xff]
    %v1423 = vld [vmem:[%s4 + $0xe48] sm:$0xff]
    %v1424 = vld [vmem:[%s4 + $0xe50] sm:$0xff]
    %v1425 = vld [vmem:[%s4 + $0xe58] sm:$0xff]
    %v1426 = vld [vmem:[%s4 + $0xe60] sm:$0xff]
    %v1427 = vld [vmem:[%s4 + $0xe68] sm:$0xff]
    %v1428 = vld [vmem:[%s4 + $0xe70] sm:$0xff]
    %v1429 = vld [vmem:[%s4 + $0xe78] sm:$0xff]
    %v1430 = vld [vmem:[%s4 + $0xe80] sm:$0xff]
    %v1431 = vld [vmem:[%s4 + $0xe88] sm:$0xff]
    %v1432 = vld [vmem:[%s4 + $0xe90] sm:$0xff]
    %v1433 = vld [vmem:[%s4 + $0xe98] sm:$0xff]
    %v1434 = vld [vmem:[%s4 + $0xea0] sm:$0xff]
    %v1435 = vld [vmem:[%s4 + $0xea8] sm:$0xff]
    %v1436 = vld [vmem:[%s4 + $0xeb0] sm:$0xff]
    %v1437 = vld [vmem:[%s4 + $0xeb8] sm:$0xff]
    %v1438 = vld [vmem:[%s4 + $0xec0] sm:$0xff]
    %v1439 = vld [vmem:[%s4 + $0xec8] sm:$0xff]
    %v1440 = vld [vmem:[%s4 + $0xed0] sm:$0xff]
    %v1441 = vld [vmem:[%s4 + $0xed8] sm:$0xff]
    %v1442 = vld [vmem:[%s4 + $0xee0] sm:$0xff]
    %v1443 = vld [vmem:[%s4 + $0xee8] sm:$0xff]
    %v1444 = vld [vmem:[%s4 + $0xef0] sm:$0xff]
    %v1445 = vld [vmem:[%s4 + $0xef8] sm:$0xff]
    %v1446 = vld [vmem:[%s4 + $0xf00] sm:$0xff]
    %v1447 = vld [vmem:[%s4 + $0xf08] sm:$0xff]
    %v1448 = vld [vmem:[%s4 + $0xf10] sm:$0xff]
    %v1449 = vld [vmem:[%s4 + $0xf18] sm:$0xff]
    %v1450 = vld [vmem:[%s4 + $0xf20] sm:$0xff]
    %v1451 = vld [vmem:[%s4 + $0xf28] sm:$0xff]
    %v1452 = vld [vmem:[%s4 + $0xf30] sm:$0xff]
    %v1453 = vld [vmem:[%s4 + $0xf38] sm:$0xff]
    %v1454 = vld [vmem:[%s4 + $0xf40] sm:$0xff]
    %v1455 = vld [vmem:[%s4 + $0xf48] sm:$0xff]
    %v1456 = vld [vmem:[%s4 + $0xf50] sm:$0xff]
    %v1457 = vld [vmem:[%s4 + $0xf58] sm:$0xff]
    %v1458 = vld [vmem:[%s4 + $0xf60] sm:$0xff]
    %v1459 = vld [vmem:[%s4 + $0xf68] sm:$0xff]
    %v1460 = vld [vmem:[%s4 + $0xf70] sm:$0xff]
    %v1461 = vld [vmem:[%s4 + $0xf78] sm:$0xff]
    %v1462 = vld [vmem:[%s4 + $0xf80] sm:$0xff]
    %v1463 = vld [vmem:[%s4 + $0xf88] sm:$0xff]
    %v1464 = vld [vmem:[%s4 + $0xf90] sm:$0xff]
    %v1465 = vld [vmem:[%s4 + $0xf98] sm:$0xff]
    %v1466 = vld [vmem:[%s4 + $0xfa0] sm:$0xff]
    %v1467 = vld [vmem:[%s4 + $0xfa8] sm:$0xff]
    %v1468 = vld [vmem:[%s4 + $0xfb0] sm:$0xff]
    %v1469 = vld [vmem:[%s4 + $0xfb8] sm:$0xff]
    %v1470 = vld [vmem:[%s4 + $0xfc0] sm:$0xff]
    %v1471 = vld [vmem:[%s4 + $0xfc8] sm:$0xff]
    %v1472 = vld [vmem:[%s4 + $0xfd0] sm:$0xff]
    %v1473 = vld [vmem:[%s4 + $0xfd8] sm:$0xff]
    %v1474 = vld [vmem:[%s4 + $0xfe0] sm:$0xff]
    %v1475 = vld [vmem:[%s4 + $0xfe8] sm:$0xff]
    %v1476 = vld [vmem:[%s4 + $0xff0] sm:$0xff]
    %v1477 = vld [vmem:[%s4 + $0xff8] sm:$0xff]
    %v1478 = vld [vmem:[%s5] sm:$0x3]
    %v1480 = vlaneseq
    %v1481 = vshrl.u32 %v1480, 7
    %v1482 = vsub.s32 0, %v1481
    %v1483 = vrot.slane %v1478, %v1482
    %v1484 = vlaneseq
    %v1485 = vshrl.u32 %v1484, 7
    %v1486 = vsub.s32 1, %v1485
    %v1487 = vrot.slane %v1478, %v1486
    %v1494 = vcombine.high %v962, %v962
    %v1496 = vunpack.c.l.s4 1983009808
    %v1497 = vunpack.c.0.s8 %v1496
    %v1498 = vlaneseq
    %v1499 = vshrl.u32 %v1498, 7
    %v1500 = vsub.s32 %v1497, %v1499
    %v1501 = vrot.slane %v962, %v1500
    %v1503 = vunpack.c.l.s4 1983009808
    %v1504 = vunpack.c.0.s8 %v1503
    %v1505 = vlaneseq
    %v1506 = vshrl.u32 %v1505, 7
    %v1507 = vsub.s32 %v1504, %v1506
    %v1508 = vrot.slane %v1494, %v1507
    %v1509 = vcombine.high %v1501, %v1501
    %v1510 = vcombine.high %v1508, %v1508
    %v1511 = vcombine.high %v963, %v963
    %v1513 = vunpack.c.l.s4 1983009808
    %v1514 = vunpack.c.0.s8 %v1513
    %v1515 = vlaneseq
    %v1516 = vshrl.u32 %v1515, 7
    %v1517 = vsub.s32 %v1514, %v1516
    %v1518 = vrot.slane %v963, %v1517
    %v1520 = vunpack.c.l.s4 1983009808
    %v1521 = vunpack.c.0.s8 %v1520
    %v1522 = vlaneseq
    %v1523 = vshrl.u32 %v1522, 7
    %v1524 = vsub.s32 %v1521, %v1523
    %v1525 = vrot.slane %v1511, %v1524
    %v1526 = vcombine.high %v1518, %v1518
    %v1527 = vcombine.high %v1525, %v1525
    %v1528 = vcombine.high %v964, %v964
    %v1530 = vunpack.c.l.s4 1983009808
    %v1531 = vunpack.c.0.s8 %v1530
    %v1532 = vlaneseq
    %v1533 = vshrl.u32 %v1532, 7
    %v1534 = vsub.s32 %v1531, %v1533
    %v1535 = vrot.slane %v964, %v1534
    %v1537 = vunpack.c.l.s4 1983009808
    %v1538 = vunpack.c.0.s8 %v1537
    %v1539 = vlaneseq
    %v1540 = vshrl.u32 %v1539, 7
    %v1541 = vsub.s32 %v1538, %v1540
    %v1542 = vrot.slane %v1528, %v1541
    %v1543 = vcombine.high %v1535, %v1535
    %v1544 = vcombine.high %v1542, %v1542
    %v1545 = vcombine.high %v965, %v965
    %v1547 = vunpack.c.l.s4 1983009808
    %v1548 = vunpack.c.0.s8 %v1547
    %v1549 = vlaneseq
    %v1550 = vshrl.u32 %v1549, 7
    %v1551 = vsub.s32 %v1548, %v1550
    %v1552 = vrot.slane %v965, %v1551
    %v1554 = vunpack.c.l.s4 1983009808
    %v1555 = vunpack.c.0.s8 %v1554
    %v1556 = vlaneseq
    %v1557 = vshrl.u32 %v1556, 7
    %v1558 = vsub.s32 %v1555, %v1557
    %v1559 = vrot.slane %v1545, %v1558
    %v1560 = vcombine.high %v1552, %v1552
    %v1561 = vcombine.high %v1559, %v1559
    %1578 = vmatprep.subr.mxu0 %v997
    %1579 = vmatpush1.msra.mxu0 %v996
    %1580 = vmatprep.subr.mxu0 %v995
    %1581 = vmatpush1.msra.mxu0 %v994
    %1582 = vmatprep.subr.mxu0 %v993
    %1583 = vmatpush1.msra.mxu0 %v992
    %1584 = vmatprep.subr.mxu0 %v991
    %1585 = vmatpush1.msra.mxu0 %v990
    %1586 = vmatprep.subr.mxu0 %v989
    %1587 = vmatpush1.msra.mxu0 %v988
    %1588 = vmatprep.subr.mxu0 %v987
    %1589 = vmatpush1.msra.mxu0 %v986
    %1590 = vmatprep.subr.mxu0 %v985
    %1591 = vmatpush1.msra.mxu0 %v984
    %1592 = vmatprep.subr.mxu0 %v983
    %1593 = vmatpush1.msra.mxu0 %v982
    %1594 = vmatprep.subr.mxu0 %v981
    %1595 = vmatpush1.msra.mxu0 %v980
    %1596 = vmatprep.subr.mxu0 %v979
    %1597 = vmatpush1.msra.mxu0 %v978
    %1598 = vmatprep.subr.mxu0 %v977
    %1599 = vmatpush1.msra.mxu0 %v976
    %1600 = vmatprep.subr.mxu0 %v975
    %1601 = vmatpush1.msra.mxu0 %v974
    %1602 = vmatprep.subr.mxu0 %v973
    %1603 = vmatpush1.msra.mxu0 %v972
    %1604 = vmatprep.subr.mxu0 %v971
    %1605 = vmatpush1.msra.mxu0 %v970
    %1606 = vmatprep.subr.mxu0 %v969
    %1607 = vmatpush1.msra.mxu0 %v968
    %1608 = vmatprep.subr.mxu0 %v967
    %1609 = vmatpush1.msra.mxu0 %v966
    %1610 = vmatprep.subr.mxu0 %v1029
    %1611 = vmatpush2.msra.mxu0 %v1028
    %1612 = vmatprep.subr.mxu0 %v1027
    %1613 = vmatpush2.msra.mxu0 %v1026
    %1614 = vmatprep.subr.mxu0 %v1025
    %1615 = vmatpush2.msra.mxu0 %v1024
    %1616 = vmatprep.subr.mxu0 %v1023
    %1617 = vmatpush2.msra.mxu0 %v1022
    %1618 = vmatprep.subr.mxu0 %v1021
    %1619 = vmatpush2.msra.mxu0 %v1020
    %1620 = vmatprep.subr.mxu0 %v1019
    %1621 = vmatpush2.msra.mxu0 %v1018
    %1622 = vmatprep.subr.mxu0 %v1017
    %1623 = vmatpush2.msra.mxu0 %v1016
    %1624 = vmatprep.subr.mxu0 %v1015
    %1625 = vmatpush2.msra.mxu0 %v1014
    %1626 = vmatprep.subr.mxu0 %v1013
    %1627 = vmatpush2.msra.mxu0 %v1012
    %1628 = vmatprep.subr.mxu0 %v1011
    %1629 = vmatpush2.msra.mxu0 %v1010
    %1630 = vmatprep.subr.mxu0 %v1009
    %1631 = vmatpush2.msra.mxu0 %v1008
    %1632 = vmatprep.subr.mxu0 %v1007
    %1633 = vmatpush2.msra.mxu0 %v1006
    %1634 = vmatprep.subr.mxu0 %v1005
    %1635 = vmatpush2.msra.mxu0 %v1004
    %1636 = vmatprep.subr.mxu0 %v1003
    %1637 = vmatpush2.msra.mxu0 %v1002
    %1638 = vmatprep.subr.mxu0 %v1001
    %1639 = vmatpush2.msra.mxu0 %v1000
    %1640 = vmatprep.subr.mxu0 %v999
    %1641 = vmatpush2.msra.mxu0 %v998
    %1642 = vmatprep.mubr.f32.mxu0 %v1509
    %1643 = vmatmul.mubr.f32.gmra.mxu0 %v1501
    %v1644 = vpop.f32.mrf.mxu0
    %v1645 = vadd.f32 %v1483, %v1644
    %v1646 = vpop.f32.mrf.mxu0
    %v1647 = vadd.f32 %v1487, %v1646
    %1648 = vdwg.mxu0
    %1649 = vmatprep.subr.mxu0 %v1061
    %1650 = vmatpush1.msra.mxu0 %v1060
    %1651 = vmatprep.subr.mxu0 %v1059
    %1652 = vmatpush1.msra.mxu0 %v1058
    %1653 = vmatprep.subr.mxu0 %v1057
    %1654 = vmatpush1.msra.mxu0 %v1056
    %1655 = vmatprep.subr.mxu0 %v1055
    %1656 = vmatpush1.msra.mxu0 %v1054
    %1657 = vmatprep.subr.mxu0 %v1053
    %1658 = vmatpush1.msra.mxu0 %v1052
    %1659 = vmatprep.subr.mxu0 %v1051
    %1660 = vmatpush1.msra.mxu0 %v1050
    %1661 = vmatprep.subr.mxu0 %v1049
    %1662 = vmatpush1.msra.mxu0 %v1048
    %1663 = vmatprep.subr.mxu0 %v1047
    %1664 = vmatpush1.msra.mxu0 %v1046
    %1665 = vmatprep.subr.mxu0 %v1045
    %1666 = vmatpush1.msra.mxu0 %v1044
    %1667 = vmatprep.subr.mxu0 %v1043
    %1668 = vmatpush1.msra.mxu0 %v1042
    %1669 = vmatprep.subr.mxu0 %v1041
    %1670 = vmatpush1.msra.mxu0 %v1040
    %1671 = vmatprep.subr.mxu0 %v1039
    %1672 = vmatpush1.msra.mxu0 %v1038
    %1673 = vmatprep.subr.mxu0 %v1037
    %1674 = vmatpush1.msra.mxu0 %v1036
    %1675 = vmatprep.subr.mxu0 %v1035
    %1676 = vmatpush1.msra.mxu0 %v1034
    %1677 = vmatprep.subr.mxu0 %v1033
    %1678 = vmatpush1.msra.mxu0 %v1032
    %1679 = vmatprep.subr.mxu0 %v1031
    %1680 = vmatpush1.msra.mxu0 %v1030
    %1681 = vmatprep.subr.mxu0 %v1093
    %1682 = vmatpush2.msra.mxu0 %v1092
    %1683 = vmatprep.subr.mxu0 %v1091
    %1684 = vmatpush2.msra.mxu0 %v1090
    %1685 = vmatprep.subr.mxu0 %v1089
    %1686 = vmatpush2.msra.mxu0 %v1088
    %1687 = vmatprep.subr.mxu0 %v1087
    %1688 = vmatpush2.msra.mxu0 %v1086
    %1689 = vmatprep.subr.mxu0 %v1085
    %1690 = vmatpush2.msra.mxu0 %v1084
    %1691 = vmatprep.subr.mxu0 %v1083
    %1692 = vmatpush2.msra.mxu0 %v1082
    %1693 = vmatprep.subr.mxu0 %v1081
    %1694 = vmatpush2.msra.mxu0 %v1080
    %1695 = vmatprep.subr.mxu0 %v1079
    %1696 = vmatpush2.msra.mxu0 %v1078
    %1697 = vmatprep.subr.mxu0 %v1077
    %1698 = vmatpush2.msra.mxu0 %v1076
    %1699 = vmatprep.subr.mxu0 %v1075
    %1700 = vmatpush2.msra.mxu0 %v1074
    %1701 = vmatprep.subr.mxu0 %v1073
    %1702 = vmatpush2.msra.mxu0 %v1072
    %1703 = vmatprep.subr.mxu0 %v1071
    %1704 = vmatpush2.msra.mxu0 %v1070
    %1705 = vmatprep.subr.mxu0 %v1069
    %1706 = vmatpush2.msra.mxu0 %v1068
    %1707 = vmatprep.subr.mxu0 %v1067
    %1708 = vmatpush2.msra.mxu0 %v1066
    %1709 = vmatprep.subr.mxu0 %v1065
    %1710 = vmatpush2.msra.mxu0 %v1064
    %1711 = vmatprep.subr.mxu0 %v1063
    %1712 = vmatpush2.msra.mxu0 %v1062
    %1713 = vmatprep.mubr.f32.mxu0 %v1510
    %1714 = vmatmul.mubr.f32.gmra.mxu0 %v1508
    %v1715 = vpop.f32.mrf.mxu0
    %v1716 = vadd.f32 %v1645, %v1715
    %v1717 = vpop.f32.mrf.mxu0
    %v1718 = vadd.f32 %v1647, %v1717
    %1719 = vdwg.mxu0
    %1720 = vmatprep.subr.mxu0 %v1125
    %1721 = vmatpush1.msra.mxu0 %v1124
    %1722 = vmatprep.subr.mxu0 %v1123
    %1723 = vmatpush1.msra.mxu0 %v1122
    %1724 = vmatprep.subr.mxu0 %v1121
    %1725 = vmatpush1.msra.mxu0 %v1120
    %1726 = vmatprep.subr.mxu0 %v1119
    %1727 = vmatpush1.msra.mxu0 %v1118
    %1728 = vmatprep.subr.mxu0 %v1117
    %1729 = vmatpush1.msra.mxu0 %v1116
    %1730 = vmatprep.subr.mxu0 %v1115
    %1731 = vmatpush1.msra.mxu0 %v1114
    %1732 = vmatprep.subr.mxu0 %v1113
    %1733 = vmatpush1.msra.mxu0 %v1112
    %1734 = vmatprep.subr.mxu0 %v1111
    %1735 = vmatpush1.msra.mxu0 %v1110
    %1736 = vmatprep.subr.mxu0 %v1109
    %1737 = vmatpush1.msra.mxu0 %v1108
    %1738 = vmatprep.subr.mxu0 %v1107
    %1739 = vmatpush1.msra.mxu0 %v1106
    %1740 = vmatprep.subr.mxu0 %v1105
    %1741 = vmatpush1.msra.mxu0 %v1104
    %1742 = vmatprep.subr.mxu0 %v1103
    %1743 = vmatpush1.msra.mxu0 %v1102
    %1744 = vmatprep.subr.mxu0 %v1101
    %1745 = vmatpush1.msra.mxu0 %v1100
    %1746 = vmatprep.subr.mxu0 %v1099
    %1747 = vmatpush1.msra.mxu0 %v1098
    %1748 = vmatprep.subr.mxu0 %v1097
    %1749 = vmatpush1.msra.mxu0 %v1096
    %1750 = vmatprep.subr.mxu0 %v1095
    %1751 = vmatpush1.msra.mxu0 %v1094
    %1752 = vmatprep.subr.mxu0 %v1157
    %1753 = vmatpush2.msra.mxu0 %v1156
    %1754 = vmatprep.subr.mxu0 %v1155
    %1755 = vmatpush2.msra.mxu0 %v1154
    %1756 = vmatprep.subr.mxu0 %v1153
    %1757 = vmatpush2.msra.mxu0 %v1152
    %1758 = vmatprep.subr.mxu0 %v1151
    %1759 = vmatpush2.msra.mxu0 %v1150
    %1760 = vmatprep.subr.mxu0 %v1149
    %1761 = vmatpush2.msra.mxu0 %v1148
    %1762 = vmatprep.subr.mxu0 %v1147
    %1763 = vmatpush2.msra.mxu0 %v1146
    %1764 = vmatprep.subr.mxu0 %v1145
    %1765 = vmatpush2.msra.mxu0 %v1144
    %1766 = vmatprep.subr.mxu0 %v1143
    %1767 = vmatpush2.msra.mxu0 %v1142
    %1768 = vmatprep.subr.mxu0 %v1141
    %1769 = vmatpush2.msra.mxu0 %v1140
    %1770 = vmatprep.subr.mxu0 %v1139
    %1771 = vmatpush2.msra.mxu0 %v1138
    %1772 = vmatprep.subr.mxu0 %v1137
    %1773 = vmatpush2.msra.mxu0 %v1136
    %1774 = vmatprep.subr.mxu0 %v1135
    %1775 = vmatpush2.msra.mxu0 %v1134
    %1776 = vmatprep.subr.mxu0 %v1133
    %1777 = vmatpush2.msra.mxu0 %v1132
    %1778 = vmatprep.subr.mxu0 %v1131
    %1779 = vmatpush2.msra.mxu0 %v1130
    %1780 = vmatprep.subr.mxu0 %v1129
    %1781 = vmatpush2.msra.mxu0 %v1128
    %1782 = vmatprep.subr.mxu0 %v1127
    %1783 = vmatpush2.msra.mxu0 %v1126
    %1784 = vmatprep.mubr.f32.mxu0 %v1526
    %1785 = vmatmul.mubr.f32.gmra.mxu0 %v1518
    %v1786 = vpop.f32.mrf.mxu0
    %v1787 = vadd.f32 %v1716, %v1786
    %v1788 = vpop.f32.mrf.mxu0
    %v1789 = vadd.f32 %v1718, %v1788
    %1790 = vdwg.mxu0
    %1791 = vmatprep.subr.mxu0 %v1189
    %1792 = vmatpush1.msra.mxu0 %v1188
    %1793 = vmatprep.subr.mxu0 %v1187
    %1794 = vmatpush1.msra.mxu0 %v1186
    %1795 = vmatprep.subr.mxu0 %v1185
    %1796 = vmatpush1.msra.mxu0 %v1184
    %1797 = vmatprep.subr.mxu0 %v1183
    %1798 = vmatpush1.msra.mxu0 %v1182
    %1799 = vmatprep.subr.mxu0 %v1181
    %1800 = vmatpush1.msra.mxu0 %v1180
    %1801 = vmatprep.subr.mxu0 %v1179
    %1802 = vmatpush1.msra.mxu0 %v1178
    %1803 = vmatprep.subr.mxu0 %v1177
    %1804 = vmatpush1.msra.mxu0 %v1176
    %1805 = vmatprep.subr.mxu0 %v1175
    %1806 = vmatpush1.msra.mxu0 %v1174
    %1807 = vmatprep.subr.mxu0 %v1173
    %1808 = vmatpush1.msra.mxu0 %v1172
    %1809 = vmatprep.subr.mxu0 %v1171
    %1810 = vmatpush1.msra.mxu0 %v1170
    %1811 = vmatprep.subr.mxu0 %v1169
    %1812 = vmatpush1.msra.mxu0 %v1168
    %1813 = vmatprep.subr.mxu0 %v1167
    %1814 = vmatpush1.msra.mxu0 %v1166
    %1815 = vmatprep.subr.mxu0 %v1165
    %1816 = vmatpush1.msra.mxu0 %v1164
    %1817 = vmatprep.subr.mxu0 %v1163
    %1818 = vmatpush1.msra.mxu0 %v1162
    %1819 = vmatprep.subr.mxu0 %v1161
    %1820 = vmatpush1.msra.mxu0 %v1160
    %1821 = vmatprep.subr.mxu0 %v1159
    %1822 = vmatpush1.msra.mxu0 %v1158
    %1823 = vmatprep.subr.mxu0 %v1221
    %1824 = vmatpush2.msra.mxu0 %v1220
    %1825 = vmatprep.subr.mxu0 %v1219
    %1826 = vmatpush2.msra.mxu0 %v1218
    %1827 = vmatprep.subr.mxu0 %v1217
    %1828 = vmatpush2.msra.mxu0 %v1216
    %1829 = vmatprep.subr.mxu0 %v1215
    %1830 = vmatpush2.msra.mxu0 %v1214
    %1831 = vmatprep.subr.mxu0 %v1213
    %1832 = vmatpush2.msra.mxu0 %v1212
    %1833 = vmatprep.subr.mxu0 %v1211
    %1834 = vmatpush2.msra.mxu0 %v1210
    %1835 = vmatprep.subr.mxu0 %v1209
    %1836 = vmatpush2.msra.mxu0 %v1208
    %1837 = vmatprep.subr.mxu0 %v1207
    %1838 = vmatpush2.msra.mxu0 %v1206
    %1839 = vmatprep.subr.mxu0 %v1205
    %1840 = vmatpush2.msra.mxu0 %v1204
    %1841 = vmatprep.subr.mxu0 %v1203
    %1842 = vmatpush2.msra.mxu0 %v1202
    %1843 = vmatprep.subr.mxu0 %v1201
    %1844 = vmatpush2.msra.mxu0 %v1200
    %1845 = vmatprep.subr.mxu0 %v1199
    %1846 = vmatpush2.msra.mxu0 %v1198
    %1847 = vmatprep.subr.mxu0 %v1197
    %1848 = vmatpush2.msra.mxu0 %v1196
    %1849 = vmatprep.subr.mxu0 %v1195
    %1850 = vmatpush2.msra.mxu0 %v1194
    %1851 = vmatprep.subr.mxu0 %v1193
    %1852 = vmatpush2.msra.mxu0 %v1192
    %1853 = vmatprep.subr.mxu0 %v1191
    %1854 = vmatpush2.msra.mxu0 %v1190
    %1855 = vmatprep.mubr.f32.mxu0 %v1527
    %1856 = vmatmul.mubr.f32.gmra.mxu0 %v1525
    %v1857 = vpop.f32.mrf.mxu0
    %v1858 = vadd.f32 %v1787, %v1857
    %v1859 = vpop.f32.mrf.mxu0
    %v1860 = vadd.f32 %v1789, %v1859
    %1861 = vdwg.mxu0
    %1862 = vmatprep.subr.mxu0 %v1253
    %1863 = vmatpush1.msra.mxu0 %v1252
    %1864 = vmatprep.subr.mxu0 %v1251
    %1865 = vmatpush1.msra.mxu0 %v1250
    %1866 = vmatprep.subr.mxu0 %v1249
    %1867 = vmatpush1.msra.mxu0 %v1248
    %1868 = vmatprep.subr.mxu0 %v1247
    %1869 = vmatpush1.msra.mxu0 %v1246
    %1870 = vmatprep.subr.mxu0 %v1245
    %1871 = vmatpush1.msra.mxu0 %v1244
    %1872 = vmatprep.subr.mxu0 %v1243
    %1873 = vmatpush1.msra.mxu0 %v1242
    %1874 = vmatprep.subr.mxu0 %v1241
    %1875 = vmatpush1.msra.mxu0 %v1240
    %1876 = vmatprep.subr.mxu0 %v1239
    %1877 = vmatpush1.msra.mxu0 %v1238
    %1878 = vmatprep.subr.mxu0 %v1237
    %1879 = vmatpush1.msra.mxu0 %v1236
    %1880 = vmatprep.subr.mxu0 %v1235
    %1881 = vmatpush1.msra.mxu0 %v1234
    %1882 = vmatprep.subr.mxu0 %v1233
    %1883 = vmatpush1.msra.mxu0 %v1232
    %1884 = vmatprep.subr.mxu0 %v1231
    %1885 = vmatpush1.msra.mxu0 %v1230
    %1886 = vmatprep.subr.mxu0 %v1229
    %1887 = vmatpush1.msra.mxu0 %v1228
    %1888 = vmatprep.subr.mxu0 %v1227
    %1889 = vmatpush1.msra.mxu0 %v1226
    %1890 = vmatprep.subr.mxu0 %v1225
    %1891 = vmatpush1.msra.mxu0 %v1224
    %1892 = vmatprep.subr.mxu0 %v1223
    %1893 = vmatpush1.msra.mxu0 %v1222
    %1894 = vmatprep.subr.mxu0 %v1285
    %1895 = vmatpush2.msra.mxu0 %v1284
    %1896 = vmatprep.subr.mxu0 %v1283
    %1897 = vmatpush2.msra.mxu0 %v1282
    %1898 = vmatprep.subr.mxu0 %v1281
    %1899 = vmatpush2.msra.mxu0 %v1280
    %1900 = vmatprep.subr.mxu0 %v1279
    %1901 = vmatpush2.msra.mxu0 %v1278
    %1902 = vmatprep.subr.mxu0 %v1277
    %1903 = vmatpush2.msra.mxu0 %v1276
    %1904 = vmatprep.subr.mxu0 %v1275
    %1905 = vmatpush2.msra.mxu0 %v1274
    %1906 = vmatprep.subr.mxu0 %v1273
    %1907 = vmatpush2.msra.mxu0 %v1272
    %1908 = vmatprep.subr.mxu0 %v1271
    %1909 = vmatpush2.msra.mxu0 %v1270
    %1910 = vmatprep.subr.mxu0 %v1269
    %1911 = vmatpush2.msra.mxu0 %v1268
    %1912 = vmatprep.subr.mxu0 %v1267
    %1913 = vmatpush2.msra.mxu0 %v1266
    %1914 = vmatprep.subr.mxu0 %v1265
    %1915 = vmatpush2.msra.mxu0 %v1264
    %1916 = vmatprep.subr.mxu0 %v1263
    %1917 = vmatpush2.msra.mxu0 %v1262
    %1918 = vmatprep.subr.mxu0 %v1261
    %1919 = vmatpush2.msra.mxu0 %v1260
    %1920 = vmatprep.subr.mxu0 %v1259
    %1921 = vmatpush2.msra.mxu0 %v1258
    %1922 = vmatprep.subr.mxu0 %v1257
    %1923 = vmatpush2.msra.mxu0 %v1256
    %1924 = vmatprep.subr.mxu0 %v1255
    %1925 = vmatpush2.msra.mxu0 %v1254
    %1926 = vmatprep.mubr.f32.mxu0 %v1543
    %1927 = vmatmul.mubr.f32.gmra.mxu0 %v1535
    %v1928 = vpop.f32.mrf.mxu0
    %v1929 = vadd.f32 %v1858, %v1928
    %v1930 = vpop.f32.mrf.mxu0
    %v1931 = vadd.f32 %v1860, %v1930
    %1932 = vdwg.mxu0
    %1933 = vmatprep.subr.mxu0 %v1317
    %1934 = vmatpush1.msra.mxu0 %v1316
    %1935 = vmatprep.subr.mxu0 %v1315
    %1936 = vmatpush1.msra.mxu0 %v1314
    %1937 = vmatprep.subr.mxu0 %v1313
    %1938 = vmatpush1.msra.mxu0 %v1312
    %1939 = vmatprep.subr.mxu0 %v1311
    %1940 = vmatpush1.msra.mxu0 %v1310
    %1941 = vmatprep.subr.mxu0 %v1309
    %1942 = vmatpush1.msra.mxu0 %v1308
    %1943 = vmatprep.subr.mxu0 %v1307
    %1944 = vmatpush1.msra.mxu0 %v1306
    %1945 = vmatprep.subr.mxu0 %v1305
    %1946 = vmatpush1.msra.mxu0 %v1304
    %1947 = vmatprep.subr.mxu0 %v1303
    %1948 = vmatpush1.msra.mxu0 %v1302
    %1949 = vmatprep.subr.mxu0 %v1301
    %1950 = vmatpush1.msra.mxu0 %v1300
    %1951 = vmatprep.subr.mxu0 %v1299
    %1952 = vmatpush1.msra.mxu0 %v1298
    %1953 = vmatprep.subr.mxu0 %v1297
    %1954 = vmatpush1.msra.mxu0 %v1296
    %1955 = vmatprep.subr.mxu0 %v1295
    %1956 = vmatpush1.msra.mxu0 %v1294
    %1957 = vmatprep.subr.mxu0 %v1293
    %1958 = vmatpush1.msra.mxu0 %v1292
    %1959 = vmatprep.subr.mxu0 %v1291
    %1960 = vmatpush1.msra.mxu0 %v1290
    %1961 = vmatprep.subr.mxu0 %v1289
    %1962 = vmatpush1.msra.mxu0 %v1288
    %1963 = vmatprep.subr.mxu0 %v1287
    %1964 = vmatpush1.msra.mxu0 %v1286
    %1965 = vmatprep.subr.mxu0 %v1349
    %1966 = vmatpush2.msra.mxu0 %v1348
    %1967 = vmatprep.subr.mxu0 %v1347
    %1968 = vmatpush2.msra.mxu0 %v1346
    %1969 = vmatprep.subr.mxu0 %v1345
    %1970 = vmatpush2.msra.mxu0 %v1344
    %1971 = vmatprep.subr.mxu0 %v1343
    %1972 = vmatpush2.msra.mxu0 %v1342
    %1973 = vmatprep.subr.mxu0 %v1341
    %1974 = vmatpush2.msra.mxu0 %v1340
    %1975 = vmatprep.subr.mxu0 %v1339
    %1976 = vmatpush2.msra.mxu0 %v1338
    %1977 = vmatprep.subr.mxu0 %v1337
    %1978 = vmatpush2.msra.mxu0 %v1336
    %1979 = vmatprep.subr.mxu0 %v1335
    %1980 = vmatpush2.msra.mxu0 %v1334
    %1981 = vmatprep.subr.mxu0 %v1333
    %1982 = vmatpush2.msra.mxu0 %v1332
    %1983 = vmatprep.subr.mxu0 %v1331
    %1984 = vmatpush2.msra.mxu0 %v1330
    %1985 = vmatprep.subr.mxu0 %v1329
    %1986 = vmatpush2.msra.mxu0 %v1328
    %1987 = vmatprep.subr.mxu0 %v1327
    %1988 = vmatpush2.msra.mxu0 %v1326
    %1989 = vmatprep.subr.mxu0 %v1325
    %1990 = vmatpush2.msra.mxu0 %v1324
    %1991 = vmatprep.subr.mxu0 %v1323
    %1992 = vmatpush2.msra.mxu0 %v1322
    %1993 = vmatprep.subr.mxu0 %v1321
    %1994 = vmatpush2.msra.mxu0 %v1320
    %1995 = vmatprep.subr.mxu0 %v1319
    %1996 = vmatpush2.msra.mxu0 %v1318
    %1997 = vmatprep.mubr.f32.mxu0 %v1544
    %1998 = vmatmul.mubr.f32.gmra.mxu0 %v1542
    %v1999 = vpop.f32.mrf.mxu0
    %v2000 = vadd.f32 %v1929, %v1999
    %v2001 = vpop.f32.mrf.mxu0
    %v2002 = vadd.f32 %v1931, %v2001
    %2003 = vdwg.mxu0
    %2004 = vmatprep.subr.mxu0 %v1381
    %2005 = vmatpush1.msra.mxu0 %v1380
    %2006 = vmatprep.subr.mxu0 %v1379
    %2007 = vmatpush1.msra.mxu0 %v1378
    %2008 = vmatprep.subr.mxu0 %v1377
    %2009 = vmatpush1.msra.mxu0 %v1376
    %2010 = vmatprep.subr.mxu0 %v1375
    %2011 = vmatpush1.msra.mxu0 %v1374
    %2012 = vmatprep.subr.mxu0 %v1373
    %2013 = vmatpush1.msra.mxu0 %v1372
    %2014 = vmatprep.subr.mxu0 %v1371
    %2015 = vmatpush1.msra.mxu0 %v1370
    %2016 = vmatprep.subr.mxu0 %v1369
    %2017 = vmatpush1.msra.mxu0 %v1368
    %2018 = vmatprep.subr.mxu0 %v1367
    %2019 = vmatpush1.msra.mxu0 %v1366
    %2020 = vmatprep.subr.mxu0 %v1365
    %2021 = vmatpush1.msra.mxu0 %v1364
    %2022 = vmatprep.subr.mxu0 %v1363
    %2023 = vmatpush1.msra.mxu0 %v1362
    %2024 = vmatprep.subr.mxu0 %v1361
    %2025 = vmatpush1.msra.mxu0 %v1360
    %2026 = vmatprep.subr.mxu0 %v1359
    %2027 = vmatpush1.msra.mxu0 %v1358
    %2028 = vmatprep.subr.mxu0 %v1357
    %2029 = vmatpush1.msra.mxu0 %v1356
    %2030 = vmatprep.subr.mxu0 %v1355
    %2031 = vmatpush1.msra.mxu0 %v1354
    %2032 = vmatprep.subr.mxu0 %v1353
    %2033 = vmatpush1.msra.mxu0 %v1352
    %2034 = vmatprep.subr.mxu0 %v1351
    %2035 = vmatpush1.msra.mxu0 %v1350
    %2036 = vmatprep.subr.mxu0 %v1413
    %2037 = vmatpush2.msra.mxu0 %v1412
    %2038 = vmatprep.subr.mxu0 %v1411
    %2039 = vmatpush2.msra.mxu0 %v1410
    %2040 = vmatprep.subr.mxu0 %v1409
    %2041 = vmatpush2.msra.mxu0 %v1408
    %2042 = vmatprep.subr.mxu0 %v1407
    %2043 = vmatpush2.msra.mxu0 %v1406
    %2044 = vmatprep.subr.mxu0 %v1405
    %2045 = vmatpush2.msra.mxu0 %v1404
    %2046 = vmatprep.subr.mxu0 %v1403
    %2047 = vmatpush2.msra.mxu0 %v1402
    %2048 = vmatprep.subr.mxu0 %v1401
    %2049 = vmatpush2.msra.mxu0 %v1400
    %2050 = vmatprep.subr.mxu0 %v1399
    %2051 = vmatpush2.msra.mxu0 %v1398
    %2052 = vmatprep.subr.mxu0 %v1397
    %2053 = vmatpush2.msra.mxu0 %v1396
    %2054 = vmatprep.subr.mxu0 %v1395
    %2055 = vmatpush2.msra.mxu0 %v1394
    %2056 = vmatprep.subr.mxu0 %v1393
    %2057 = vmatpush2.msra.mxu0 %v1392
    %2058 = vmatprep.subr.mxu0 %v1391
    %2059 = vmatpush2.msra.mxu0 %v1390
    %2060 = vmatprep.subr.mxu0 %v1389
    %2061 = vmatpush2.msra.mxu0 %v1388
    %2062 = vmatprep.subr.mxu0 %v1387
    %2063 = vmatpush2.msra.mxu0 %v1386
    %2064 = vmatprep.subr.mxu0 %v1385
    %2065 = vmatpush2.msra.mxu0 %v1384
    %2066 = vmatprep.subr.mxu0 %v1383
    %2067 = vmatpush2.msra.mxu0 %v1382
    %2068 = vmatprep.mubr.f32.mxu0 %v1560
    %2069 = vmatmul.mubr.f32.gmra.mxu0 %v1552
    %v2070 = vpop.f32.mrf.mxu0
    %v2071 = vadd.f32 %v2000, %v2070
    %v2072 = vpop.f32.mrf.mxu0
    %v2073 = vadd.f32 %v2002, %v2072
    %2074 = vdwg.mxu0
    %2075 = vmatprep.subr.mxu0 %v1445
    %2076 = vmatpush1.msra.mxu0 %v1444
    %2077 = vmatprep.subr.mxu0 %v1443
    %2078 = vmatpush1.msra.mxu0 %v1442
    %2079 = vmatprep.subr.mxu0 %v1441
    %2080 = vmatpush1.msra.mxu0 %v1440
    %2081 = vmatprep.subr.mxu0 %v1439
    %2082 = vmatpush1.msra.mxu0 %v1438
    %2083 = vmatprep.subr.mxu0 %v1437
    %2084 = vmatpush1.msra.mxu0 %v1436
    %2085 = vmatprep.subr.mxu0 %v1435
    %2086 = vmatpush1.msra.mxu0 %v1434
    %2087 = vmatprep.subr.mxu0 %v1433
    %2088 = vmatpush1.msra.mxu0 %v1432
    %2089 = vmatprep.subr.mxu0 %v1431
    %2090 = vmatpush1.msra.mxu0 %v1430
    %2091 = vmatprep.subr.mxu0 %v1429
    %2092 = vmatpush1.msra.mxu0 %v1428
    %2093 = vmatprep.subr.mxu0 %v1427
    %2094 = vmatpush1.msra.mxu0 %v1426
    %2095 = vmatprep.subr.mxu0 %v1425
    %2096 = vmatpush1.msra.mxu0 %v1424
    %2097 = vmatprep.subr.mxu0 %v1423
    %2098 = vmatpush1.msra.mxu0 %v1422
    %2099 = vmatprep.subr.mxu0 %v1421
    %2100 = vmatpush1.msra.mxu0 %v1420
    %2101 = vmatprep.subr.mxu0 %v1419
    %2102 = vmatpush1.msra.mxu0 %v1418
    %2103 = vmatprep.subr.mxu0 %v1417
    %2104 = vmatpush1.msra.mxu0 %v1416
    %2105 = vmatprep.subr.mxu0 %v1415
    %2106 = vmatpush1.msra.mxu0 %v1414
    %2107 = vmatprep.subr.mxu0 %v1477
    %2108 = vmatpush2.msra.mxu0 %v1476
    %2109 = vmatprep.subr.mxu0 %v1475
    %2110 = vmatpush2.msra.mxu0 %v1474
    %2111 = vmatprep.subr.mxu0 %v1473
    %2112 = vmatpush2.msra.mxu0 %v1472
    %2113 = vmatprep.subr.mxu0 %v1471
    %2114 = vmatpush2.msra.mxu0 %v1470
    %2115 = vmatprep.subr.mxu0 %v1469
    %2116 = vmatpush2.msra.mxu0 %v1468
    %2117 = vmatprep.subr.mxu0 %v1467
    %2118 = vmatpush2.msra.mxu0 %v1466
    %2119 = vmatprep.subr.mxu0 %v1465
    %2120 = vmatpush2.msra.mxu0 %v1464
    %2121 = vmatprep.subr.mxu0 %v1463
    %2122 = vmatpush2.msra.mxu0 %v1462
    %2123 = vmatprep.subr.mxu0 %v1461
    %2124 = vmatpush2.msra.mxu0 %v1460
    %2125 = vmatprep.subr.mxu0 %v1459
    %2126 = vmatpush2.msra.mxu0 %v1458
    %2127 = vmatprep.subr.mxu0 %v1457
    %2128 = vmatpush2.msra.mxu0 %v1456
    %2129 = vmatprep.subr.mxu0 %v1455
    %2130 = vmatpush2.msra.mxu0 %v1454
    %2131 = vmatprep.subr.mxu0 %v1453
    %2132 = vmatpush2.msra.mxu0 %v1452
    %2133 = vmatprep.subr.mxu0 %v1451
    %2134 = vmatpush2.msra.mxu0 %v1450
    %2135 = vmatprep.subr.mxu0 %v1449
    %2136 = vmatpush2.msra.mxu0 %v1448
    %2137 = vmatprep.subr.mxu0 %v1447
    %2138 = vmatpush2.msra.mxu0 %v1446
    %2139 = vmatprep.mubr.f32.mxu0 %v1561
    %2140 = vmatmul.mubr.f32.gmra.mxu0 %v1559
    %v2141 = vpop.f32.mrf.mxu0
    %v2142 = vadd.f32 %v2071, %v2141
    %v2143 = vpop.f32.mrf.mxu0
    %v2144 = vadd.f32 %v2073, %v2143
    %2145 = vdwg.mxu0
    %v2146 = vmax.f32 %v2142, 0.0
    %v2147 = vmax.f32 %v2144, 0.0
    %v2148 = vld [vmem:[%s6] sm:$0xff]
    %v2149 = vld [vmem:[%s6 + $0x8] sm:$0xff]
    %v2150 = vld [vmem:[%s6 + $0x10] sm:$0xff]
    %v2151 = vld [vmem:[%s6 + $0x18] sm:$0xff]
    %v2152 = vld [vmem:[%s6 + $0x20] sm:$0xff]
    %v2153 = vld [vmem:[%s6 + $0x28] sm:$0xff]
    %v2154 = vld [vmem:[%s6 + $0x30] sm:$0xff]
    %v2155 = vld [vmem:[%s6 + $0x38] sm:$0xff]
    %v2156 = vld [vmem:[%s6 + $0x40] sm:$0xff]
    %v2157 = vld [vmem:[%s6 + $0x48] sm:$0xff]
    %v2158 = vld [vmem:[%s6 + $0x50] sm:$0xff]
    %v2159 = vld [vmem:[%s6 + $0x58] sm:$0xff]
    %v2160 = vld [vmem:[%s6 + $0x60] sm:$0xff]
    %v2161 = vld [vmem:[%s6 + $0x68] sm:$0xff]
    %v2162 = vld [vmem:[%s6 + $0x70] sm:$0xff]
    %v2163 = vld [vmem:[%s6 + $0x78] sm:$0xff]
    %v2164 = vld [vmem:[%s6 + $0x80] sm:$0xff]
    %v2165 = vld [vmem:[%s6 + $0x88] sm:$0xff]
    %v2166 = vld [vmem:[%s6 + $0x90] sm:$0xff]
    %v2167 = vld [vmem:[%s6 + $0x98] sm:$0xff]
    %v2168 = vld [vmem:[%s6 + $0xa0] sm:$0xff]
    %v2169 = vld [vmem:[%s6 + $0xa8] sm:$0xff]
    %v2170 = vld [vmem:[%s6 + $0xb0] sm:$0xff]
    %v2171 = vld [vmem:[%s6 + $0xb8] sm:$0xff]
    %v2172 = vld [vmem:[%s6 + $0xc0] sm:$0xff]
    %v2173 = vld [vmem:[%s6 + $0xc8] sm:$0xff]
    %v2174 = vld [vmem:[%s6 + $0xd0] sm:$0xff]
    %v2175 = vld [vmem:[%s6 + $0xd8] sm:$0xff]
    %v2176 = vld [vmem:[%s6 + $0xe0] sm:$0xff]
    %v2177 = vld [vmem:[%s6 + $0xe8] sm:$0xff]
    %v2178 = vld [vmem:[%s6 + $0xf0] sm:$0xff]
    %v2179 = vld [vmem:[%s6 + $0xf8] sm:$0xff]
    %v2180 = vld [vmem:[#allocation2] sm:$0x1]
    %v2182 = vlaneseq
    %v2183 = vshrl.u32 %v2182, 7
    %v2184 = vsub.s32 0, %v2183
    %v2185 = vrot.slane %v2180, %v2184
    %2187 = vmatprep.subr.mxu0 0.0
    %2188 = vmatpush1.msra.mxu0 %v2163
    %2189 = vmatprep.subr.mxu0 0.0
    %2190 = vmatpush1.msra.mxu0 %v2162
    %2191 = vmatprep.subr.mxu0 0.0
    %2192 = vmatpush1.msra.mxu0 %v2161
    %2193 = vmatprep.subr.mxu0 0.0
    %2194 = vmatpush1.msra.mxu0 %v2160
    %2195 = vmatprep.subr.mxu0 0.0
    %2196 = vmatpush1.msra.mxu0 %v2159
    %2197 = vmatprep.subr.mxu0 0.0
    %2198 = vmatpush1.msra.mxu0 %v2158
    %2199 = vmatprep.subr.mxu0 0.0
    %2200 = vmatpush1.msra.mxu0 %v2157
    %2201 = vmatprep.subr.mxu0 0.0
    %2202 = vmatpush1.msra.mxu0 %v2156
    %2203 = vmatprep.subr.mxu0 0.0
    %2204 = vmatpush1.msra.mxu0 %v2155
    %2205 = vmatprep.subr.mxu0 0.0
    %2206 = vmatpush1.msra.mxu0 %v2154
    %2207 = vmatprep.subr.mxu0 0.0
    %2208 = vmatpush1.msra.mxu0 %v2153
    %2209 = vmatprep.subr.mxu0 0.0
    %2210 = vmatpush1.msra.mxu0 %v2152
    %2211 = vmatprep.subr.mxu0 0.0
    %2212 = vmatpush1.msra.mxu0 %v2151
    %2213 = vmatprep.subr.mxu0 0.0
    %2214 = vmatpush1.msra.mxu0 %v2150
    %2215 = vmatprep.subr.mxu0 0.0
    %2216 = vmatpush1.msra.mxu0 %v2149
    %2217 = vmatprep.subr.mxu0 0.0
    %2218 = vmatpush1.msra.mxu0 %v2148
    %2219 = vmatprep.subr.mxu0 0.0
    %2220 = vmatpush2.msra.mxu0 %v2179
    %2221 = vmatprep.subr.mxu0 0.0
    %2222 = vmatpush2.msra.mxu0 %v2178
    %2223 = vmatprep.subr.mxu0 0.0
    %2224 = vmatpush2.msra.mxu0 %v2177
    %2225 = vmatprep.subr.mxu0 0.0
    %2226 = vmatpush2.msra.mxu0 %v2176
    %2227 = vmatprep.subr.mxu0 0.0
    %2228 = vmatpush2.msra.mxu0 %v2175
    %2229 = vmatprep.subr.mxu0 0.0
    %2230 = vmatpush2.msra.mxu0 %v2174
    %2231 = vmatprep.subr.mxu0 0.0
    %2232 = vmatpush2.msra.mxu0 %v2173
    %2233 = vmatprep.subr.mxu0 0.0
    %2234 = vmatpush2.msra.mxu0 %v2172
    %2235 = vmatprep.subr.mxu0 0.0
    %2236 = vmatpush2.msra.mxu0 %v2171
    %2237 = vmatprep.subr.mxu0 0.0
    %2238 = vmatpush2.msra.mxu0 %v2170
    %2239 = vmatprep.subr.mxu0 0.0
    %2240 = vmatpush2.msra.mxu0 %v2169
    %2241 = vmatprep.subr.mxu0 0.0
    %2242 = vmatpush2.msra.mxu0 %v2168
    %2243 = vmatprep.subr.mxu0 0.0
    %2244 = vmatpush2.msra.mxu0 %v2167
    %2245 = vmatprep.subr.mxu0 0.0
    %2246 = vmatpush2.msra.mxu0 %v2166
    %2247 = vmatprep.subr.mxu0 0.0
    %2248 = vmatpush2.msra.mxu0 %v2165
    %2249 = vmatprep.subr.mxu0 0.0
    %2250 = vmatpush2.msra.mxu0 %v2164
    %2251 = vmatprep.mubr.f32.mxu0 %v2147
    %2252 = vmatmul.mubr.f32.gmra.mxu0 %v2146
    %v2253 = vpop.f32.mrf.mxu0
    %v2254 = vadd.f32 %v2185, %v2253
    %v2255 = vpop.f32.mrf.mxu0
    %2256 = vdwg.mxu0
    %v2257 = vtanh.pop %v2254
    %vm2258 = vcmask 1024
    %2259 = vst.msk [vmem:[%s9] sm:$0x3] %vm2258, %v2257
    // Predicated region
    $region34: #{net_forward.3} parent=1 // pred_check
      _
    $region35: #{net_forward.3} parent=1 // pred_check_branch
      %2261 = sbr.rel (0) target = $region37
    $region36: #{net_forward.3} parent=1 // pred_region
      %s2263 = ssub.s32 32, 32
      %2264 = vsyncadd [#allocation4], %s2263
      %s2266 = sshll.u32 [#allocation3], 4
      %s2267 = int_to_ptr.vmem [resolvable:$true] %s2266
      %2269 = dma.vmem_to_hbm [thread:$0]  %s2267, 32, %s8, [#allocation4]
    $region37: #{net_forward.3} parent=1 // pred_fallthru
      _
    // Predicated region
    $region38: #{net_forward.3} parent=1 // pred_check
      _
    $region39: #{net_forward.3} parent=1 // pred_check_branch
      %2271 = sbr.rel (0) target = $region41
    $region40: #{net_forward.3} parent=1 // pred_region
      _
    $region41: #{net_forward.3} parent=1 // pred_fallthru
      _
    // Predicated region
    $region42: #{net_forward.3} parent=1 // pred_check
      _
    $region43: #{net_forward.3} parent=1 // pred_check_branch
      %2273 = sbr.rel (0) target = $region45
    $region44: #{net_forward.3} parent=1 // pred_region
      %2274 = dma.done [#allocation4], 32
    $region45: #{net_forward.3} parent=1 // pred_fallthru
      _
    // Predicated region
    $region46: #{net_forward.3} parent=1 // pred_check
      _
    $region47: #{net_forward.3} parent=1 // pred_check_branch
      %2276 = sbr.rel (0) target = $region49
    $region48: #{net_forward.3} parent=1 // pred_region
      _
    $region49: #{net_forward.3} parent=1 // pred_fallthru
      _
    %2277 = vsyncpa [#allocation4], 1

</llo_original>
